<compile_context>
chip_gen: v7x
topology: tpu7x:2x2x1
jax: 0.10.0
libtpu: 0.0.40
codegen_flags: <defaults>
</compile_context>

<pallas_src>
import functools
import numpy as np

import jax
import jax.numpy as jnp
from jax import lax
from jax.experimental import pallas as pl
from jax.experimental.pallas import tpu as pltpu


# ---------------------------------------------------------------------------
# In-kernel building blocks
# ---------------------------------------------------------------------------
def _conv_block(parts, w, b, *, K, Lc, Bb):
    """'same'-padded Conv1d (+ folded BN) + ReLU as K shifted, accumulated MXU dots.

    parts : list of (Bb, Lc, Ci) float32 activations whose channel widths sum to
            w.shape[1].  Passing [x, z] here realises torch.cat([x, z], dim=2)
            without a lane concat or an HBM round trip.
    w     : (K, Cin, Cout) bfloat16 value (BN + bias folded on the host)
    b     : (1, Cout) float32 value
    """
    f32 = jnp.float32
    left = (K - 1) // 2
    right = K - 1 - left
    cout = w.shape[2]
    acc = jnp.zeros((Bb * Lc, cout), f32)
    c_off = 0
    for p in parts:
        ci = p.shape[2]
        pads = []
        if left > 0:
            pads.append(jnp.zeros((Bb, left, ci), f32))      # only the halo is zeroed
        pads.append(p)
        if right > 0:
            pads.append(jnp.zeros((Bb, right, ci), f32))
        hp = jnp.concatenate(pads, axis=1) if len(pads) > 1 else p
        for k in range(K):                 # K small dots; the MXU is otherwise idle
            xk = hp[:, k:k + Lc, :].reshape(Bb * Lc, ci)
            wk = w[k, c_off:c_off + ci, :]
            acc = acc + jnp.dot(xk.astype(jnp.bfloat16), wk,
                                preferred_element_type=f32)
        c_off += ci
    return jnp.maximum(acc + b, 0.0).reshape(Bb, Lc, cout)


def _cpab_forward_kernel(*refs, n_conv, n_rec, Ks, outsize, nc, N, has_z):
    """refs = [x, (z), (w_i, b_i)*n_conv, wf, bf, wl1, bl1, wl2, bl2, basis_T,
               x_align_out, thetas_out]"""
    f32 = jnp.float32
    it = iter(refs)
    x_ref = next(it)
    z_ref = next(it) if has_z else None
    conv_w, conv_b = [], []
    for _ in range(n_conv):
        conv_w.append(next(it)[...])                      # (K, Cin, Cout) bf16
        conv_b.append(next(it)[...].astype(f32))          # (1, Cout)
    wf = next(it)[...].astype(f32)
    bf = next(it)[...].astype(f32)
    w1 = next(it)[...].astype(f32)
    b1 = next(it)[...].astype(f32)
    w2 = next(it)[...].astype(f32)
    b2 = next(it)[...].astype(f32)
    basis = next(it)[...].astype(f32)                     # (d, 2*nc)
    xa_ref = next(it)
    th_ref = next(it)

    Bb = x_ref.shape[0]
    L0 = x_ref.shape[1]

    # ---- theta-independent constants, built once and shared by all recurrences ----
    denom_out = float(max(outsize - 1, 1))
    g_row = lax.broadcasted_iota(jnp.int32, (1, outsize), 1).astype(f32) / denom_out
    cell = jnp.clip(jnp.floor(g_row * nc), 0.0, nc - 1.0).astype(jnp.int32)
    c_iota = lax.broadcasted_iota(jnp.int32, (nc, outsize), 0)
    sel_cell = (c_iota == cell).astype(f32)               # (nc, outsize) one-hot
    dt = 1.0 / float(2 ** N)

    x_cur = x_ref[...].astype(f32)                        # (Bb, L, C)
    z_val = z_ref[...].astype(f32) if has_z else None
    L_cur = L0
    thetas = []

    for _r in range(n_rec):                               # fused recurrence (unrolled)
        # ------- localization FCN: ConvBlock stack -> final Linear -> mean -------
        parts = [x_cur] + ([z_val] if has_z else [])
        h = None
        for i in range(n_conv):
            h = _conv_block(parts if i == 0 else [h], conv_w[i], conv_b[i],
                            K=Ks[i], Lc=L_cur, Bb=Bb)
        c_last = h.shape[2]
        # apply the (linear) final layer before averaging: M = Bb*L rows on the MXU
        p = jnp.dot(h.reshape(Bb * L_cur, c_last), wf, preferred_element_type=f32)
        xs = jnp.mean(p.reshape(Bb, L_cur, -1), axis=1) + bf          # (Bb, out_ch)

        # ------- fc_loc MLP -> theta -------
        z1 = jnp.maximum(jnp.dot(xs, w1, preferred_element_type=f32) + b1, 0.0)
        theta = jnp.dot(z1, w2, preferred_element_type=f32) + b2      # (Bb, d)
        thetas.append(theta.reshape(Bb, 1, theta.shape[1]))

        # ------- CPAB velocity field on the output grid (batched, lane-major) -------
        A = jnp.dot(theta, basis, preferred_element_type=f32)         # (Bb, 2*nc)
        a_g = jnp.dot(A[:, :nc], sel_cell, preferred_element_type=f32)  # (Bb, outsize)
        b_g = jnp.dot(A[:, nc:], sel_cell, preferred_element_type=f32)

        # exact per-cell closed-form flow for the small step dt = 2^-N
        small = jnp.abs(a_g) < 1e-7
        ea = jnp.exp(a_g * dt)
        ratio = jnp.where(small, dt * (1.0 + 0.5 * a_g * dt),
                          (ea - 1.0) / jnp.where(small, 1.0, a_g))
        phi = g_row * ea + b_g * ratio                                 # (Bb, outsize)

        # N squarings phi <- phi o phi, batched over Bb: 2-tap hat interpolation on
        # the uniform grid via a select-gather (no per-batch dense matmuls, no MXU
        # push->pop latency chain).
        for _ in range(N):
            pos = jnp.clip(phi, 0.0, 1.0) * denom_out
            idx = jnp.clip(jnp.floor(pos), 0.0, float(outsize - 2)).astype(jnp.int32)
            frac = pos - idx.astype(f32)
            lo = jnp.zeros_like(phi)
            hi = jnp.zeros_like(phi)
            for j in range(outsize - 1):
                m = idx == j
                lo = jnp.where(m, phi[:, j:j + 1], lo)
                hi = jnp.where(m, phi[:, j + 1:j + 2], hi)
            phi = lo * (1.0 - frac) + hi * frac

        # ------- batched linear resample at the warped grid -------
        posl = jnp.clip(phi, 0.0, 1.0) * float(L_cur - 1)              # (Bb, outsize)
        l_row = lax.broadcasted_iota(jnp.int32, (1, 1, L_cur), 2).astype(f32)
        wres = jnp.maximum(1.0 - jnp.abs(posl.reshape(Bb, outsize, 1) - l_row), 0.0)
        x_cur = jnp.einsum('bol,blc->boc', wres, x_cur,
                           preferred_element_type=f32)                 # (Bb,outsize,C)
        L_cur = outsize

    # single full-block stores (no per-batch masked partial stores)
    xa_ref[...] = x_cur.astype(xa_ref.dtype)
    th_ref[...] = jnp.concatenate(thetas, axis=1).astype(th_ref.dtype)


# ---------------------------------------------------------------------------
# pallas_call wrapper
# ---------------------------------------------------------------------------
def _full_spec(shape):
    nd = len(shape)
    return pl.BlockSpec(shape, lambda i, _nd=nd: (0,) * _nd)


def cpab_average_forward(x, z, conv_params, wf, bf, w1, b1, w2, b2, basis_T,
                         *, outsize, N, nc, n_rec):
    """Whole CPABAverage forward (all recurrences) in one fused pallas_call.

    x: (B, L, C), z: optional (B, L, Cz).  Returns (x_align (B,outsize,C),
    thetas (B, n_rec, d))."""
    B, L, C = x.shape
    d = basis_T.shape[0]
    n_conv = len(conv_params)
    has_z = z is not None
    if has_z:
        assert z.shape[0] == B and z.shape[1] == L
        if n_rec > 1:
            assert outsize == L, "recurrence with z requires outsize == input length"

    # Split the batch over (up to) two grid blocks: a "parallel" grid axis uses both
    # TensorCores on v7x; on v5e/v6e it is one extra, cheap sequential grid step.
    G = 2 if (B >= 2 and B % 2 == 0) else 1
    Bb = B // G

    Ks = tuple(k for (k, _, _) in conv_params)
    kernel = functools.partial(
        _cpab_forward_kernel, n_conv=n_conv, n_rec=n_rec, Ks=Ks,
        outsize=outsize, nc=nc, N=N, has_z=has_z)

    operands = [x]
    in_specs = [pl.BlockSpec((Bb, L, C), lambda i: (i, 0, 0))]
    if has_z:
        operands.append(z)
        in_specs.append(pl.BlockSpec((Bb, L, z.shape[2]), lambda i: (i, 0, 0)))
    for (_, w, b) in conv_params:
        operands += [w, b]
        in_specs += [_full_spec(w.shape), _full_spec(b.shape)]
    operands += [wf, bf, w1, b1, w2, b2, basis_T]
    in_specs += [_full_spec(a.shape) for a in (wf, bf, w1, b1, w2, b2, basis_T)]

    out_shape = (jax.ShapeDtypeStruct((B, outsize, C), jnp.float32),
                 jax.ShapeDtypeStruct((B, n_rec, d), jnp.float32))
    out_specs = (pl.BlockSpec((Bb, outsize, C), lambda i: (i, 0, 0)),
                 pl.BlockSpec((Bb, n_rec, d), lambda i: (i, 0, 0)))

    x_align, thetas = pl.pallas_call(
        kernel,
        grid=(G,),
        in_specs=in_specs,
        out_shape=out_shape,
        out_specs=out_specs,
        compiler_params=pltpu.CompilerParams(
            dimension_semantics=("parallel",)),
    )(*operands)
    return x_align, thetas


# ---------------------------------------------------------------------------
# Host-side parameter preparation
# ---------------------------------------------------------------------------
def _fold_bn(w, b, gamma, beta, running_mean, running_var, eps=1e-5):
    """Fold inference-mode BatchNorm1d + conv bias into the conv weight.
    w: (K, Cin, Cout) -> bf16 (K, Cin, Cout);  bias -> f32 (1, Cout)."""
    scale = gamma / jnp.sqrt(running_var + eps)
    w_fold = (w * scale[None, None, :]).astype(jnp.bfloat16)
    b_fold = ((b - running_mean) * scale + beta).reshape(1, -1).astype(jnp.float32)
    return w_fold, b_fold


def cpab_basis(nc, zero_boundary):
    # velocity v(x) = a_c*x + b_c on cell c; params ordered [a_0..a_{nc-1}, b_0..b_{nc-1}]
    rows = []
    for k in range(1, nc):                        # continuity at interior knots
        xk = k / nc
        r = np.zeros(2 * nc)
        r[k - 1] = xk
        r[nc + k - 1] = 1.0
        r[k] = -xk
        r[nc + k] = -1.0
        rows.append(r)
    if zero_boundary:
        r = np.zeros(2 * nc); r[nc] = 1.0; rows.append(r)                           # v(0)=0
        r = np.zeros(2 * nc); r[nc - 1] = 1.0; r[2 * nc - 1] = 1.0; rows.append(r)  # v(1)=0
    Lc = np.stack(rows)
    _, S, Vh = np.linalg.svd(Lc, full_matrices=True)
    rank = int(np.sum(S > 1e-8))
    return jnp.asarray(Vh[rank:].T, jnp.float32)  # (2*nc, d)


class CPABAveragePallas:
    def __init__(self, tess_size, zero_boundary, n_recurrence, outsize, N,
                 in_channels, out_channels, channels, kernels, strides, key):
        assert all(s == 1 for s in strides), "only stride=1 'same' conv implemented"
        self.n_recurrence = n_recurrence
        self.outsize = outsize
        self.N = N
        self.nc = tess_size

        basis = cpab_basis(tess_size, zero_boundary)     # (2*nc, d)
        self.d = basis.shape[1]
        self.basis_T = jnp.transpose(basis)              # (d, 2*nc)

        chs = [in_channels] + list(channels)
        keys = iter(jax.random.split(key, 4 * len(kernels) + 8))

        # conv blocks: (K, folded weight (K, Cin, Cout) bf16, folded bias (1, Cout) f32)
        self.conv_params = []
        for i in range(len(kernels)):
            cin, cout, k = chs[i], chs[i + 1], kernels[i]
            w = 0.1 * jax.random.normal(next(keys), (k, cin, cout), jnp.float32)
            b = 0.1 * jax.random.normal(next(keys), (cout,), jnp.float32)
            gamma = jnp.ones((cout,), jnp.float32)
            beta = jnp.zeros((cout,), jnp.float32)
            rmean = jnp.zeros((cout,), jnp.float32)
            rvar = jnp.ones((cout,), jnp.float32)
            w_f, b_f = _fold_bn(w, b, gamma, beta, rmean, rvar)
            self.conv_params.append((k, w_f, b_f))

        c_last = chs[-1]
        # head + fc_loc kept in f32 (theta is very sensitive to rounding here)
        self.wf = 0.1 * jax.random.normal(next(keys), (c_last, out_channels), jnp.float32)
        self.bf = 0.1 * jax.random.normal(next(keys), (1, out_channels), jnp.float32)
        self.w1 = 0.1 * jax.random.normal(next(keys), (out_channels, 16), jnp.float32)
        self.b1 = 0.1 * jax.random.normal(next(keys), (1, 16), jnp.float32)
        # fc_loc[2] is zero-initialized in the reference __init__
        self.w2 = jnp.zeros((16, self.d), jnp.float32)
        self.b2 = jnp.zeros((1, self.d), jnp.float32)

    def __call__(self, x, z=None):
        x_out, th = cpab_average_forward(
            x, z, self.conv_params, self.wf, self.bf, self.w1, self.b1,
            self.w2, self.b2, self.basis_T,
            outsize=self.outsize, N=self.N, nc=self.nc, n_rec=self.n_recurrence)
        thetas = [th[:, r, :] for r in range(self.n_recurrence)]
        return x_out, thetas


if __name__ == "__main__":
    key = jax.random.PRNGKey(0)
    k_data, k_params = jax.random.split(key)

    B, L, C = 2, 16, 3                      # x layout: (batch, length, channels)
    x = jax.random.normal(k_data, (B, L, C), jnp.float32)

    model = CPABAveragePallas(
        tess_size=8, zero_boundary=True, n_recurrence=2, outsize=16, N=4,
        in_channels=C, out_channels=11, channels=[20, 20], kernels=[8, 8],
        strides=[1, 1], key=k_params)

    x_out, thetas = model(x, None)
    x_out = jax.block_until_ready(x_out)
    for t in thetas:
        jax.block_until_ready(t)

    assert x_out.shape == (B, 16, C)
    assert all(t.shape == (B, model.d) for t in thetas)
    # fc_loc's last layer is zero-initialised (as in the reference), so theta == 0 and
    # the CPAB warp is the identity: the transformer must return x up to fp error.
    assert all(bool(jnp.allclose(t, 0.0)) for t in thetas)
    assert bool(jnp.allclose(x_out, x, atol=1e-3))
    print("KERNEL_OK")
</pallas_src>

<mosaic_0001>
module attributes {stable_mosaic.version = 11 : i64} {
  func.func @_cpab_forward_kernel(%arg0: i32, %arg1: memref<1x16x3xf32, #tpu.memory_space<vmem>>, %arg2: memref<8x3x20xbf16, #tpu.memory_space<vmem>>, %arg3: memref<1x20xf32, #tpu.memory_space<vmem>>, %arg4: memref<8x20x20xbf16, #tpu.memory_space<vmem>>, %arg5: memref<1x20xf32, #tpu.memory_space<vmem>>, %arg6: memref<20x11xf32, #tpu.memory_space<vmem>>, %arg7: memref<1x11xf32, #tpu.memory_space<vmem>>, %arg8: memref<11x16xf32, #tpu.memory_space<vmem>>, %arg9: memref<1x16xf32, #tpu.memory_space<vmem>>, %arg10: memref<16x7xf32, #tpu.memory_space<vmem>>, %arg11: memref<1x7xf32, #tpu.memory_space<vmem>>, %arg12: memref<7x16xf32, #tpu.memory_space<vmem>>, %arg13: memref<1x16x3xf32, #tpu.memory_space<vmem>>, %arg14: memref<1x2x7xf32, #tpu.memory_space<vmem>>) attributes {dimension_semantics = [#tpu.dimension_semantics<parallel>], iteration_bounds = array<i64: 2>, scalar_prefetch = 0 : i64, scratch_operands = 0 : i64, tpu.core_type = #tpu.core_type<tc>, window_params = [{transform_indices = @transform_0, window_bounds = array<i64: 1, 16, 3>}, {pipeline_mode = #tpu.pipeline_mode<synchronous>, transform_indices = @transform_1, window_bounds = array<i64: 8, 3, 20>}, {pipeline_mode = #tpu.pipeline_mode<synchronous>, transform_indices = @transform_2, window_bounds = array<i64: 1, 20>}, {pipeline_mode = #tpu.pipeline_mode<synchronous>, transform_indices = @transform_3, window_bounds = array<i64: 8, 20, 20>}, {pipeline_mode = #tpu.pipeline_mode<synchronous>, transform_indices = @transform_4, window_bounds = array<i64: 1, 20>}, {pipeline_mode = #tpu.pipeline_mode<synchronous>, transform_indices = @transform_5, window_bounds = array<i64: 20, 11>}, {pipeline_mode = #tpu.pipeline_mode<synchronous>, transform_indices = @transform_6, window_bounds = array<i64: 1, 11>}, {pipeline_mode = #tpu.pipeline_mode<synchronous>, transform_indices = @transform_7, window_bounds = array<i64: 11, 16>}, {pipeline_mode = #tpu.pipeline_mode<synchronous>, transform_indices = @transform_8, window_bounds = array<i64: 1, 16>}, {pipeline_mode = #tpu.pipeline_mode<synchronous>, transform_indices = @transform_9, window_bounds = array<i64: 16, 7>}, {pipeline_mode = #tpu.pipeline_mode<synchronous>, transform_indices = @transform_10, window_bounds = array<i64: 1, 7>}, {pipeline_mode = #tpu.pipeline_mode<synchronous>, transform_indices = @transform_11, window_bounds = array<i64: 7, 16>}, {transform_indices = @transform_12, window_bounds = array<i64: 1, 16, 3>}, {transform_indices = @transform_13, window_bounds = array<i64: 1, 2, 7>}]} {
    %c0 = arith.constant 0 : index
    %c0_0 = arith.constant 0 : index
    %c0_1 = arith.constant 0 : index
    %0 = vector.load %arg2[%c0, %c0_0, %c0_1] : memref<8x3x20xbf16, #tpu.memory_space<vmem>>, vector<8x3x20xbf16>
    %c0_2 = arith.constant 0 : index
    %c0_3 = arith.constant 0 : index
    %1 = vector.load %arg3[%c0_2, %c0_3] : memref<1x20xf32, #tpu.memory_space<vmem>>, vector<1x20xf32>
    %c0_4 = arith.constant 0 : index
    %c0_5 = arith.constant 0 : index
    %c0_6 = arith.constant 0 : index
    %2 = vector.load %arg4[%c0_4, %c0_5, %c0_6] : memref<8x20x20xbf16, #tpu.memory_space<vmem>>, vector<8x20x20xbf16>
    %c0_7 = arith.constant 0 : index
    %c0_8 = arith.constant 0 : index
    %3 = vector.load %arg5[%c0_7, %c0_8] : memref<1x20xf32, #tpu.memory_space<vmem>>, vector<1x20xf32>
    %c0_9 = arith.constant 0 : index
    %c0_10 = arith.constant 0 : index
    %4 = vector.load %arg6[%c0_9, %c0_10] : memref<20x11xf32, #tpu.memory_space<vmem>>, vector<20x11xf32>
    %c0_11 = arith.constant 0 : index
    %c0_12 = arith.constant 0 : index
    %5 = vector.load %arg7[%c0_11, %c0_12] : memref<1x11xf32, #tpu.memory_space<vmem>>, vector<1x11xf32>
    %c0_13 = arith.constant 0 : index
    %c0_14 = arith.constant 0 : index
    %6 = vector.load %arg8[%c0_13, %c0_14] : memref<11x16xf32, #tpu.memory_space<vmem>>, vector<11x16xf32>
    %c0_15 = arith.constant 0 : index
    %c0_16 = arith.constant 0 : index
    %7 = vector.load %arg9[%c0_15, %c0_16] : memref<1x16xf32, #tpu.memory_space<vmem>>, vector<1x16xf32>
    %c0_17 = arith.constant 0 : index
    %c0_18 = arith.constant 0 : index
    %8 = vector.load %arg10[%c0_17, %c0_18] : memref<16x7xf32, #tpu.memory_space<vmem>>, vector<16x7xf32>
    %c0_19 = arith.constant 0 : index
    %c0_20 = arith.constant 0 : index
    %9 = vector.load %arg11[%c0_19, %c0_20] : memref<1x7xf32, #tpu.memory_space<vmem>>, vector<1x7xf32>
    %c0_21 = arith.constant 0 : index
    %c0_22 = arith.constant 0 : index
    %10 = vector.load %arg12[%c0_21, %c0_22] : memref<7x16xf32, #tpu.memory_space<vmem>>, vector<7x16xf32>
    %11 = tpu.iota {dimensions = array<i32: 1>} : vector<1x16xi32>
    %12 = arith.sitofp %11 : vector<1x16xi32> to vector<1x16xf32>
    %cst = arith.constant 1.500000e+01 : f32
    %13 = vector.broadcast %cst : f32 to vector<1x16xf32>
    %14 = arith.divf %12, %13 : vector<1x16xf32>
    %cst_23 = arith.constant 8.000000e+00 : f32
    %15 = vector.broadcast %cst_23 : f32 to vector<1x16xf32>
    %16 = arith.mulf %14, %15 : vector<1x16xf32>
    %17 = math.floor %16 : vector<1x16xf32>
    %cst_24 = arith.constant 0.000000e+00 : f32
    %cst_25 = arith.constant 7.000000e+00 : f32
    %18 = vector.broadcast %cst_24 : f32 to vector<1x16xf32>
    %19 = arith.maximumf %18, %17 : vector<1x16xf32>
    %20 = vector.broadcast %cst_25 : f32 to vector<1x16xf32>
    %21 = arith.minimumf %20, %19 : vector<1x16xf32>
    %22 = arith.fptosi %21 : vector<1x16xf32> to vector<1x16xi32>
    %23 = tpu.iota {dimensions = array<i32: 0>} : vector<8x16xi32>
    %24 = vector.broadcast %22 : vector<1x16xi32> to vector<8x16xi32>
    %25 = arith.cmpi eq, %23, %24 : vector<8x16xi32>
    %26 = arith.extui %25 : vector<8x16xi1> to vector<8x16xi32>
    %27 = arith.sitofp %26 : vector<8x16xi32> to vector<8x16xf32>
    %c0_26 = arith.constant 0 : index
    %c0_27 = arith.constant 0 : index
    %c0_28 = arith.constant 0 : index
    %28 = vector.load %arg1[%c0_26, %c0_27, %c0_28] : memref<1x16x3xf32, #tpu.memory_space<vmem>>, vector<1x16x3xf32>
    %cst_29 = arith.constant 0.000000e+00 : f32
    %29 = vector.broadcast %cst_29 : f32 to vector<16x20xf32>
    %cst_30 = arith.constant 0.000000e+00 : f32
    %30 = vector.broadcast %cst_30 : f32 to vector<1x3x3xf32>
    %cst_31 = arith.constant 0.000000e+00 : f32
    %31 = vector.broadcast %cst_31 : f32 to vector<1x4x3xf32>
    %32 = tpu.concatenate %30, %28, %31 in 1 : vector<1x3x3xf32>, vector<1x16x3xf32>, vector<1x4x3xf32> -> vector<1x23x3xf32>
    %33 = vector.extract_strided_slice %32 {offsets = [0, 0, 0], sizes = [1, 16, 3], strides = [1, 1, 1]} : vector<1x23x3xf32> to vector<1x16x3xf32>
    %34 = vector.shape_cast %33 : vector<1x16x3xf32> to vector<16x3xf32>
    %35 = vector.extract_strided_slice %0 {offsets = [0, 0, 0], sizes = [1, 3, 20], strides = [1, 1, 1]} : vector<8x3x20xbf16> to vector<1x3x20xbf16>
    %36 = vector.shape_cast %35 : vector<1x3x20xbf16> to vector<3x20xbf16>
    %37 = arith.truncf %34 : vector<16x3xf32> to vector<16x3xbf16>
    %cst_32 = arith.constant dense<0.000000e+00> : vector<16x20xf32>
    %38 = tpu.matmul %37, %36, %cst_32 {dimension_numbers = #tpu.dot_dimension_numbers<[1], [0], [0], [1], [0, 0, 1, 1], [], []>} : vector<16x3xbf16>, vector<3x20xbf16>, vector<16x20xf32> -> vector<16x20xf32>
    %39 = arith.addf %29, %38 : vector<16x20xf32>
    %40 = vector.extract_strided_slice %32 {offsets = [0, 1, 0], sizes = [1, 16, 3], strides = [1, 1, 1]} : vector<1x23x3xf32> to vector<1x16x3xf32>
    %41 = vector.shape_cast %40 : vector<1x16x3xf32> to vector<16x3xf32>
    %42 = vector.extract_strided_slice %0 {offsets = [1, 0, 0], sizes = [1, 3, 20], strides = [1, 1, 1]} : vector<8x3x20xbf16> to vector<1x3x20xbf16>
    %43 = vector.shape_cast %42 : vector<1x3x20xbf16> to vector<3x20xbf16>
    %44 = arith.truncf %41 : vector<16x3xf32> to vector<16x3xbf16>
    %cst_33 = arith.constant dense<0.000000e+00> : vector<16x20xf32>
    %45 = tpu.matmul %44, %43, %cst_33 {dimension_numbers = #tpu.dot_dimension_numbers<[1], [0], [0], [1], [0, 0, 1, 1], [], []>} : vector<16x3xbf16>, vector<3x20xbf16>, vector<16x20xf32> -> vector<16x20xf32>
    %46 = arith.addf %39, %45 : vector<16x20xf32>
    %47 = vector.extract_strided_slice %32 {offsets = [0, 2, 0], sizes = [1, 16, 3], strides = [1, 1, 1]} : vector<1x23x3xf32> to vector<1x16x3xf32>
    %48 = vector.shape_cast %47 : vector<1x16x3xf32> to vector<16x3xf32>
    %49 = vector.extract_strided_slice %0 {offsets = [2, 0, 0], sizes = [1, 3, 20], strides = [1, 1, 1]} : vector<8x3x20xbf16> to vector<1x3x20xbf16>
    %50 = vector.shape_cast %49 : vector<1x3x20xbf16> to vector<3x20xbf16>
    %51 = arith.truncf %48 : vector<16x3xf32> to vector<16x3xbf16>
    %cst_34 = arith.constant dense<0.000000e+00> : vector<16x20xf32>
    %52 = tpu.matmul %51, %50, %cst_34 {dimension_numbers = #tpu.dot_dimension_numbers<[1], [0], [0], [1], [0, 0, 1, 1], [], []>} : vector<16x3xbf16>, vector<3x20xbf16>, vector<16x20xf32> -> vector<16x20xf32>
    %53 = arith.addf %46, %52 : vector<16x20xf32>
    %54 = vector.extract_strided_slice %32 {offsets = [0, 3, 0], sizes = [1, 16, 3], strides = [1, 1, 1]} : vector<1x23x3xf32> to vector<1x16x3xf32>
    %55 = vector.shape_cast %54 : vector<1x16x3xf32> to vector<16x3xf32>
    %56 = vector.extract_strided_slice %0 {offsets = [3, 0, 0], sizes = [1, 3, 20], strides = [1, 1, 1]} : vector<8x3x20xbf16> to vector<1x3x20xbf16>
    %57 = vector.shape_cast %56 : vector<1x3x20xbf16> to vector<3x20xbf16>
    %58 = arith.truncf %55 : vector<16x3xf32> to vector<16x3xbf16>
    %cst_35 = arith.constant dense<0.000000e+00> : vector<16x20xf32>
    %59 = tpu.matmul %58, %57, %cst_35 {dimension_numbers = #tpu.dot_dimension_numbers<[1], [0], [0], [1], [0, 0, 1, 1], [], []>} : vector<16x3xbf16>, vector<3x20xbf16>, vector<16x20xf32> -> vector<16x20xf32>
    %60 = arith.addf %53, %59 : vector<16x20xf32>
    %61 = vector.extract_strided_slice %32 {offsets = [0, 4, 0], sizes = [1, 16, 3], strides = [1, 1, 1]} : vector<1x23x3xf32> to vector<1x16x3xf32>
    %62 = vector.shape_cast %61 : vector<1x16x3xf32> to vector<16x3xf32>
    %63 = vector.extract_strided_slice %0 {offsets = [4, 0, 0], sizes = [1, 3, 20], strides = [1, 1, 1]} : vector<8x3x20xbf16> to vector<1x3x20xbf16>
    %64 = vector.shape_cast %63 : vector<1x3x20xbf16> to vector<3x20xbf16>
    %65 = arith.truncf %62 : vector<16x3xf32> to vector<16x3xbf16>
    %cst_36 = arith.constant dense<0.000000e+00> : vector<16x20xf32>
    %66 = tpu.matmul %65, %64, %cst_36 {dimension_numbers = #tpu.dot_dimension_numbers<[1], [0], [0], [1], [0, 0, 1, 1], [], []>} : vector<16x3xbf16>, vector<3x20xbf16>, vector<16x20xf32> -> vector<16x20xf32>
    %67 = arith.addf %60, %66 : vector<16x20xf32>
    %68 = vector.extract_strided_slice %32 {offsets = [0, 5, 0], sizes = [1, 16, 3], strides = [1, 1, 1]} : vector<1x23x3xf32> to vector<1x16x3xf32>
    %69 = vector.shape_cast %68 : vector<1x16x3xf32> to vector<16x3xf32>
    %70 = vector.extract_strided_slice %0 {offsets = [5, 0, 0], sizes = [1, 3, 20], strides = [1, 1, 1]} : vector<8x3x20xbf16> to vector<1x3x20xbf16>
    %71 = vector.shape_cast %70 : vector<1x3x20xbf16> to vector<3x20xbf16>
    %72 = arith.truncf %69 : vector<16x3xf32> to vector<16x3xbf16>
    %cst_37 = arith.constant dense<0.000000e+00> : vector<16x20xf32>
    %73 = tpu.matmul %72, %71, %cst_37 {dimension_numbers = #tpu.dot_dimension_numbers<[1], [0], [0], [1], [0, 0, 1, 1], [], []>} : vector<16x3xbf16>, vector<3x20xbf16>, vector<16x20xf32> -> vector<16x20xf32>
    %74 = arith.addf %67, %73 : vector<16x20xf32>
    %75 = vector.extract_strided_slice %32 {offsets = [0, 6, 0], sizes = [1, 16, 3], strides = [1, 1, 1]} : vector<1x23x3xf32> to vector<1x16x3xf32>
    %76 = vector.shape_cast %75 : vector<1x16x3xf32> to vector<16x3xf32>
    %77 = vector.extract_strided_slice %0 {offsets = [6, 0, 0], sizes = [1, 3, 20], strides = [1, 1, 1]} : vector<8x3x20xbf16> to vector<1x3x20xbf16>
    %78 = vector.shape_cast %77 : vector<1x3x20xbf16> to vector<3x20xbf16>
    %79 = arith.truncf %76 : vector<16x3xf32> to vector<16x3xbf16>
    %cst_38 = arith.constant dense<0.000000e+00> : vector<16x20xf32>
    %80 = tpu.matmul %79, %78, %cst_38 {dimension_numbers = #tpu.dot_dimension_numbers<[1], [0], [0], [1], [0, 0, 1, 1], [], []>} : vector<16x3xbf16>, vector<3x20xbf16>, vector<16x20xf32> -> vector<16x20xf32>
    %81 = arith.addf %74, %80 : vector<16x20xf32>
    %82 = vector.extract_strided_slice %32 {offsets = [0, 7, 0], sizes = [1, 16, 3], strides = [1, 1, 1]} : vector<1x23x3xf32> to vector<1x16x3xf32>
    %83 = vector.shape_cast %82 : vector<1x16x3xf32> to vector<16x3xf32>
    %84 = vector.extract_strided_slice %0 {offsets = [7, 0, 0], sizes = [1, 3, 20], strides = [1, 1, 1]} : vector<8x3x20xbf16> to vector<1x3x20xbf16>
    %85 = vector.shape_cast %84 : vector<1x3x20xbf16> to vector<3x20xbf16>
    %86 = arith.truncf %83 : vector<16x3xf32> to vector<16x3xbf16>
    %cst_39 = arith.constant dense<0.000000e+00> : vector<16x20xf32>
    %87 = tpu.matmul %86, %85, %cst_39 {dimension_numbers = #tpu.dot_dimension_numbers<[1], [0], [0], [1], [0, 0, 1, 1], [], []>} : vector<16x3xbf16>, vector<3x20xbf16>, vector<16x20xf32> -> vector<16x20xf32>
    %88 = arith.addf %81, %87 : vector<16x20xf32>
    %89 = vector.broadcast %1 : vector<1x20xf32> to vector<16x20xf32>
    %90 = arith.addf %88, %89 : vector<16x20xf32>
    %cst_40 = arith.constant 0.000000e+00 : f32
    %91 = vector.broadcast %cst_40 : f32 to vector<16x20xf32>
    %92 = arith.maximumf %90, %91 : vector<16x20xf32>
    %93 = vector.shape_cast %92 : vector<16x20xf32> to vector<1x16x20xf32>
    %cst_41 = arith.constant 0.000000e+00 : f32
    %94 = vector.broadcast %cst_41 : f32 to vector<16x20xf32>
    %cst_42 = arith.constant 0.000000e+00 : f32
    %95 = vector.broadcast %cst_42 : f32 to vector<1x3x20xf32>
    %cst_43 = arith.constant 0.000000e+00 : f32
    %96 = vector.broadcast %cst_43 : f32 to vector<1x4x20xf32>
    %97 = tpu.concatenate %95, %93, %96 in 1 : vector<1x3x20xf32>, vector<1x16x20xf32>, vector<1x4x20xf32> -> vector<1x23x20xf32>
    %98 = vector.extract_strided_slice %97 {offsets = [0, 0, 0], sizes = [1, 16, 20], strides = [1, 1, 1]} : vector<1x23x20xf32> to vector<1x16x20xf32>
    %99 = vector.shape_cast %98 : vector<1x16x20xf32> to vector<16x20xf32>
    %100 = vector.extract_strided_slice %2 {offsets = [0, 0, 0], sizes = [1, 20, 20], strides = [1, 1, 1]} : vector<8x20x20xbf16> to vector<1x20x20xbf16>
    %101 = vector.shape_cast %100 : vector<1x20x20xbf16> to vector<20x20xbf16>
    %102 = arith.truncf %99 : vector<16x20xf32> to vector<16x20xbf16>
    %cst_44 = arith.constant dense<0.000000e+00> : vector<16x20xf32>
    %103 = tpu.matmul %102, %101, %cst_44 {dimension_numbers = #tpu.dot_dimension_numbers<[1], [0], [0], [1], [0, 0, 1, 1], [], []>} : vector<16x20xbf16>, vector<20x20xbf16>, vector<16x20xf32> -> vector<16x20xf32>
    %104 = arith.addf %94, %103 : vector<16x20xf32>
    %105 = vector.extract_strided_slice %97 {offsets = [0, 1, 0], sizes = [1, 16, 20], strides = [1, 1, 1]} : vector<1x23x20xf32> to vector<1x16x20xf32>
    %106 = vector.shape_cast %105 : vector<1x16x20xf32> to vector<16x20xf32>
    %107 = vector.extract_strided_slice %2 {offsets = [1, 0, 0], sizes = [1, 20, 20], strides = [1, 1, 1]} : vector<8x20x20xbf16> to vector<1x20x20xbf16>
    %108 = vector.shape_cast %107 : vector<1x20x20xbf16> to vector<20x20xbf16>
    %109 = arith.truncf %106 : vector<16x20xf32> to vector<16x20xbf16>
    %cst_45 = arith.constant dense<0.000000e+00> : vector<16x20xf32>
    %110 = tpu.matmul %109, %108, %cst_45 {dimension_numbers = #tpu.dot_dimension_numbers<[1], [0], [0], [1], [0, 0, 1, 1], [], []>} : vector<16x20xbf16>, vector<20x20xbf16>, vector<16x20xf32> -> vector<16x20xf32>
    %111 = arith.addf %104, %110 : vector<16x20xf32>
    %112 = vector.extract_strided_slice %97 {offsets = [0, 2, 0], sizes = [1, 16, 20], strides = [1, 1, 1]} : vector<1x23x20xf32> to vector<1x16x20xf32>
    %113 = vector.shape_cast %112 : vector<1x16x20xf32> to vector<16x20xf32>
    %114 = vector.extract_strided_slice %2 {offsets = [2, 0, 0], sizes = [1, 20, 20], strides = [1, 1, 1]} : vector<8x20x20xbf16> to vector<1x20x20xbf16>
    %115 = vector.shape_cast %114 : vector<1x20x20xbf16> to vector<20x20xbf16>
    %116 = arith.truncf %113 : vector<16x20xf32> to vector<16x20xbf16>
    %cst_46 = arith.constant dense<0.000000e+00> : vector<16x20xf32>
    %117 = tpu.matmul %116, %115, %cst_46 {dimension_numbers = #tpu.dot_dimension_numbers<[1], [0], [0], [1], [0, 0, 1, 1], [], []>} : vector<16x20xbf16>, vector<20x20xbf16>, vector<16x20xf32> -> vector<16x20xf32>
    %118 = arith.addf %111, %117 : vector<16x20xf32>
    %119 = vector.extract_strided_slice %97 {offsets = [0, 3, 0], sizes = [1, 16, 20], strides = [1, 1, 1]} : vector<1x23x20xf32> to vector<1x16x20xf32>
    %120 = vector.shape_cast %119 : vector<1x16x20xf32> to vector<16x20xf32>
    %121 = vector.extract_strided_slice %2 {offsets = [3, 0, 0], sizes = [1, 20, 20], strides = [1, 1, 1]} : vector<8x20x20xbf16> to vector<1x20x20xbf16>
    %122 = vector.shape_cast %121 : vector<1x20x20xbf16> to vector<20x20xbf16>
    %123 = arith.truncf %120 : vector<16x20xf32> to vector<16x20xbf16>
    %cst_47 = arith.constant dense<0.000000e+00> : vector<16x20xf32>
    %124 = tpu.matmul %123, %122, %cst_47 {dimension_numbers = #tpu.dot_dimension_numbers<[1], [0], [0], [1], [0, 0, 1, 1], [], []>} : vector<16x20xbf16>, vector<20x20xbf16>, vector<16x20xf32> -> vector<16x20xf32>
    %125 = arith.addf %118, %124 : vector<16x20xf32>
    %126 = vector.extract_strided_slice %97 {offsets = [0, 4, 0], sizes = [1, 16, 20], strides = [1, 1, 1]} : vector<1x23x20xf32> to vector<1x16x20xf32>
    %127 = vector.shape_cast %126 : vector<1x16x20xf32> to vector<16x20xf32>
    %128 = vector.extract_strided_slice %2 {offsets = [4, 0, 0], sizes = [1, 20, 20], strides = [1, 1, 1]} : vector<8x20x20xbf16> to vector<1x20x20xbf16>
    %129 = vector.shape_cast %128 : vector<1x20x20xbf16> to vector<20x20xbf16>
    %130 = arith.truncf %127 : vector<16x20xf32> to vector<16x20xbf16>
    %cst_48 = arith.constant dense<0.000000e+00> : vector<16x20xf32>
    %131 = tpu.matmul %130, %129, %cst_48 {dimension_numbers = #tpu.dot_dimension_numbers<[1], [0], [0], [1], [0, 0, 1, 1], [], []>} : vector<16x20xbf16>, vector<20x20xbf16>, vector<16x20xf32> -> vector<16x20xf32>
    %132 = arith.addf %125, %131 : vector<16x20xf32>
    %133 = vector.extract_strided_slice %97 {offsets = [0, 5, 0], sizes = [1, 16, 20], strides = [1, 1, 1]} : vector<1x23x20xf32> to vector<1x16x20xf32>
    %134 = vector.shape_cast %133 : vector<1x16x20xf32> to vector<16x20xf32>
    %135 = vector.extract_strided_slice %2 {offsets = [5, 0, 0], sizes = [1, 20, 20], strides = [1, 1, 1]} : vector<8x20x20xbf16> to vector<1x20x20xbf16>
    %136 = vector.shape_cast %135 : vector<1x20x20xbf16> to vector<20x20xbf16>
    %137 = arith.truncf %134 : vector<16x20xf32> to vector<16x20xbf16>
    %cst_49 = arith.constant dense<0.000000e+00> : vector<16x20xf32>
    %138 = tpu.matmul %137, %136, %cst_49 {dimension_numbers = #tpu.dot_dimension_numbers<[1], [0], [0], [1], [0, 0, 1, 1], [], []>} : vector<16x20xbf16>, vector<20x20xbf16>, vector<16x20xf32> -> vector<16x20xf32>
    %139 = arith.addf %132, %138 : vector<16x20xf32>
    %140 = vector.extract_strided_slice %97 {offsets = [0, 6, 0], sizes = [1, 16, 20], strides = [1, 1, 1]} : vector<1x23x20xf32> to vector<1x16x20xf32>
    %141 = vector.shape_cast %140 : vector<1x16x20xf32> to vector<16x20xf32>
    %142 = vector.extract_strided_slice %2 {offsets = [6, 0, 0], sizes = [1, 20, 20], strides = [1, 1, 1]} : vector<8x20x20xbf16> to vector<1x20x20xbf16>
    %143 = vector.shape_cast %142 : vector<1x20x20xbf16> to vector<20x20xbf16>
    %144 = arith.truncf %141 : vector<16x20xf32> to vector<16x20xbf16>
    %cst_50 = arith.constant dense<0.000000e+00> : vector<16x20xf32>
    %145 = tpu.matmul %144, %143, %cst_50 {dimension_numbers = #tpu.dot_dimension_numbers<[1], [0], [0], [1], [0, 0, 1, 1], [], []>} : vector<16x20xbf16>, vector<20x20xbf16>, vector<16x20xf32> -> vector<16x20xf32>
    %146 = arith.addf %139, %145 : vector<16x20xf32>
    %147 = vector.extract_strided_slice %97 {offsets = [0, 7, 0], sizes = [1, 16, 20], strides = [1, 1, 1]} : vector<1x23x20xf32> to vector<1x16x20xf32>
    %148 = vector.shape_cast %147 : vector<1x16x20xf32> to vector<16x20xf32>
    %149 = vector.extract_strided_slice %2 {offsets = [7, 0, 0], sizes = [1, 20, 20], strides = [1, 1, 1]} : vector<8x20x20xbf16> to vector<1x20x20xbf16>
    %150 = vector.shape_cast %149 : vector<1x20x20xbf16> to vector<20x20xbf16>
    %151 = arith.truncf %148 : vector<16x20xf32> to vector<16x20xbf16>
    %cst_51 = arith.constant dense<0.000000e+00> : vector<16x20xf32>
    %152 = tpu.matmul %151, %150, %cst_51 {dimension_numbers = #tpu.dot_dimension_numbers<[1], [0], [0], [1], [0, 0, 1, 1], [], []>} : vector<16x20xbf16>, vector<20x20xbf16>, vector<16x20xf32> -> vector<16x20xf32>
    %153 = arith.addf %146, %152 : vector<16x20xf32>
    %154 = vector.broadcast %3 : vector<1x20xf32> to vector<16x20xf32>
    %155 = arith.addf %153, %154 : vector<16x20xf32>
    %cst_52 = arith.constant 0.000000e+00 : f32
    %156 = vector.broadcast %cst_52 : f32 to vector<16x20xf32>
    %157 = arith.maximumf %155, %156 : vector<16x20xf32>
    %158 = vector.shape_cast %157 : vector<16x20xf32> to vector<1x16x20xf32>
    %159 = vector.shape_cast %158 : vector<1x16x20xf32> to vector<16x20xf32>
    %cst_53 = arith.constant dense<0.000000e+00> : vector<16x11xf32>
    %160 = tpu.matmul %159, %4, %cst_53 {dimension_numbers = #tpu.dot_dimension_numbers<[1], [0], [0], [1], [0, 0, 1, 1], [], []>} : vector<16x20xf32>, vector<20x11xf32>, vector<16x11xf32> -> vector<16x11xf32>
    %161 = vector.shape_cast %160 : vector<16x11xf32> to vector<1x16x11xf32>
    %cst_54 = arith.constant dense<0.000000e+00> : vector<1x11xf32>
    %162 = vector.multi_reduction <add>, %161, %cst_54 [1] : vector<1x16x11xf32> to vector<1x11xf32>
    %cst_55 = arith.constant 1.600000e+01 : f32
    %163 = vector.broadcast %cst_55 : f32 to vector<1x11xf32>
    %164 = arith.divf %162, %163 : vector<1x11xf32>
    %165 = arith.addf %164, %5 : vector<1x11xf32>
    %cst_56 = arith.constant dense<0.000000e+00> : vector<1x16xf32>
    %166 = tpu.matmul %165, %6, %cst_56 {dimension_numbers = #tpu.dot_dimension_numbers<[1], [0], [0], [1], [0, 0, 1, 1], [], []>} : vector<1x11xf32>, vector<11x16xf32>, vector<1x16xf32> -> vector<1x16xf32>
    %167 = arith.addf %166, %7 : vector<1x16xf32>
    %cst_57 = arith.constant 0.000000e+00 : f32
    %168 = vector.broadcast %cst_57 : f32 to vector<1x16xf32>
    %169 = arith.maximumf %167, %168 : vector<1x16xf32>
    %cst_58 = arith.constant dense<0.000000e+00> : vector<1x7xf32>
    %170 = tpu.matmul %169, %8, %cst_58 {dimension_numbers = #tpu.dot_dimension_numbers<[1], [0], [0], [1], [0, 0, 1, 1], [], []>} : vector<1x16xf32>, vector<16x7xf32>, vector<1x7xf32> -> vector<1x7xf32>
    %171 = arith.addf %170, %9 : vector<1x7xf32>
    %172 = vector.shape_cast %171 : vector<1x7xf32> to vector<1x1x7xf32>
    %cst_59 = arith.constant dense<0.000000e+00> : vector<1x16xf32>
    %173 = tpu.matmul %171, %10, %cst_59 {dimension_numbers = #tpu.dot_dimension_numbers<[1], [0], [0], [1], [0, 0, 1, 1], [], []>} : vector<1x7xf32>, vector<7x16xf32>, vector<1x16xf32> -> vector<1x16xf32>
    %174 = vector.extract_strided_slice %173 {offsets = [0, 0], sizes = [1, 8], strides = [1, 1]} : vector<1x16xf32> to vector<1x8xf32>
    %cst_60 = arith.constant dense<0.000000e+00> : vector<1x16xf32>
    %175 = tpu.matmul %174, %27, %cst_60 {dimension_numbers = #tpu.dot_dimension_numbers<[1], [0], [0], [1], [0, 0, 1, 1], [], []>} : vector<1x8xf32>, vector<8x16xf32>, vector<1x16xf32> -> vector<1x16xf32>
    %176 = vector.extract_strided_slice %173 {offsets = [0, 8], sizes = [1, 8], strides = [1, 1]} : vector<1x16xf32> to vector<1x8xf32>
    %cst_61 = arith.constant dense<0.000000e+00> : vector<1x16xf32>
    %177 = tpu.matmul %176, %27, %cst_61 {dimension_numbers = #tpu.dot_dimension_numbers<[1], [0], [0], [1], [0, 0, 1, 1], [], []>} : vector<1x8xf32>, vector<8x16xf32>, vector<1x16xf32> -> vector<1x16xf32>
    %178 = math.absf %175 : vector<1x16xf32>
    %cst_62 = arith.constant 1.000000e-07 : f32
    %179 = vector.broadcast %cst_62 : f32 to vector<1x16xf32>
    %180 = arith.cmpf olt, %178, %179 : vector<1x16xf32>
    %cst_63 = arith.constant 6.250000e-02 : f32
    %181 = vector.broadcast %cst_63 : f32 to vector<1x16xf32>
    %182 = arith.mulf %175, %181 : vector<1x16xf32>
    %183 = math.exp %182 : vector<1x16xf32>
    %cst_64 = arith.constant 5.000000e-01 : f32
    %184 = vector.broadcast %cst_64 : f32 to vector<1x16xf32>
    %185 = arith.mulf %184, %175 : vector<1x16xf32>
    %cst_65 = arith.constant 6.250000e-02 : f32
    %186 = vector.broadcast %cst_65 : f32 to vector<1x16xf32>
    %187 = arith.mulf %185, %186 : vector<1x16xf32>
    %cst_66 = arith.constant 1.000000e+00 : f32
    %188 = vector.broadcast %cst_66 : f32 to vector<1x16xf32>
    %189 = arith.addf %188, %187 : vector<1x16xf32>
    %cst_67 = arith.constant 6.250000e-02 : f32
    %190 = vector.broadcast %cst_67 : f32 to vector<1x16xf32>
    %191 = arith.mulf %190, %189 : vector<1x16xf32>
    %cst_68 = arith.constant 1.000000e+00 : f32
    %192 = vector.broadcast %cst_68 : f32 to vector<1x16xf32>
    %193 = arith.subf %183, %192 : vector<1x16xf32>
    %cst_69 = arith.constant 1.000000e+00 : f32
    %194 = vector.broadcast %cst_69 : f32 to vector<1x16xf32>
    %195 = arith.select %180, %194, %175 : vector<1x16xi1>, vector<1x16xf32>
    %196 = arith.divf %193, %195 : vector<1x16xf32>
    %197 = arith.select %180, %191, %196 : vector<1x16xi1>, vector<1x16xf32>
    %198 = arith.mulf %14, %183 : vector<1x16xf32>
    %199 = arith.mulf %177, %197 : vector<1x16xf32>
    %200 = arith.addf %198, %199 : vector<1x16xf32>
    %cst_70 = arith.constant 0.000000e+00 : f32
    %cst_71 = arith.constant 1.000000e+00 : f32
    %201 = vector.broadcast %cst_70 : f32 to vector<1x16xf32>
    %202 = arith.maximumf %201, %200 : vector<1x16xf32>
    %203 = vector.broadcast %cst_71 : f32 to vector<1x16xf32>
    %204 = arith.minimumf %203, %202 : vector<1x16xf32>
    %cst_72 = arith.constant 1.500000e+01 : f32
    %205 = vector.broadcast %cst_72 : f32 to vector<1x16xf32>
    %206 = arith.mulf %204, %205 : vector<1x16xf32>
    %207 = math.floor %206 : vector<1x16xf32>
    %cst_73 = arith.constant 0.000000e+00 : f32
    %cst_74 = arith.constant 1.400000e+01 : f32
    %208 = vector.broadcast %cst_73 : f32 to vector<1x16xf32>
    %209 = arith.maximumf %208, %207 : vector<1x16xf32>
    %210 = vector.broadcast %cst_74 : f32 to vector<1x16xf32>
    %211 = arith.minimumf %210, %209 : vector<1x16xf32>
    %212 = arith.fptosi %211 : vector<1x16xf32> to vector<1x16xi32>
    %213 = arith.sitofp %212 : vector<1x16xi32> to vector<1x16xf32>
    %214 = arith.subf %206, %213 : vector<1x16xf32>
    %cst_75 = arith.constant 0.000000e+00 : f32
    %215 = vector.broadcast %cst_75 : f32 to vector<1x16xf32>
    %cst_76 = arith.constant 0.000000e+00 : f32
    %216 = vector.broadcast %cst_76 : f32 to vector<1x16xf32>
    %c0_i32 = arith.constant 0 : i32
    %217 = vector.broadcast %c0_i32 : i32 to vector<1x16xi32>
    %218 = arith.cmpi eq, %212, %217 : vector<1x16xi32>
    %219 = vector.extract_strided_slice %200 {offsets = [0, 0], sizes = [1, 1], strides = [1, 1]} : vector<1x16xf32> to vector<1x1xf32>
    %220 = vector.shape_cast %219 : vector<1x1xf32> to vector<1x1xf32>
    %221 = vector.broadcast %220 : vector<1x1xf32> to vector<1x16xf32>
    %222 = arith.select %218, %221, %215 : vector<1x16xi1>, vector<1x16xf32>
    %223 = vector.extract_strided_slice %200 {offsets = [0, 1], sizes = [1, 1], strides = [1, 1]} : vector<1x16xf32> to vector<1x1xf32>
    %224 = vector.shape_cast %223 : vector<1x1xf32> to vector<1x1xf32>
    %225 = vector.broadcast %224 : vector<1x1xf32> to vector<1x16xf32>
    %226 = arith.select %218, %225, %216 : vector<1x16xi1>, vector<1x16xf32>
    %c1_i32 = arith.constant 1 : i32
    %227 = vector.broadcast %c1_i32 : i32 to vector<1x16xi32>
    %228 = arith.cmpi eq, %212, %227 : vector<1x16xi32>
    %229 = vector.extract_strided_slice %200 {offsets = [0, 1], sizes = [1, 1], strides = [1, 1]} : vector<1x16xf32> to vector<1x1xf32>
    %230 = vector.shape_cast %229 : vector<1x1xf32> to vector<1x1xf32>
    %231 = vector.broadcast %230 : vector<1x1xf32> to vector<1x16xf32>
    %232 = arith.select %228, %231, %222 : vector<1x16xi1>, vector<1x16xf32>
    %233 = vector.extract_strided_slice %200 {offsets = [0, 2], sizes = [1, 1], strides = [1, 1]} : vector<1x16xf32> to vector<1x1xf32>
    %234 = vector.shape_cast %233 : vector<1x1xf32> to vector<1x1xf32>
    %235 = vector.broadcast %234 : vector<1x1xf32> to vector<1x16xf32>
    %236 = arith.select %228, %235, %226 : vector<1x16xi1>, vector<1x16xf32>
    %c2_i32 = arith.constant 2 : i32
    %237 = vector.broadcast %c2_i32 : i32 to vector<1x16xi32>
    %238 = arith.cmpi eq, %212, %237 : vector<1x16xi32>
    %239 = vector.extract_strided_slice %200 {offsets = [0, 2], sizes = [1, 1], strides = [1, 1]} : vector<1x16xf32> to vector<1x1xf32>
    %240 = vector.shape_cast %239 : vector<1x1xf32> to vector<1x1xf32>
    %241 = vector.broadcast %240 : vector<1x1xf32> to vector<1x16xf32>
    %242 = arith.select %238, %241, %232 : vector<1x16xi1>, vector<1x16xf32>
    %243 = vector.extract_strided_slice %200 {offsets = [0, 3], sizes = [1, 1], strides = [1, 1]} : vector<1x16xf32> to vector<1x1xf32>
    %244 = vector.shape_cast %243 : vector<1x1xf32> to vector<1x1xf32>
    %245 = vector.broadcast %244 : vector<1x1xf32> to vector<1x16xf32>
    %246 = arith.select %238, %245, %236 : vector<1x16xi1>, vector<1x16xf32>
    %c3_i32 = arith.constant 3 : i32
    %247 = vector.broadcast %c3_i32 : i32 to vector<1x16xi32>
    %248 = arith.cmpi eq, %212, %247 : vector<1x16xi32>
    %249 = vector.extract_strided_slice %200 {offsets = [0, 3], sizes = [1, 1], strides = [1, 1]} : vector<1x16xf32> to vector<1x1xf32>
    %250 = vector.shape_cast %249 : vector<1x1xf32> to vector<1x1xf32>
    %251 = vector.broadcast %250 : vector<1x1xf32> to vector<1x16xf32>
    %252 = arith.select %248, %251, %242 : vector<1x16xi1>, vector<1x16xf32>
    %253 = vector.extract_strided_slice %200 {offsets = [0, 4], sizes = [1, 1], strides = [1, 1]} : vector<1x16xf32> to vector<1x1xf32>
    %254 = vector.shape_cast %253 : vector<1x1xf32> to vector<1x1xf32>
    %255 = vector.broadcast %254 : vector<1x1xf32> to vector<1x16xf32>
    %256 = arith.select %248, %255, %246 : vector<1x16xi1>, vector<1x16xf32>
    %c4_i32 = arith.constant 4 : i32
    %257 = vector.broadcast %c4_i32 : i32 to vector<1x16xi32>
    %258 = arith.cmpi eq, %212, %257 : vector<1x16xi32>
    %259 = vector.extract_strided_slice %200 {offsets = [0, 4], sizes = [1, 1], strides = [1, 1]} : vector<1x16xf32> to vector<1x1xf32>
    %260 = vector.shape_cast %259 : vector<1x1xf32> to vector<1x1xf32>
    %261 = vector.broadcast %260 : vector<1x1xf32> to vector<1x16xf32>
    %262 = arith.select %258, %261, %252 : vector<1x16xi1>, vector<1x16xf32>
    %263 = vector.extract_strided_slice %200 {offsets = [0, 5], sizes = [1, 1], strides = [1, 1]} : vector<1x16xf32> to vector<1x1xf32>
    %264 = vector.shape_cast %263 : vector<1x1xf32> to vector<1x1xf32>
    %265 = vector.broadcast %264 : vector<1x1xf32> to vector<1x16xf32>
    %266 = arith.select %258, %265, %256 : vector<1x16xi1>, vector<1x16xf32>
    %c5_i32 = arith.constant 5 : i32
    %267 = vector.broadcast %c5_i32 : i32 to vector<1x16xi32>
    %268 = arith.cmpi eq, %212, %267 : vector<1x16xi32>
    %269 = vector.extract_strided_slice %200 {offsets = [0, 5], sizes = [1, 1], strides = [1, 1]} : vector<1x16xf32> to vector<1x1xf32>
    %270 = vector.shape_cast %269 : vector<1x1xf32> to vector<1x1xf32>
    %271 = vector.broadcast %270 : vector<1x1xf32> to vector<1x16xf32>
    %272 = arith.select %268, %271, %262 : vector<1x16xi1>, vector<1x16xf32>
    %273 = vector.extract_strided_slice %200 {offsets = [0, 6], sizes = [1, 1], strides = [1, 1]} : vector<1x16xf32> to vector<1x1xf32>
    %274 = vector.shape_cast %273 : vector<1x1xf32> to vector<1x1xf32>
    %275 = vector.broadcast %274 : vector<1x1xf32> to vector<1x16xf32>
    %276 = arith.select %268, %275, %266 : vector<1x16xi1>, vector<1x16xf32>
    %c6_i32 = arith.constant 6 : i32
    %277 = vector.broadcast %c6_i32 : i32 to vector<1x16xi32>
    %278 = arith.cmpi eq, %212, %277 : vector<1x16xi32>
    %279 = vector.extract_strided_slice %200 {offsets = [0, 6], sizes = [1, 1], strides = [1, 1]} : vector<1x16xf32> to vector<1x1xf32>
    %280 = vector.shape_cast %279 : vector<1x1xf32> to vector<1x1xf32>
    %281 = vector.broadcast %280 : vector<1x1xf32> to vector<1x16xf32>
    %282 = arith.select %278, %281, %272 : vector<1x16xi1>, vector<1x16xf32>
    %283 = vector.extract_strided_slice %200 {offsets = [0, 7], sizes = [1, 1], strides = [1, 1]} : vector<1x16xf32> to vector<1x1xf32>
    %284 = vector.shape_cast %283 : vector<1x1xf32> to vector<1x1xf32>
    %285 = vector.broadcast %284 : vector<1x1xf32> to vector<1x16xf32>
    %286 = arith.select %278, %285, %276 : vector<1x16xi1>, vector<1x16xf32>
    %c7_i32 = arith.constant 7 : i32
    %287 = vector.broadcast %c7_i32 : i32 to vector<1x16xi32>
    %288 = arith.cmpi eq, %212, %287 : vector<1x16xi32>
    %289 = vector.extract_strided_slice %200 {offsets = [0, 7], sizes = [1, 1], strides = [1, 1]} : vector<1x16xf32> to vector<1x1xf32>
    %290 = vector.shape_cast %289 : vector<1x1xf32> to vector<1x1xf32>
    %291 = vector.broadcast %290 : vector<1x1xf32> to vector<1x16xf32>
    %292 = arith.select %288, %291, %282 : vector<1x16xi1>, vector<1x16xf32>
    %293 = vector.extract_strided_slice %200 {offsets = [0, 8], sizes = [1, 1], strides = [1, 1]} : vector<1x16xf32> to vector<1x1xf32>
    %294 = vector.shape_cast %293 : vector<1x1xf32> to vector<1x1xf32>
    %295 = vector.broadcast %294 : vector<1x1xf32> to vector<1x16xf32>
    %296 = arith.select %288, %295, %286 : vector<1x16xi1>, vector<1x16xf32>
    %c8_i32 = arith.constant 8 : i32
    %297 = vector.broadcast %c8_i32 : i32 to vector<1x16xi32>
    %298 = arith.cmpi eq, %212, %297 : vector<1x16xi32>
    %299 = vector.extract_strided_slice %200 {offsets = [0, 8], sizes = [1, 1], strides = [1, 1]} : vector<1x16xf32> to vector<1x1xf32>
    %300 = vector.shape_cast %299 : vector<1x1xf32> to vector<1x1xf32>
    %301 = vector.broadcast %300 : vector<1x1xf32> to vector<1x16xf32>
    %302 = arith.select %298, %301, %292 : vector<1x16xi1>, vector<1x16xf32>
    %303 = vector.extract_strided_slice %200 {offsets = [0, 9], sizes = [1, 1], strides = [1, 1]} : vector<1x16xf32> to vector<1x1xf32>
    %304 = vector.shape_cast %303 : vector<1x1xf32> to vector<1x1xf32>
    %305 = vector.broadcast %304 : vector<1x1xf32> to vector<1x16xf32>
    %306 = arith.select %298, %305, %296 : vector<1x16xi1>, vector<1x16xf32>
    %c9_i32 = arith.constant 9 : i32
    %307 = vector.broadcast %c9_i32 : i32 to vector<1x16xi32>
    %308 = arith.cmpi eq, %212, %307 : vector<1x16xi32>
    %309 = vector.extract_strided_slice %200 {offsets = [0, 9], sizes = [1, 1], strides = [1, 1]} : vector<1x16xf32> to vector<1x1xf32>
    %310 = vector.shape_cast %309 : vector<1x1xf32> to vector<1x1xf32>
    %311 = vector.broadcast %310 : vector<1x1xf32> to vector<1x16xf32>
    %312 = arith.select %308, %311, %302 : vector<1x16xi1>, vector<1x16xf32>
    %313 = vector.extract_strided_slice %200 {offsets = [0, 10], sizes = [1, 1], strides = [1, 1]} : vector<1x16xf32> to vector<1x1xf32>
    %314 = vector.shape_cast %313 : vector<1x1xf32> to vector<1x1xf32>
    %315 = vector.broadcast %314 : vector<1x1xf32> to vector<1x16xf32>
    %316 = arith.select %308, %315, %306 : vector<1x16xi1>, vector<1x16xf32>
    %c10_i32 = arith.constant 10 : i32
    %317 = vector.broadcast %c10_i32 : i32 to vector<1x16xi32>
    %318 = arith.cmpi eq, %212, %317 : vector<1x16xi32>
    %319 = vector.extract_strided_slice %200 {offsets = [0, 10], sizes = [1, 1], strides = [1, 1]} : vector<1x16xf32> to vector<1x1xf32>
    %320 = vector.shape_cast %319 : vector<1x1xf32> to vector<1x1xf32>
    %321 = vector.broadcast %320 : vector<1x1xf32> to vector<1x16xf32>
    %322 = arith.select %318, %321, %312 : vector<1x16xi1>, vector<1x16xf32>
    %323 = vector.extract_strided_slice %200 {offsets = [0, 11], sizes = [1, 1], strides = [1, 1]} : vector<1x16xf32> to vector<1x1xf32>
    %324 = vector.shape_cast %323 : vector<1x1xf32> to vector<1x1xf32>
    %325 = vector.broadcast %324 : vector<1x1xf32> to vector<1x16xf32>
    %326 = arith.select %318, %325, %316 : vector<1x16xi1>, vector<1x16xf32>
    %c11_i32 = arith.constant 11 : i32
    %327 = vector.broadcast %c11_i32 : i32 to vector<1x16xi32>
    %328 = arith.cmpi eq, %212, %327 : vector<1x16xi32>
    %329 = vector.extract_strided_slice %200 {offsets = [0, 11], sizes = [1, 1], strides = [1, 1]} : vector<1x16xf32> to vector<1x1xf32>
    %330 = vector.shape_cast %329 : vector<1x1xf32> to vector<1x1xf32>
    %331 = vector.broadcast %330 : vector<1x1xf32> to vector<1x16xf32>
    %332 = arith.select %328, %331, %322 : vector<1x16xi1>, vector<1x16xf32>
    %333 = vector.extract_strided_slice %200 {offsets = [0, 12], sizes = [1, 1], strides = [1, 1]} : vector<1x16xf32> to vector<1x1xf32>
    %334 = vector.shape_cast %333 : vector<1x1xf32> to vector<1x1xf32>
    %335 = vector.broadcast %334 : vector<1x1xf32> to vector<1x16xf32>
    %336 = arith.select %328, %335, %326 : vector<1x16xi1>, vector<1x16xf32>
    %c12_i32 = arith.constant 12 : i32
    %337 = vector.broadcast %c12_i32 : i32 to vector<1x16xi32>
    %338 = arith.cmpi eq, %212, %337 : vector<1x16xi32>
    %339 = vector.extract_strided_slice %200 {offsets = [0, 12], sizes = [1, 1], strides = [1, 1]} : vector<1x16xf32> to vector<1x1xf32>
    %340 = vector.shape_cast %339 : vector<1x1xf32> to vector<1x1xf32>
    %341 = vector.broadcast %340 : vector<1x1xf32> to vector<1x16xf32>
    %342 = arith.select %338, %341, %332 : vector<1x16xi1>, vector<1x16xf32>
    %343 = vector.extract_strided_slice %200 {offsets = [0, 13], sizes = [1, 1], strides = [1, 1]} : vector<1x16xf32> to vector<1x1xf32>
    %344 = vector.shape_cast %343 : vector<1x1xf32> to vector<1x1xf32>
    %345 = vector.broadcast %344 : vector<1x1xf32> to vector<1x16xf32>
    %346 = arith.select %338, %345, %336 : vector<1x16xi1>, vector<1x16xf32>
    %c13_i32 = arith.constant 13 : i32
    %347 = vector.broadcast %c13_i32 : i32 to vector<1x16xi32>
    %348 = arith.cmpi eq, %212, %347 : vector<1x16xi32>
    %349 = vector.extract_strided_slice %200 {offsets = [0, 13], sizes = [1, 1], strides = [1, 1]} : vector<1x16xf32> to vector<1x1xf32>
    %350 = vector.shape_cast %349 : vector<1x1xf32> to vector<1x1xf32>
    %351 = vector.broadcast %350 : vector<1x1xf32> to vector<1x16xf32>
    %352 = arith.select %348, %351, %342 : vector<1x16xi1>, vector<1x16xf32>
    %353 = vector.extract_strided_slice %200 {offsets = [0, 14], sizes = [1, 1], strides = [1, 1]} : vector<1x16xf32> to vector<1x1xf32>
    %354 = vector.shape_cast %353 : vector<1x1xf32> to vector<1x1xf32>
    %355 = vector.broadcast %354 : vector<1x1xf32> to vector<1x16xf32>
    %356 = arith.select %348, %355, %346 : vector<1x16xi1>, vector<1x16xf32>
    %c14_i32 = arith.constant 14 : i32
    %357 = vector.broadcast %c14_i32 : i32 to vector<1x16xi32>
    %358 = arith.cmpi eq, %212, %357 : vector<1x16xi32>
    %359 = vector.extract_strided_slice %200 {offsets = [0, 14], sizes = [1, 1], strides = [1, 1]} : vector<1x16xf32> to vector<1x1xf32>
    %360 = vector.shape_cast %359 : vector<1x1xf32> to vector<1x1xf32>
    %361 = vector.broadcast %360 : vector<1x1xf32> to vector<1x16xf32>
    %362 = arith.select %358, %361, %352 : vector<1x16xi1>, vector<1x16xf32>
    %363 = vector.extract_strided_slice %200 {offsets = [0, 15], sizes = [1, 1], strides = [1, 1]} : vector<1x16xf32> to vector<1x1xf32>
    %364 = vector.shape_cast %363 : vector<1x1xf32> to vector<1x1xf32>
    %365 = vector.broadcast %364 : vector<1x1xf32> to vector<1x16xf32>
    %366 = arith.select %358, %365, %356 : vector<1x16xi1>, vector<1x16xf32>
    %cst_77 = arith.constant 1.000000e+00 : f32
    %367 = vector.broadcast %cst_77 : f32 to vector<1x16xf32>
    %368 = arith.subf %367, %214 : vector<1x16xf32>
    %369 = arith.mulf %362, %368 : vector<1x16xf32>
    %370 = arith.mulf %366, %214 : vector<1x16xf32>
    %371 = arith.addf %369, %370 : vector<1x16xf32>
    %cst_78 = arith.constant 0.000000e+00 : f32
    %cst_79 = arith.constant 1.000000e+00 : f32
    %372 = vector.broadcast %cst_78 : f32 to vector<1x16xf32>
    %373 = arith.maximumf %372, %371 : vector<1x16xf32>
    %374 = vector.broadcast %cst_79 : f32 to vector<1x16xf32>
    %375 = arith.minimumf %374, %373 : vector<1x16xf32>
    %cst_80 = arith.constant 1.500000e+01 : f32
    %376 = vector.broadcast %cst_80 : f32 to vector<1x16xf32>
    %377 = arith.mulf %375, %376 : vector<1x16xf32>
    %378 = math.floor %377 : vector<1x16xf32>
    %cst_81 = arith.constant 0.000000e+00 : f32
    %cst_82 = arith.constant 1.400000e+01 : f32
    %379 = vector.broadcast %cst_81 : f32 to vector<1x16xf32>
    %380 = arith.maximumf %379, %378 : vector<1x16xf32>
    %381 = vector.broadcast %cst_82 : f32 to vector<1x16xf32>
    %382 = arith.minimumf %381, %380 : vector<1x16xf32>
    %383 = arith.fptosi %382 : vector<1x16xf32> to vector<1x16xi32>
    %384 = arith.sitofp %383 : vector<1x16xi32> to vector<1x16xf32>
    %385 = arith.subf %377, %384 : vector<1x16xf32>
    %cst_83 = arith.constant 0.000000e+00 : f32
    %386 = vector.broadcast %cst_83 : f32 to vector<1x16xf32>
    %cst_84 = arith.constant 0.000000e+00 : f32
    %387 = vector.broadcast %cst_84 : f32 to vector<1x16xf32>
    %c0_i32_85 = arith.constant 0 : i32
    %388 = vector.broadcast %c0_i32_85 : i32 to vector<1x16xi32>
    %389 = arith.cmpi eq, %383, %388 : vector<1x16xi32>
    %390 = vector.extract_strided_slice %371 {offsets = [0, 0], sizes = [1, 1], strides = [1, 1]} : vector<1x16xf32> to vector<1x1xf32>
    %391 = vector.shape_cast %390 : vector<1x1xf32> to vector<1x1xf32>
    %392 = vector.broadcast %391 : vector<1x1xf32> to vector<1x16xf32>
    %393 = arith.select %389, %392, %386 : vector<1x16xi1>, vector<1x16xf32>
    %394 = vector.extract_strided_slice %371 {offsets = [0, 1], sizes = [1, 1], strides = [1, 1]} : vector<1x16xf32> to vector<1x1xf32>
    %395 = vector.shape_cast %394 : vector<1x1xf32> to vector<1x1xf32>
    %396 = vector.broadcast %395 : vector<1x1xf32> to vector<1x16xf32>
    %397 = arith.select %389, %396, %387 : vector<1x16xi1>, vector<1x16xf32>
    %c1_i32_86 = arith.constant 1 : i32
    %398 = vector.broadcast %c1_i32_86 : i32 to vector<1x16xi32>
    %399 = arith.cmpi eq, %383, %398 : vector<1x16xi32>
    %400 = vector.extract_strided_slice %371 {offsets = [0, 1], sizes = [1, 1], strides = [1, 1]} : vector<1x16xf32> to vector<1x1xf32>
    %401 = vector.shape_cast %400 : vector<1x1xf32> to vector<1x1xf32>
    %402 = vector.broadcast %401 : vector<1x1xf32> to vector<1x16xf32>
    %403 = arith.select %399, %402, %393 : vector<1x16xi1>, vector<1x16xf32>
    %404 = vector.extract_strided_slice %371 {offsets = [0, 2], sizes = [1, 1], strides = [1, 1]} : vector<1x16xf32> to vector<1x1xf32>
    %405 = vector.shape_cast %404 : vector<1x1xf32> to vector<1x1xf32>
    %406 = vector.broadcast %405 : vector<1x1xf32> to vector<1x16xf32>
    %407 = arith.select %399, %406, %397 : vector<1x16xi1>, vector<1x16xf32>
    %c2_i32_87 = arith.constant 2 : i32
    %408 = vector.broadcast %c2_i32_87 : i32 to vector<1x16xi32>
    %409 = arith.cmpi eq, %383, %408 : vector<1x16xi32>
    %410 = vector.extract_strided_slice %371 {offsets = [0, 2], sizes = [1, 1], strides = [1, 1]} : vector<1x16xf32> to vector<1x1xf32>
    %411 = vector.shape_cast %410 : vector<1x1xf32> to vector<1x1xf32>
    %412 = vector.broadcast %411 : vector<1x1xf32> to vector<1x16xf32>
    %413 = arith.select %409, %412, %403 : vector<1x16xi1>, vector<1x16xf32>
    %414 = vector.extract_strided_slice %371 {offsets = [0, 3], sizes = [1, 1], strides = [1, 1]} : vector<1x16xf32> to vector<1x1xf32>
    %415 = vector.shape_cast %414 : vector<1x1xf32> to vector<1x1xf32>
    %416 = vector.broadcast %415 : vector<1x1xf32> to vector<1x16xf32>
    %417 = arith.select %409, %416, %407 : vector<1x16xi1>, vector<1x16xf32>
    %c3_i32_88 = arith.constant 3 : i32
    %418 = vector.broadcast %c3_i32_88 : i32 to vector<1x16xi32>
    %419 = arith.cmpi eq, %383, %418 : vector<1x16xi32>
    %420 = vector.extract_strided_slice %371 {offsets = [0, 3], sizes = [1, 1], strides = [1, 1]} : vector<1x16xf32> to vector<1x1xf32>
    %421 = vector.shape_cast %420 : vector<1x1xf32> to vector<1x1xf32>
    %422 = vector.broadcast %421 : vector<1x1xf32> to vector<1x16xf32>
    %423 = arith.select %419, %422, %413 : vector<1x16xi1>, vector<1x16xf32>
    %424 = vector.extract_strided_slice %371 {offsets = [0, 4], sizes = [1, 1], strides = [1, 1]} : vector<1x16xf32> to vector<1x1xf32>
    %425 = vector.shape_cast %424 : vector<1x1xf32> to vector<1x1xf32>
    %426 = vector.broadcast %425 : vector<1x1xf32> to vector<1x16xf32>
    %427 = arith.select %419, %426, %417 : vector<1x16xi1>, vector<1x16xf32>
    %c4_i32_89 = arith.constant 4 : i32
    %428 = vector.broadcast %c4_i32_89 : i32 to vector<1x16xi32>
    %429 = arith.cmpi eq, %383, %428 : vector<1x16xi32>
    %430 = vector.extract_strided_slice %371 {offsets = [0, 4], sizes = [1, 1], strides = [1, 1]} : vector<1x16xf32> to vector<1x1xf32>
    %431 = vector.shape_cast %430 : vector<1x1xf32> to vector<1x1xf32>
    %432 = vector.broadcast %431 : vector<1x1xf32> to vector<1x16xf32>
    %433 = arith.select %429, %432, %423 : vector<1x16xi1>, vector<1x16xf32>
    %434 = vector.extract_strided_slice %371 {offsets = [0, 5], sizes = [1, 1], strides = [1, 1]} : vector<1x16xf32> to vector<1x1xf32>
    %435 = vector.shape_cast %434 : vector<1x1xf32> to vector<1x1xf32>
    %436 = vector.broadcast %435 : vector<1x1xf32> to vector<1x16xf32>
    %437 = arith.select %429, %436, %427 : vector<1x16xi1>, vector<1x16xf32>
    %c5_i32_90 = arith.constant 5 : i32
    %438 = vector.broadcast %c5_i32_90 : i32 to vector<1x16xi32>
    %439 = arith.cmpi eq, %383, %438 : vector<1x16xi32>
    %440 = vector.extract_strided_slice %371 {offsets = [0, 5], sizes = [1, 1], strides = [1, 1]} : vector<1x16xf32> to vector<1x1xf32>
    %441 = vector.shape_cast %440 : vector<1x1xf32> to vector<1x1xf32>
    %442 = vector.broadcast %441 : vector<1x1xf32> to vector<1x16xf32>
    %443 = arith.select %439, %442, %433 : vector<1x16xi1>, vector<1x16xf32>
    %444 = vector.extract_strided_slice %371 {offsets = [0, 6], sizes = [1, 1], strides = [1, 1]} : vector<1x16xf32> to vector<1x1xf32>
    %445 = vector.shape_cast %444 : vector<1x1xf32> to vector<1x1xf32>
    %446 = vector.broadcast %445 : vector<1x1xf32> to vector<1x16xf32>
    %447 = arith.select %439, %446, %437 : vector<1x16xi1>, vector<1x16xf32>
    %c6_i32_91 = arith.constant 6 : i32
    %448 = vector.broadcast %c6_i32_91 : i32 to vector<1x16xi32>
    %449 = arith.cmpi eq, %383, %448 : vector<1x16xi32>
    %450 = vector.extract_strided_slice %371 {offsets = [0, 6], sizes = [1, 1], strides = [1, 1]} : vector<1x16xf32> to vector<1x1xf32>
    %451 = vector.shape_cast %450 : vector<1x1xf32> to vector<1x1xf32>
    %452 = vector.broadcast %451 : vector<1x1xf32> to vector<1x16xf32>
    %453 = arith.select %449, %452, %443 : vector<1x16xi1>, vector<1x16xf32>
    %454 = vector.extract_strided_slice %371 {offsets = [0, 7], sizes = [1, 1], strides = [1, 1]} : vector<1x16xf32> to vector<1x1xf32>
    %455 = vector.shape_cast %454 : vector<1x1xf32> to vector<1x1xf32>
    %456 = vector.broadcast %455 : vector<1x1xf32> to vector<1x16xf32>
    %457 = arith.select %449, %456, %447 : vector<1x16xi1>, vector<1x16xf32>
    %c7_i32_92 = arith.constant 7 : i32
    %458 = vector.broadcast %c7_i32_92 : i32 to vector<1x16xi32>
    %459 = arith.cmpi eq, %383, %458 : vector<1x16xi32>
    %460 = vector.extract_strided_slice %371 {offsets = [0, 7], sizes = [1, 1], strides = [1, 1]} : vector<1x16xf32> to vector<1x1xf32>
    %461 = vector.shape_cast %460 : vector<1x1xf32> to vector<1x1xf32>
    %462 = vector.broadcast %461 : vector<1x1xf32> to vector<1x16xf32>
    %463 = arith.select %459, %462, %453 : vector<1x16xi1>, vector<1x16xf32>
    %464 = vector.extract_strided_slice %371 {offsets = [0, 8], sizes = [1, 1], strides = [1, 1]} : vector<1x16xf32> to vector<1x1xf32>
    %465 = vector.shape_cast %464 : vector<1x1xf32> to vector<1x1xf32>
    %466 = vector.broadcast %465 : vector<1x1xf32> to vector<1x16xf32>
    %467 = arith.select %459, %466, %457 : vector<1x16xi1>, vector<1x16xf32>
    %c8_i32_93 = arith.constant 8 : i32
    %468 = vector.broadcast %c8_i32_93 : i32 to vector<1x16xi32>
    %469 = arith.cmpi eq, %383, %468 : vector<1x16xi32>
    %470 = vector.extract_strided_slice %371 {offsets = [0, 8], sizes = [1, 1], strides = [1, 1]} : vector<1x16xf32> to vector<1x1xf32>
    %471 = vector.shape_cast %470 : vector<1x1xf32> to vector<1x1xf32>
    %472 = vector.broadcast %471 : vector<1x1xf32> to vector<1x16xf32>
    %473 = arith.select %469, %472, %463 : vector<1x16xi1>, vector<1x16xf32>
    %474 = vector.extract_strided_slice %371 {offsets = [0, 9], sizes = [1, 1], strides = [1, 1]} : vector<1x16xf32> to vector<1x1xf32>
    %475 = vector.shape_cast %474 : vector<1x1xf32> to vector<1x1xf32>
    %476 = vector.broadcast %475 : vector<1x1xf32> to vector<1x16xf32>
    %477 = arith.select %469, %476, %467 : vector<1x16xi1>, vector<1x16xf32>
    %c9_i32_94 = arith.constant 9 : i32
    %478 = vector.broadcast %c9_i32_94 : i32 to vector<1x16xi32>
    %479 = arith.cmpi eq, %383, %478 : vector<1x16xi32>
    %480 = vector.extract_strided_slice %371 {offsets = [0, 9], sizes = [1, 1], strides = [1, 1]} : vector<1x16xf32> to vector<1x1xf32>
    %481 = vector.shape_cast %480 : vector<1x1xf32> to vector<1x1xf32>
    %482 = vector.broadcast %481 : vector<1x1xf32> to vector<1x16xf32>
    %483 = arith.select %479, %482, %473 : vector<1x16xi1>, vector<1x16xf32>
    %484 = vector.extract_strided_slice %371 {offsets = [0, 10], sizes = [1, 1], strides = [1, 1]} : vector<1x16xf32> to vector<1x1xf32>
    %485 = vector.shape_cast %484 : vector<1x1xf32> to vector<1x1xf32>
    %486 = vector.broadcast %485 : vector<1x1xf32> to vector<1x16xf32>
    %487 = arith.select %479, %486, %477 : vector<1x16xi1>, vector<1x16xf32>
    %c10_i32_95 = arith.constant 10 : i32
    %488 = vector.broadcast %c10_i32_95 : i32 to vector<1x16xi32>
    %489 = arith.cmpi eq, %383, %488 : vector<1x16xi32>
    %490 = vector.extract_strided_slice %371 {offsets = [0, 10], sizes = [1, 1], strides = [1, 1]} : vector<1x16xf32> to vector<1x1xf32>
    %491 = vector.shape_cast %490 : vector<1x1xf32> to vector<1x1xf32>
    %492 = vector.broadcast %491 : vector<1x1xf32> to vector<1x16xf32>
    %493 = arith.select %489, %492, %483 : vector<1x16xi1>, vector<1x16xf32>
    %494 = vector.extract_strided_slice %371 {offsets = [0, 11], sizes = [1, 1], strides = [1, 1]} : vector<1x16xf32> to vector<1x1xf32>
    %495 = vector.shape_cast %494 : vector<1x1xf32> to vector<1x1xf32>
    %496 = vector.broadcast %495 : vector<1x1xf32> to vector<1x16xf32>
    %497 = arith.select %489, %496, %487 : vector<1x16xi1>, vector<1x16xf32>
    %c11_i32_96 = arith.constant 11 : i32
    %498 = vector.broadcast %c11_i32_96 : i32 to vector<1x16xi32>
    %499 = arith.cmpi eq, %383, %498 : vector<1x16xi32>
    %500 = vector.extract_strided_slice %371 {offsets = [0, 11], sizes = [1, 1], strides = [1, 1]} : vector<1x16xf32> to vector<1x1xf32>
    %501 = vector.shape_cast %500 : vector<1x1xf32> to vector<1x1xf32>
    %502 = vector.broadcast %501 : vector<1x1xf32> to vector<1x16xf32>
    %503 = arith.select %499, %502, %493 : vector<1x16xi1>, vector<1x16xf32>
    %504 = vector.extract_strided_slice %371 {offsets = [0, 12], sizes = [1, 1], strides = [1, 1]} : vector<1x16xf32> to vector<1x1xf32>
    %505 = vector.shape_cast %504 : vector<1x1xf32> to vector<1x1xf32>
    %506 = vector.broadcast %505 : vector<1x1xf32> to vector<1x16xf32>
    %507 = arith.select %499, %506, %497 : vector<1x16xi1>, vector<1x16xf32>
    %c12_i32_97 = arith.constant 12 : i32
    %508 = vector.broadcast %c12_i32_97 : i32 to vector<1x16xi32>
    %509 = arith.cmpi eq, %383, %508 : vector<1x16xi32>
    %510 = vector.extract_strided_slice %371 {offsets = [0, 12], sizes = [1, 1], strides = [1, 1]} : vector<1x16xf32> to vector<1x1xf32>
    %511 = vector.shape_cast %510 : vector<1x1xf32> to vector<1x1xf32>
    %512 = vector.broadcast %511 : vector<1x1xf32> to vector<1x16xf32>
    %513 = arith.select %509, %512, %503 : vector<1x16xi1>, vector<1x16xf32>
    %514 = vector.extract_strided_slice %371 {offsets = [0, 13], sizes = [1, 1], strides = [1, 1]} : vector<1x16xf32> to vector<1x1xf32>
    %515 = vector.shape_cast %514 : vector<1x1xf32> to vector<1x1xf32>
    %516 = vector.broadcast %515 : vector<1x1xf32> to vector<1x16xf32>
    %517 = arith.select %509, %516, %507 : vector<1x16xi1>, vector<1x16xf32>
    %c13_i32_98 = arith.constant 13 : i32
    %518 = vector.broadcast %c13_i32_98 : i32 to vector<1x16xi32>
    %519 = arith.cmpi eq, %383, %518 : vector<1x16xi32>
    %520 = vector.extract_strided_slice %371 {offsets = [0, 13], sizes = [1, 1], strides = [1, 1]} : vector<1x16xf32> to vector<1x1xf32>
    %521 = vector.shape_cast %520 : vector<1x1xf32> to vector<1x1xf32>
    %522 = vector.broadcast %521 : vector<1x1xf32> to vector<1x16xf32>
    %523 = arith.select %519, %522, %513 : vector<1x16xi1>, vector<1x16xf32>
    %524 = vector.extract_strided_slice %371 {offsets = [0, 14], sizes = [1, 1], strides = [1, 1]} : vector<1x16xf32> to vector<1x1xf32>
    %525 = vector.shape_cast %524 : vector<1x1xf32> to vector<1x1xf32>
    %526 = vector.broadcast %525 : vector<1x1xf32> to vector<1x16xf32>
    %527 = arith.select %519, %526, %517 : vector<1x16xi1>, vector<1x16xf32>
    %c14_i32_99 = arith.constant 14 : i32
    %528 = vector.broadcast %c14_i32_99 : i32 to vector<1x16xi32>
    %529 = arith.cmpi eq, %383, %528 : vector<1x16xi32>
    %530 = vector.extract_strided_slice %371 {offsets = [0, 14], sizes = [1, 1], strides = [1, 1]} : vector<1x16xf32> to vector<1x1xf32>
    %531 = vector.shape_cast %530 : vector<1x1xf32> to vector<1x1xf32>
    %532 = vector.broadcast %531 : vector<1x1xf32> to vector<1x16xf32>
    %533 = arith.select %529, %532, %523 : vector<1x16xi1>, vector<1x16xf32>
    %534 = vector.extract_strided_slice %371 {offsets = [0, 15], sizes = [1, 1], strides = [1, 1]} : vector<1x16xf32> to vector<1x1xf32>
    %535 = vector.shape_cast %534 : vector<1x1xf32> to vector<1x1xf32>
    %536 = vector.broadcast %535 : vector<1x1xf32> to vector<1x16xf32>
    %537 = arith.select %529, %536, %527 : vector<1x16xi1>, vector<1x16xf32>
    %cst_100 = arith.constant 1.000000e+00 : f32
    %538 = vector.broadcast %cst_100 : f32 to vector<1x16xf32>
    %539 = arith.subf %538, %385 : vector<1x16xf32>
    %540 = arith.mulf %533, %539 : vector<1x16xf32>
    %541 = arith.mulf %537, %385 : vector<1x16xf32>
    %542 = arith.addf %540, %541 : vector<1x16xf32>
    %cst_101 = arith.constant 0.000000e+00 : f32
    %cst_102 = arith.constant 1.000000e+00 : f32
    %543 = vector.broadcast %cst_101 : f32 to vector<1x16xf32>
    %544 = arith.maximumf %543, %542 : vector<1x16xf32>
    %545 = vector.broadcast %cst_102 : f32 to vector<1x16xf32>
    %546 = arith.minimumf %545, %544 : vector<1x16xf32>
    %cst_103 = arith.constant 1.500000e+01 : f32
    %547 = vector.broadcast %cst_103 : f32 to vector<1x16xf32>
    %548 = arith.mulf %546, %547 : vector<1x16xf32>
    %549 = math.floor %548 : vector<1x16xf32>
    %cst_104 = arith.constant 0.000000e+00 : f32
    %cst_105 = arith.constant 1.400000e+01 : f32
    %550 = vector.broadcast %cst_104 : f32 to vector<1x16xf32>
    %551 = arith.maximumf %550, %549 : vector<1x16xf32>
    %552 = vector.broadcast %cst_105 : f32 to vector<1x16xf32>
    %553 = arith.minimumf %552, %551 : vector<1x16xf32>
    %554 = arith.fptosi %553 : vector<1x16xf32> to vector<1x16xi32>
    %555 = arith.sitofp %554 : vector<1x16xi32> to vector<1x16xf32>
    %556 = arith.subf %548, %555 : vector<1x16xf32>
    %cst_106 = arith.constant 0.000000e+00 : f32
    %557 = vector.broadcast %cst_106 : f32 to vector<1x16xf32>
    %cst_107 = arith.constant 0.000000e+00 : f32
    %558 = vector.broadcast %cst_107 : f32 to vector<1x16xf32>
    %c0_i32_108 = arith.constant 0 : i32
    %559 = vector.broadcast %c0_i32_108 : i32 to vector<1x16xi32>
    %560 = arith.cmpi eq, %554, %559 : vector<1x16xi32>
    %561 = vector.extract_strided_slice %542 {offsets = [0, 0], sizes = [1, 1], strides = [1, 1]} : vector<1x16xf32> to vector<1x1xf32>
    %562 = vector.shape_cast %561 : vector<1x1xf32> to vector<1x1xf32>
    %563 = vector.broadcast %562 : vector<1x1xf32> to vector<1x16xf32>
    %564 = arith.select %560, %563, %557 : vector<1x16xi1>, vector<1x16xf32>
    %565 = vector.extract_strided_slice %542 {offsets = [0, 1], sizes = [1, 1], strides = [1, 1]} : vector<1x16xf32> to vector<1x1xf32>
    %566 = vector.shape_cast %565 : vector<1x1xf32> to vector<1x1xf32>
    %567 = vector.broadcast %566 : vector<1x1xf32> to vector<1x16xf32>
    %568 = arith.select %560, %567, %558 : vector<1x16xi1>, vector<1x16xf32>
    %c1_i32_109 = arith.constant 1 : i32
    %569 = vector.broadcast %c1_i32_109 : i32 to vector<1x16xi32>
    %570 = arith.cmpi eq, %554, %569 : vector<1x16xi32>
    %571 = vector.extract_strided_slice %542 {offsets = [0, 1], sizes = [1, 1], strides = [1, 1]} : vector<1x16xf32> to vector<1x1xf32>
    %572 = vector.shape_cast %571 : vector<1x1xf32> to vector<1x1xf32>
    %573 = vector.broadcast %572 : vector<1x1xf32> to vector<1x16xf32>
    %574 = arith.select %570, %573, %564 : vector<1x16xi1>, vector<1x16xf32>
    %575 = vector.extract_strided_slice %542 {offsets = [0, 2], sizes = [1, 1], strides = [1, 1]} : vector<1x16xf32> to vector<1x1xf32>
    %576 = vector.shape_cast %575 : vector<1x1xf32> to vector<1x1xf32>
    %577 = vector.broadcast %576 : vector<1x1xf32> to vector<1x16xf32>
    %578 = arith.select %570, %577, %568 : vector<1x16xi1>, vector<1x16xf32>
    %c2_i32_110 = arith.constant 2 : i32
    %579 = vector.broadcast %c2_i32_110 : i32 to vector<1x16xi32>
    %580 = arith.cmpi eq, %554, %579 : vector<1x16xi32>
    %581 = vector.extract_strided_slice %542 {offsets = [0, 2], sizes = [1, 1], strides = [1, 1]} : vector<1x16xf32> to vector<1x1xf32>
    %582 = vector.shape_cast %581 : vector<1x1xf32> to vector<1x1xf32>
    %583 = vector.broadcast %582 : vector<1x1xf32> to vector<1x16xf32>
    %584 = arith.select %580, %583, %574 : vector<1x16xi1>, vector<1x16xf32>
    %585 = vector.extract_strided_slice %542 {offsets = [0, 3], sizes = [1, 1], strides = [1, 1]} : vector<1x16xf32> to vector<1x1xf32>
    %586 = vector.shape_cast %585 : vector<1x1xf32> to vector<1x1xf32>
    %587 = vector.broadcast %586 : vector<1x1xf32> to vector<1x16xf32>
    %588 = arith.select %580, %587, %578 : vector<1x16xi1>, vector<1x16xf32>
    %c3_i32_111 = arith.constant 3 : i32
    %589 = vector.broadcast %c3_i32_111 : i32 to vector<1x16xi32>
    %590 = arith.cmpi eq, %554, %589 : vector<1x16xi32>
    %591 = vector.extract_strided_slice %542 {offsets = [0, 3], sizes = [1, 1], strides = [1, 1]} : vector<1x16xf32> to vector<1x1xf32>
    %592 = vector.shape_cast %591 : vector<1x1xf32> to vector<1x1xf32>
    %593 = vector.broadcast %592 : vector<1x1xf32> to vector<1x16xf32>
    %594 = arith.select %590, %593, %584 : vector<1x16xi1>, vector<1x16xf32>
    %595 = vector.extract_strided_slice %542 {offsets = [0, 4], sizes = [1, 1], strides = [1, 1]} : vector<1x16xf32> to vector<1x1xf32>
    %596 = vector.shape_cast %595 : vector<1x1xf32> to vector<1x1xf32>
    %597 = vector.broadcast %596 : vector<1x1xf32> to vector<1x16xf32>
    %598 = arith.select %590, %597, %588 : vector<1x16xi1>, vector<1x16xf32>
    %c4_i32_112 = arith.constant 4 : i32
    %599 = vector.broadcast %c4_i32_112 : i32 to vector<1x16xi32>
    %600 = arith.cmpi eq, %554, %599 : vector<1x16xi32>
    %601 = vector.extract_strided_slice %542 {offsets = [0, 4], sizes = [1, 1], strides = [1, 1]} : vector<1x16xf32> to vector<1x1xf32>
    %602 = vector.shape_cast %601 : vector<1x1xf32> to vector<1x1xf32>
    %603 = vector.broadcast %602 : vector<1x1xf32> to vector<1x16xf32>
    %604 = arith.select %600, %603, %594 : vector<1x16xi1>, vector<1x16xf32>
    %605 = vector.extract_strided_slice %542 {offsets = [0, 5], sizes = [1, 1], strides = [1, 1]} : vector<1x16xf32> to vector<1x1xf32>
    %606 = vector.shape_cast %605 : vector<1x1xf32> to vector<1x1xf32>
    %607 = vector.broadcast %606 : vector<1x1xf32> to vector<1x16xf32>
    %608 = arith.select %600, %607, %598 : vector<1x16xi1>, vector<1x16xf32>
    %c5_i32_113 = arith.constant 5 : i32
    %609 = vector.broadcast %c5_i32_113 : i32 to vector<1x16xi32>
    %610 = arith.cmpi eq, %554, %609 : vector<1x16xi32>
    %611 = vector.extract_strided_slice %542 {offsets = [0, 5], sizes = [1, 1], strides = [1, 1]} : vector<1x16xf32> to vector<1x1xf32>
    %612 = vector.shape_cast %611 : vector<1x1xf32> to vector<1x1xf32>
    %613 = vector.broadcast %612 : vector<1x1xf32> to vector<1x16xf32>
    %614 = arith.select %610, %613, %604 : vector<1x16xi1>, vector<1x16xf32>
    %615 = vector.extract_strided_slice %542 {offsets = [0, 6], sizes = [1, 1], strides = [1, 1]} : vector<1x16xf32> to vector<1x1xf32>
    %616 = vector.shape_cast %615 : vector<1x1xf32> to vector<1x1xf32>
    %617 = vector.broadcast %616 : vector<1x1xf32> to vector<1x16xf32>
    %618 = arith.select %610, %617, %608 : vector<1x16xi1>, vector<1x16xf32>
    %c6_i32_114 = arith.constant 6 : i32
    %619 = vector.broadcast %c6_i32_114 : i32 to vector<1x16xi32>
    %620 = arith.cmpi eq, %554, %619 : vector<1x16xi32>
    %621 = vector.extract_strided_slice %542 {offsets = [0, 6], sizes = [1, 1], strides = [1, 1]} : vector<1x16xf32> to vector<1x1xf32>
    %622 = vector.shape_cast %621 : vector<1x1xf32> to vector<1x1xf32>
    %623 = vector.broadcast %622 : vector<1x1xf32> to vector<1x16xf32>
    %624 = arith.select %620, %623, %614 : vector<1x16xi1>, vector<1x16xf32>
    %625 = vector.extract_strided_slice %542 {offsets = [0, 7], sizes = [1, 1], strides = [1, 1]} : vector<1x16xf32> to vector<1x1xf32>
    %626 = vector.shape_cast %625 : vector<1x1xf32> to vector<1x1xf32>
    %627 = vector.broadcast %626 : vector<1x1xf32> to vector<1x16xf32>
    %628 = arith.select %620, %627, %618 : vector<1x16xi1>, vector<1x16xf32>
    %c7_i32_115 = arith.constant 7 : i32
    %629 = vector.broadcast %c7_i32_115 : i32 to vector<1x16xi32>
    %630 = arith.cmpi eq, %554, %629 : vector<1x16xi32>
    %631 = vector.extract_strided_slice %542 {offsets = [0, 7], sizes = [1, 1], strides = [1, 1]} : vector<1x16xf32> to vector<1x1xf32>
    %632 = vector.shape_cast %631 : vector<1x1xf32> to vector<1x1xf32>
    %633 = vector.broadcast %632 : vector<1x1xf32> to vector<1x16xf32>
    %634 = arith.select %630, %633, %624 : vector<1x16xi1>, vector<1x16xf32>
    %635 = vector.extract_strided_slice %542 {offsets = [0, 8], sizes = [1, 1], strides = [1, 1]} : vector<1x16xf32> to vector<1x1xf32>
    %636 = vector.shape_cast %635 : vector<1x1xf32> to vector<1x1xf32>
    %637 = vector.broadcast %636 : vector<1x1xf32> to vector<1x16xf32>
    %638 = arith.select %630, %637, %628 : vector<1x16xi1>, vector<1x16xf32>
    %c8_i32_116 = arith.constant 8 : i32
    %639 = vector.broadcast %c8_i32_116 : i32 to vector<1x16xi32>
    %640 = arith.cmpi eq, %554, %639 : vector<1x16xi32>
    %641 = vector.extract_strided_slice %542 {offsets = [0, 8], sizes = [1, 1], strides = [1, 1]} : vector<1x16xf32> to vector<1x1xf32>
    %642 = vector.shape_cast %641 : vector<1x1xf32> to vector<1x1xf32>
    %643 = vector.broadcast %642 : vector<1x1xf32> to vector<1x16xf32>
    %644 = arith.select %640, %643, %634 : vector<1x16xi1>, vector<1x16xf32>
    %645 = vector.extract_strided_slice %542 {offsets = [0, 9], sizes = [1, 1], strides = [1, 1]} : vector<1x16xf32> to vector<1x1xf32>
    %646 = vector.shape_cast %645 : vector<1x1xf32> to vector<1x1xf32>
    %647 = vector.broadcast %646 : vector<1x1xf32> to vector<1x16xf32>
    %648 = arith.select %640, %647, %638 : vector<1x16xi1>, vector<1x16xf32>
    %c9_i32_117 = arith.constant 9 : i32
    %649 = vector.broadcast %c9_i32_117 : i32 to vector<1x16xi32>
    %650 = arith.cmpi eq, %554, %649 : vector<1x16xi32>
    %651 = vector.extract_strided_slice %542 {offsets = [0, 9], sizes = [1, 1], strides = [1, 1]} : vector<1x16xf32> to vector<1x1xf32>
    %652 = vector.shape_cast %651 : vector<1x1xf32> to vector<1x1xf32>
    %653 = vector.broadcast %652 : vector<1x1xf32> to vector<1x16xf32>
    %654 = arith.select %650, %653, %644 : vector<1x16xi1>, vector<1x16xf32>
    %655 = vector.extract_strided_slice %542 {offsets = [0, 10], sizes = [1, 1], strides = [1, 1]} : vector<1x16xf32> to vector<1x1xf32>
    %656 = vector.shape_cast %655 : vector<1x1xf32> to vector<1x1xf32>
    %657 = vector.broadcast %656 : vector<1x1xf32> to vector<1x16xf32>
    %658 = arith.select %650, %657, %648 : vector<1x16xi1>, vector<1x16xf32>
    %c10_i32_118 = arith.constant 10 : i32
    %659 = vector.broadcast %c10_i32_118 : i32 to vector<1x16xi32>
    %660 = arith.cmpi eq, %554, %659 : vector<1x16xi32>
    %661 = vector.extract_strided_slice %542 {offsets = [0, 10], sizes = [1, 1], strides = [1, 1]} : vector<1x16xf32> to vector<1x1xf32>
    %662 = vector.shape_cast %661 : vector<1x1xf32> to vector<1x1xf32>
    %663 = vector.broadcast %662 : vector<1x1xf32> to vector<1x16xf32>
    %664 = arith.select %660, %663, %654 : vector<1x16xi1>, vector<1x16xf32>
    %665 = vector.extract_strided_slice %542 {offsets = [0, 11], sizes = [1, 1], strides = [1, 1]} : vector<1x16xf32> to vector<1x1xf32>
    %666 = vector.shape_cast %665 : vector<1x1xf32> to vector<1x1xf32>
    %667 = vector.broadcast %666 : vector<1x1xf32> to vector<1x16xf32>
    %668 = arith.select %660, %667, %658 : vector<1x16xi1>, vector<1x16xf32>
    %c11_i32_119 = arith.constant 11 : i32
    %669 = vector.broadcast %c11_i32_119 : i32 to vector<1x16xi32>
    %670 = arith.cmpi eq, %554, %669 : vector<1x16xi32>
    %671 = vector.extract_strided_slice %542 {offsets = [0, 11], sizes = [1, 1], strides = [1, 1]} : vector<1x16xf32> to vector<1x1xf32>
    %672 = vector.shape_cast %671 : vector<1x1xf32> to vector<1x1xf32>
    %673 = vector.broadcast %672 : vector<1x1xf32> to vector<1x16xf32>
    %674 = arith.select %670, %673, %664 : vector<1x16xi1>, vector<1x16xf32>
    %675 = vector.extract_strided_slice %542 {offsets = [0, 12], sizes = [1, 1], strides = [1, 1]} : vector<1x16xf32> to vector<1x1xf32>
    %676 = vector.shape_cast %675 : vector<1x1xf32> to vector<1x1xf32>
    %677 = vector.broadcast %676 : vector<1x1xf32> to vector<1x16xf32>
    %678 = arith.select %670, %677, %668 : vector<1x16xi1>, vector<1x16xf32>
    %c12_i32_120 = arith.constant 12 : i32
    %679 = vector.broadcast %c12_i32_120 : i32 to vector<1x16xi32>
    %680 = arith.cmpi eq, %554, %679 : vector<1x16xi32>
    %681 = vector.extract_strided_slice %542 {offsets = [0, 12], sizes = [1, 1], strides = [1, 1]} : vector<1x16xf32> to vector<1x1xf32>
    %682 = vector.shape_cast %681 : vector<1x1xf32> to vector<1x1xf32>
    %683 = vector.broadcast %682 : vector<1x1xf32> to vector<1x16xf32>
    %684 = arith.select %680, %683, %674 : vector<1x16xi1>, vector<1x16xf32>
    %685 = vector.extract_strided_slice %542 {offsets = [0, 13], sizes = [1, 1], strides = [1, 1]} : vector<1x16xf32> to vector<1x1xf32>
    %686 = vector.shape_cast %685 : vector<1x1xf32> to vector<1x1xf32>
    %687 = vector.broadcast %686 : vector<1x1xf32> to vector<1x16xf32>
    %688 = arith.select %680, %687, %678 : vector<1x16xi1>, vector<1x16xf32>
    %c13_i32_121 = arith.constant 13 : i32
    %689 = vector.broadcast %c13_i32_121 : i32 to vector<1x16xi32>
    %690 = arith.cmpi eq, %554, %689 : vector<1x16xi32>
    %691 = vector.extract_strided_slice %542 {offsets = [0, 13], sizes = [1, 1], strides = [1, 1]} : vector<1x16xf32> to vector<1x1xf32>
    %692 = vector.shape_cast %691 : vector<1x1xf32> to vector<1x1xf32>
    %693 = vector.broadcast %692 : vector<1x1xf32> to vector<1x16xf32>
    %694 = arith.select %690, %693, %684 : vector<1x16xi1>, vector<1x16xf32>
    %695 = vector.extract_strided_slice %542 {offsets = [0, 14], sizes = [1, 1], strides = [1, 1]} : vector<1x16xf32> to vector<1x1xf32>
    %696 = vector.shape_cast %695 : vector<1x1xf32> to vector<1x1xf32>
    %697 = vector.broadcast %696 : vector<1x1xf32> to vector<1x16xf32>
    %698 = arith.select %690, %697, %688 : vector<1x16xi1>, vector<1x16xf32>
    %c14_i32_122 = arith.constant 14 : i32
    %699 = vector.broadcast %c14_i32_122 : i32 to vector<1x16xi32>
    %700 = arith.cmpi eq, %554, %699 : vector<1x16xi32>
    %701 = vector.extract_strided_slice %542 {offsets = [0, 14], sizes = [1, 1], strides = [1, 1]} : vector<1x16xf32> to vector<1x1xf32>
    %702 = vector.shape_cast %701 : vector<1x1xf32> to vector<1x1xf32>
    %703 = vector.broadcast %702 : vector<1x1xf32> to vector<1x16xf32>
    %704 = arith.select %700, %703, %694 : vector<1x16xi1>, vector<1x16xf32>
    %705 = vector.extract_strided_slice %542 {offsets = [0, 15], sizes = [1, 1], strides = [1, 1]} : vector<1x16xf32> to vector<1x1xf32>
    %706 = vector.shape_cast %705 : vector<1x1xf32> to vector<1x1xf32>
    %707 = vector.broadcast %706 : vector<1x1xf32> to vector<1x16xf32>
    %708 = arith.select %700, %707, %698 : vector<1x16xi1>, vector<1x16xf32>
    %cst_123 = arith.constant 1.000000e+00 : f32
    %709 = vector.broadcast %cst_123 : f32 to vector<1x16xf32>
    %710 = arith.subf %709, %556 : vector<1x16xf32>
    %711 = arith.mulf %704, %710 : vector<1x16xf32>
    %712 = arith.mulf %708, %556 : vector<1x16xf32>
    %713 = arith.addf %711, %712 : vector<1x16xf32>
    %cst_124 = arith.constant 0.000000e+00 : f32
    %cst_125 = arith.constant 1.000000e+00 : f32
    %714 = vector.broadcast %cst_124 : f32 to vector<1x16xf32>
    %715 = arith.maximumf %714, %713 : vector<1x16xf32>
    %716 = vector.broadcast %cst_125 : f32 to vector<1x16xf32>
    %717 = arith.minimumf %716, %715 : vector<1x16xf32>
    %cst_126 = arith.constant 1.500000e+01 : f32
    %718 = vector.broadcast %cst_126 : f32 to vector<1x16xf32>
    %719 = arith.mulf %717, %718 : vector<1x16xf32>
    %720 = math.floor %719 : vector<1x16xf32>
    %cst_127 = arith.constant 0.000000e+00 : f32
    %cst_128 = arith.constant 1.400000e+01 : f32
    %721 = vector.broadcast %cst_127 : f32 to vector<1x16xf32>
    %722 = arith.maximumf %721, %720 : vector<1x16xf32>
    %723 = vector.broadcast %cst_128 : f32 to vector<1x16xf32>
    %724 = arith.minimumf %723, %722 : vector<1x16xf32>
    %725 = arith.fptosi %724 : vector<1x16xf32> to vector<1x16xi32>
    %726 = arith.sitofp %725 : vector<1x16xi32> to vector<1x16xf32>
    %727 = arith.subf %719, %726 : vector<1x16xf32>
    %cst_129 = arith.constant 0.000000e+00 : f32
    %728 = vector.broadcast %cst_129 : f32 to vector<1x16xf32>
    %cst_130 = arith.constant 0.000000e+00 : f32
    %729 = vector.broadcast %cst_130 : f32 to vector<1x16xf32>
    %c0_i32_131 = arith.constant 0 : i32
    %730 = vector.broadcast %c0_i32_131 : i32 to vector<1x16xi32>
    %731 = arith.cmpi eq, %725, %730 : vector<1x16xi32>
    %732 = vector.extract_strided_slice %713 {offsets = [0, 0], sizes = [1, 1], strides = [1, 1]} : vector<1x16xf32> to vector<1x1xf32>
    %733 = vector.shape_cast %732 : vector<1x1xf32> to vector<1x1xf32>
    %734 = vector.broadcast %733 : vector<1x1xf32> to vector<1x16xf32>
    %735 = arith.select %731, %734, %728 : vector<1x16xi1>, vector<1x16xf32>
    %736 = vector.extract_strided_slice %713 {offsets = [0, 1], sizes = [1, 1], strides = [1, 1]} : vector<1x16xf32> to vector<1x1xf32>
    %737 = vector.shape_cast %736 : vector<1x1xf32> to vector<1x1xf32>
    %738 = vector.broadcast %737 : vector<1x1xf32> to vector<1x16xf32>
    %739 = arith.select %731, %738, %729 : vector<1x16xi1>, vector<1x16xf32>
    %c1_i32_132 = arith.constant 1 : i32
    %740 = vector.broadcast %c1_i32_132 : i32 to vector<1x16xi32>
    %741 = arith.cmpi eq, %725, %740 : vector<1x16xi32>
    %742 = vector.extract_strided_slice %713 {offsets = [0, 1], sizes = [1, 1], strides = [1, 1]} : vector<1x16xf32> to vector<1x1xf32>
    %743 = vector.shape_cast %742 : vector<1x1xf32> to vector<1x1xf32>
    %744 = vector.broadcast %743 : vector<1x1xf32> to vector<1x16xf32>
    %745 = arith.select %741, %744, %735 : vector<1x16xi1>, vector<1x16xf32>
    %746 = vector.extract_strided_slice %713 {offsets = [0, 2], sizes = [1, 1], strides = [1, 1]} : vector<1x16xf32> to vector<1x1xf32>
    %747 = vector.shape_cast %746 : vector<1x1xf32> to vector<1x1xf32>
    %748 = vector.broadcast %747 : vector<1x1xf32> to vector<1x16xf32>
    %749 = arith.select %741, %748, %739 : vector<1x16xi1>, vector<1x16xf32>
    %c2_i32_133 = arith.constant 2 : i32
    %750 = vector.broadcast %c2_i32_133 : i32 to vector<1x16xi32>
    %751 = arith.cmpi eq, %725, %750 : vector<1x16xi32>
    %752 = vector.extract_strided_slice %713 {offsets = [0, 2], sizes = [1, 1], strides = [1, 1]} : vector<1x16xf32> to vector<1x1xf32>
    %753 = vector.shape_cast %752 : vector<1x1xf32> to vector<1x1xf32>
    %754 = vector.broadcast %753 : vector<1x1xf32> to vector<1x16xf32>
    %755 = arith.select %751, %754, %745 : vector<1x16xi1>, vector<1x16xf32>
    %756 = vector.extract_strided_slice %713 {offsets = [0, 3], sizes = [1, 1], strides = [1, 1]} : vector<1x16xf32> to vector<1x1xf32>
    %757 = vector.shape_cast %756 : vector<1x1xf32> to vector<1x1xf32>
    %758 = vector.broadcast %757 : vector<1x1xf32> to vector<1x16xf32>
    %759 = arith.select %751, %758, %749 : vector<1x16xi1>, vector<1x16xf32>
    %c3_i32_134 = arith.constant 3 : i32
    %760 = vector.broadcast %c3_i32_134 : i32 to vector<1x16xi32>
    %761 = arith.cmpi eq, %725, %760 : vector<1x16xi32>
    %762 = vector.extract_strided_slice %713 {offsets = [0, 3], sizes = [1, 1], strides = [1, 1]} : vector<1x16xf32> to vector<1x1xf32>
    %763 = vector.shape_cast %762 : vector<1x1xf32> to vector<1x1xf32>
    %764 = vector.broadcast %763 : vector<1x1xf32> to vector<1x16xf32>
    %765 = arith.select %761, %764, %755 : vector<1x16xi1>, vector<1x16xf32>
    %766 = vector.extract_strided_slice %713 {offsets = [0, 4], sizes = [1, 1], strides = [1, 1]} : vector<1x16xf32> to vector<1x1xf32>
    %767 = vector.shape_cast %766 : vector<1x1xf32> to vector<1x1xf32>
    %768 = vector.broadcast %767 : vector<1x1xf32> to vector<1x16xf32>
    %769 = arith.select %761, %768, %759 : vector<1x16xi1>, vector<1x16xf32>
    %c4_i32_135 = arith.constant 4 : i32
    %770 = vector.broadcast %c4_i32_135 : i32 to vector<1x16xi32>
    %771 = arith.cmpi eq, %725, %770 : vector<1x16xi32>
    %772 = vector.extract_strided_slice %713 {offsets = [0, 4], sizes = [1, 1], strides = [1, 1]} : vector<1x16xf32> to vector<1x1xf32>
    %773 = vector.shape_cast %772 : vector<1x1xf32> to vector<1x1xf32>
    %774 = vector.broadcast %773 : vector<1x1xf32> to vector<1x16xf32>
    %775 = arith.select %771, %774, %765 : vector<1x16xi1>, vector<1x16xf32>
    %776 = vector.extract_strided_slice %713 {offsets = [0, 5], sizes = [1, 1], strides = [1, 1]} : vector<1x16xf32> to vector<1x1xf32>
    %777 = vector.shape_cast %776 : vector<1x1xf32> to vector<1x1xf32>
    %778 = vector.broadcast %777 : vector<1x1xf32> to vector<1x16xf32>
    %779 = arith.select %771, %778, %769 : vector<1x16xi1>, vector<1x16xf32>
    %c5_i32_136 = arith.constant 5 : i32
    %780 = vector.broadcast %c5_i32_136 : i32 to vector<1x16xi32>
    %781 = arith.cmpi eq, %725, %780 : vector<1x16xi32>
    %782 = vector.extract_strided_slice %713 {offsets = [0, 5], sizes = [1, 1], strides = [1, 1]} : vector<1x16xf32> to vector<1x1xf32>
    %783 = vector.shape_cast %782 : vector<1x1xf32> to vector<1x1xf32>
    %784 = vector.broadcast %783 : vector<1x1xf32> to vector<1x16xf32>
    %785 = arith.select %781, %784, %775 : vector<1x16xi1>, vector<1x16xf32>
    %786 = vector.extract_strided_slice %713 {offsets = [0, 6], sizes = [1, 1], strides = [1, 1]} : vector<1x16xf32> to vector<1x1xf32>
    %787 = vector.shape_cast %786 : vector<1x1xf32> to vector<1x1xf32>
    %788 = vector.broadcast %787 : vector<1x1xf32> to vector<1x16xf32>
    %789 = arith.select %781, %788, %779 : vector<1x16xi1>, vector<1x16xf32>
    %c6_i32_137 = arith.constant 6 : i32
    %790 = vector.broadcast %c6_i32_137 : i32 to vector<1x16xi32>
    %791 = arith.cmpi eq, %725, %790 : vector<1x16xi32>
    %792 = vector.extract_strided_slice %713 {offsets = [0, 6], sizes = [1, 1], strides = [1, 1]} : vector<1x16xf32> to vector<1x1xf32>
    %793 = vector.shape_cast %792 : vector<1x1xf32> to vector<1x1xf32>
    %794 = vector.broadcast %793 : vector<1x1xf32> to vector<1x16xf32>
    %795 = arith.select %791, %794, %785 : vector<1x16xi1>, vector<1x16xf32>
    %796 = vector.extract_strided_slice %713 {offsets = [0, 7], sizes = [1, 1], strides = [1, 1]} : vector<1x16xf32> to vector<1x1xf32>
    %797 = vector.shape_cast %796 : vector<1x1xf32> to vector<1x1xf32>
    %798 = vector.broadcast %797 : vector<1x1xf32> to vector<1x16xf32>
    %799 = arith.select %791, %798, %789 : vector<1x16xi1>, vector<1x16xf32>
    %c7_i32_138 = arith.constant 7 : i32
    %800 = vector.broadcast %c7_i32_138 : i32 to vector<1x16xi32>
    %801 = arith.cmpi eq, %725, %800 : vector<1x16xi32>
    %802 = vector.extract_strided_slice %713 {offsets = [0, 7], sizes = [1, 1], strides = [1, 1]} : vector<1x16xf32> to vector<1x1xf32>
    %803 = vector.shape_cast %802 : vector<1x1xf32> to vector<1x1xf32>
    %804 = vector.broadcast %803 : vector<1x1xf32> to vector<1x16xf32>
    %805 = arith.select %801, %804, %795 : vector<1x16xi1>, vector<1x16xf32>
    %806 = vector.extract_strided_slice %713 {offsets = [0, 8], sizes = [1, 1], strides = [1, 1]} : vector<1x16xf32> to vector<1x1xf32>
    %807 = vector.shape_cast %806 : vector<1x1xf32> to vector<1x1xf32>
    %808 = vector.broadcast %807 : vector<1x1xf32> to vector<1x16xf32>
    %809 = arith.select %801, %808, %799 : vector<1x16xi1>, vector<1x16xf32>
    %c8_i32_139 = arith.constant 8 : i32
    %810 = vector.broadcast %c8_i32_139 : i32 to vector<1x16xi32>
    %811 = arith.cmpi eq, %725, %810 : vector<1x16xi32>
    %812 = vector.extract_strided_slice %713 {offsets = [0, 8], sizes = [1, 1], strides = [1, 1]} : vector<1x16xf32> to vector<1x1xf32>
    %813 = vector.shape_cast %812 : vector<1x1xf32> to vector<1x1xf32>
    %814 = vector.broadcast %813 : vector<1x1xf32> to vector<1x16xf32>
    %815 = arith.select %811, %814, %805 : vector<1x16xi1>, vector<1x16xf32>
    %816 = vector.extract_strided_slice %713 {offsets = [0, 9], sizes = [1, 1], strides = [1, 1]} : vector<1x16xf32> to vector<1x1xf32>
    %817 = vector.shape_cast %816 : vector<1x1xf32> to vector<1x1xf32>
    %818 = vector.broadcast %817 : vector<1x1xf32> to vector<1x16xf32>
    %819 = arith.select %811, %818, %809 : vector<1x16xi1>, vector<1x16xf32>
    %c9_i32_140 = arith.constant 9 : i32
    %820 = vector.broadcast %c9_i32_140 : i32 to vector<1x16xi32>
    %821 = arith.cmpi eq, %725, %820 : vector<1x16xi32>
    %822 = vector.extract_strided_slice %713 {offsets = [0, 9], sizes = [1, 1], strides = [1, 1]} : vector<1x16xf32> to vector<1x1xf32>
    %823 = vector.shape_cast %822 : vector<1x1xf32> to vector<1x1xf32>
    %824 = vector.broadcast %823 : vector<1x1xf32> to vector<1x16xf32>
    %825 = arith.select %821, %824, %815 : vector<1x16xi1>, vector<1x16xf32>
    %826 = vector.extract_strided_slice %713 {offsets = [0, 10], sizes = [1, 1], strides = [1, 1]} : vector<1x16xf32> to vector<1x1xf32>
    %827 = vector.shape_cast %826 : vector<1x1xf32> to vector<1x1xf32>
    %828 = vector.broadcast %827 : vector<1x1xf32> to vector<1x16xf32>
    %829 = arith.select %821, %828, %819 : vector<1x16xi1>, vector<1x16xf32>
    %c10_i32_141 = arith.constant 10 : i32
    %830 = vector.broadcast %c10_i32_141 : i32 to vector<1x16xi32>
    %831 = arith.cmpi eq, %725, %830 : vector<1x16xi32>
    %832 = vector.extract_strided_slice %713 {offsets = [0, 10], sizes = [1, 1], strides = [1, 1]} : vector<1x16xf32> to vector<1x1xf32>
    %833 = vector.shape_cast %832 : vector<1x1xf32> to vector<1x1xf32>
    %834 = vector.broadcast %833 : vector<1x1xf32> to vector<1x16xf32>
    %835 = arith.select %831, %834, %825 : vector<1x16xi1>, vector<1x16xf32>
    %836 = vector.extract_strided_slice %713 {offsets = [0, 11], sizes = [1, 1], strides = [1, 1]} : vector<1x16xf32> to vector<1x1xf32>
    %837 = vector.shape_cast %836 : vector<1x1xf32> to vector<1x1xf32>
    %838 = vector.broadcast %837 : vector<1x1xf32> to vector<1x16xf32>
    %839 = arith.select %831, %838, %829 : vector<1x16xi1>, vector<1x16xf32>
    %c11_i32_142 = arith.constant 11 : i32
    %840 = vector.broadcast %c11_i32_142 : i32 to vector<1x16xi32>
    %841 = arith.cmpi eq, %725, %840 : vector<1x16xi32>
    %842 = vector.extract_strided_slice %713 {offsets = [0, 11], sizes = [1, 1], strides = [1, 1]} : vector<1x16xf32> to vector<1x1xf32>
    %843 = vector.shape_cast %842 : vector<1x1xf32> to vector<1x1xf32>
    %844 = vector.broadcast %843 : vector<1x1xf32> to vector<1x16xf32>
    %845 = arith.select %841, %844, %835 : vector<1x16xi1>, vector<1x16xf32>
    %846 = vector.extract_strided_slice %713 {offsets = [0, 12], sizes = [1, 1], strides = [1, 1]} : vector<1x16xf32> to vector<1x1xf32>
    %847 = vector.shape_cast %846 : vector<1x1xf32> to vector<1x1xf32>
    %848 = vector.broadcast %847 : vector<1x1xf32> to vector<1x16xf32>
    %849 = arith.select %841, %848, %839 : vector<1x16xi1>, vector<1x16xf32>
    %c12_i32_143 = arith.constant 12 : i32
    %850 = vector.broadcast %c12_i32_143 : i32 to vector<1x16xi32>
    %851 = arith.cmpi eq, %725, %850 : vector<1x16xi32>
    %852 = vector.extract_strided_slice %713 {offsets = [0, 12], sizes = [1, 1], strides = [1, 1]} : vector<1x16xf32> to vector<1x1xf32>
    %853 = vector.shape_cast %852 : vector<1x1xf32> to vector<1x1xf32>
    %854 = vector.broadcast %853 : vector<1x1xf32> to vector<1x16xf32>
    %855 = arith.select %851, %854, %845 : vector<1x16xi1>, vector<1x16xf32>
    %856 = vector.extract_strided_slice %713 {offsets = [0, 13], sizes = [1, 1], strides = [1, 1]} : vector<1x16xf32> to vector<1x1xf32>
    %857 = vector.shape_cast %856 : vector<1x1xf32> to vector<1x1xf32>
    %858 = vector.broadcast %857 : vector<1x1xf32> to vector<1x16xf32>
    %859 = arith.select %851, %858, %849 : vector<1x16xi1>, vector<1x16xf32>
    %c13_i32_144 = arith.constant 13 : i32
    %860 = vector.broadcast %c13_i32_144 : i32 to vector<1x16xi32>
    %861 = arith.cmpi eq, %725, %860 : vector<1x16xi32>
    %862 = vector.extract_strided_slice %713 {offsets = [0, 13], sizes = [1, 1], strides = [1, 1]} : vector<1x16xf32> to vector<1x1xf32>
    %863 = vector.shape_cast %862 : vector<1x1xf32> to vector<1x1xf32>
    %864 = vector.broadcast %863 : vector<1x1xf32> to vector<1x16xf32>
    %865 = arith.select %861, %864, %855 : vector<1x16xi1>, vector<1x16xf32>
    %866 = vector.extract_strided_slice %713 {offsets = [0, 14], sizes = [1, 1], strides = [1, 1]} : vector<1x16xf32> to vector<1x1xf32>
    %867 = vector.shape_cast %866 : vector<1x1xf32> to vector<1x1xf32>
    %868 = vector.broadcast %867 : vector<1x1xf32> to vector<1x16xf32>
    %869 = arith.select %861, %868, %859 : vector<1x16xi1>, vector<1x16xf32>
    %c14_i32_145 = arith.constant 14 : i32
    %870 = vector.broadcast %c14_i32_145 : i32 to vector<1x16xi32>
    %871 = arith.cmpi eq, %725, %870 : vector<1x16xi32>
    %872 = vector.extract_strided_slice %713 {offsets = [0, 14], sizes = [1, 1], strides = [1, 1]} : vector<1x16xf32> to vector<1x1xf32>
    %873 = vector.shape_cast %872 : vector<1x1xf32> to vector<1x1xf32>
    %874 = vector.broadcast %873 : vector<1x1xf32> to vector<1x16xf32>
    %875 = arith.select %871, %874, %865 : vector<1x16xi1>, vector<1x16xf32>
    %876 = vector.extract_strided_slice %713 {offsets = [0, 15], sizes = [1, 1], strides = [1, 1]} : vector<1x16xf32> to vector<1x1xf32>
    %877 = vector.shape_cast %876 : vector<1x1xf32> to vector<1x1xf32>
    %878 = vector.broadcast %877 : vector<1x1xf32> to vector<1x16xf32>
    %879 = arith.select %871, %878, %869 : vector<1x16xi1>, vector<1x16xf32>
    %cst_146 = arith.constant 1.000000e+00 : f32
    %880 = vector.broadcast %cst_146 : f32 to vector<1x16xf32>
    %881 = arith.subf %880, %727 : vector<1x16xf32>
    %882 = arith.mulf %875, %881 : vector<1x16xf32>
    %883 = arith.mulf %879, %727 : vector<1x16xf32>
    %884 = arith.addf %882, %883 : vector<1x16xf32>
    %cst_147 = arith.constant 0.000000e+00 : f32
    %cst_148 = arith.constant 1.000000e+00 : f32
    %885 = vector.broadcast %cst_147 : f32 to vector<1x16xf32>
    %886 = arith.maximumf %885, %884 : vector<1x16xf32>
    %887 = vector.broadcast %cst_148 : f32 to vector<1x16xf32>
    %888 = arith.minimumf %887, %886 : vector<1x16xf32>
    %cst_149 = arith.constant 1.500000e+01 : f32
    %889 = vector.broadcast %cst_149 : f32 to vector<1x16xf32>
    %890 = arith.mulf %888, %889 : vector<1x16xf32>
    %891 = tpu.iota {dimensions = array<i32: 2>} : vector<1x1x16xi32>
    %892 = arith.sitofp %891 : vector<1x1x16xi32> to vector<1x1x16xf32>
    %893 = vector.shape_cast %890 : vector<1x16xf32> to vector<1x16x1xf32>
    %894 = vector.broadcast %893 : vector<1x16x1xf32> to vector<1x16x16xf32>
    %895 = vector.broadcast %892 : vector<1x1x16xf32> to vector<1x16x16xf32>
    %896 = arith.subf %894, %895 : vector<1x16x16xf32>
    %897 = math.absf %896 : vector<1x16x16xf32>
    %cst_150 = arith.constant 1.000000e+00 : f32
    %898 = vector.broadcast %cst_150 : f32 to vector<1x16x16xf32>
    %899 = arith.subf %898, %897 : vector<1x16x16xf32>
    %cst_151 = arith.constant 0.000000e+00 : f32
    %900 = vector.broadcast %cst_151 : f32 to vector<1x16x16xf32>
    %901 = arith.maximumf %899, %900 : vector<1x16x16xf32>
    "tpu.trace_start"() <{level = 10 : i32, message = "bol,blc->boc"}> : () -> ()
    %cst_152 = arith.constant dense<0.000000e+00> : vector<1x16x3xf32>
    %902 = tpu.matmul %901, %28, %cst_152 {dimension_numbers = #tpu.dot_dimension_numbers<[2], [1], [1], [2], [0, 0, 0, 1, 1, 2], [0], [0]>} : vector<1x16x16xf32>, vector<1x16x3xf32>, vector<1x16x3xf32> -> vector<1x16x3xf32>
    %cst_153 = arith.constant 0.000000e+00 : f32
    "tpu.trace_stop"() : () -> ()
    %903 = vector.broadcast %cst_153 : f32 to vector<16x20xf32>
    %cst_154 = arith.constant 0.000000e+00 : f32
    %904 = vector.broadcast %cst_154 : f32 to vector<1x3x3xf32>
    %cst_155 = arith.constant 0.000000e+00 : f32
    %905 = vector.broadcast %cst_155 : f32 to vector<1x4x3xf32>
    %906 = tpu.concatenate %904, %902, %905 in 1 : vector<1x3x3xf32>, vector<1x16x3xf32>, vector<1x4x3xf32> -> vector<1x23x3xf32>
    %907 = vector.extract_strided_slice %906 {offsets = [0, 0, 0], sizes = [1, 16, 3], strides = [1, 1, 1]} : vector<1x23x3xf32> to vector<1x16x3xf32>
    %908 = vector.shape_cast %907 : vector<1x16x3xf32> to vector<16x3xf32>
    %909 = vector.extract_strided_slice %0 {offsets = [0, 0, 0], sizes = [1, 3, 20], strides = [1, 1, 1]} : vector<8x3x20xbf16> to vector<1x3x20xbf16>
    %910 = vector.shape_cast %909 : vector<1x3x20xbf16> to vector<3x20xbf16>
    %911 = arith.truncf %908 : vector<16x3xf32> to vector<16x3xbf16>
    %cst_156 = arith.constant dense<0.000000e+00> : vector<16x20xf32>
    %912 = tpu.matmul %911, %910, %cst_156 {dimension_numbers = #tpu.dot_dimension_numbers<[1], [0], [0], [1], [0, 0, 1, 1], [], []>} : vector<16x3xbf16>, vector<3x20xbf16>, vector<16x20xf32> -> vector<16x20xf32>
    %913 = arith.addf %903, %912 : vector<16x20xf32>
    %914 = vector.extract_strided_slice %906 {offsets = [0, 1, 0], sizes = [1, 16, 3], strides = [1, 1, 1]} : vector<1x23x3xf32> to vector<1x16x3xf32>
    %915 = vector.shape_cast %914 : vector<1x16x3xf32> to vector<16x3xf32>
    %916 = vector.extract_strided_slice %0 {offsets = [1, 0, 0], sizes = [1, 3, 20], strides = [1, 1, 1]} : vector<8x3x20xbf16> to vector<1x3x20xbf16>
    %917 = vector.shape_cast %916 : vector<1x3x20xbf16> to vector<3x20xbf16>
    %918 = arith.truncf %915 : vector<16x3xf32> to vector<16x3xbf16>
    %cst_157 = arith.constant dense<0.000000e+00> : vector<16x20xf32>
    %919 = tpu.matmul %918, %917, %cst_157 {dimension_numbers = #tpu.dot_dimension_numbers<[1], [0], [0], [1], [0, 0, 1, 1], [], []>} : vector<16x3xbf16>, vector<3x20xbf16>, vector<16x20xf32> -> vector<16x20xf32>
    %920 = arith.addf %913, %919 : vector<16x20xf32>
    %921 = vector.extract_strided_slice %906 {offsets = [0, 2, 0], sizes = [1, 16, 3], strides = [1, 1, 1]} : vector<1x23x3xf32> to vector<1x16x3xf32>
    %922 = vector.shape_cast %921 : vector<1x16x3xf32> to vector<16x3xf32>
    %923 = vector.extract_strided_slice %0 {offsets = [2, 0, 0], sizes = [1, 3, 20], strides = [1, 1, 1]} : vector<8x3x20xbf16> to vector<1x3x20xbf16>
    %924 = vector.shape_cast %923 : vector<1x3x20xbf16> to vector<3x20xbf16>
    %925 = arith.truncf %922 : vector<16x3xf32> to vector<16x3xbf16>
    %cst_158 = arith.constant dense<0.000000e+00> : vector<16x20xf32>
    %926 = tpu.matmul %925, %924, %cst_158 {dimension_numbers = #tpu.dot_dimension_numbers<[1], [0], [0], [1], [0, 0, 1, 1], [], []>} : vector<16x3xbf16>, vector<3x20xbf16>, vector<16x20xf32> -> vector<16x20xf32>
    %927 = arith.addf %920, %926 : vector<16x20xf32>
    %928 = vector.extract_strided_slice %906 {offsets = [0, 3, 0], sizes = [1, 16, 3], strides = [1, 1, 1]} : vector<1x23x3xf32> to vector<1x16x3xf32>
    %929 = vector.shape_cast %928 : vector<1x16x3xf32> to vector<16x3xf32>
    %930 = vector.extract_strided_slice %0 {offsets = [3, 0, 0], sizes = [1, 3, 20], strides = [1, 1, 1]} : vector<8x3x20xbf16> to vector<1x3x20xbf16>
    %931 = vector.shape_cast %930 : vector<1x3x20xbf16> to vector<3x20xbf16>
    %932 = arith.truncf %929 : vector<16x3xf32> to vector<16x3xbf16>
    %cst_159 = arith.constant dense<0.000000e+00> : vector<16x20xf32>
    %933 = tpu.matmul %932, %931, %cst_159 {dimension_numbers = #tpu.dot_dimension_numbers<[1], [0], [0], [1], [0, 0, 1, 1], [], []>} : vector<16x3xbf16>, vector<3x20xbf16>, vector<16x20xf32> -> vector<16x20xf32>
    %934 = arith.addf %927, %933 : vector<16x20xf32>
    %935 = vector.extract_strided_slice %906 {offsets = [0, 4, 0], sizes = [1, 16, 3], strides = [1, 1, 1]} : vector<1x23x3xf32> to vector<1x16x3xf32>
    %936 = vector.shape_cast %935 : vector<1x16x3xf32> to vector<16x3xf32>
    %937 = vector.extract_strided_slice %0 {offsets = [4, 0, 0], sizes = [1, 3, 20], strides = [1, 1, 1]} : vector<8x3x20xbf16> to vector<1x3x20xbf16>
    %938 = vector.shape_cast %937 : vector<1x3x20xbf16> to vector<3x20xbf16>
    %939 = arith.truncf %936 : vector<16x3xf32> to vector<16x3xbf16>
    %cst_160 = arith.constant dense<0.000000e+00> : vector<16x20xf32>
    %940 = tpu.matmul %939, %938, %cst_160 {dimension_numbers = #tpu.dot_dimension_numbers<[1], [0], [0], [1], [0, 0, 1, 1], [], []>} : vector<16x3xbf16>, vector<3x20xbf16>, vector<16x20xf32> -> vector<16x20xf32>
    %941 = arith.addf %934, %940 : vector<16x20xf32>
    %942 = vector.extract_strided_slice %906 {offsets = [0, 5, 0], sizes = [1, 16, 3], strides = [1, 1, 1]} : vector<1x23x3xf32> to vector<1x16x3xf32>
    %943 = vector.shape_cast %942 : vector<1x16x3xf32> to vector<16x3xf32>
    %944 = vector.extract_strided_slice %0 {offsets = [5, 0, 0], sizes = [1, 3, 20], strides = [1, 1, 1]} : vector<8x3x20xbf16> to vector<1x3x20xbf16>
    %945 = vector.shape_cast %944 : vector<1x3x20xbf16> to vector<3x20xbf16>
    %946 = arith.truncf %943 : vector<16x3xf32> to vector<16x3xbf16>
    %cst_161 = arith.constant dense<0.000000e+00> : vector<16x20xf32>
    %947 = tpu.matmul %946, %945, %cst_161 {dimension_numbers = #tpu.dot_dimension_numbers<[1], [0], [0], [1], [0, 0, 1, 1], [], []>} : vector<16x3xbf16>, vector<3x20xbf16>, vector<16x20xf32> -> vector<16x20xf32>
    %948 = arith.addf %941, %947 : vector<16x20xf32>
    %949 = vector.extract_strided_slice %906 {offsets = [0, 6, 0], sizes = [1, 16, 3], strides = [1, 1, 1]} : vector<1x23x3xf32> to vector<1x16x3xf32>
    %950 = vector.shape_cast %949 : vector<1x16x3xf32> to vector<16x3xf32>
    %951 = vector.extract_strided_slice %0 {offsets = [6, 0, 0], sizes = [1, 3, 20], strides = [1, 1, 1]} : vector<8x3x20xbf16> to vector<1x3x20xbf16>
    %952 = vector.shape_cast %951 : vector<1x3x20xbf16> to vector<3x20xbf16>
    %953 = arith.truncf %950 : vector<16x3xf32> to vector<16x3xbf16>
    %cst_162 = arith.constant dense<0.000000e+00> : vector<16x20xf32>
    %954 = tpu.matmul %953, %952, %cst_162 {dimension_numbers = #tpu.dot_dimension_numbers<[1], [0], [0], [1], [0, 0, 1, 1], [], []>} : vector<16x3xbf16>, vector<3x20xbf16>, vector<16x20xf32> -> vector<16x20xf32>
    %955 = arith.addf %948, %954 : vector<16x20xf32>
    %956 = vector.extract_strided_slice %906 {offsets = [0, 7, 0], sizes = [1, 16, 3], strides = [1, 1, 1]} : vector<1x23x3xf32> to vector<1x16x3xf32>
    %957 = vector.shape_cast %956 : vector<1x16x3xf32> to vector<16x3xf32>
    %958 = vector.extract_strided_slice %0 {offsets = [7, 0, 0], sizes = [1, 3, 20], strides = [1, 1, 1]} : vector<8x3x20xbf16> to vector<1x3x20xbf16>
    %959 = vector.shape_cast %958 : vector<1x3x20xbf16> to vector<3x20xbf16>
    %960 = arith.truncf %957 : vector<16x3xf32> to vector<16x3xbf16>
    %cst_163 = arith.constant dense<0.000000e+00> : vector<16x20xf32>
    %961 = tpu.matmul %960, %959, %cst_163 {dimension_numbers = #tpu.dot_dimension_numbers<[1], [0], [0], [1], [0, 0, 1, 1], [], []>} : vector<16x3xbf16>, vector<3x20xbf16>, vector<16x20xf32> -> vector<16x20xf32>
    %962 = arith.addf %955, %961 : vector<16x20xf32>
    %963 = vector.broadcast %1 : vector<1x20xf32> to vector<16x20xf32>
    %964 = arith.addf %962, %963 : vector<16x20xf32>
    %cst_164 = arith.constant 0.000000e+00 : f32
    %965 = vector.broadcast %cst_164 : f32 to vector<16x20xf32>
    %966 = arith.maximumf %964, %965 : vector<16x20xf32>
    %967 = vector.shape_cast %966 : vector<16x20xf32> to vector<1x16x20xf32>
    %cst_165 = arith.constant 0.000000e+00 : f32
    %968 = vector.broadcast %cst_165 : f32 to vector<16x20xf32>
    %cst_166 = arith.constant 0.000000e+00 : f32
    %969 = vector.broadcast %cst_166 : f32 to vector<1x3x20xf32>
    %cst_167 = arith.constant 0.000000e+00 : f32
    %970 = vector.broadcast %cst_167 : f32 to vector<1x4x20xf32>
    %971 = tpu.concatenate %969, %967, %970 in 1 : vector<1x3x20xf32>, vector<1x16x20xf32>, vector<1x4x20xf32> -> vector<1x23x20xf32>
    %972 = vector.extract_strided_slice %971 {offsets = [0, 0, 0], sizes = [1, 16, 20], strides = [1, 1, 1]} : vector<1x23x20xf32> to vector<1x16x20xf32>
    %973 = vector.shape_cast %972 : vector<1x16x20xf32> to vector<16x20xf32>
    %974 = vector.extract_strided_slice %2 {offsets = [0, 0, 0], sizes = [1, 20, 20], strides = [1, 1, 1]} : vector<8x20x20xbf16> to vector<1x20x20xbf16>
    %975 = vector.shape_cast %974 : vector<1x20x20xbf16> to vector<20x20xbf16>
    %976 = arith.truncf %973 : vector<16x20xf32> to vector<16x20xbf16>
    %cst_168 = arith.constant dense<0.000000e+00> : vector<16x20xf32>
    %977 = tpu.matmul %976, %975, %cst_168 {dimension_numbers = #tpu.dot_dimension_numbers<[1], [0], [0], [1], [0, 0, 1, 1], [], []>} : vector<16x20xbf16>, vector<20x20xbf16>, vector<16x20xf32> -> vector<16x20xf32>
    %978 = arith.addf %968, %977 : vector<16x20xf32>
    %979 = vector.extract_strided_slice %971 {offsets = [0, 1, 0], sizes = [1, 16, 20], strides = [1, 1, 1]} : vector<1x23x20xf32> to vector<1x16x20xf32>
    %980 = vector.shape_cast %979 : vector<1x16x20xf32> to vector<16x20xf32>
    %981 = vector.extract_strided_slice %2 {offsets = [1, 0, 0], sizes = [1, 20, 20], strides = [1, 1, 1]} : vector<8x20x20xbf16> to vector<1x20x20xbf16>
    %982 = vector.shape_cast %981 : vector<1x20x20xbf16> to vector<20x20xbf16>
    %983 = arith.truncf %980 : vector<16x20xf32> to vector<16x20xbf16>
    %cst_169 = arith.constant dense<0.000000e+00> : vector<16x20xf32>
    %984 = tpu.matmul %983, %982, %cst_169 {dimension_numbers = #tpu.dot_dimension_numbers<[1], [0], [0], [1], [0, 0, 1, 1], [], []>} : vector<16x20xbf16>, vector<20x20xbf16>, vector<16x20xf32> -> vector<16x20xf32>
    %985 = arith.addf %978, %984 : vector<16x20xf32>
    %986 = vector.extract_strided_slice %971 {offsets = [0, 2, 0], sizes = [1, 16, 20], strides = [1, 1, 1]} : vector<1x23x20xf32> to vector<1x16x20xf32>
    %987 = vector.shape_cast %986 : vector<1x16x20xf32> to vector<16x20xf32>
    %988 = vector.extract_strided_slice %2 {offsets = [2, 0, 0], sizes = [1, 20, 20], strides = [1, 1, 1]} : vector<8x20x20xbf16> to vector<1x20x20xbf16>
    %989 = vector.shape_cast %988 : vector<1x20x20xbf16> to vector<20x20xbf16>
    %990 = arith.truncf %987 : vector<16x20xf32> to vector<16x20xbf16>
    %cst_170 = arith.constant dense<0.000000e+00> : vector<16x20xf32>
    %991 = tpu.matmul %990, %989, %cst_170 {dimension_numbers = #tpu.dot_dimension_numbers<[1], [0], [0], [1], [0, 0, 1, 1], [], []>} : vector<16x20xbf16>, vector<20x20xbf16>, vector<16x20xf32> -> vector<16x20xf32>
    %992 = arith.addf %985, %991 : vector<16x20xf32>
    %993 = vector.extract_strided_slice %971 {offsets = [0, 3, 0], sizes = [1, 16, 20], strides = [1, 1, 1]} : vector<1x23x20xf32> to vector<1x16x20xf32>
    %994 = vector.shape_cast %993 : vector<1x16x20xf32> to vector<16x20xf32>
    %995 = vector.extract_strided_slice %2 {offsets = [3, 0, 0], sizes = [1, 20, 20], strides = [1, 1, 1]} : vector<8x20x20xbf16> to vector<1x20x20xbf16>
    %996 = vector.shape_cast %995 : vector<1x20x20xbf16> to vector<20x20xbf16>
    %997 = arith.truncf %994 : vector<16x20xf32> to vector<16x20xbf16>
    %cst_171 = arith.constant dense<0.000000e+00> : vector<16x20xf32>
    %998 = tpu.matmul %997, %996, %cst_171 {dimension_numbers = #tpu.dot_dimension_numbers<[1], [0], [0], [1], [0, 0, 1, 1], [], []>} : vector<16x20xbf16>, vector<20x20xbf16>, vector<16x20xf32> -> vector<16x20xf32>
    %999 = arith.addf %992, %998 : vector<16x20xf32>
    %1000 = vector.extract_strided_slice %971 {offsets = [0, 4, 0], sizes = [1, 16, 20], strides = [1, 1, 1]} : vector<1x23x20xf32> to vector<1x16x20xf32>
    %1001 = vector.shape_cast %1000 : vector<1x16x20xf32> to vector<16x20xf32>
    %1002 = vector.extract_strided_slice %2 {offsets = [4, 0, 0], sizes = [1, 20, 20], strides = [1, 1, 1]} : vector<8x20x20xbf16> to vector<1x20x20xbf16>
    %1003 = vector.shape_cast %1002 : vector<1x20x20xbf16> to vector<20x20xbf16>
    %1004 = arith.truncf %1001 : vector<16x20xf32> to vector<16x20xbf16>
    %cst_172 = arith.constant dense<0.000000e+00> : vector<16x20xf32>
    %1005 = tpu.matmul %1004, %1003, %cst_172 {dimension_numbers = #tpu.dot_dimension_numbers<[1], [0], [0], [1], [0, 0, 1, 1], [], []>} : vector<16x20xbf16>, vector<20x20xbf16>, vector<16x20xf32> -> vector<16x20xf32>
    %1006 = arith.addf %999, %1005 : vector<16x20xf32>
    %1007 = vector.extract_strided_slice %971 {offsets = [0, 5, 0], sizes = [1, 16, 20], strides = [1, 1, 1]} : vector<1x23x20xf32> to vector<1x16x20xf32>
    %1008 = vector.shape_cast %1007 : vector<1x16x20xf32> to vector<16x20xf32>
    %1009 = vector.extract_strided_slice %2 {offsets = [5, 0, 0], sizes = [1, 20, 20], strides = [1, 1, 1]} : vector<8x20x20xbf16> to vector<1x20x20xbf16>
    %1010 = vector.shape_cast %1009 : vector<1x20x20xbf16> to vector<20x20xbf16>
    %1011 = arith.truncf %1008 : vector<16x20xf32> to vector<16x20xbf16>
    %cst_173 = arith.constant dense<0.000000e+00> : vector<16x20xf32>
    %1012 = tpu.matmul %1011, %1010, %cst_173 {dimension_numbers = #tpu.dot_dimension_numbers<[1], [0], [0], [1], [0, 0, 1, 1], [], []>} : vector<16x20xbf16>, vector<20x20xbf16>, vector<16x20xf32> -> vector<16x20xf32>
    %1013 = arith.addf %1006, %1012 : vector<16x20xf32>
    %1014 = vector.extract_strided_slice %971 {offsets = [0, 6, 0], sizes = [1, 16, 20], strides = [1, 1, 1]} : vector<1x23x20xf32> to vector<1x16x20xf32>
    %1015 = vector.shape_cast %1014 : vector<1x16x20xf32> to vector<16x20xf32>
    %1016 = vector.extract_strided_slice %2 {offsets = [6, 0, 0], sizes = [1, 20, 20], strides = [1, 1, 1]} : vector<8x20x20xbf16> to vector<1x20x20xbf16>
    %1017 = vector.shape_cast %1016 : vector<1x20x20xbf16> to vector<20x20xbf16>
    %1018 = arith.truncf %1015 : vector<16x20xf32> to vector<16x20xbf16>
    %cst_174 = arith.constant dense<0.000000e+00> : vector<16x20xf32>
    %1019 = tpu.matmul %1018, %1017, %cst_174 {dimension_numbers = #tpu.dot_dimension_numbers<[1], [0], [0], [1], [0, 0, 1, 1], [], []>} : vector<16x20xbf16>, vector<20x20xbf16>, vector<16x20xf32> -> vector<16x20xf32>
    %1020 = arith.addf %1013, %1019 : vector<16x20xf32>
    %1021 = vector.extract_strided_slice %971 {offsets = [0, 7, 0], sizes = [1, 16, 20], strides = [1, 1, 1]} : vector<1x23x20xf32> to vector<1x16x20xf32>
    %1022 = vector.shape_cast %1021 : vector<1x16x20xf32> to vector<16x20xf32>
    %1023 = vector.extract_strided_slice %2 {offsets = [7, 0, 0], sizes = [1, 20, 20], strides = [1, 1, 1]} : vector<8x20x20xbf16> to vector<1x20x20xbf16>
    %1024 = vector.shape_cast %1023 : vector<1x20x20xbf16> to vector<20x20xbf16>
    %1025 = arith.truncf %1022 : vector<16x20xf32> to vector<16x20xbf16>
    %cst_175 = arith.constant dense<0.000000e+00> : vector<16x20xf32>
    %1026 = tpu.matmul %1025, %1024, %cst_175 {dimension_numbers = #tpu.dot_dimension_numbers<[1], [0], [0], [1], [0, 0, 1, 1], [], []>} : vector<16x20xbf16>, vector<20x20xbf16>, vector<16x20xf32> -> vector<16x20xf32>
    %1027 = arith.addf %1020, %1026 : vector<16x20xf32>
    %1028 = vector.broadcast %3 : vector<1x20xf32> to vector<16x20xf32>
    %1029 = arith.addf %1027, %1028 : vector<16x20xf32>
    %cst_176 = arith.constant 0.000000e+00 : f32
    %1030 = vector.broadcast %cst_176 : f32 to vector<16x20xf32>
    %1031 = arith.maximumf %1029, %1030 : vector<16x20xf32>
    %1032 = vector.shape_cast %1031 : vector<16x20xf32> to vector<1x16x20xf32>
    %1033 = vector.shape_cast %1032 : vector<1x16x20xf32> to vector<16x20xf32>
    %cst_177 = arith.constant dense<0.000000e+00> : vector<16x11xf32>
    %1034 = tpu.matmul %1033, %4, %cst_177 {dimension_numbers = #tpu.dot_dimension_numbers<[1], [0], [0], [1], [0, 0, 1, 1], [], []>} : vector<16x20xf32>, vector<20x11xf32>, vector<16x11xf32> -> vector<16x11xf32>
    %1035 = vector.shape_cast %1034 : vector<16x11xf32> to vector<1x16x11xf32>
    %cst_178 = arith.constant dense<0.000000e+00> : vector<1x11xf32>
    %1036 = vector.multi_reduction <add>, %1035, %cst_178 [1] : vector<1x16x11xf32> to vector<1x11xf32>
    %cst_179 = arith.constant 1.600000e+01 : f32
    %1037 = vector.broadcast %cst_179 : f32 to vector<1x11xf32>
    %1038 = arith.divf %1036, %1037 : vector<1x11xf32>
    %1039 = arith.addf %1038, %5 : vector<1x11xf32>
    %cst_180 = arith.constant dense<0.000000e+00> : vector<1x16xf32>
    %1040 = tpu.matmul %1039, %6, %cst_180 {dimension_numbers = #tpu.dot_dimension_numbers<[1], [0], [0], [1], [0, 0, 1, 1], [], []>} : vector<1x11xf32>, vector<11x16xf32>, vector<1x16xf32> -> vector<1x16xf32>
    %1041 = arith.addf %1040, %7 : vector<1x16xf32>
    %cst_181 = arith.constant 0.000000e+00 : f32
    %1042 = vector.broadcast %cst_181 : f32 to vector<1x16xf32>
    %1043 = arith.maximumf %1041, %1042 : vector<1x16xf32>
    %cst_182 = arith.constant dense<0.000000e+00> : vector<1x7xf32>
    %1044 = tpu.matmul %1043, %8, %cst_182 {dimension_numbers = #tpu.dot_dimension_numbers<[1], [0], [0], [1], [0, 0, 1, 1], [], []>} : vector<1x16xf32>, vector<16x7xf32>, vector<1x7xf32> -> vector<1x7xf32>
    %1045 = arith.addf %1044, %9 : vector<1x7xf32>
    %1046 = vector.shape_cast %1045 : vector<1x7xf32> to vector<1x1x7xf32>
    %cst_183 = arith.constant dense<0.000000e+00> : vector<1x16xf32>
    %1047 = tpu.matmul %1045, %10, %cst_183 {dimension_numbers = #tpu.dot_dimension_numbers<[1], [0], [0], [1], [0, 0, 1, 1], [], []>} : vector<1x7xf32>, vector<7x16xf32>, vector<1x16xf32> -> vector<1x16xf32>
    %1048 = vector.extract_strided_slice %1047 {offsets = [0, 0], sizes = [1, 8], strides = [1, 1]} : vector<1x16xf32> to vector<1x8xf32>
    %cst_184 = arith.constant dense<0.000000e+00> : vector<1x16xf32>
    %1049 = tpu.matmul %1048, %27, %cst_184 {dimension_numbers = #tpu.dot_dimension_numbers<[1], [0], [0], [1], [0, 0, 1, 1], [], []>} : vector<1x8xf32>, vector<8x16xf32>, vector<1x16xf32> -> vector<1x16xf32>
    %1050 = vector.extract_strided_slice %1047 {offsets = [0, 8], sizes = [1, 8], strides = [1, 1]} : vector<1x16xf32> to vector<1x8xf32>
    %cst_185 = arith.constant dense<0.000000e+00> : vector<1x16xf32>
    %1051 = tpu.matmul %1050, %27, %cst_185 {dimension_numbers = #tpu.dot_dimension_numbers<[1], [0], [0], [1], [0, 0, 1, 1], [], []>} : vector<1x8xf32>, vector<8x16xf32>, vector<1x16xf32> -> vector<1x16xf32>
    %1052 = math.absf %1049 : vector<1x16xf32>
    %cst_186 = arith.constant 1.000000e-07 : f32
    %1053 = vector.broadcast %cst_186 : f32 to vector<1x16xf32>
    %1054 = arith.cmpf olt, %1052, %1053 : vector<1x16xf32>
    %cst_187 = arith.constant 6.250000e-02 : f32
    %1055 = vector.broadcast %cst_187 : f32 to vector<1x16xf32>
    %1056 = arith.mulf %1049, %1055 : vector<1x16xf32>
    %1057 = math.exp %1056 : vector<1x16xf32>
    %cst_188 = arith.constant 5.000000e-01 : f32
    %1058 = vector.broadcast %cst_188 : f32 to vector<1x16xf32>
    %1059 = arith.mulf %1058, %1049 : vector<1x16xf32>
    %cst_189 = arith.constant 6.250000e-02 : f32
    %1060 = vector.broadcast %cst_189 : f32 to vector<1x16xf32>
    %1061 = arith.mulf %1059, %1060 : vector<1x16xf32>
    %cst_190 = arith.constant 1.000000e+00 : f32
    %1062 = vector.broadcast %cst_190 : f32 to vector<1x16xf32>
    %1063 = arith.addf %1062, %1061 : vector<1x16xf32>
    %cst_191 = arith.constant 6.250000e-02 : f32
    %1064 = vector.broadcast %cst_191 : f32 to vector<1x16xf32>
    %1065 = arith.mulf %1064, %1063 : vector<1x16xf32>
    %cst_192 = arith.constant 1.000000e+00 : f32
    %1066 = vector.broadcast %cst_192 : f32 to vector<1x16xf32>
    %1067 = arith.subf %1057, %1066 : vector<1x16xf32>
    %cst_193 = arith.constant 1.000000e+00 : f32
    %1068 = vector.broadcast %cst_193 : f32 to vector<1x16xf32>
    %1069 = arith.select %1054, %1068, %1049 : vector<1x16xi1>, vector<1x16xf32>
    %1070 = arith.divf %1067, %1069 : vector<1x16xf32>
    %1071 = arith.select %1054, %1065, %1070 : vector<1x16xi1>, vector<1x16xf32>
    %1072 = arith.mulf %14, %1057 : vector<1x16xf32>
    %1073 = arith.mulf %1051, %1071 : vector<1x16xf32>
    %1074 = arith.addf %1072, %1073 : vector<1x16xf32>
    %cst_194 = arith.constant 0.000000e+00 : f32
    %cst_195 = arith.constant 1.000000e+00 : f32
    %1075 = vector.broadcast %cst_194 : f32 to vector<1x16xf32>
    %1076 = arith.maximumf %1075, %1074 : vector<1x16xf32>
    %1077 = vector.broadcast %cst_195 : f32 to vector<1x16xf32>
    %1078 = arith.minimumf %1077, %1076 : vector<1x16xf32>
    %cst_196 = arith.constant 1.500000e+01 : f32
    %1079 = vector.broadcast %cst_196 : f32 to vector<1x16xf32>
    %1080 = arith.mulf %1078, %1079 : vector<1x16xf32>
    %1081 = math.floor %1080 : vector<1x16xf32>
    %cst_197 = arith.constant 0.000000e+00 : f32
    %cst_198 = arith.constant 1.400000e+01 : f32
    %1082 = vector.broadcast %cst_197 : f32 to vector<1x16xf32>
    %1083 = arith.maximumf %1082, %1081 : vector<1x16xf32>
    %1084 = vector.broadcast %cst_198 : f32 to vector<1x16xf32>
    %1085 = arith.minimumf %1084, %1083 : vector<1x16xf32>
    %1086 = arith.fptosi %1085 : vector<1x16xf32> to vector<1x16xi32>
    %1087 = arith.sitofp %1086 : vector<1x16xi32> to vector<1x16xf32>
    %1088 = arith.subf %1080, %1087 : vector<1x16xf32>
    %cst_199 = arith.constant 0.000000e+00 : f32
    %1089 = vector.broadcast %cst_199 : f32 to vector<1x16xf32>
    %cst_200 = arith.constant 0.000000e+00 : f32
    %1090 = vector.broadcast %cst_200 : f32 to vector<1x16xf32>
    %c0_i32_201 = arith.constant 0 : i32
    %1091 = vector.broadcast %c0_i32_201 : i32 to vector<1x16xi32>
    %1092 = arith.cmpi eq, %1086, %1091 : vector<1x16xi32>
    %1093 = vector.extract_strided_slice %1074 {offsets = [0, 0], sizes = [1, 1], strides = [1, 1]} : vector<1x16xf32> to vector<1x1xf32>
    %1094 = vector.shape_cast %1093 : vector<1x1xf32> to vector<1x1xf32>
    %1095 = vector.broadcast %1094 : vector<1x1xf32> to vector<1x16xf32>
    %1096 = arith.select %1092, %1095, %1089 : vector<1x16xi1>, vector<1x16xf32>
    %1097 = vector.extract_strided_slice %1074 {offsets = [0, 1], sizes = [1, 1], strides = [1, 1]} : vector<1x16xf32> to vector<1x1xf32>
    %1098 = vector.shape_cast %1097 : vector<1x1xf32> to vector<1x1xf32>
    %1099 = vector.broadcast %1098 : vector<1x1xf32> to vector<1x16xf32>
    %1100 = arith.select %1092, %1099, %1090 : vector<1x16xi1>, vector<1x16xf32>
    %c1_i32_202 = arith.constant 1 : i32
    %1101 = vector.broadcast %c1_i32_202 : i32 to vector<1x16xi32>
    %1102 = arith.cmpi eq, %1086, %1101 : vector<1x16xi32>
    %1103 = vector.extract_strided_slice %1074 {offsets = [0, 1], sizes = [1, 1], strides = [1, 1]} : vector<1x16xf32> to vector<1x1xf32>
    %1104 = vector.shape_cast %1103 : vector<1x1xf32> to vector<1x1xf32>
    %1105 = vector.broadcast %1104 : vector<1x1xf32> to vector<1x16xf32>
    %1106 = arith.select %1102, %1105, %1096 : vector<1x16xi1>, vector<1x16xf32>
    %1107 = vector.extract_strided_slice %1074 {offsets = [0, 2], sizes = [1, 1], strides = [1, 1]} : vector<1x16xf32> to vector<1x1xf32>
    %1108 = vector.shape_cast %1107 : vector<1x1xf32> to vector<1x1xf32>
    %1109 = vector.broadcast %1108 : vector<1x1xf32> to vector<1x16xf32>
    %1110 = arith.select %1102, %1109, %1100 : vector<1x16xi1>, vector<1x16xf32>
    %c2_i32_203 = arith.constant 2 : i32
    %1111 = vector.broadcast %c2_i32_203 : i32 to vector<1x16xi32>
    %1112 = arith.cmpi eq, %1086, %1111 : vector<1x16xi32>
    %1113 = vector.extract_strided_slice %1074 {offsets = [0, 2], sizes = [1, 1], strides = [1, 1]} : vector<1x16xf32> to vector<1x1xf32>
    %1114 = vector.shape_cast %1113 : vector<1x1xf32> to vector<1x1xf32>
    %1115 = vector.broadcast %1114 : vector<1x1xf32> to vector<1x16xf32>
    %1116 = arith.select %1112, %1115, %1106 : vector<1x16xi1>, vector<1x16xf32>
    %1117 = vector.extract_strided_slice %1074 {offsets = [0, 3], sizes = [1, 1], strides = [1, 1]} : vector<1x16xf32> to vector<1x1xf32>
    %1118 = vector.shape_cast %1117 : vector<1x1xf32> to vector<1x1xf32>
    %1119 = vector.broadcast %1118 : vector<1x1xf32> to vector<1x16xf32>
    %1120 = arith.select %1112, %1119, %1110 : vector<1x16xi1>, vector<1x16xf32>
    %c3_i32_204 = arith.constant 3 : i32
    %1121 = vector.broadcast %c3_i32_204 : i32 to vector<1x16xi32>
    %1122 = arith.cmpi eq, %1086, %1121 : vector<1x16xi32>
    %1123 = vector.extract_strided_slice %1074 {offsets = [0, 3], sizes = [1, 1], strides = [1, 1]} : vector<1x16xf32> to vector<1x1xf32>
    %1124 = vector.shape_cast %1123 : vector<1x1xf32> to vector<1x1xf32>
    %1125 = vector.broadcast %1124 : vector<1x1xf32> to vector<1x16xf32>
    %1126 = arith.select %1122, %1125, %1116 : vector<1x16xi1>, vector<1x16xf32>
    %1127 = vector.extract_strided_slice %1074 {offsets = [0, 4], sizes = [1, 1], strides = [1, 1]} : vector<1x16xf32> to vector<1x1xf32>
    %1128 = vector.shape_cast %1127 : vector<1x1xf32> to vector<1x1xf32>
    %1129 = vector.broadcast %1128 : vector<1x1xf32> to vector<1x16xf32>
    %1130 = arith.select %1122, %1129, %1120 : vector<1x16xi1>, vector<1x16xf32>
    %c4_i32_205 = arith.constant 4 : i32
    %1131 = vector.broadcast %c4_i32_205 : i32 to vector<1x16xi32>
    %1132 = arith.cmpi eq, %1086, %1131 : vector<1x16xi32>
    %1133 = vector.extract_strided_slice %1074 {offsets = [0, 4], sizes = [1, 1], strides = [1, 1]} : vector<1x16xf32> to vector<1x1xf32>
    %1134 = vector.shape_cast %1133 : vector<1x1xf32> to vector<1x1xf32>
    %1135 = vector.broadcast %1134 : vector<1x1xf32> to vector<1x16xf32>
    %1136 = arith.select %1132, %1135, %1126 : vector<1x16xi1>, vector<1x16xf32>
    %1137 = vector.extract_strided_slice %1074 {offsets = [0, 5], sizes = [1, 1], strides = [1, 1]} : vector<1x16xf32> to vector<1x1xf32>
    %1138 = vector.shape_cast %1137 : vector<1x1xf32> to vector<1x1xf32>
    %1139 = vector.broadcast %1138 : vector<1x1xf32> to vector<1x16xf32>
    %1140 = arith.select %1132, %1139, %1130 : vector<1x16xi1>, vector<1x16xf32>
    %c5_i32_206 = arith.constant 5 : i32
    %1141 = vector.broadcast %c5_i32_206 : i32 to vector<1x16xi32>
    %1142 = arith.cmpi eq, %1086, %1141 : vector<1x16xi32>
    %1143 = vector.extract_strided_slice %1074 {offsets = [0, 5], sizes = [1, 1], strides = [1, 1]} : vector<1x16xf32> to vector<1x1xf32>
    %1144 = vector.shape_cast %1143 : vector<1x1xf32> to vector<1x1xf32>
    %1145 = vector.broadcast %1144 : vector<1x1xf32> to vector<1x16xf32>
    %1146 = arith.select %1142, %1145, %1136 : vector<1x16xi1>, vector<1x16xf32>
    %1147 = vector.extract_strided_slice %1074 {offsets = [0, 6], sizes = [1, 1], strides = [1, 1]} : vector<1x16xf32> to vector<1x1xf32>
    %1148 = vector.shape_cast %1147 : vector<1x1xf32> to vector<1x1xf32>
    %1149 = vector.broadcast %1148 : vector<1x1xf32> to vector<1x16xf32>
    %1150 = arith.select %1142, %1149, %1140 : vector<1x16xi1>, vector<1x16xf32>
    %c6_i32_207 = arith.constant 6 : i32
    %1151 = vector.broadcast %c6_i32_207 : i32 to vector<1x16xi32>
    %1152 = arith.cmpi eq, %1086, %1151 : vector<1x16xi32>
    %1153 = vector.extract_strided_slice %1074 {offsets = [0, 6], sizes = [1, 1], strides = [1, 1]} : vector<1x16xf32> to vector<1x1xf32>
    %1154 = vector.shape_cast %1153 : vector<1x1xf32> to vector<1x1xf32>
    %1155 = vector.broadcast %1154 : vector<1x1xf32> to vector<1x16xf32>
    %1156 = arith.select %1152, %1155, %1146 : vector<1x16xi1>, vector<1x16xf32>
    %1157 = vector.extract_strided_slice %1074 {offsets = [0, 7], sizes = [1, 1], strides = [1, 1]} : vector<1x16xf32> to vector<1x1xf32>
    %1158 = vector.shape_cast %1157 : vector<1x1xf32> to vector<1x1xf32>
    %1159 = vector.broadcast %1158 : vector<1x1xf32> to vector<1x16xf32>
    %1160 = arith.select %1152, %1159, %1150 : vector<1x16xi1>, vector<1x16xf32>
    %c7_i32_208 = arith.constant 7 : i32
    %1161 = vector.broadcast %c7_i32_208 : i32 to vector<1x16xi32>
    %1162 = arith.cmpi eq, %1086, %1161 : vector<1x16xi32>
    %1163 = vector.extract_strided_slice %1074 {offsets = [0, 7], sizes = [1, 1], strides = [1, 1]} : vector<1x16xf32> to vector<1x1xf32>
    %1164 = vector.shape_cast %1163 : vector<1x1xf32> to vector<1x1xf32>
    %1165 = vector.broadcast %1164 : vector<1x1xf32> to vector<1x16xf32>
    %1166 = arith.select %1162, %1165, %1156 : vector<1x16xi1>, vector<1x16xf32>
    %1167 = vector.extract_strided_slice %1074 {offsets = [0, 8], sizes = [1, 1], strides = [1, 1]} : vector<1x16xf32> to vector<1x1xf32>
    %1168 = vector.shape_cast %1167 : vector<1x1xf32> to vector<1x1xf32>
    %1169 = vector.broadcast %1168 : vector<1x1xf32> to vector<1x16xf32>
    %1170 = arith.select %1162, %1169, %1160 : vector<1x16xi1>, vector<1x16xf32>
    %c8_i32_209 = arith.constant 8 : i32
    %1171 = vector.broadcast %c8_i32_209 : i32 to vector<1x16xi32>
    %1172 = arith.cmpi eq, %1086, %1171 : vector<1x16xi32>
    %1173 = vector.extract_strided_slice %1074 {offsets = [0, 8], sizes = [1, 1], strides = [1, 1]} : vector<1x16xf32> to vector<1x1xf32>
    %1174 = vector.shape_cast %1173 : vector<1x1xf32> to vector<1x1xf32>
    %1175 = vector.broadcast %1174 : vector<1x1xf32> to vector<1x16xf32>
    %1176 = arith.select %1172, %1175, %1166 : vector<1x16xi1>, vector<1x16xf32>
    %1177 = vector.extract_strided_slice %1074 {offsets = [0, 9], sizes = [1, 1], strides = [1, 1]} : vector<1x16xf32> to vector<1x1xf32>
    %1178 = vector.shape_cast %1177 : vector<1x1xf32> to vector<1x1xf32>
    %1179 = vector.broadcast %1178 : vector<1x1xf32> to vector<1x16xf32>
    %1180 = arith.select %1172, %1179, %1170 : vector<1x16xi1>, vector<1x16xf32>
    %c9_i32_210 = arith.constant 9 : i32
    %1181 = vector.broadcast %c9_i32_210 : i32 to vector<1x16xi32>
    %1182 = arith.cmpi eq, %1086, %1181 : vector<1x16xi32>
    %1183 = vector.extract_strided_slice %1074 {offsets = [0, 9], sizes = [1, 1], strides = [1, 1]} : vector<1x16xf32> to vector<1x1xf32>
    %1184 = vector.shape_cast %1183 : vector<1x1xf32> to vector<1x1xf32>
    %1185 = vector.broadcast %1184 : vector<1x1xf32> to vector<1x16xf32>
    %1186 = arith.select %1182, %1185, %1176 : vector<1x16xi1>, vector<1x16xf32>
    %1187 = vector.extract_strided_slice %1074 {offsets = [0, 10], sizes = [1, 1], strides = [1, 1]} : vector<1x16xf32> to vector<1x1xf32>
    %1188 = vector.shape_cast %1187 : vector<1x1xf32> to vector<1x1xf32>
    %1189 = vector.broadcast %1188 : vector<1x1xf32> to vector<1x16xf32>
    %1190 = arith.select %1182, %1189, %1180 : vector<1x16xi1>, vector<1x16xf32>
    %c10_i32_211 = arith.constant 10 : i32
    %1191 = vector.broadcast %c10_i32_211 : i32 to vector<1x16xi32>
    %1192 = arith.cmpi eq, %1086, %1191 : vector<1x16xi32>
    %1193 = vector.extract_strided_slice %1074 {offsets = [0, 10], sizes = [1, 1], strides = [1, 1]} : vector<1x16xf32> to vector<1x1xf32>
    %1194 = vector.shape_cast %1193 : vector<1x1xf32> to vector<1x1xf32>
    %1195 = vector.broadcast %1194 : vector<1x1xf32> to vector<1x16xf32>
    %1196 = arith.select %1192, %1195, %1186 : vector<1x16xi1>, vector<1x16xf32>
    %1197 = vector.extract_strided_slice %1074 {offsets = [0, 11], sizes = [1, 1], strides = [1, 1]} : vector<1x16xf32> to vector<1x1xf32>
    %1198 = vector.shape_cast %1197 : vector<1x1xf32> to vector<1x1xf32>
    %1199 = vector.broadcast %1198 : vector<1x1xf32> to vector<1x16xf32>
    %1200 = arith.select %1192, %1199, %1190 : vector<1x16xi1>, vector<1x16xf32>
    %c11_i32_212 = arith.constant 11 : i32
    %1201 = vector.broadcast %c11_i32_212 : i32 to vector<1x16xi32>
    %1202 = arith.cmpi eq, %1086, %1201 : vector<1x16xi32>
    %1203 = vector.extract_strided_slice %1074 {offsets = [0, 11], sizes = [1, 1], strides = [1, 1]} : vector<1x16xf32> to vector<1x1xf32>
    %1204 = vector.shape_cast %1203 : vector<1x1xf32> to vector<1x1xf32>
    %1205 = vector.broadcast %1204 : vector<1x1xf32> to vector<1x16xf32>
    %1206 = arith.select %1202, %1205, %1196 : vector<1x16xi1>, vector<1x16xf32>
    %1207 = vector.extract_strided_slice %1074 {offsets = [0, 12], sizes = [1, 1], strides = [1, 1]} : vector<1x16xf32> to vector<1x1xf32>
    %1208 = vector.shape_cast %1207 : vector<1x1xf32> to vector<1x1xf32>
    %1209 = vector.broadcast %1208 : vector<1x1xf32> to vector<1x16xf32>
    %1210 = arith.select %1202, %1209, %1200 : vector<1x16xi1>, vector<1x16xf32>
    %c12_i32_213 = arith.constant 12 : i32
    %1211 = vector.broadcast %c12_i32_213 : i32 to vector<1x16xi32>
    %1212 = arith.cmpi eq, %1086, %1211 : vector<1x16xi32>
    %1213 = vector.extract_strided_slice %1074 {offsets = [0, 12], sizes = [1, 1], strides = [1, 1]} : vector<1x16xf32> to vector<1x1xf32>
    %1214 = vector.shape_cast %1213 : vector<1x1xf32> to vector<1x1xf32>
    %1215 = vector.broadcast %1214 : vector<1x1xf32> to vector<1x16xf32>
    %1216 = arith.select %1212, %1215, %1206 : vector<1x16xi1>, vector<1x16xf32>
    %1217 = vector.extract_strided_slice %1074 {offsets = [0, 13], sizes = [1, 1], strides = [1, 1]} : vector<1x16xf32> to vector<1x1xf32>
    %1218 = vector.shape_cast %1217 : vector<1x1xf32> to vector<1x1xf32>
    %1219 = vector.broadcast %1218 : vector<1x1xf32> to vector<1x16xf32>
    %1220 = arith.select %1212, %1219, %1210 : vector<1x16xi1>, vector<1x16xf32>
    %c13_i32_214 = arith.constant 13 : i32
    %1221 = vector.broadcast %c13_i32_214 : i32 to vector<1x16xi32>
    %1222 = arith.cmpi eq, %1086, %1221 : vector<1x16xi32>
    %1223 = vector.extract_strided_slice %1074 {offsets = [0, 13], sizes = [1, 1], strides = [1, 1]} : vector<1x16xf32> to vector<1x1xf32>
    %1224 = vector.shape_cast %1223 : vector<1x1xf32> to vector<1x1xf32>
    %1225 = vector.broadcast %1224 : vector<1x1xf32> to vector<1x16xf32>
    %1226 = arith.select %1222, %1225, %1216 : vector<1x16xi1>, vector<1x16xf32>
    %1227 = vector.extract_strided_slice %1074 {offsets = [0, 14], sizes = [1, 1], strides = [1, 1]} : vector<1x16xf32> to vector<1x1xf32>
    %1228 = vector.shape_cast %1227 : vector<1x1xf32> to vector<1x1xf32>
    %1229 = vector.broadcast %1228 : vector<1x1xf32> to vector<1x16xf32>
    %1230 = arith.select %1222, %1229, %1220 : vector<1x16xi1>, vector<1x16xf32>
    %c14_i32_215 = arith.constant 14 : i32
    %1231 = vector.broadcast %c14_i32_215 : i32 to vector<1x16xi32>
    %1232 = arith.cmpi eq, %1086, %1231 : vector<1x16xi32>
    %1233 = vector.extract_strided_slice %1074 {offsets = [0, 14], sizes = [1, 1], strides = [1, 1]} : vector<1x16xf32> to vector<1x1xf32>
    %1234 = vector.shape_cast %1233 : vector<1x1xf32> to vector<1x1xf32>
    %1235 = vector.broadcast %1234 : vector<1x1xf32> to vector<1x16xf32>
    %1236 = arith.select %1232, %1235, %1226 : vector<1x16xi1>, vector<1x16xf32>
    %1237 = vector.extract_strided_slice %1074 {offsets = [0, 15], sizes = [1, 1], strides = [1, 1]} : vector<1x16xf32> to vector<1x1xf32>
    %1238 = vector.shape_cast %1237 : vector<1x1xf32> to vector<1x1xf32>
    %1239 = vector.broadcast %1238 : vector<1x1xf32> to vector<1x16xf32>
    %1240 = arith.select %1232, %1239, %1230 : vector<1x16xi1>, vector<1x16xf32>
    %cst_216 = arith.constant 1.000000e+00 : f32
    %1241 = vector.broadcast %cst_216 : f32 to vector<1x16xf32>
    %1242 = arith.subf %1241, %1088 : vector<1x16xf32>
    %1243 = arith.mulf %1236, %1242 : vector<1x16xf32>
    %1244 = arith.mulf %1240, %1088 : vector<1x16xf32>
    %1245 = arith.addf %1243, %1244 : vector<1x16xf32>
    %cst_217 = arith.constant 0.000000e+00 : f32
    %cst_218 = arith.constant 1.000000e+00 : f32
    %1246 = vector.broadcast %cst_217 : f32 to vector<1x16xf32>
    %1247 = arith.maximumf %1246, %1245 : vector<1x16xf32>
    %1248 = vector.broadcast %cst_218 : f32 to vector<1x16xf32>
    %1249 = arith.minimumf %1248, %1247 : vector<1x16xf32>
    %cst_219 = arith.constant 1.500000e+01 : f32
    %1250 = vector.broadcast %cst_219 : f32 to vector<1x16xf32>
    %1251 = arith.mulf %1249, %1250 : vector<1x16xf32>
    %1252 = math.floor %1251 : vector<1x16xf32>
    %cst_220 = arith.constant 0.000000e+00 : f32
    %cst_221 = arith.constant 1.400000e+01 : f32
    %1253 = vector.broadcast %cst_220 : f32 to vector<1x16xf32>
    %1254 = arith.maximumf %1253, %1252 : vector<1x16xf32>
    %1255 = vector.broadcast %cst_221 : f32 to vector<1x16xf32>
    %1256 = arith.minimumf %1255, %1254 : vector<1x16xf32>
    %1257 = arith.fptosi %1256 : vector<1x16xf32> to vector<1x16xi32>
    %1258 = arith.sitofp %1257 : vector<1x16xi32> to vector<1x16xf32>
    %1259 = arith.subf %1251, %1258 : vector<1x16xf32>
    %cst_222 = arith.constant 0.000000e+00 : f32
    %1260 = vector.broadcast %cst_222 : f32 to vector<1x16xf32>
    %cst_223 = arith.constant 0.000000e+00 : f32
    %1261 = vector.broadcast %cst_223 : f32 to vector<1x16xf32>
    %c0_i32_224 = arith.constant 0 : i32
    %1262 = vector.broadcast %c0_i32_224 : i32 to vector<1x16xi32>
    %1263 = arith.cmpi eq, %1257, %1262 : vector<1x16xi32>
    %1264 = vector.extract_strided_slice %1245 {offsets = [0, 0], sizes = [1, 1], strides = [1, 1]} : vector<1x16xf32> to vector<1x1xf32>
    %1265 = vector.shape_cast %1264 : vector<1x1xf32> to vector<1x1xf32>
    %1266 = vector.broadcast %1265 : vector<1x1xf32> to vector<1x16xf32>
    %1267 = arith.select %1263, %1266, %1260 : vector<1x16xi1>, vector<1x16xf32>
    %1268 = vector.extract_strided_slice %1245 {offsets = [0, 1], sizes = [1, 1], strides = [1, 1]} : vector<1x16xf32> to vector<1x1xf32>
    %1269 = vector.shape_cast %1268 : vector<1x1xf32> to vector<1x1xf32>
    %1270 = vector.broadcast %1269 : vector<1x1xf32> to vector<1x16xf32>
    %1271 = arith.select %1263, %1270, %1261 : vector<1x16xi1>, vector<1x16xf32>
    %c1_i32_225 = arith.constant 1 : i32
    %1272 = vector.broadcast %c1_i32_225 : i32 to vector<1x16xi32>
    %1273 = arith.cmpi eq, %1257, %1272 : vector<1x16xi32>
    %1274 = vector.extract_strided_slice %1245 {offsets = [0, 1], sizes = [1, 1], strides = [1, 1]} : vector<1x16xf32> to vector<1x1xf32>
    %1275 = vector.shape_cast %1274 : vector<1x1xf32> to vector<1x1xf32>
    %1276 = vector.broadcast %1275 : vector<1x1xf32> to vector<1x16xf32>
    %1277 = arith.select %1273, %1276, %1267 : vector<1x16xi1>, vector<1x16xf32>
    %1278 = vector.extract_strided_slice %1245 {offsets = [0, 2], sizes = [1, 1], strides = [1, 1]} : vector<1x16xf32> to vector<1x1xf32>
    %1279 = vector.shape_cast %1278 : vector<1x1xf32> to vector<1x1xf32>
    %1280 = vector.broadcast %1279 : vector<1x1xf32> to vector<1x16xf32>
    %1281 = arith.select %1273, %1280, %1271 : vector<1x16xi1>, vector<1x16xf32>
    %c2_i32_226 = arith.constant 2 : i32
    %1282 = vector.broadcast %c2_i32_226 : i32 to vector<1x16xi32>
    %1283 = arith.cmpi eq, %1257, %1282 : vector<1x16xi32>
    %1284 = vector.extract_strided_slice %1245 {offsets = [0, 2], sizes = [1, 1], strides = [1, 1]} : vector<1x16xf32> to vector<1x1xf32>
    %1285 = vector.shape_cast %1284 : vector<1x1xf32> to vector<1x1xf32>
    %1286 = vector.broadcast %1285 : vector<1x1xf32> to vector<1x16xf32>
    %1287 = arith.select %1283, %1286, %1277 : vector<1x16xi1>, vector<1x16xf32>
    %1288 = vector.extract_strided_slice %1245 {offsets = [0, 3], sizes = [1, 1], strides = [1, 1]} : vector<1x16xf32> to vector<1x1xf32>
    %1289 = vector.shape_cast %1288 : vector<1x1xf32> to vector<1x1xf32>
    %1290 = vector.broadcast %1289 : vector<1x1xf32> to vector<1x16xf32>
    %1291 = arith.select %1283, %1290, %1281 : vector<1x16xi1>, vector<1x16xf32>
    %c3_i32_227 = arith.constant 3 : i32
    %1292 = vector.broadcast %c3_i32_227 : i32 to vector<1x16xi32>
    %1293 = arith.cmpi eq, %1257, %1292 : vector<1x16xi32>
    %1294 = vector.extract_strided_slice %1245 {offsets = [0, 3], sizes = [1, 1], strides = [1, 1]} : vector<1x16xf32> to vector<1x1xf32>
    %1295 = vector.shape_cast %1294 : vector<1x1xf32> to vector<1x1xf32>
    %1296 = vector.broadcast %1295 : vector<1x1xf32> to vector<1x16xf32>
    %1297 = arith.select %1293, %1296, %1287 : vector<1x16xi1>, vector<1x16xf32>
    %1298 = vector.extract_strided_slice %1245 {offsets = [0, 4], sizes = [1, 1], strides = [1, 1]} : vector<1x16xf32> to vector<1x1xf32>
    %1299 = vector.shape_cast %1298 : vector<1x1xf32> to vector<1x1xf32>
    %1300 = vector.broadcast %1299 : vector<1x1xf32> to vector<1x16xf32>
    %1301 = arith.select %1293, %1300, %1291 : vector<1x16xi1>, vector<1x16xf32>
    %c4_i32_228 = arith.constant 4 : i32
    %1302 = vector.broadcast %c4_i32_228 : i32 to vector<1x16xi32>
    %1303 = arith.cmpi eq, %1257, %1302 : vector<1x16xi32>
    %1304 = vector.extract_strided_slice %1245 {offsets = [0, 4], sizes = [1, 1], strides = [1, 1]} : vector<1x16xf32> to vector<1x1xf32>
    %1305 = vector.shape_cast %1304 : vector<1x1xf32> to vector<1x1xf32>
    %1306 = vector.broadcast %1305 : vector<1x1xf32> to vector<1x16xf32>
    %1307 = arith.select %1303, %1306, %1297 : vector<1x16xi1>, vector<1x16xf32>
    %1308 = vector.extract_strided_slice %1245 {offsets = [0, 5], sizes = [1, 1], strides = [1, 1]} : vector<1x16xf32> to vector<1x1xf32>
    %1309 = vector.shape_cast %1308 : vector<1x1xf32> to vector<1x1xf32>
    %1310 = vector.broadcast %1309 : vector<1x1xf32> to vector<1x16xf32>
    %1311 = arith.select %1303, %1310, %1301 : vector<1x16xi1>, vector<1x16xf32>
    %c5_i32_229 = arith.constant 5 : i32
    %1312 = vector.broadcast %c5_i32_229 : i32 to vector<1x16xi32>
    %1313 = arith.cmpi eq, %1257, %1312 : vector<1x16xi32>
    %1314 = vector.extract_strided_slice %1245 {offsets = [0, 5], sizes = [1, 1], strides = [1, 1]} : vector<1x16xf32> to vector<1x1xf32>
    %1315 = vector.shape_cast %1314 : vector<1x1xf32> to vector<1x1xf32>
    %1316 = vector.broadcast %1315 : vector<1x1xf32> to vector<1x16xf32>
    %1317 = arith.select %1313, %1316, %1307 : vector<1x16xi1>, vector<1x16xf32>
    %1318 = vector.extract_strided_slice %1245 {offsets = [0, 6], sizes = [1, 1], strides = [1, 1]} : vector<1x16xf32> to vector<1x1xf32>
    %1319 = vector.shape_cast %1318 : vector<1x1xf32> to vector<1x1xf32>
    %1320 = vector.broadcast %1319 : vector<1x1xf32> to vector<1x16xf32>
    %1321 = arith.select %1313, %1320, %1311 : vector<1x16xi1>, vector<1x16xf32>
    %c6_i32_230 = arith.constant 6 : i32
    %1322 = vector.broadcast %c6_i32_230 : i32 to vector<1x16xi32>
    %1323 = arith.cmpi eq, %1257, %1322 : vector<1x16xi32>
    %1324 = vector.extract_strided_slice %1245 {offsets = [0, 6], sizes = [1, 1], strides = [1, 1]} : vector<1x16xf32> to vector<1x1xf32>
    %1325 = vector.shape_cast %1324 : vector<1x1xf32> to vector<1x1xf32>
    %1326 = vector.broadcast %1325 : vector<1x1xf32> to vector<1x16xf32>
    %1327 = arith.select %1323, %1326, %1317 : vector<1x16xi1>, vector<1x16xf32>
    %1328 = vector.extract_strided_slice %1245 {offsets = [0, 7], sizes = [1, 1], strides = [1, 1]} : vector<1x16xf32> to vector<1x1xf32>
    %1329 = vector.shape_cast %1328 : vector<1x1xf32> to vector<1x1xf32>
    %1330 = vector.broadcast %1329 : vector<1x1xf32> to vector<1x16xf32>
    %1331 = arith.select %1323, %1330, %1321 : vector<1x16xi1>, vector<1x16xf32>
    %c7_i32_231 = arith.constant 7 : i32
    %1332 = vector.broadcast %c7_i32_231 : i32 to vector<1x16xi32>
    %1333 = arith.cmpi eq, %1257, %1332 : vector<1x16xi32>
    %1334 = vector.extract_strided_slice %1245 {offsets = [0, 7], sizes = [1, 1], strides = [1, 1]} : vector<1x16xf32> to vector<1x1xf32>
    %1335 = vector.shape_cast %1334 : vector<1x1xf32> to vector<1x1xf32>
    %1336 = vector.broadcast %1335 : vector<1x1xf32> to vector<1x16xf32>
    %1337 = arith.select %1333, %1336, %1327 : vector<1x16xi1>, vector<1x16xf32>
    %1338 = vector.extract_strided_slice %1245 {offsets = [0, 8], sizes = [1, 1], strides = [1, 1]} : vector<1x16xf32> to vector<1x1xf32>
    %1339 = vector.shape_cast %1338 : vector<1x1xf32> to vector<1x1xf32>
    %1340 = vector.broadcast %1339 : vector<1x1xf32> to vector<1x16xf32>
    %1341 = arith.select %1333, %1340, %1331 : vector<1x16xi1>, vector<1x16xf32>
    %c8_i32_232 = arith.constant 8 : i32
    %1342 = vector.broadcast %c8_i32_232 : i32 to vector<1x16xi32>
    %1343 = arith.cmpi eq, %1257, %1342 : vector<1x16xi32>
    %1344 = vector.extract_strided_slice %1245 {offsets = [0, 8], sizes = [1, 1], strides = [1, 1]} : vector<1x16xf32> to vector<1x1xf32>
    %1345 = vector.shape_cast %1344 : vector<1x1xf32> to vector<1x1xf32>
    %1346 = vector.broadcast %1345 : vector<1x1xf32> to vector<1x16xf32>
    %1347 = arith.select %1343, %1346, %1337 : vector<1x16xi1>, vector<1x16xf32>
    %1348 = vector.extract_strided_slice %1245 {offsets = [0, 9], sizes = [1, 1], strides = [1, 1]} : vector<1x16xf32> to vector<1x1xf32>
    %1349 = vector.shape_cast %1348 : vector<1x1xf32> to vector<1x1xf32>
    %1350 = vector.broadcast %1349 : vector<1x1xf32> to vector<1x16xf32>
    %1351 = arith.select %1343, %1350, %1341 : vector<1x16xi1>, vector<1x16xf32>
    %c9_i32_233 = arith.constant 9 : i32
    %1352 = vector.broadcast %c9_i32_233 : i32 to vector<1x16xi32>
    %1353 = arith.cmpi eq, %1257, %1352 : vector<1x16xi32>
    %1354 = vector.extract_strided_slice %1245 {offsets = [0, 9], sizes = [1, 1], strides = [1, 1]} : vector<1x16xf32> to vector<1x1xf32>
    %1355 = vector.shape_cast %1354 : vector<1x1xf32> to vector<1x1xf32>
    %1356 = vector.broadcast %1355 : vector<1x1xf32> to vector<1x16xf32>
    %1357 = arith.select %1353, %1356, %1347 : vector<1x16xi1>, vector<1x16xf32>
    %1358 = vector.extract_strided_slice %1245 {offsets = [0, 10], sizes = [1, 1], strides = [1, 1]} : vector<1x16xf32> to vector<1x1xf32>
    %1359 = vector.shape_cast %1358 : vector<1x1xf32> to vector<1x1xf32>
    %1360 = vector.broadcast %1359 : vector<1x1xf32> to vector<1x16xf32>
    %1361 = arith.select %1353, %1360, %1351 : vector<1x16xi1>, vector<1x16xf32>
    %c10_i32_234 = arith.constant 10 : i32
    %1362 = vector.broadcast %c10_i32_234 : i32 to vector<1x16xi32>
    %1363 = arith.cmpi eq, %1257, %1362 : vector<1x16xi32>
    %1364 = vector.extract_strided_slice %1245 {offsets = [0, 10], sizes = [1, 1], strides = [1, 1]} : vector<1x16xf32> to vector<1x1xf32>
    %1365 = vector.shape_cast %1364 : vector<1x1xf32> to vector<1x1xf32>
    %1366 = vector.broadcast %1365 : vector<1x1xf32> to vector<1x16xf32>
    %1367 = arith.select %1363, %1366, %1357 : vector<1x16xi1>, vector<1x16xf32>
    %1368 = vector.extract_strided_slice %1245 {offsets = [0, 11], sizes = [1, 1], strides = [1, 1]} : vector<1x16xf32> to vector<1x1xf32>
    %1369 = vector.shape_cast %1368 : vector<1x1xf32> to vector<1x1xf32>
    %1370 = vector.broadcast %1369 : vector<1x1xf32> to vector<1x16xf32>
    %1371 = arith.select %1363, %1370, %1361 : vector<1x16xi1>, vector<1x16xf32>
    %c11_i32_235 = arith.constant 11 : i32
    %1372 = vector.broadcast %c11_i32_235 : i32 to vector<1x16xi32>
    %1373 = arith.cmpi eq, %1257, %1372 : vector<1x16xi32>
    %1374 = vector.extract_strided_slice %1245 {offsets = [0, 11], sizes = [1, 1], strides = [1, 1]} : vector<1x16xf32> to vector<1x1xf32>
    %1375 = vector.shape_cast %1374 : vector<1x1xf32> to vector<1x1xf32>
    %1376 = vector.broadcast %1375 : vector<1x1xf32> to vector<1x16xf32>
    %1377 = arith.select %1373, %1376, %1367 : vector<1x16xi1>, vector<1x16xf32>
    %1378 = vector.extract_strided_slice %1245 {offsets = [0, 12], sizes = [1, 1], strides = [1, 1]} : vector<1x16xf32> to vector<1x1xf32>
    %1379 = vector.shape_cast %1378 : vector<1x1xf32> to vector<1x1xf32>
    %1380 = vector.broadcast %1379 : vector<1x1xf32> to vector<1x16xf32>
    %1381 = arith.select %1373, %1380, %1371 : vector<1x16xi1>, vector<1x16xf32>
    %c12_i32_236 = arith.constant 12 : i32
    %1382 = vector.broadcast %c12_i32_236 : i32 to vector<1x16xi32>
    %1383 = arith.cmpi eq, %1257, %1382 : vector<1x16xi32>
    %1384 = vector.extract_strided_slice %1245 {offsets = [0, 12], sizes = [1, 1], strides = [1, 1]} : vector<1x16xf32> to vector<1x1xf32>
    %1385 = vector.shape_cast %1384 : vector<1x1xf32> to vector<1x1xf32>
    %1386 = vector.broadcast %1385 : vector<1x1xf32> to vector<1x16xf32>
    %1387 = arith.select %1383, %1386, %1377 : vector<1x16xi1>, vector<1x16xf32>
    %1388 = vector.extract_strided_slice %1245 {offsets = [0, 13], sizes = [1, 1], strides = [1, 1]} : vector<1x16xf32> to vector<1x1xf32>
    %1389 = vector.shape_cast %1388 : vector<1x1xf32> to vector<1x1xf32>
    %1390 = vector.broadcast %1389 : vector<1x1xf32> to vector<1x16xf32>
    %1391 = arith.select %1383, %1390, %1381 : vector<1x16xi1>, vector<1x16xf32>
    %c13_i32_237 = arith.constant 13 : i32
    %1392 = vector.broadcast %c13_i32_237 : i32 to vector<1x16xi32>
    %1393 = arith.cmpi eq, %1257, %1392 : vector<1x16xi32>
    %1394 = vector.extract_strided_slice %1245 {offsets = [0, 13], sizes = [1, 1], strides = [1, 1]} : vector<1x16xf32> to vector<1x1xf32>
    %1395 = vector.shape_cast %1394 : vector<1x1xf32> to vector<1x1xf32>
    %1396 = vector.broadcast %1395 : vector<1x1xf32> to vector<1x16xf32>
    %1397 = arith.select %1393, %1396, %1387 : vector<1x16xi1>, vector<1x16xf32>
    %1398 = vector.extract_strided_slice %1245 {offsets = [0, 14], sizes = [1, 1], strides = [1, 1]} : vector<1x16xf32> to vector<1x1xf32>
    %1399 = vector.shape_cast %1398 : vector<1x1xf32> to vector<1x1xf32>
    %1400 = vector.broadcast %1399 : vector<1x1xf32> to vector<1x16xf32>
    %1401 = arith.select %1393, %1400, %1391 : vector<1x16xi1>, vector<1x16xf32>
    %c14_i32_238 = arith.constant 14 : i32
    %1402 = vector.broadcast %c14_i32_238 : i32 to vector<1x16xi32>
    %1403 = arith.cmpi eq, %1257, %1402 : vector<1x16xi32>
    %1404 = vector.extract_strided_slice %1245 {offsets = [0, 14], sizes = [1, 1], strides = [1, 1]} : vector<1x16xf32> to vector<1x1xf32>
    %1405 = vector.shape_cast %1404 : vector<1x1xf32> to vector<1x1xf32>
    %1406 = vector.broadcast %1405 : vector<1x1xf32> to vector<1x16xf32>
    %1407 = arith.select %1403, %1406, %1397 : vector<1x16xi1>, vector<1x16xf32>
    %1408 = vector.extract_strided_slice %1245 {offsets = [0, 15], sizes = [1, 1], strides = [1, 1]} : vector<1x16xf32> to vector<1x1xf32>
    %1409 = vector.shape_cast %1408 : vector<1x1xf32> to vector<1x1xf32>
    %1410 = vector.broadcast %1409 : vector<1x1xf32> to vector<1x16xf32>
    %1411 = arith.select %1403, %1410, %1401 : vector<1x16xi1>, vector<1x16xf32>
    %cst_239 = arith.constant 1.000000e+00 : f32
    %1412 = vector.broadcast %cst_239 : f32 to vector<1x16xf32>
    %1413 = arith.subf %1412, %1259 : vector<1x16xf32>
    %1414 = arith.mulf %1407, %1413 : vector<1x16xf32>
    %1415 = arith.mulf %1411, %1259 : vector<1x16xf32>
    %1416 = arith.addf %1414, %1415 : vector<1x16xf32>
    %cst_240 = arith.constant 0.000000e+00 : f32
    %cst_241 = arith.constant 1.000000e+00 : f32
    %1417 = vector.broadcast %cst_240 : f32 to vector<1x16xf32>
    %1418 = arith.maximumf %1417, %1416 : vector<1x16xf32>
    %1419 = vector.broadcast %cst_241 : f32 to vector<1x16xf32>
    %1420 = arith.minimumf %1419, %1418 : vector<1x16xf32>
    %cst_242 = arith.constant 1.500000e+01 : f32
    %1421 = vector.broadcast %cst_242 : f32 to vector<1x16xf32>
    %1422 = arith.mulf %1420, %1421 : vector<1x16xf32>
    %1423 = math.floor %1422 : vector<1x16xf32>
    %cst_243 = arith.constant 0.000000e+00 : f32
    %cst_244 = arith.constant 1.400000e+01 : f32
    %1424 = vector.broadcast %cst_243 : f32 to vector<1x16xf32>
    %1425 = arith.maximumf %1424, %1423 : vector<1x16xf32>
    %1426 = vector.broadcast %cst_244 : f32 to vector<1x16xf32>
    %1427 = arith.minimumf %1426, %1425 : vector<1x16xf32>
    %1428 = arith.fptosi %1427 : vector<1x16xf32> to vector<1x16xi32>
    %1429 = arith.sitofp %1428 : vector<1x16xi32> to vector<1x16xf32>
    %1430 = arith.subf %1422, %1429 : vector<1x16xf32>
    %cst_245 = arith.constant 0.000000e+00 : f32
    %1431 = vector.broadcast %cst_245 : f32 to vector<1x16xf32>
    %cst_246 = arith.constant 0.000000e+00 : f32
    %1432 = vector.broadcast %cst_246 : f32 to vector<1x16xf32>
    %c0_i32_247 = arith.constant 0 : i32
    %1433 = vector.broadcast %c0_i32_247 : i32 to vector<1x16xi32>
    %1434 = arith.cmpi eq, %1428, %1433 : vector<1x16xi32>
    %1435 = vector.extract_strided_slice %1416 {offsets = [0, 0], sizes = [1, 1], strides = [1, 1]} : vector<1x16xf32> to vector<1x1xf32>
    %1436 = vector.shape_cast %1435 : vector<1x1xf32> to vector<1x1xf32>
    %1437 = vector.broadcast %1436 : vector<1x1xf32> to vector<1x16xf32>
    %1438 = arith.select %1434, %1437, %1431 : vector<1x16xi1>, vector<1x16xf32>
    %1439 = vector.extract_strided_slice %1416 {offsets = [0, 1], sizes = [1, 1], strides = [1, 1]} : vector<1x16xf32> to vector<1x1xf32>
    %1440 = vector.shape_cast %1439 : vector<1x1xf32> to vector<1x1xf32>
    %1441 = vector.broadcast %1440 : vector<1x1xf32> to vector<1x16xf32>
    %1442 = arith.select %1434, %1441, %1432 : vector<1x16xi1>, vector<1x16xf32>
    %c1_i32_248 = arith.constant 1 : i32
    %1443 = vector.broadcast %c1_i32_248 : i32 to vector<1x16xi32>
    %1444 = arith.cmpi eq, %1428, %1443 : vector<1x16xi32>
    %1445 = vector.extract_strided_slice %1416 {offsets = [0, 1], sizes = [1, 1], strides = [1, 1]} : vector<1x16xf32> to vector<1x1xf32>
    %1446 = vector.shape_cast %1445 : vector<1x1xf32> to vector<1x1xf32>
    %1447 = vector.broadcast %1446 : vector<1x1xf32> to vector<1x16xf32>
    %1448 = arith.select %1444, %1447, %1438 : vector<1x16xi1>, vector<1x16xf32>
    %1449 = vector.extract_strided_slice %1416 {offsets = [0, 2], sizes = [1, 1], strides = [1, 1]} : vector<1x16xf32> to vector<1x1xf32>
    %1450 = vector.shape_cast %1449 : vector<1x1xf32> to vector<1x1xf32>
    %1451 = vector.broadcast %1450 : vector<1x1xf32> to vector<1x16xf32>
    %1452 = arith.select %1444, %1451, %1442 : vector<1x16xi1>, vector<1x16xf32>
    %c2_i32_249 = arith.constant 2 : i32
    %1453 = vector.broadcast %c2_i32_249 : i32 to vector<1x16xi32>
    %1454 = arith.cmpi eq, %1428, %1453 : vector<1x16xi32>
    %1455 = vector.extract_strided_slice %1416 {offsets = [0, 2], sizes = [1, 1], strides = [1, 1]} : vector<1x16xf32> to vector<1x1xf32>
    %1456 = vector.shape_cast %1455 : vector<1x1xf32> to vector<1x1xf32>
    %1457 = vector.broadcast %1456 : vector<1x1xf32> to vector<1x16xf32>
    %1458 = arith.select %1454, %1457, %1448 : vector<1x16xi1>, vector<1x16xf32>
    %1459 = vector.extract_strided_slice %1416 {offsets = [0, 3], sizes = [1, 1], strides = [1, 1]} : vector<1x16xf32> to vector<1x1xf32>
    %1460 = vector.shape_cast %1459 : vector<1x1xf32> to vector<1x1xf32>
    %1461 = vector.broadcast %1460 : vector<1x1xf32> to vector<1x16xf32>
    %1462 = arith.select %1454, %1461, %1452 : vector<1x16xi1>, vector<1x16xf32>
    %c3_i32_250 = arith.constant 3 : i32
    %1463 = vector.broadcast %c3_i32_250 : i32 to vector<1x16xi32>
    %1464 = arith.cmpi eq, %1428, %1463 : vector<1x16xi32>
    %1465 = vector.extract_strided_slice %1416 {offsets = [0, 3], sizes = [1, 1], strides = [1, 1]} : vector<1x16xf32> to vector<1x1xf32>
    %1466 = vector.shape_cast %1465 : vector<1x1xf32> to vector<1x1xf32>
    %1467 = vector.broadcast %1466 : vector<1x1xf32> to vector<1x16xf32>
    %1468 = arith.select %1464, %1467, %1458 : vector<1x16xi1>, vector<1x16xf32>
    %1469 = vector.extract_strided_slice %1416 {offsets = [0, 4], sizes = [1, 1], strides = [1, 1]} : vector<1x16xf32> to vector<1x1xf32>
    %1470 = vector.shape_cast %1469 : vector<1x1xf32> to vector<1x1xf32>
    %1471 = vector.broadcast %1470 : vector<1x1xf32> to vector<1x16xf32>
    %1472 = arith.select %1464, %1471, %1462 : vector<1x16xi1>, vector<1x16xf32>
    %c4_i32_251 = arith.constant 4 : i32
    %1473 = vector.broadcast %c4_i32_251 : i32 to vector<1x16xi32>
    %1474 = arith.cmpi eq, %1428, %1473 : vector<1x16xi32>
    %1475 = vector.extract_strided_slice %1416 {offsets = [0, 4], sizes = [1, 1], strides = [1, 1]} : vector<1x16xf32> to vector<1x1xf32>
    %1476 = vector.shape_cast %1475 : vector<1x1xf32> to vector<1x1xf32>
    %1477 = vector.broadcast %1476 : vector<1x1xf32> to vector<1x16xf32>
    %1478 = arith.select %1474, %1477, %1468 : vector<1x16xi1>, vector<1x16xf32>
    %1479 = vector.extract_strided_slice %1416 {offsets = [0, 5], sizes = [1, 1], strides = [1, 1]} : vector<1x16xf32> to vector<1x1xf32>
    %1480 = vector.shape_cast %1479 : vector<1x1xf32> to vector<1x1xf32>
    %1481 = vector.broadcast %1480 : vector<1x1xf32> to vector<1x16xf32>
    %1482 = arith.select %1474, %1481, %1472 : vector<1x16xi1>, vector<1x16xf32>
    %c5_i32_252 = arith.constant 5 : i32
    %1483 = vector.broadcast %c5_i32_252 : i32 to vector<1x16xi32>
    %1484 = arith.cmpi eq, %1428, %1483 : vector<1x16xi32>
    %1485 = vector.extract_strided_slice %1416 {offsets = [0, 5], sizes = [1, 1], strides = [1, 1]} : vector<1x16xf32> to vector<1x1xf32>
    %1486 = vector.shape_cast %1485 : vector<1x1xf32> to vector<1x1xf32>
    %1487 = vector.broadcast %1486 : vector<1x1xf32> to vector<1x16xf32>
    %1488 = arith.select %1484, %1487, %1478 : vector<1x16xi1>, vector<1x16xf32>
    %1489 = vector.extract_strided_slice %1416 {offsets = [0, 6], sizes = [1, 1], strides = [1, 1]} : vector<1x16xf32> to vector<1x1xf32>
    %1490 = vector.shape_cast %1489 : vector<1x1xf32> to vector<1x1xf32>
    %1491 = vector.broadcast %1490 : vector<1x1xf32> to vector<1x16xf32>
    %1492 = arith.select %1484, %1491, %1482 : vector<1x16xi1>, vector<1x16xf32>
    %c6_i32_253 = arith.constant 6 : i32
    %1493 = vector.broadcast %c6_i32_253 : i32 to vector<1x16xi32>
    %1494 = arith.cmpi eq, %1428, %1493 : vector<1x16xi32>
    %1495 = vector.extract_strided_slice %1416 {offsets = [0, 6], sizes = [1, 1], strides = [1, 1]} : vector<1x16xf32> to vector<1x1xf32>
    %1496 = vector.shape_cast %1495 : vector<1x1xf32> to vector<1x1xf32>
    %1497 = vector.broadcast %1496 : vector<1x1xf32> to vector<1x16xf32>
    %1498 = arith.select %1494, %1497, %1488 : vector<1x16xi1>, vector<1x16xf32>
    %1499 = vector.extract_strided_slice %1416 {offsets = [0, 7], sizes = [1, 1], strides = [1, 1]} : vector<1x16xf32> to vector<1x1xf32>
    %1500 = vector.shape_cast %1499 : vector<1x1xf32> to vector<1x1xf32>
    %1501 = vector.broadcast %1500 : vector<1x1xf32> to vector<1x16xf32>
    %1502 = arith.select %1494, %1501, %1492 : vector<1x16xi1>, vector<1x16xf32>
    %c7_i32_254 = arith.constant 7 : i32
    %1503 = vector.broadcast %c7_i32_254 : i32 to vector<1x16xi32>
    %1504 = arith.cmpi eq, %1428, %1503 : vector<1x16xi32>
    %1505 = vector.extract_strided_slice %1416 {offsets = [0, 7], sizes = [1, 1], strides = [1, 1]} : vector<1x16xf32> to vector<1x1xf32>
    %1506 = vector.shape_cast %1505 : vector<1x1xf32> to vector<1x1xf32>
    %1507 = vector.broadcast %1506 : vector<1x1xf32> to vector<1x16xf32>
    %1508 = arith.select %1504, %1507, %1498 : vector<1x16xi1>, vector<1x16xf32>
    %1509 = vector.extract_strided_slice %1416 {offsets = [0, 8], sizes = [1, 1], strides = [1, 1]} : vector<1x16xf32> to vector<1x1xf32>
    %1510 = vector.shape_cast %1509 : vector<1x1xf32> to vector<1x1xf32>
    %1511 = vector.broadcast %1510 : vector<1x1xf32> to vector<1x16xf32>
    %1512 = arith.select %1504, %1511, %1502 : vector<1x16xi1>, vector<1x16xf32>
    %c8_i32_255 = arith.constant 8 : i32
    %1513 = vector.broadcast %c8_i32_255 : i32 to vector<1x16xi32>
    %1514 = arith.cmpi eq, %1428, %1513 : vector<1x16xi32>
    %1515 = vector.extract_strided_slice %1416 {offsets = [0, 8], sizes = [1, 1], strides = [1, 1]} : vector<1x16xf32> to vector<1x1xf32>
    %1516 = vector.shape_cast %1515 : vector<1x1xf32> to vector<1x1xf32>
    %1517 = vector.broadcast %1516 : vector<1x1xf32> to vector<1x16xf32>
    %1518 = arith.select %1514, %1517, %1508 : vector<1x16xi1>, vector<1x16xf32>
    %1519 = vector.extract_strided_slice %1416 {offsets = [0, 9], sizes = [1, 1], strides = [1, 1]} : vector<1x16xf32> to vector<1x1xf32>
    %1520 = vector.shape_cast %1519 : vector<1x1xf32> to vector<1x1xf32>
    %1521 = vector.broadcast %1520 : vector<1x1xf32> to vector<1x16xf32>
    %1522 = arith.select %1514, %1521, %1512 : vector<1x16xi1>, vector<1x16xf32>
    %c9_i32_256 = arith.constant 9 : i32
    %1523 = vector.broadcast %c9_i32_256 : i32 to vector<1x16xi32>
    %1524 = arith.cmpi eq, %1428, %1523 : vector<1x16xi32>
    %1525 = vector.extract_strided_slice %1416 {offsets = [0, 9], sizes = [1, 1], strides = [1, 1]} : vector<1x16xf32> to vector<1x1xf32>
    %1526 = vector.shape_cast %1525 : vector<1x1xf32> to vector<1x1xf32>
    %1527 = vector.broadcast %1526 : vector<1x1xf32> to vector<1x16xf32>
    %1528 = arith.select %1524, %1527, %1518 : vector<1x16xi1>, vector<1x16xf32>
    %1529 = vector.extract_strided_slice %1416 {offsets = [0, 10], sizes = [1, 1], strides = [1, 1]} : vector<1x16xf32> to vector<1x1xf32>
    %1530 = vector.shape_cast %1529 : vector<1x1xf32> to vector<1x1xf32>
    %1531 = vector.broadcast %1530 : vector<1x1xf32> to vector<1x16xf32>
    %1532 = arith.select %1524, %1531, %1522 : vector<1x16xi1>, vector<1x16xf32>
    %c10_i32_257 = arith.constant 10 : i32
    %1533 = vector.broadcast %c10_i32_257 : i32 to vector<1x16xi32>
    %1534 = arith.cmpi eq, %1428, %1533 : vector<1x16xi32>
    %1535 = vector.extract_strided_slice %1416 {offsets = [0, 10], sizes = [1, 1], strides = [1, 1]} : vector<1x16xf32> to vector<1x1xf32>
    %1536 = vector.shape_cast %1535 : vector<1x1xf32> to vector<1x1xf32>
    %1537 = vector.broadcast %1536 : vector<1x1xf32> to vector<1x16xf32>
    %1538 = arith.select %1534, %1537, %1528 : vector<1x16xi1>, vector<1x16xf32>
    %1539 = vector.extract_strided_slice %1416 {offsets = [0, 11], sizes = [1, 1], strides = [1, 1]} : vector<1x16xf32> to vector<1x1xf32>
    %1540 = vector.shape_cast %1539 : vector<1x1xf32> to vector<1x1xf32>
    %1541 = vector.broadcast %1540 : vector<1x1xf32> to vector<1x16xf32>
    %1542 = arith.select %1534, %1541, %1532 : vector<1x16xi1>, vector<1x16xf32>
    %c11_i32_258 = arith.constant 11 : i32
    %1543 = vector.broadcast %c11_i32_258 : i32 to vector<1x16xi32>
    %1544 = arith.cmpi eq, %1428, %1543 : vector<1x16xi32>
    %1545 = vector.extract_strided_slice %1416 {offsets = [0, 11], sizes = [1, 1], strides = [1, 1]} : vector<1x16xf32> to vector<1x1xf32>
    %1546 = vector.shape_cast %1545 : vector<1x1xf32> to vector<1x1xf32>
    %1547 = vector.broadcast %1546 : vector<1x1xf32> to vector<1x16xf32>
    %1548 = arith.select %1544, %1547, %1538 : vector<1x16xi1>, vector<1x16xf32>
    %1549 = vector.extract_strided_slice %1416 {offsets = [0, 12], sizes = [1, 1], strides = [1, 1]} : vector<1x16xf32> to vector<1x1xf32>
    %1550 = vector.shape_cast %1549 : vector<1x1xf32> to vector<1x1xf32>
    %1551 = vector.broadcast %1550 : vector<1x1xf32> to vector<1x16xf32>
    %1552 = arith.select %1544, %1551, %1542 : vector<1x16xi1>, vector<1x16xf32>
    %c12_i32_259 = arith.constant 12 : i32
    %1553 = vector.broadcast %c12_i32_259 : i32 to vector<1x16xi32>
    %1554 = arith.cmpi eq, %1428, %1553 : vector<1x16xi32>
    %1555 = vector.extract_strided_slice %1416 {offsets = [0, 12], sizes = [1, 1], strides = [1, 1]} : vector<1x16xf32> to vector<1x1xf32>
    %1556 = vector.shape_cast %1555 : vector<1x1xf32> to vector<1x1xf32>
    %1557 = vector.broadcast %1556 : vector<1x1xf32> to vector<1x16xf32>
    %1558 = arith.select %1554, %1557, %1548 : vector<1x16xi1>, vector<1x16xf32>
    %1559 = vector.extract_strided_slice %1416 {offsets = [0, 13], sizes = [1, 1], strides = [1, 1]} : vector<1x16xf32> to vector<1x1xf32>
    %1560 = vector.shape_cast %1559 : vector<1x1xf32> to vector<1x1xf32>
    %1561 = vector.broadcast %1560 : vector<1x1xf32> to vector<1x16xf32>
    %1562 = arith.select %1554, %1561, %1552 : vector<1x16xi1>, vector<1x16xf32>
    %c13_i32_260 = arith.constant 13 : i32
    %1563 = vector.broadcast %c13_i32_260 : i32 to vector<1x16xi32>
    %1564 = arith.cmpi eq, %1428, %1563 : vector<1x16xi32>
    %1565 = vector.extract_strided_slice %1416 {offsets = [0, 13], sizes = [1, 1], strides = [1, 1]} : vector<1x16xf32> to vector<1x1xf32>
    %1566 = vector.shape_cast %1565 : vector<1x1xf32> to vector<1x1xf32>
    %1567 = vector.broadcast %1566 : vector<1x1xf32> to vector<1x16xf32>
    %1568 = arith.select %1564, %1567, %1558 : vector<1x16xi1>, vector<1x16xf32>
    %1569 = vector.extract_strided_slice %1416 {offsets = [0, 14], sizes = [1, 1], strides = [1, 1]} : vector<1x16xf32> to vector<1x1xf32>
    %1570 = vector.shape_cast %1569 : vector<1x1xf32> to vector<1x1xf32>
    %1571 = vector.broadcast %1570 : vector<1x1xf32> to vector<1x16xf32>
    %1572 = arith.select %1564, %1571, %1562 : vector<1x16xi1>, vector<1x16xf32>
    %c14_i32_261 = arith.constant 14 : i32
    %1573 = vector.broadcast %c14_i32_261 : i32 to vector<1x16xi32>
    %1574 = arith.cmpi eq, %1428, %1573 : vector<1x16xi32>
    %1575 = vector.extract_strided_slice %1416 {offsets = [0, 14], sizes = [1, 1], strides = [1, 1]} : vector<1x16xf32> to vector<1x1xf32>
    %1576 = vector.shape_cast %1575 : vector<1x1xf32> to vector<1x1xf32>
    %1577 = vector.broadcast %1576 : vector<1x1xf32> to vector<1x16xf32>
    %1578 = arith.select %1574, %1577, %1568 : vector<1x16xi1>, vector<1x16xf32>
    %1579 = vector.extract_strided_slice %1416 {offsets = [0, 15], sizes = [1, 1], strides = [1, 1]} : vector<1x16xf32> to vector<1x1xf32>
    %1580 = vector.shape_cast %1579 : vector<1x1xf32> to vector<1x1xf32>
    %1581 = vector.broadcast %1580 : vector<1x1xf32> to vector<1x16xf32>
    %1582 = arith.select %1574, %1581, %1572 : vector<1x16xi1>, vector<1x16xf32>
    %cst_262 = arith.constant 1.000000e+00 : f32
    %1583 = vector.broadcast %cst_262 : f32 to vector<1x16xf32>
    %1584 = arith.subf %1583, %1430 : vector<1x16xf32>
    %1585 = arith.mulf %1578, %1584 : vector<1x16xf32>
    %1586 = arith.mulf %1582, %1430 : vector<1x16xf32>
    %1587 = arith.addf %1585, %1586 : vector<1x16xf32>
    %cst_263 = arith.constant 0.000000e+00 : f32
    %cst_264 = arith.constant 1.000000e+00 : f32
    %1588 = vector.broadcast %cst_263 : f32 to vector<1x16xf32>
    %1589 = arith.maximumf %1588, %1587 : vector<1x16xf32>
    %1590 = vector.broadcast %cst_264 : f32 to vector<1x16xf32>
    %1591 = arith.minimumf %1590, %1589 : vector<1x16xf32>
    %cst_265 = arith.constant 1.500000e+01 : f32
    %1592 = vector.broadcast %cst_265 : f32 to vector<1x16xf32>
    %1593 = arith.mulf %1591, %1592 : vector<1x16xf32>
    %1594 = math.floor %1593 : vector<1x16xf32>
    %cst_266 = arith.constant 0.000000e+00 : f32
    %cst_267 = arith.constant 1.400000e+01 : f32
    %1595 = vector.broadcast %cst_266 : f32 to vector<1x16xf32>
    %1596 = arith.maximumf %1595, %1594 : vector<1x16xf32>
    %1597 = vector.broadcast %cst_267 : f32 to vector<1x16xf32>
    %1598 = arith.minimumf %1597, %1596 : vector<1x16xf32>
    %1599 = arith.fptosi %1598 : vector<1x16xf32> to vector<1x16xi32>
    %1600 = arith.sitofp %1599 : vector<1x16xi32> to vector<1x16xf32>
    %1601 = arith.subf %1593, %1600 : vector<1x16xf32>
    %cst_268 = arith.constant 0.000000e+00 : f32
    %1602 = vector.broadcast %cst_268 : f32 to vector<1x16xf32>
    %cst_269 = arith.constant 0.000000e+00 : f32
    %1603 = vector.broadcast %cst_269 : f32 to vector<1x16xf32>
    %c0_i32_270 = arith.constant 0 : i32
    %1604 = vector.broadcast %c0_i32_270 : i32 to vector<1x16xi32>
    %1605 = arith.cmpi eq, %1599, %1604 : vector<1x16xi32>
    %1606 = vector.extract_strided_slice %1587 {offsets = [0, 0], sizes = [1, 1], strides = [1, 1]} : vector<1x16xf32> to vector<1x1xf32>
    %1607 = vector.shape_cast %1606 : vector<1x1xf32> to vector<1x1xf32>
    %1608 = vector.broadcast %1607 : vector<1x1xf32> to vector<1x16xf32>
    %1609 = arith.select %1605, %1608, %1602 : vector<1x16xi1>, vector<1x16xf32>
    %1610 = vector.extract_strided_slice %1587 {offsets = [0, 1], sizes = [1, 1], strides = [1, 1]} : vector<1x16xf32> to vector<1x1xf32>
    %1611 = vector.shape_cast %1610 : vector<1x1xf32> to vector<1x1xf32>
    %1612 = vector.broadcast %1611 : vector<1x1xf32> to vector<1x16xf32>
    %1613 = arith.select %1605, %1612, %1603 : vector<1x16xi1>, vector<1x16xf32>
    %c1_i32_271 = arith.constant 1 : i32
    %1614 = vector.broadcast %c1_i32_271 : i32 to vector<1x16xi32>
    %1615 = arith.cmpi eq, %1599, %1614 : vector<1x16xi32>
    %1616 = vector.extract_strided_slice %1587 {offsets = [0, 1], sizes = [1, 1], strides = [1, 1]} : vector<1x16xf32> to vector<1x1xf32>
    %1617 = vector.shape_cast %1616 : vector<1x1xf32> to vector<1x1xf32>
    %1618 = vector.broadcast %1617 : vector<1x1xf32> to vector<1x16xf32>
    %1619 = arith.select %1615, %1618, %1609 : vector<1x16xi1>, vector<1x16xf32>
    %1620 = vector.extract_strided_slice %1587 {offsets = [0, 2], sizes = [1, 1], strides = [1, 1]} : vector<1x16xf32> to vector<1x1xf32>
    %1621 = vector.shape_cast %1620 : vector<1x1xf32> to vector<1x1xf32>
    %1622 = vector.broadcast %1621 : vector<1x1xf32> to vector<1x16xf32>
    %1623 = arith.select %1615, %1622, %1613 : vector<1x16xi1>, vector<1x16xf32>
    %c2_i32_272 = arith.constant 2 : i32
    %1624 = vector.broadcast %c2_i32_272 : i32 to vector<1x16xi32>
    %1625 = arith.cmpi eq, %1599, %1624 : vector<1x16xi32>
    %1626 = vector.extract_strided_slice %1587 {offsets = [0, 2], sizes = [1, 1], strides = [1, 1]} : vector<1x16xf32> to vector<1x1xf32>
    %1627 = vector.shape_cast %1626 : vector<1x1xf32> to vector<1x1xf32>
    %1628 = vector.broadcast %1627 : vector<1x1xf32> to vector<1x16xf32>
    %1629 = arith.select %1625, %1628, %1619 : vector<1x16xi1>, vector<1x16xf32>
    %1630 = vector.extract_strided_slice %1587 {offsets = [0, 3], sizes = [1, 1], strides = [1, 1]} : vector<1x16xf32> to vector<1x1xf32>
    %1631 = vector.shape_cast %1630 : vector<1x1xf32> to vector<1x1xf32>
    %1632 = vector.broadcast %1631 : vector<1x1xf32> to vector<1x16xf32>
    %1633 = arith.select %1625, %1632, %1623 : vector<1x16xi1>, vector<1x16xf32>
    %c3_i32_273 = arith.constant 3 : i32
    %1634 = vector.broadcast %c3_i32_273 : i32 to vector<1x16xi32>
    %1635 = arith.cmpi eq, %1599, %1634 : vector<1x16xi32>
    %1636 = vector.extract_strided_slice %1587 {offsets = [0, 3], sizes = [1, 1], strides = [1, 1]} : vector<1x16xf32> to vector<1x1xf32>
    %1637 = vector.shape_cast %1636 : vector<1x1xf32> to vector<1x1xf32>
    %1638 = vector.broadcast %1637 : vector<1x1xf32> to vector<1x16xf32>
    %1639 = arith.select %1635, %1638, %1629 : vector<1x16xi1>, vector<1x16xf32>
    %1640 = vector.extract_strided_slice %1587 {offsets = [0, 4], sizes = [1, 1], strides = [1, 1]} : vector<1x16xf32> to vector<1x1xf32>
    %1641 = vector.shape_cast %1640 : vector<1x1xf32> to vector<1x1xf32>
    %1642 = vector.broadcast %1641 : vector<1x1xf32> to vector<1x16xf32>
    %1643 = arith.select %1635, %1642, %1633 : vector<1x16xi1>, vector<1x16xf32>
    %c4_i32_274 = arith.constant 4 : i32
    %1644 = vector.broadcast %c4_i32_274 : i32 to vector<1x16xi32>
    %1645 = arith.cmpi eq, %1599, %1644 : vector<1x16xi32>
    %1646 = vector.extract_strided_slice %1587 {offsets = [0, 4], sizes = [1, 1], strides = [1, 1]} : vector<1x16xf32> to vector<1x1xf32>
    %1647 = vector.shape_cast %1646 : vector<1x1xf32> to vector<1x1xf32>
    %1648 = vector.broadcast %1647 : vector<1x1xf32> to vector<1x16xf32>
    %1649 = arith.select %1645, %1648, %1639 : vector<1x16xi1>, vector<1x16xf32>
    %1650 = vector.extract_strided_slice %1587 {offsets = [0, 5], sizes = [1, 1], strides = [1, 1]} : vector<1x16xf32> to vector<1x1xf32>
    %1651 = vector.shape_cast %1650 : vector<1x1xf32> to vector<1x1xf32>
    %1652 = vector.broadcast %1651 : vector<1x1xf32> to vector<1x16xf32>
    %1653 = arith.select %1645, %1652, %1643 : vector<1x16xi1>, vector<1x16xf32>
    %c5_i32_275 = arith.constant 5 : i32
    %1654 = vector.broadcast %c5_i32_275 : i32 to vector<1x16xi32>
    %1655 = arith.cmpi eq, %1599, %1654 : vector<1x16xi32>
    %1656 = vector.extract_strided_slice %1587 {offsets = [0, 5], sizes = [1, 1], strides = [1, 1]} : vector<1x16xf32> to vector<1x1xf32>
    %1657 = vector.shape_cast %1656 : vector<1x1xf32> to vector<1x1xf32>
    %1658 = vector.broadcast %1657 : vector<1x1xf32> to vector<1x16xf32>
    %1659 = arith.select %1655, %1658, %1649 : vector<1x16xi1>, vector<1x16xf32>
    %1660 = vector.extract_strided_slice %1587 {offsets = [0, 6], sizes = [1, 1], strides = [1, 1]} : vector<1x16xf32> to vector<1x1xf32>
    %1661 = vector.shape_cast %1660 : vector<1x1xf32> to vector<1x1xf32>
    %1662 = vector.broadcast %1661 : vector<1x1xf32> to vector<1x16xf32>
    %1663 = arith.select %1655, %1662, %1653 : vector<1x16xi1>, vector<1x16xf32>
    %c6_i32_276 = arith.constant 6 : i32
    %1664 = vector.broadcast %c6_i32_276 : i32 to vector<1x16xi32>
    %1665 = arith.cmpi eq, %1599, %1664 : vector<1x16xi32>
    %1666 = vector.extract_strided_slice %1587 {offsets = [0, 6], sizes = [1, 1], strides = [1, 1]} : vector<1x16xf32> to vector<1x1xf32>
    %1667 = vector.shape_cast %1666 : vector<1x1xf32> to vector<1x1xf32>
    %1668 = vector.broadcast %1667 : vector<1x1xf32> to vector<1x16xf32>
    %1669 = arith.select %1665, %1668, %1659 : vector<1x16xi1>, vector<1x16xf32>
    %1670 = vector.extract_strided_slice %1587 {offsets = [0, 7], sizes = [1, 1], strides = [1, 1]} : vector<1x16xf32> to vector<1x1xf32>
    %1671 = vector.shape_cast %1670 : vector<1x1xf32> to vector<1x1xf32>
    %1672 = vector.broadcast %1671 : vector<1x1xf32> to vector<1x16xf32>
    %1673 = arith.select %1665, %1672, %1663 : vector<1x16xi1>, vector<1x16xf32>
    %c7_i32_277 = arith.constant 7 : i32
    %1674 = vector.broadcast %c7_i32_277 : i32 to vector<1x16xi32>
    %1675 = arith.cmpi eq, %1599, %1674 : vector<1x16xi32>
    %1676 = vector.extract_strided_slice %1587 {offsets = [0, 7], sizes = [1, 1], strides = [1, 1]} : vector<1x16xf32> to vector<1x1xf32>
    %1677 = vector.shape_cast %1676 : vector<1x1xf32> to vector<1x1xf32>
    %1678 = vector.broadcast %1677 : vector<1x1xf32> to vector<1x16xf32>
    %1679 = arith.select %1675, %1678, %1669 : vector<1x16xi1>, vector<1x16xf32>
    %1680 = vector.extract_strided_slice %1587 {offsets = [0, 8], sizes = [1, 1], strides = [1, 1]} : vector<1x16xf32> to vector<1x1xf32>
    %1681 = vector.shape_cast %1680 : vector<1x1xf32> to vector<1x1xf32>
    %1682 = vector.broadcast %1681 : vector<1x1xf32> to vector<1x16xf32>
    %1683 = arith.select %1675, %1682, %1673 : vector<1x16xi1>, vector<1x16xf32>
    %c8_i32_278 = arith.constant 8 : i32
    %1684 = vector.broadcast %c8_i32_278 : i32 to vector<1x16xi32>
    %1685 = arith.cmpi eq, %1599, %1684 : vector<1x16xi32>
    %1686 = vector.extract_strided_slice %1587 {offsets = [0, 8], sizes = [1, 1], strides = [1, 1]} : vector<1x16xf32> to vector<1x1xf32>
    %1687 = vector.shape_cast %1686 : vector<1x1xf32> to vector<1x1xf32>
    %1688 = vector.broadcast %1687 : vector<1x1xf32> to vector<1x16xf32>
    %1689 = arith.select %1685, %1688, %1679 : vector<1x16xi1>, vector<1x16xf32>
    %1690 = vector.extract_strided_slice %1587 {offsets = [0, 9], sizes = [1, 1], strides = [1, 1]} : vector<1x16xf32> to vector<1x1xf32>
    %1691 = vector.shape_cast %1690 : vector<1x1xf32> to vector<1x1xf32>
    %1692 = vector.broadcast %1691 : vector<1x1xf32> to vector<1x16xf32>
    %1693 = arith.select %1685, %1692, %1683 : vector<1x16xi1>, vector<1x16xf32>
    %c9_i32_279 = arith.constant 9 : i32
    %1694 = vector.broadcast %c9_i32_279 : i32 to vector<1x16xi32>
    %1695 = arith.cmpi eq, %1599, %1694 : vector<1x16xi32>
    %1696 = vector.extract_strided_slice %1587 {offsets = [0, 9], sizes = [1, 1], strides = [1, 1]} : vector<1x16xf32> to vector<1x1xf32>
    %1697 = vector.shape_cast %1696 : vector<1x1xf32> to vector<1x1xf32>
    %1698 = vector.broadcast %1697 : vector<1x1xf32> to vector<1x16xf32>
    %1699 = arith.select %1695, %1698, %1689 : vector<1x16xi1>, vector<1x16xf32>
    %1700 = vector.extract_strided_slice %1587 {offsets = [0, 10], sizes = [1, 1], strides = [1, 1]} : vector<1x16xf32> to vector<1x1xf32>
    %1701 = vector.shape_cast %1700 : vector<1x1xf32> to vector<1x1xf32>
    %1702 = vector.broadcast %1701 : vector<1x1xf32> to vector<1x16xf32>
    %1703 = arith.select %1695, %1702, %1693 : vector<1x16xi1>, vector<1x16xf32>
    %c10_i32_280 = arith.constant 10 : i32
    %1704 = vector.broadcast %c10_i32_280 : i32 to vector<1x16xi32>
    %1705 = arith.cmpi eq, %1599, %1704 : vector<1x16xi32>
    %1706 = vector.extract_strided_slice %1587 {offsets = [0, 10], sizes = [1, 1], strides = [1, 1]} : vector<1x16xf32> to vector<1x1xf32>
    %1707 = vector.shape_cast %1706 : vector<1x1xf32> to vector<1x1xf32>
    %1708 = vector.broadcast %1707 : vector<1x1xf32> to vector<1x16xf32>
    %1709 = arith.select %1705, %1708, %1699 : vector<1x16xi1>, vector<1x16xf32>
    %1710 = vector.extract_strided_slice %1587 {offsets = [0, 11], sizes = [1, 1], strides = [1, 1]} : vector<1x16xf32> to vector<1x1xf32>
    %1711 = vector.shape_cast %1710 : vector<1x1xf32> to vector<1x1xf32>
    %1712 = vector.broadcast %1711 : vector<1x1xf32> to vector<1x16xf32>
    %1713 = arith.select %1705, %1712, %1703 : vector<1x16xi1>, vector<1x16xf32>
    %c11_i32_281 = arith.constant 11 : i32
    %1714 = vector.broadcast %c11_i32_281 : i32 to vector<1x16xi32>
    %1715 = arith.cmpi eq, %1599, %1714 : vector<1x16xi32>
    %1716 = vector.extract_strided_slice %1587 {offsets = [0, 11], sizes = [1, 1], strides = [1, 1]} : vector<1x16xf32> to vector<1x1xf32>
    %1717 = vector.shape_cast %1716 : vector<1x1xf32> to vector<1x1xf32>
    %1718 = vector.broadcast %1717 : vector<1x1xf32> to vector<1x16xf32>
    %1719 = arith.select %1715, %1718, %1709 : vector<1x16xi1>, vector<1x16xf32>
    %1720 = vector.extract_strided_slice %1587 {offsets = [0, 12], sizes = [1, 1], strides = [1, 1]} : vector<1x16xf32> to vector<1x1xf32>
    %1721 = vector.shape_cast %1720 : vector<1x1xf32> to vector<1x1xf32>
    %1722 = vector.broadcast %1721 : vector<1x1xf32> to vector<1x16xf32>
    %1723 = arith.select %1715, %1722, %1713 : vector<1x16xi1>, vector<1x16xf32>
    %c12_i32_282 = arith.constant 12 : i32
    %1724 = vector.broadcast %c12_i32_282 : i32 to vector<1x16xi32>
    %1725 = arith.cmpi eq, %1599, %1724 : vector<1x16xi32>
    %1726 = vector.extract_strided_slice %1587 {offsets = [0, 12], sizes = [1, 1], strides = [1, 1]} : vector<1x16xf32> to vector<1x1xf32>
    %1727 = vector.shape_cast %1726 : vector<1x1xf32> to vector<1x1xf32>
    %1728 = vector.broadcast %1727 : vector<1x1xf32> to vector<1x16xf32>
    %1729 = arith.select %1725, %1728, %1719 : vector<1x16xi1>, vector<1x16xf32>
    %1730 = vector.extract_strided_slice %1587 {offsets = [0, 13], sizes = [1, 1], strides = [1, 1]} : vector<1x16xf32> to vector<1x1xf32>
    %1731 = vector.shape_cast %1730 : vector<1x1xf32> to vector<1x1xf32>
    %1732 = vector.broadcast %1731 : vector<1x1xf32> to vector<1x16xf32>
    %1733 = arith.select %1725, %1732, %1723 : vector<1x16xi1>, vector<1x16xf32>
    %c13_i32_283 = arith.constant 13 : i32
    %1734 = vector.broadcast %c13_i32_283 : i32 to vector<1x16xi32>
    %1735 = arith.cmpi eq, %1599, %1734 : vector<1x16xi32>
    %1736 = vector.extract_strided_slice %1587 {offsets = [0, 13], sizes = [1, 1], strides = [1, 1]} : vector<1x16xf32> to vector<1x1xf32>
    %1737 = vector.shape_cast %1736 : vector<1x1xf32> to vector<1x1xf32>
    %1738 = vector.broadcast %1737 : vector<1x1xf32> to vector<1x16xf32>
    %1739 = arith.select %1735, %1738, %1729 : vector<1x16xi1>, vector<1x16xf32>
    %1740 = vector.extract_strided_slice %1587 {offsets = [0, 14], sizes = [1, 1], strides = [1, 1]} : vector<1x16xf32> to vector<1x1xf32>
    %1741 = vector.shape_cast %1740 : vector<1x1xf32> to vector<1x1xf32>
    %1742 = vector.broadcast %1741 : vector<1x1xf32> to vector<1x16xf32>
    %1743 = arith.select %1735, %1742, %1733 : vector<1x16xi1>, vector<1x16xf32>
    %c14_i32_284 = arith.constant 14 : i32
    %1744 = vector.broadcast %c14_i32_284 : i32 to vector<1x16xi32>
    %1745 = arith.cmpi eq, %1599, %1744 : vector<1x16xi32>
    %1746 = vector.extract_strided_slice %1587 {offsets = [0, 14], sizes = [1, 1], strides = [1, 1]} : vector<1x16xf32> to vector<1x1xf32>
    %1747 = vector.shape_cast %1746 : vector<1x1xf32> to vector<1x1xf32>
    %1748 = vector.broadcast %1747 : vector<1x1xf32> to vector<1x16xf32>
    %1749 = arith.select %1745, %1748, %1739 : vector<1x16xi1>, vector<1x16xf32>
    %1750 = vector.extract_strided_slice %1587 {offsets = [0, 15], sizes = [1, 1], strides = [1, 1]} : vector<1x16xf32> to vector<1x1xf32>
    %1751 = vector.shape_cast %1750 : vector<1x1xf32> to vector<1x1xf32>
    %1752 = vector.broadcast %1751 : vector<1x1xf32> to vector<1x16xf32>
    %1753 = arith.select %1745, %1752, %1743 : vector<1x16xi1>, vector<1x16xf32>
    %cst_285 = arith.constant 1.000000e+00 : f32
    %1754 = vector.broadcast %cst_285 : f32 to vector<1x16xf32>
    %1755 = arith.subf %1754, %1601 : vector<1x16xf32>
    %1756 = arith.mulf %1749, %1755 : vector<1x16xf32>
    %1757 = arith.mulf %1753, %1601 : vector<1x16xf32>
    %1758 = arith.addf %1756, %1757 : vector<1x16xf32>
    %cst_286 = arith.constant 0.000000e+00 : f32
    %cst_287 = arith.constant 1.000000e+00 : f32
    %1759 = vector.broadcast %cst_286 : f32 to vector<1x16xf32>
    %1760 = arith.maximumf %1759, %1758 : vector<1x16xf32>
    %1761 = vector.broadcast %cst_287 : f32 to vector<1x16xf32>
    %1762 = arith.minimumf %1761, %1760 : vector<1x16xf32>
    %cst_288 = arith.constant 1.500000e+01 : f32
    %1763 = vector.broadcast %cst_288 : f32 to vector<1x16xf32>
    %1764 = arith.mulf %1762, %1763 : vector<1x16xf32>
    %1765 = tpu.iota {dimensions = array<i32: 2>} : vector<1x1x16xi32>
    %1766 = arith.sitofp %1765 : vector<1x1x16xi32> to vector<1x1x16xf32>
    %1767 = vector.shape_cast %1764 : vector<1x16xf32> to vector<1x16x1xf32>
    %1768 = vector.broadcast %1767 : vector<1x16x1xf32> to vector<1x16x16xf32>
    %1769 = vector.broadcast %1766 : vector<1x1x16xf32> to vector<1x16x16xf32>
    %1770 = arith.subf %1768, %1769 : vector<1x16x16xf32>
    %1771 = math.absf %1770 : vector<1x16x16xf32>
    %cst_289 = arith.constant 1.000000e+00 : f32
    %1772 = vector.broadcast %cst_289 : f32 to vector<1x16x16xf32>
    %1773 = arith.subf %1772, %1771 : vector<1x16x16xf32>
    %cst_290 = arith.constant 0.000000e+00 : f32
    %1774 = vector.broadcast %cst_290 : f32 to vector<1x16x16xf32>
    %1775 = arith.maximumf %1773, %1774 : vector<1x16x16xf32>
    "tpu.trace_start"() <{level = 10 : i32, message = "bol,blc->boc"}> : () -> ()
    %cst_291 = arith.constant dense<0.000000e+00> : vector<1x16x3xf32>
    %1776 = tpu.matmul %1775, %902, %cst_291 {dimension_numbers = #tpu.dot_dimension_numbers<[2], [1], [1], [2], [0, 0, 0, 1, 1, 2], [0], [0]>} : vector<1x16x16xf32>, vector<1x16x3xf32>, vector<1x16x3xf32> -> vector<1x16x3xf32>
    "tpu.trace_stop"() : () -> ()
    %c0_292 = arith.constant 0 : index
    %c0_293 = arith.constant 0 : index
    %c0_294 = arith.constant 0 : index
    %1777 = vector.load %arg13[%c0_292, %c0_293, %c0_294] : memref<1x16x3xf32, #tpu.memory_space<vmem>>, vector<1x16x3xf32>
    tpu.vector_store %arg13[%c0_292, %c0_293, %c0_294], %1776 {strides = array<i32>} : memref<1x16x3xf32, #tpu.memory_space<vmem>>, vector<1x16x3xf32>,
    %1778 = tpu.concatenate %172, %1046 in 1 : vector<1x1x7xf32>, vector<1x1x7xf32> -> vector<1x2x7xf32>
    %c0_295 = arith.constant 0 : index
    %c0_296 = arith.constant 0 : index
    %c0_297 = arith.constant 0 : index
    %1779 = vector.load %arg14[%c0_295, %c0_296, %c0_297] : memref<1x2x7xf32, #tpu.memory_space<vmem>>, vector<1x2x7xf32>
    tpu.vector_store %arg14[%c0_295, %c0_296, %c0_297], %1778 {strides = array<i32>} : memref<1x2x7xf32, #tpu.memory_space<vmem>>, vector<1x2x7xf32>,
    return
  }
  func.func @transform_0(%arg0: i32) -> (i32, i32, i32) {
    %c0_i32 = arith.constant 0 : i32
    %c0_i32_0 = arith.constant 0 : i32
    %c0_i32_1 = arith.constant 0 : i32
    return %arg0, %c0_i32, %c0_i32_0 : i32, i32, i32
  }
  func.func @transform_1(%arg0: i32) -> (i32, i32, i32) {
    %c0_i32 = arith.constant 0 : i32
    %c0_i32_0 = arith.constant 0 : i32
    %c0_i32_1 = arith.constant 0 : i32
    %c0_i32_2 = arith.constant 0 : i32
    return %c0_i32, %c0_i32_0, %c0_i32_1 : i32, i32, i32
  }
  func.func @transform_2(%arg0: i32) -> (i32, i32) {
    %c0_i32 = arith.constant 0 : i32
    %c0_i32_0 = arith.constant 0 : i32
    %c0_i32_1 = arith.constant 0 : i32
    return %c0_i32, %c0_i32_0 : i32, i32
  }
  func.func @transform_3(%arg0: i32) -> (i32, i32, i32) {
    %c0_i32 = arith.constant 0 : i32
    %c0_i32_0 = arith.constant 0 : i32
    %c0_i32_1 = arith.constant 0 : i32
    %c0_i32_2 = arith.constant 0 : i32
    return %c0_i32, %c0_i32_0, %c0_i32_1 : i32, i32, i32
  }
  func.func @transform_4(%arg0: i32) -> (i32, i32) {
    %c0_i32 = arith.constant 0 : i32
    %c0_i32_0 = arith.constant 0 : i32
    %c0_i32_1 = arith.constant 0 : i32
    return %c0_i32, %c0_i32_0 : i32, i32
  }
  func.func @transform_5(%arg0: i32) -> (i32, i32) {
    %c0_i32 = arith.constant 0 : i32
    %c0_i32_0 = arith.constant 0 : i32
    %c0_i32_1 = arith.constant 0 : i32
    return %c0_i32, %c0_i32_0 : i32, i32
  }
  func.func @transform_6(%arg0: i32) -> (i32, i32) {
    %c0_i32 = arith.constant 0 : i32
    %c0_i32_0 = arith.constant 0 : i32
    %c0_i32_1 = arith.constant 0 : i32
    return %c0_i32, %c0_i32_0 : i32, i32
  }
  func.func @transform_7(%arg0: i32) -> (i32, i32) {
    %c0_i32 = arith.constant 0 : i32
    %c0_i32_0 = arith.constant 0 : i32
    %c0_i32_1 = arith.constant 0 : i32
    return %c0_i32, %c0_i32_0 : i32, i32
  }
  func.func @transform_8(%arg0: i32) -> (i32, i32) {
    %c0_i32 = arith.constant 0 : i32
    %c0_i32_0 = arith.constant 0 : i32
    %c0_i32_1 = arith.constant 0 : i32
    return %c0_i32, %c0_i32_0 : i32, i32
  }
  func.func @transform_9(%arg0: i32) -> (i32, i32) {
    %c0_i32 = arith.constant 0 : i32
    %c0_i32_0 = arith.constant 0 : i32
    %c0_i32_1 = arith.constant 0 : i32
    return %c0_i32, %c0_i32_0 : i32, i32
  }
  func.func @transform_10(%arg0: i32) -> (i32, i32) {
    %c0_i32 = arith.constant 0 : i32
    %c0_i32_0 = arith.constant 0 : i32
    %c0_i32_1 = arith.constant 0 : i32
    return %c0_i32, %c0_i32_0 : i32, i32
  }
  func.func @transform_11(%arg0: i32) -> (i32, i32) {
    %c0_i32 = arith.constant 0 : i32
    %c0_i32_0 = arith.constant 0 : i32
    %c0_i32_1 = arith.constant 0 : i32
    return %c0_i32, %c0_i32_0 : i32, i32
  }
  func.func @transform_12(%arg0: i32) -> (i32, i32, i32) {
    %c0_i32 = arith.constant 0 : i32
    %c0_i32_0 = arith.constant 0 : i32
    %c0_i32_1 = arith.constant 0 : i32
    return %arg0, %c0_i32, %c0_i32_0 : i32, i32, i32
  }
  func.func @transform_13(%arg0: i32) -> (i32, i32, i32) {
    %c0_i32 = arith.constant 0 : i32
    %c0_i32_0 = arith.constant 0 : i32
    %c0_i32_1 = arith.constant 0 : i32
    return %arg0, %c0_i32, %c0_i32_0 : i32, i32, i32
  }
}

</mosaic_0001>

<llo_original>
// kernel: tpu_custom_call.1
$region0: #{tpu_custom_call.1}
  #allocation0 [shape = 'u32[]', space=smem, size = 0x4, offset = 0x4, fixed_abs, tag = 'smem constant byte address 0x4 - core index']
  #allocation1 [shape = 'u32[144,128]{1,0:T(1,128)}', space=vmem, size = 0x12000, scoped, tag = 'internal scratch']
  %s0 = inlined_call_operand.vmem [shape: f32[2,16,3], index: 0, kind: input, shape index: {}]
  %s1 = inlined_call_operand.vmem [shape: bf16[8,3,20], index: 1, kind: input, shape index: {}]
  %s2 = inlined_call_operand.vmem [shape: f32[1,20], index: 2, kind: input, shape index: {}]
  %s3 = inlined_call_operand.vmem [shape: bf16[8,20,20], index: 3, kind: input, shape index: {}]
  %s4 = inlined_call_operand.vmem [shape: f32[1,20], index: 4, kind: input, shape index: {}]
  %s5 = inlined_call_operand.vmem [shape: f32[20,11], index: 5, kind: input, shape index: {}]
  %s6 = inlined_call_operand.vmem [shape: f32[1,11], index: 6, kind: input, shape index: {}]
  %s7 = inlined_call_operand.vmem [shape: f32[11,16], index: 7, kind: input, shape index: {}]
  %s8 = inlined_call_operand.vmem [shape: f32[1,16], index: 8, kind: input, shape index: {}]
  %s9 = inlined_call_operand.vmem [shape: f32[16,7], index: 9, kind: input, shape index: {}]
  %s10 = inlined_call_operand.vmem [shape: f32[1,7], index: 10, kind: input, shape index: {}]
  %s11 = inlined_call_operand.vmem [shape: f32[7,16], index: 11, kind: input, shape index: {}]
  %s12 = inlined_call_operand.vmem [shape: f32[2,16,3], index: 12, kind: output, shape index: {0}]
  %s13 = inlined_call_operand.hbm [shape: f32[2,2,7], index: 13, kind: output, shape index: {1}]
  %14 = xla_tuple %s12, %s13
  %s15 = sld [smem:[#allocation0]]
  $region89: #{tpu_custom_call.1} parent=0
    _
  %s17 = ssub.s32 1, %s15
  %s18 = scalar_select 0, %s17, %s15
  $region1: #{tpu_custom_call.1} parent=0
    #allocation2 [shape = 'u8[2048]{0}', space=vmem, size = 0x800, scoped, tag = 'output window, operand 1']
    #allocation3 [shape = 's32[2]{0}', space=sflag, size = 0x8, scoped, tag = 'scoped memory for tpu_custom_call.1']
    %19 = vsyncpa [#allocation3], 0
    %s20 = scalar_lea.sflag [#allocation3], 1
    %21 = vsyncpa %s20, 0
    loop: start=0, step=1, limit=4
    $region2: #{tpu_custom_call.1} parent=1 // loop_pre_header
      _
    $region3: #{tpu_custom_call.1} parent=1 // loop_header
      %s23 = sphi 0, %s27
      %p24 = scmp.ge.s32.totalorder %s23, 4
      %s33 = sphi 0, %s35
      %s36 = sphi 0, %s33
      %s37 = sphi 0, %s36
      %s53 = sphi 0, %s37
      %s57 = sphi 0, %s57
      %s59 = sphi 0, %s57
      %s60 = sphi 0, %s59
      %s74 = sphi 0, %s60
      %s78 = sphi 0, %s78
      %s80 = sphi 0, %s78
      %s81 = sphi 0, %s80
      %s95 = sphi 0, %s81
      %s99 = sphi 0, %s99
      %s101 = sphi 0, %s99
      %s102 = sphi 0, %s101
      %s116 = sphi 0, %s102
      %s120 = sphi 0, %s120
      %s122 = sphi 0, %s120
      %s123 = sphi 0, %s122
      %s137 = sphi 0, %s123
      %s141 = sphi 0, %s141
      %s143 = sphi 0, %s141
      %s144 = sphi 0, %s143
      %s158 = sphi 0, %s144
      %s162 = sphi 0, %s162
      %s164 = sphi 0, %s162
      %s165 = sphi 0, %s164
      %s179 = sphi 0, %s165
      %s183 = sphi 0, %s183
      %s185 = sphi 0, %s183
      %s186 = sphi 0, %s185
      %s200 = sphi 0, %s186
      %s204 = sphi 0, %s204
      %s206 = sphi 0, %s204
      %s207 = sphi 0, %s206
      %s221 = sphi 0, %s207
      %s225 = sphi 0, %s225
      %s227 = sphi 0, %s225
      %s228 = sphi 0, %s227
      %s242 = sphi 0, %s228
      %s246 = sphi 0, %s246
      %s248 = sphi 0, %s246
      %s249 = sphi 0, %s248
      %s263 = sphi 0, %s249
      %s267 = sphi 0, %s267
      %s269 = sphi 0, %s267
      %s270 = sphi 0, %s269
      %s284 = sphi 0, %s270
      %s290 = sphi 0, %s292
      %s293 = sphi 0, %s290
      %s294 = sphi 0, %s293
      %s310 = sphi 0, %s294
      %s316 = sphi 0, %s318
      %s319 = sphi 0, %s316
      %s320 = sphi 0, %s319
      %s336 = sphi 0, %s320
    $region4: #{tpu_custom_call.1} parent=1 // loop_header_branch
      %26 = sbr.rel (%p24) target = $region8
    $region5: #{tpu_custom_call.1} parent=1 // loop_body
      %s28 = ssub.s32 %s23, 1
      %s29 = ssub.s32 %s23, 2
      %s30 = sadd.s32 %s23, 1
      %s31 = ssub.s32 %s23, %s30
      %p32 = scmp.eq.s32.totalorder %s31, 0
      %s34 = sadd.s32 %s33, 1
      %s35 = scalar_select %p32, %s33, %s34
      %p38 = pneg %p32
      %p39 = scmp.eq.s32.totalorder %s23, 1
      %p40 = por %p38, %p39
      %p41 = scmp.ne.s32.totalorder %s33, %s36
      %p42 = scmp.eq.s32.totalorder %s23, 0
      %p43 = por %p41, %p42
      %p44 = scmp.ne.s32.totalorder %s33, %s36
      %p45 = scmp.eq.s32.totalorder %s28, 1
      %p46 = por %p44, %p45
      %p47 = scmp.ne.s32.totalorder %s36, %s37
      %p48 = scmp.eq.s32.totalorder %s28, 0
      %p49 = por %p47, %p48
      %p50 = scmp.ne.s32.totalorder %s36, %s37
      %p51 = scmp.eq.s32.totalorder %s29, 1
      %p52 = por %p50, %p51
      %p54 = scmp.ne.s32.totalorder %s37, %s53
      %p55 = scmp.eq.s32.totalorder %s29, 0
      %p56 = por %p54, %p55
      %s58 = sadd.s32 %s57, 1
      %p61 = scmp.eq.s32.totalorder %s23, 1
      %p62 = scmp.ne.s32.totalorder %s57, %s59
      %p63 = scmp.eq.s32.totalorder %s23, 0
      %p64 = por %p62, %p63
      %p65 = scmp.ne.s32.totalorder %s57, %s59
      %p66 = scmp.eq.s32.totalorder %s28, 1
      %p67 = por %p65, %p66
      %p68 = scmp.ne.s32.totalorder %s59, %s60
      %p69 = scmp.eq.s32.totalorder %s28, 0
      %p70 = por %p68, %p69
      %p71 = scmp.ne.s32.totalorder %s59, %s60
      %p72 = scmp.eq.s32.totalorder %s29, 1
      %p73 = por %p71, %p72
      %p75 = scmp.ne.s32.totalorder %s60, %s74
      %p76 = scmp.eq.s32.totalorder %s29, 0
      %p77 = por %p75, %p76
      %s79 = sadd.s32 %s78, 1
      %p82 = scmp.eq.s32.totalorder %s23, 1
      %p83 = scmp.ne.s32.totalorder %s78, %s80
      %p84 = scmp.eq.s32.totalorder %s23, 0
      %p85 = por %p83, %p84
      %p86 = scmp.ne.s32.totalorder %s78, %s80
      %p87 = scmp.eq.s32.totalorder %s28, 1
      %p88 = por %p86, %p87
      %p89 = scmp.ne.s32.totalorder %s80, %s81
      %p90 = scmp.eq.s32.totalorder %s28, 0
      %p91 = por %p89, %p90
      %p92 = scmp.ne.s32.totalorder %s80, %s81
      %p93 = scmp.eq.s32.totalorder %s29, 1
      %p94 = por %p92, %p93
      %p96 = scmp.ne.s32.totalorder %s81, %s95
      %p97 = scmp.eq.s32.totalorder %s29, 0
      %p98 = por %p96, %p97
      %s100 = sadd.s32 %s99, 1
      %p103 = scmp.eq.s32.totalorder %s23, 1
      %p104 = scmp.ne.s32.totalorder %s99, %s101
      %p105 = scmp.eq.s32.totalorder %s23, 0
      %p106 = por %p104, %p105
      %p107 = scmp.ne.s32.totalorder %s99, %s101
      %p108 = scmp.eq.s32.totalorder %s28, 1
      %p109 = por %p107, %p108
      %p110 = scmp.ne.s32.totalorder %s101, %s102
      %p111 = scmp.eq.s32.totalorder %s28, 0
      %p112 = por %p110, %p111
      %p113 = scmp.ne.s32.totalorder %s101, %s102
      %p114 = scmp.eq.s32.totalorder %s29, 1
      %p115 = por %p113, %p114
      %p117 = scmp.ne.s32.totalorder %s102, %s116
      %p118 = scmp.eq.s32.totalorder %s29, 0
      %p119 = por %p117, %p118
      %s121 = sadd.s32 %s120, 1
      %p124 = scmp.eq.s32.totalorder %s23, 1
      %p125 = scmp.ne.s32.totalorder %s120, %s122
      %p126 = scmp.eq.s32.totalorder %s23, 0
      %p127 = por %p125, %p126
      %p128 = scmp.ne.s32.totalorder %s120, %s122
      %p129 = scmp.eq.s32.totalorder %s28, 1
      %p130 = por %p128, %p129
      %p131 = scmp.ne.s32.totalorder %s122, %s123
      %p132 = scmp.eq.s32.totalorder %s28, 0
      %p133 = por %p131, %p132
      %p134 = scmp.ne.s32.totalorder %s122, %s123
      %p135 = scmp.eq.s32.totalorder %s29, 1
      %p136 = por %p134, %p135
      %p138 = scmp.ne.s32.totalorder %s123, %s137
      %p139 = scmp.eq.s32.totalorder %s29, 0
      %p140 = por %p138, %p139
      %s142 = sadd.s32 %s141, 1
      %p145 = scmp.eq.s32.totalorder %s23, 1
      %p146 = scmp.ne.s32.totalorder %s141, %s143
      %p147 = scmp.eq.s32.totalorder %s23, 0
      %p148 = por %p146, %p147
      %p149 = scmp.ne.s32.totalorder %s141, %s143
      %p150 = scmp.eq.s32.totalorder %s28, 1
      %p151 = por %p149, %p150
      %p152 = scmp.ne.s32.totalorder %s143, %s144
      %p153 = scmp.eq.s32.totalorder %s28, 0
      %p154 = por %p152, %p153
      %p155 = scmp.ne.s32.totalorder %s143, %s144
      %p156 = scmp.eq.s32.totalorder %s29, 1
      %p157 = por %p155, %p156
      %p159 = scmp.ne.s32.totalorder %s144, %s158
      %p160 = scmp.eq.s32.totalorder %s29, 0
      %p161 = por %p159, %p160
      %s163 = sadd.s32 %s162, 1
      %p166 = scmp.eq.s32.totalorder %s23, 1
      %p167 = scmp.ne.s32.totalorder %s162, %s164
      %p168 = scmp.eq.s32.totalorder %s23, 0
      %p169 = por %p167, %p168
      %p170 = scmp.ne.s32.totalorder %s162, %s164
      %p171 = scmp.eq.s32.totalorder %s28, 1
      %p172 = por %p170, %p171
      %p173 = scmp.ne.s32.totalorder %s164, %s165
      %p174 = scmp.eq.s32.totalorder %s28, 0
      %p175 = por %p173, %p174
      %p176 = scmp.ne.s32.totalorder %s164, %s165
      %p177 = scmp.eq.s32.totalorder %s29, 1
      %p178 = por %p176, %p177
      %p180 = scmp.ne.s32.totalorder %s165, %s179
      %p181 = scmp.eq.s32.totalorder %s29, 0
      %p182 = por %p180, %p181
      %s184 = sadd.s32 %s183, 1
      %p187 = scmp.eq.s32.totalorder %s23, 1
      %p188 = scmp.ne.s32.totalorder %s183, %s185
      %p189 = scmp.eq.s32.totalorder %s23, 0
      %p190 = por %p188, %p189
      %p191 = scmp.ne.s32.totalorder %s183, %s185
      %p192 = scmp.eq.s32.totalorder %s28, 1
      %p193 = por %p191, %p192
      %p194 = scmp.ne.s32.totalorder %s185, %s186
      %p195 = scmp.eq.s32.totalorder %s28, 0
      %p196 = por %p194, %p195
      %p197 = scmp.ne.s32.totalorder %s185, %s186
      %p198 = scmp.eq.s32.totalorder %s29, 1
      %p199 = por %p197, %p198
      %p201 = scmp.ne.s32.totalorder %s186, %s200
      %p202 = scmp.eq.s32.totalorder %s29, 0
      %p203 = por %p201, %p202
      %s205 = sadd.s32 %s204, 1
      %p208 = scmp.eq.s32.totalorder %s23, 1
      %p209 = scmp.ne.s32.totalorder %s204, %s206
      %p210 = scmp.eq.s32.totalorder %s23, 0
      %p211 = por %p209, %p210
      %p212 = scmp.ne.s32.totalorder %s204, %s206
      %p213 = scmp.eq.s32.totalorder %s28, 1
      %p214 = por %p212, %p213
      %p215 = scmp.ne.s32.totalorder %s206, %s207
      %p216 = scmp.eq.s32.totalorder %s28, 0
      %p217 = por %p215, %p216
      %p218 = scmp.ne.s32.totalorder %s206, %s207
      %p219 = scmp.eq.s32.totalorder %s29, 1
      %p220 = por %p218, %p219
      %p222 = scmp.ne.s32.totalorder %s207, %s221
      %p223 = scmp.eq.s32.totalorder %s29, 0
      %p224 = por %p222, %p223
      %s226 = sadd.s32 %s225, 1
      %p229 = scmp.eq.s32.totalorder %s23, 1
      %p230 = scmp.ne.s32.totalorder %s225, %s227
      %p231 = scmp.eq.s32.totalorder %s23, 0
      %p232 = por %p230, %p231
      %p233 = scmp.ne.s32.totalorder %s225, %s227
      %p234 = scmp.eq.s32.totalorder %s28, 1
      %p235 = por %p233, %p234
      %p236 = scmp.ne.s32.totalorder %s227, %s228
      %p237 = scmp.eq.s32.totalorder %s28, 0
      %p238 = por %p236, %p237
      %p239 = scmp.ne.s32.totalorder %s227, %s228
      %p240 = scmp.eq.s32.totalorder %s29, 1
      %p241 = por %p239, %p240
      %p243 = scmp.ne.s32.totalorder %s228, %s242
      %p244 = scmp.eq.s32.totalorder %s29, 0
      %p245 = por %p243, %p244
      %s247 = sadd.s32 %s246, 1
      %p250 = scmp.eq.s32.totalorder %s23, 1
      %p251 = scmp.ne.s32.totalorder %s246, %s248
      %p252 = scmp.eq.s32.totalorder %s23, 0
      %p253 = por %p251, %p252
      %p254 = scmp.ne.s32.totalorder %s246, %s248
      %p255 = scmp.eq.s32.totalorder %s28, 1
      %p256 = por %p254, %p255
      %p257 = scmp.ne.s32.totalorder %s248, %s249
      %p258 = scmp.eq.s32.totalorder %s28, 0
      %p259 = por %p257, %p258
      %p260 = scmp.ne.s32.totalorder %s248, %s249
      %p261 = scmp.eq.s32.totalorder %s29, 1
      %p262 = por %p260, %p261
      %p264 = scmp.ne.s32.totalorder %s249, %s263
      %p265 = scmp.eq.s32.totalorder %s29, 0
      %p266 = por %p264, %p265
      %s268 = sadd.s32 %s267, 1
      %p271 = scmp.eq.s32.totalorder %s23, 1
      %p272 = scmp.ne.s32.totalorder %s267, %s269
      %p273 = scmp.eq.s32.totalorder %s23, 0
      %p274 = por %p272, %p273
      %p275 = scmp.ne.s32.totalorder %s267, %s269
      %p276 = scmp.eq.s32.totalorder %s28, 1
      %p277 = por %p275, %p276
      %p278 = scmp.ne.s32.totalorder %s269, %s270
      %p279 = scmp.eq.s32.totalorder %s28, 0
      %p280 = por %p278, %p279
      %p281 = scmp.ne.s32.totalorder %s269, %s270
      %p282 = scmp.eq.s32.totalorder %s29, 1
      %p283 = por %p281, %p282
      %p285 = scmp.ne.s32.totalorder %s270, %s284
      %p286 = scmp.eq.s32.totalorder %s29, 0
      %p287 = por %p285, %p286
      %s288 = ssub.s32 %s23, %s30
      %p289 = scmp.eq.s32.totalorder %s288, 0
      %s291 = sadd.s32 %s290, 1
      %s292 = scalar_select %p289, %s290, %s291
      %p295 = pneg %p289
      %p296 = scmp.eq.s32.totalorder %s23, 1
      %p297 = por %p295, %p296
      %p298 = scmp.ne.s32.totalorder %s290, %s293
      %p299 = scmp.eq.s32.totalorder %s23, 0
      %p300 = por %p298, %p299
      %p301 = scmp.ne.s32.totalorder %s290, %s293
      %p302 = scmp.eq.s32.totalorder %s28, 1
      %p303 = por %p301, %p302
      %p304 = scmp.ne.s32.totalorder %s293, %s294
      %p305 = scmp.eq.s32.totalorder %s28, 0
      %p306 = por %p304, %p305
      %p307 = scmp.ne.s32.totalorder %s293, %s294
      %p308 = scmp.eq.s32.totalorder %s29, 1
      %p309 = por %p307, %p308
      %p311 = scmp.ne.s32.totalorder %s294, %s310
      %p312 = scmp.eq.s32.totalorder %s29, 0
      %p313 = por %p311, %p312
      %s314 = ssub.s32 %s23, %s30
      %p315 = scmp.eq.s32.totalorder %s314, 0
      %s317 = sadd.s32 %s316, 1
      %s318 = scalar_select %p315, %s316, %s317
      %p321 = pneg %p315
      %p322 = scmp.eq.s32.totalorder %s23, 1
      %p323 = por %p321, %p322
      %p324 = scmp.ne.s32.totalorder %s316, %s319
      %p325 = scmp.eq.s32.totalorder %s23, 0
      %p326 = por %p324, %p325
      %p327 = scmp.ne.s32.totalorder %s316, %s319
      %p328 = scmp.eq.s32.totalorder %s28, 1
      %p329 = por %p327, %p328
      %p330 = scmp.ne.s32.totalorder %s319, %s320
      %p331 = scmp.eq.s32.totalorder %s28, 0
      %p332 = por %p330, %p331
      %p333 = scmp.ne.s32.totalorder %s319, %s320
      %p334 = scmp.eq.s32.totalorder %s29, 1
      %p335 = por %p333, %p334
      %p337 = scmp.ne.s32.totalorder %s320, %s336
      %p338 = scmp.eq.s32.totalorder %s29, 0
      %p339 = por %p337, %p338
      %p340 = scmp.le.s32.totalorder 1, %s23
      %p341 = scmp.lt.s32.totalorder %s23, 3
      %p342 = pnand %p340, %p341
      %p343 = pneg %p342
      // Predicated region
      $region9: #{tpu_custom_call.1} parent=5 // pred_check
        _
      $region10: #{tpu_custom_call.1} parent=5 // pred_check_branch
        %345 = sbr.rel (%p342) target = $region12
      $region11: #{tpu_custom_call.1} parent=5 // pred_region
        %s346 = ssub.s32 %s23, 1
        // Predicated region
        $region13: #{tpu_custom_call.1} parent=11 // pred_check
          %p347 = pneg %p70
        $region14: #{tpu_custom_call.1} parent=11 // pred_check_branch
          %349 = sbr.rel (%p347) target = $region16
        $region15: #{tpu_custom_call.1} parent=11 // pred_region
          _
        $region16: #{tpu_custom_call.1} parent=11 // pred_fallthru
          _
        // Predicated region
        $region17: #{tpu_custom_call.1} parent=11 // pred_check
          %p350 = pneg %p91
        $region18: #{tpu_custom_call.1} parent=11 // pred_check_branch
          %352 = sbr.rel (%p350) target = $region20
        $region19: #{tpu_custom_call.1} parent=11 // pred_region
          _
        $region20: #{tpu_custom_call.1} parent=11 // pred_fallthru
          _
        // Predicated region
        $region21: #{tpu_custom_call.1} parent=11 // pred_check
          %p353 = pneg %p112
        $region22: #{tpu_custom_call.1} parent=11 // pred_check_branch
          %355 = sbr.rel (%p353) target = $region24
        $region23: #{tpu_custom_call.1} parent=11 // pred_region
          _
        $region24: #{tpu_custom_call.1} parent=11 // pred_fallthru
          _
        // Predicated region
        $region25: #{tpu_custom_call.1} parent=11 // pred_check
          %p356 = pneg %p133
        $region26: #{tpu_custom_call.1} parent=11 // pred_check_branch
          %358 = sbr.rel (%p356) target = $region28
        $region27: #{tpu_custom_call.1} parent=11 // pred_region
          _
        $region28: #{tpu_custom_call.1} parent=11 // pred_fallthru
          _
        // Predicated region
        $region29: #{tpu_custom_call.1} parent=11 // pred_check
          %p359 = pneg %p154
        $region30: #{tpu_custom_call.1} parent=11 // pred_check_branch
          %361 = sbr.rel (%p359) target = $region32
        $region31: #{tpu_custom_call.1} parent=11 // pred_region
          _
        $region32: #{tpu_custom_call.1} parent=11 // pred_fallthru
          _
        // Predicated region
        $region33: #{tpu_custom_call.1} parent=11 // pred_check
          %p362 = pneg %p175
        $region34: #{tpu_custom_call.1} parent=11 // pred_check_branch
          %364 = sbr.rel (%p362) target = $region36
        $region35: #{tpu_custom_call.1} parent=11 // pred_region
          _
        $region36: #{tpu_custom_call.1} parent=11 // pred_fallthru
          _
        // Predicated region
        $region37: #{tpu_custom_call.1} parent=11 // pred_check
          %p365 = pneg %p196
        $region38: #{tpu_custom_call.1} parent=11 // pred_check_branch
          %367 = sbr.rel (%p365) target = $region40
        $region39: #{tpu_custom_call.1} parent=11 // pred_region
          _
        $region40: #{tpu_custom_call.1} parent=11 // pred_fallthru
          _
        // Predicated region
        $region41: #{tpu_custom_call.1} parent=11 // pred_check
          %p368 = pneg %p217
        $region42: #{tpu_custom_call.1} parent=11 // pred_check_branch
          %370 = sbr.rel (%p368) target = $region44
        $region43: #{tpu_custom_call.1} parent=11 // pred_region
          _
        $region44: #{tpu_custom_call.1} parent=11 // pred_fallthru
          _
        // Predicated region
        $region45: #{tpu_custom_call.1} parent=11 // pred_check
          %p371 = pneg %p238
        $region46: #{tpu_custom_call.1} parent=11 // pred_check_branch
          %373 = sbr.rel (%p371) target = $region48
        $region47: #{tpu_custom_call.1} parent=11 // pred_region
          _
        $region48: #{tpu_custom_call.1} parent=11 // pred_fallthru
          _
        // Predicated region
        $region49: #{tpu_custom_call.1} parent=11 // pred_check
          %p374 = pneg %p259
        $region50: #{tpu_custom_call.1} parent=11 // pred_check_branch
          %376 = sbr.rel (%p374) target = $region52
        $region51: #{tpu_custom_call.1} parent=11 // pred_region
          _
        $region52: #{tpu_custom_call.1} parent=11 // pred_fallthru
          _
        // Predicated region
        $region53: #{tpu_custom_call.1} parent=11 // pred_check
          %p377 = pneg %p280
        $region54: #{tpu_custom_call.1} parent=11 // pred_check_branch
          %379 = sbr.rel (%p377) target = $region56
        $region55: #{tpu_custom_call.1} parent=11 // pred_region
          _
        $region56: #{tpu_custom_call.1} parent=11 // pred_fallthru
          _
      $region12: #{tpu_custom_call.1} parent=5 // pred_fallthru
        _
      %p380 = scmp.lt.s32.totalorder %s23, 2
      // Predicated region
      $region57: #{tpu_custom_call.1} parent=5 // pred_check
        %p381 = pneg %p380
      $region58: #{tpu_custom_call.1} parent=5 // pred_check_branch
        %383 = sbr.rel (%p381) target = $region60
      $region59: #{tpu_custom_call.1} parent=5 // pred_region
        // Predicated region
        $region61: #{tpu_custom_call.1} parent=59 // pred_check
          %p384 = pneg %p43
        $region62: #{tpu_custom_call.1} parent=59 // pred_check_branch
          %386 = sbr.rel (%p384) target = $region64
        $region63: #{tpu_custom_call.1} parent=59 // pred_region
          %p387 = scmp.lt.s32.totalorder %s23, 1
          %s388 = scalar_select %p387, %s23, 1
          %s389 = smul.addr %s388, 2
          %s390 = smul.addr %s389, 8
          %s391 = scalar_lea.vmem %s0, %s390
        $region64: #{tpu_custom_call.1} parent=59 // pred_fallthru
          _
      $region60: #{tpu_custom_call.1} parent=5 // pred_fallthru
        _
      %p392 = scmp.le.s32.totalorder 1, %s23
      %p393 = scmp.lt.s32.totalorder %s23, 3
      %p394 = pnand %p392, %p393
      %p395 = pneg %p394
      // Predicated region
      $region65: #{tpu_custom_call.1} parent=5 // pred_check
        _
      $region66: #{tpu_custom_call.1} parent=5 // pred_check_branch
        %397 = sbr.rel (%p394) target = $region68
      $region67: #{tpu_custom_call.1} parent=5 // pred_region
        %s398 = ssub.s32 %s23, 1
        %p399 = scmp.lt.s32.totalorder %s28, 1
        %s400 = scalar_select %p399, %s28, 1
        %s401 = smul.addr %s400, 2
        %s402 = smul.addr %s401, 8
        %s403 = scalar_lea.vmem %s0, %s402
        %p404 = pneg %p49
        %p405 = pneg %p46
        %p406 = pneg %p70
        %p407 = pneg %p67
        %p408 = pneg %p91
        %p409 = pneg %p88
        %p410 = pneg %p112
        %p411 = pneg %p109
        %p412 = pneg %p133
        %p413 = pneg %p130
        %p414 = pneg %p154
        %p415 = pneg %p151
        %p416 = pneg %p175
        %p417 = pneg %p172
        %p418 = pneg %p196
        %p419 = pneg %p193
        %p420 = pneg %p217
        %p421 = pneg %p214
        %p422 = pneg %p238
        %p423 = pneg %p235
        %p424 = pneg %p259
        %p425 = pneg %p256
        %p426 = pneg %p280
        %p427 = pneg %p277
        %p428 = pneg %p306
        %p429 = pneg %p303
        %p430 = scmp.lt.s32.totalorder %s28, 1
        %s431 = scalar_select %p430, %s28, 1
        %s432 = smul.addr %s431, 2
        %s433 = smul.addr %s432, 8
        %s434 = scalar_lea.vmem %s12, %s433
        %p435 = pneg %p332
        %p436 = pneg %p329
        %s437 = sand.u32 %s319, 1
        %s438 = scalar_lea.sflag [#allocation3], %s437
        %s439 = sand.u32 %s319, 1
        %s440 = smul.addr %s439, 2
        %s441 = scalar_lea.vmem [#allocation2], %s440
        %p442 = scmp.lt.s32.totalorder %s28, 1
        %s443 = scalar_select %p442, %s28, 1
        %s444 = smul.addr %s443, 2
        %s445 = smul.addr %s444, 8
        %s446 = scalar_lea.vmem %s0, %s445
        %p447 = scmp.lt.s32.totalorder %s28, 1
        %s448 = scalar_select %p447, %s28, 1
        %s449 = smul.addr %s448, 2
        %s450 = smul.addr %s449, 8
        %s451 = scalar_lea.vmem %s12, %s450
        %v453 = vld [vmem:[%s1] sm:$0x3]
        %v454 = vld [vmem:[%s1 + $0x2] sm:$0x3]
        %v455 = vld [vmem:[%s1 + $0x4] sm:$0x3]
        %v456 = vld [vmem:[%s1 + $0x6] sm:$0x3]
        %v457 = vld [vmem:[%s1 + $0x8] sm:$0x3]
        %v458 = vld [vmem:[%s1 + $0xa] sm:$0x3]
        %v459 = vld [vmem:[%s1 + $0xc] sm:$0x3]
        %v460 = vld [vmem:[%s1 + $0xe] sm:$0x3]
        %v461 = vld [vmem:[%s2] sm:$0x1]
        %v462 = vld [vmem:[%s3] sm:$0xf]
        %v463 = vld [vmem:[%s3 + $0x4] sm:$0xf]
        %v464 = vld [vmem:[%s3 + $0x8] sm:$0x3]
        %v465 = vld [vmem:[%s3 + $0xc] sm:$0xf]
        %v466 = vld [vmem:[%s3 + $0x10] sm:$0xf]
        %v467 = vld [vmem:[%s3 + $0x14] sm:$0x3]
        %v468 = vld [vmem:[%s3 + $0x18] sm:$0xf]
        %v469 = vld [vmem:[%s3 + $0x1c] sm:$0xf]
        %v470 = vld [vmem:[%s3 + $0x20] sm:$0x3]
        %v471 = vld [vmem:[%s3 + $0x24] sm:$0xf]
        %v472 = vld [vmem:[%s3 + $0x28] sm:$0xf]
        %v473 = vld [vmem:[%s3 + $0x2c] sm:$0x3]
        %v474 = vld [vmem:[%s3 + $0x30] sm:$0xf]
        %v475 = vld [vmem:[%s3 + $0x34] sm:$0xf]
        %v476 = vld [vmem:[%s3 + $0x38] sm:$0x3]
        %v477 = vld [vmem:[%s3 + $0x3c] sm:$0xf]
        %v478 = vld [vmem:[%s3 + $0x40] sm:$0xf]
        %v479 = vld [vmem:[%s3 + $0x44] sm:$0x3]
        %v480 = vld [vmem:[%s3 + $0x48] sm:$0xf]
        %v481 = vld [vmem:[%s3 + $0x4c] sm:$0xf]
        %v482 = vld [vmem:[%s3 + $0x50] sm:$0x3]
        %v483 = vld [vmem:[%s3 + $0x54] sm:$0xf]
        %v484 = vld [vmem:[%s3 + $0x58] sm:$0xf]
        %v485 = vld [vmem:[%s3 + $0x5c] sm:$0x3]
        %v486 = vld [vmem:[%s4] sm:$0x1]
        %v487 = vld [vmem:[%s5] sm:$0xff]
        %v488 = vld [vmem:[%s5 + $0x8] sm:$0xff]
        %v489 = vld [vmem:[%s5 + $0x10] sm:$0xf]
        %v490 = vld [vmem:[%s6] sm:$0x1]
        %v491 = vld [vmem:[%s7] sm:$0xff]
        %v492 = vld [vmem:[%s7 + $0x8] sm:$0x7]
        %v493 = vld [vmem:[%s8] sm:$0x1]
        %v494 = vld [vmem:[%s9] sm:$0xff]
        %v495 = vld [vmem:[%s9 + $0x8] sm:$0xff]
        %v496 = vld [vmem:[%s10] sm:$0x1]
        %v497 = vld [vmem:[%s11] sm:$0x7f]
        %v498 = vlaneseq
        %v499 = vand.u32 %v498, 127
        %v500 = vcvt.s32.f32 %v499
        %v501 = vrcp.pop 15.0
        %v502 = vmul.f32 %v500, %v501
        %v503 = vmul.f32 %v502, 8.0
        %v504 = vfloor.f32 %v503
        %v505 = vmax.f32 %v504, 0.0
        %v506 = vmin.f32 %v505, 7.0
        %v507 = vcvt.f32.s32.to.zero.pseudo %v506
        %v508 = vlaneseq
        %v509 = vshrl.u32 %v508, 7
        %vm510 = vcmp.eq.s32.totalorder %v509, %v507
        %v511 = vsel %vm510, 1, 0
        %v512 = vcvt.s32.f32 %v511
        %v513 = vld [vmem:[%s446] sm:$0xff]
        %v514 = vld [vmem:[%s446 + $0x8] sm:$0xff]
        %vm517 = vcmask 1042432
        %v518 = vrot.slane %v513, 5
        %v519 = vrot.slane %v514, 5
        %v520 = vsel %vm517, %v518, %v519
        %v524 = vsel %vm517, 0.0, %v518
        %v525 = vsel %vm517, %v519, 0.0
        %v526 = vpack.c.bf16 %v520, %v524
        %v527 = vpack.c.bf16 %v525, %v525
        %vm528 = vsmask.f32 7424
        %v530 = vshrl.u32 %v526, 16
        %v532 = vshll.u32 %v526, 16
        %v534 = vrot.slane %v532, 1
        %v535 = vor.u32 %v530, %v534
        %v537 = vshll.u32 %v527, 16
        %v539 = vrot.slane %v537, 1
        %v540 = vsel %vm528, %v535, %v539
        %vm541 = vcmask 23552
        %v543 = vsel %vm541, %v540, 0
        %vm545 = vcmask 1040384
        %vm546 = vcmask 1041408
        %v547 = vsel %vm545, 4294967295, 65535
        %v548 = vsel %vm546, %v547, 0
        %v550 = vand.u32 %v454, %v548
        %552 = vmatprep.subr.bf16.mxu0 0
        %553 = vmatpush1.bf16.msra.mxu0 %v550
        %554 = vmatprep.subr.bf16.mxu0 0
        %555 = vmatpush1.bf16.msra.mxu0 0
        %556 = vmatprep.subr.bf16.mxu0 0
        %557 = vmatpush1.bf16.msra.mxu0 0
        %558 = vmatprep.subr.bf16.mxu0 0
        %559 = vmatpush1.bf16.msra.mxu0 0
        %560 = vmatprep.subr.bf16.mxu0 0
        %561 = vmatpush1.bf16.msra.mxu0 0
        %562 = vmatprep.subr.bf16.mxu0 0
        %563 = vmatpush1.bf16.msra.mxu0 0
        %564 = vmatprep.subr.bf16.mxu0 0
        %565 = vmatpush1.bf16.msra.mxu0 0
        %566 = vmatprep.subr.bf16.mxu0 0
        %567 = vmatpush1.bf16.msra.mxu0 0
        %568 = vmatprep.subr.bf16.mxu0 0
        %569 = vmatpush1.bf16.msra.mxu0 0
        %570 = vmatprep.subr.bf16.mxu0 0
        %571 = vmatpush1.bf16.msra.mxu0 0
        %572 = vmatprep.subr.bf16.mxu0 0
        %573 = vmatpush1.bf16.msra.mxu0 0
        %574 = vmatprep.subr.bf16.mxu0 0
        %575 = vmatpush1.bf16.msra.mxu0 0
        %576 = vmatprep.subr.bf16.mxu0 0
        %577 = vmatpush1.bf16.msra.mxu0 0
        %578 = vmatprep.subr.bf16.mxu0 0
        %579 = vmatpush1.bf16.msra.mxu0 0
        %580 = vmatprep.subr.bf16.mxu0 0
        %581 = vmatpush1.bf16.msra.mxu0 0
        %582 = vmatprep.subr.bf16.mxu0 0
        %583 = vmatpush1.bf16.msra.mxu0 0
        %584 = vmatprep.mubr.bf16.mxu0 0
        %585 = vmatmul.mubr.bf16.gmra.mrb[0].mxu0 %v543
        %v586 = vpop.f32.mrb[0].mxu0
        %v587 = vadd.f32 0.0, %v586
        %v588 = vpop.f32.mrb[0].mxu0
        %v589 = vpop.f32.mrb[0].mxu0
        %v590 = vadd.f32 0.0, %v589
        %v591 = vpop.f32.mrb[0].mxu0
        %592 = vdwg.mxu0
        %v593 = vsel %vm541, %v526, 0
        %v596 = vand.u32 %v453, %v548
        %598 = vmatprep.subr.bf16.mxu0 0
        %599 = vmatpush1.bf16.msra.mxu0 %v596
        %600 = vmatprep.subr.bf16.mxu0 0
        %601 = vmatpush1.bf16.msra.mxu0 0
        %602 = vmatprep.subr.bf16.mxu0 0
        %603 = vmatpush1.bf16.msra.mxu0 0
        %604 = vmatprep.subr.bf16.mxu0 0
        %605 = vmatpush1.bf16.msra.mxu0 0
        %606 = vmatprep.subr.bf16.mxu0 0
        %607 = vmatpush1.bf16.msra.mxu0 0
        %608 = vmatprep.subr.bf16.mxu0 0
        %609 = vmatpush1.bf16.msra.mxu0 0
        %610 = vmatprep.subr.bf16.mxu0 0
        %611 = vmatpush1.bf16.msra.mxu0 0
        %612 = vmatprep.subr.bf16.mxu0 0
        %613 = vmatpush1.bf16.msra.mxu0 0
        %614 = vmatprep.subr.bf16.mxu0 0
        %615 = vmatpush1.bf16.msra.mxu0 0
        %616 = vmatprep.subr.bf16.mxu0 0
        %617 = vmatpush1.bf16.msra.mxu0 0
        %618 = vmatprep.subr.bf16.mxu0 0
        %619 = vmatpush1.bf16.msra.mxu0 0
        %620 = vmatprep.subr.bf16.mxu0 0
        %621 = vmatpush1.bf16.msra.mxu0 0
        %622 = vmatprep.subr.bf16.mxu0 0
        %623 = vmatpush1.bf16.msra.mxu0 0
        %624 = vmatprep.subr.bf16.mxu0 0
        %625 = vmatpush1.bf16.msra.mxu0 0
        %626 = vmatprep.subr.bf16.mxu0 0
        %627 = vmatpush1.bf16.msra.mxu0 0
        %628 = vmatprep.subr.bf16.mxu0 0
        %629 = vmatpush1.bf16.msra.mxu0 0
        %630 = vmatprep.mubr.bf16.mxu0 0
        %631 = vmatmul.mubr.bf16.gmra.mrb[0].mxu0 %v593
        %v632 = vpop.f32.mrb[0].mxu0
        %v633 = vadd.f32 %v587, %v632
        %v634 = vpop.f32.mrb[0].mxu0
        %v635 = vpop.f32.mrb[0].mxu0
        %v636 = vadd.f32 %v590, %v635
        %v637 = vpop.f32.mrb[0].mxu0
        %638 = vdwg.mxu0
        %vm641 = vcmask 1046528
        %v642 = vrot.slane %v526, 1
        %v643 = vrot.slane %v527, 1
        %v644 = vsel %vm641, %v642, %v643
        %v646 = vsel %vm541, %v644, 0
        %v649 = vand.u32 %v455, %v548
        %651 = vmatprep.subr.bf16.mxu0 0
        %652 = vmatpush1.bf16.msra.mxu0 %v649
        %653 = vmatprep.subr.bf16.mxu0 0
        %654 = vmatpush1.bf16.msra.mxu0 0
        %655 = vmatprep.subr.bf16.mxu0 0
        %656 = vmatpush1.bf16.msra.mxu0 0
        %657 = vmatprep.subr.bf16.mxu0 0
        %658 = vmatpush1.bf16.msra.mxu0 0
        %659 = vmatprep.subr.bf16.mxu0 0
        %660 = vmatpush1.bf16.msra.mxu0 0
        %661 = vmatprep.subr.bf16.mxu0 0
        %662 = vmatpush1.bf16.msra.mxu0 0
        %663 = vmatprep.subr.bf16.mxu0 0
        %664 = vmatpush1.bf16.msra.mxu0 0
        %665 = vmatprep.subr.bf16.mxu0 0
        %666 = vmatpush1.bf16.msra.mxu0 0
        %667 = vmatprep.subr.bf16.mxu0 0
        %668 = vmatpush1.bf16.msra.mxu0 0
        %669 = vmatprep.subr.bf16.mxu0 0
        %670 = vmatpush1.bf16.msra.mxu0 0
        %671 = vmatprep.subr.bf16.mxu0 0
        %672 = vmatpush1.bf16.msra.mxu0 0
        %673 = vmatprep.subr.bf16.mxu0 0
        %674 = vmatpush1.bf16.msra.mxu0 0
        %675 = vmatprep.subr.bf16.mxu0 0
        %676 = vmatpush1.bf16.msra.mxu0 0
        %677 = vmatprep.subr.bf16.mxu0 0
        %678 = vmatpush1.bf16.msra.mxu0 0
        %679 = vmatprep.subr.bf16.mxu0 0
        %680 = vmatpush1.bf16.msra.mxu0 0
        %681 = vmatprep.subr.bf16.mxu0 0
        %682 = vmatpush1.bf16.msra.mxu0 0
        %683 = vmatprep.mubr.bf16.mxu0 0
        %684 = vmatmul.mubr.bf16.gmra.mrb[0].mxu0 %v646
        %v685 = vpop.f32.mrb[0].mxu0
        %v686 = vadd.f32 0.0, %v685
        %v687 = vpop.f32.mrb[0].mxu0
        %v688 = vpop.f32.mrb[0].mxu0
        %v689 = vadd.f32 0.0, %v688
        %v690 = vpop.f32.mrb[0].mxu0
        %691 = vdwg.mxu0
        %v692 = vadd.f32 %v633, %v686
        %v693 = vadd.f32 %v636, %v689
        %vm694 = vsmask.f32 6400
        %v695 = vrot.slane %v530, 1
        %v696 = vrot.slane %v532, 2
        %v697 = vor.u32 %v695, %v696
        %v698 = vshrl.u32 %v527, 16
        %v700 = vrot.slane %v698, 1
        %v701 = vrot.slane %v537, 2
        %v702 = vor.u32 %v700, %v701
        %v703 = vsel %vm694, %v697, %v702
        %v705 = vsel %vm541, %v703, 0
        %v708 = vand.u32 %v456, %v548
        %710 = vmatprep.subr.bf16.mxu0 0
        %711 = vmatpush1.bf16.msra.mxu0 %v708
        %712 = vmatprep.subr.bf16.mxu0 0
        %713 = vmatpush1.bf16.msra.mxu0 0
        %714 = vmatprep.subr.bf16.mxu0 0
        %715 = vmatpush1.bf16.msra.mxu0 0
        %716 = vmatprep.subr.bf16.mxu0 0
        %717 = vmatpush1.bf16.msra.mxu0 0
        %718 = vmatprep.subr.bf16.mxu0 0
        %719 = vmatpush1.bf16.msra.mxu0 0
        %720 = vmatprep.subr.bf16.mxu0 0
        %721 = vmatpush1.bf16.msra.mxu0 0
        %722 = vmatprep.subr.bf16.mxu0 0
        %723 = vmatpush1.bf16.msra.mxu0 0
        %724 = vmatprep.subr.bf16.mxu0 0
        %725 = vmatpush1.bf16.msra.mxu0 0
        %726 = vmatprep.subr.bf16.mxu0 0
        %727 = vmatpush1.bf16.msra.mxu0 0
        %728 = vmatprep.subr.bf16.mxu0 0
        %729 = vmatpush1.bf16.msra.mxu0 0
        %730 = vmatprep.subr.bf16.mxu0 0
        %731 = vmatpush1.bf16.msra.mxu0 0
        %732 = vmatprep.subr.bf16.mxu0 0
        %733 = vmatpush1.bf16.msra.mxu0 0
        %734 = vmatprep.subr.bf16.mxu0 0
        %735 = vmatpush1.bf16.msra.mxu0 0
        %736 = vmatprep.subr.bf16.mxu0 0
        %737 = vmatpush1.bf16.msra.mxu0 0
        %738 = vmatprep.subr.bf16.mxu0 0
        %739 = vmatpush1.bf16.msra.mxu0 0
        %740 = vmatprep.subr.bf16.mxu0 0
        %741 = vmatpush1.bf16.msra.mxu0 0
        %742 = vmatprep.mubr.bf16.mxu0 0
        %743 = vmatmul.mubr.bf16.gmra.mrb[0].mxu0 %v705
        %v744 = vpop.f32.mrb[0].mxu0
        %v745 = vadd.f32 0.0, %v744
        %v746 = vpop.f32.mrb[0].mxu0
        %v747 = vpop.f32.mrb[0].mxu0
        %v748 = vadd.f32 0.0, %v747
        %v749 = vpop.f32.mrb[0].mxu0
        %750 = vdwg.mxu0
        %v751 = vadd.f32 %v692, %v745
        %v752 = vadd.f32 %v693, %v748
        %vm753 = vcmask 1045504
        %v754 = vrot.slane %v526, 2
        %v755 = vrot.slane %v527, 2
        %v756 = vsel %vm753, %v754, %v755
        %v758 = vsel %vm541, %v756, 0
        %v761 = vand.u32 %v457, %v548
        %763 = vmatprep.subr.bf16.mxu0 0
        %764 = vmatpush1.bf16.msra.mxu0 %v761
        %765 = vmatprep.subr.bf16.mxu0 0
        %766 = vmatpush1.bf16.msra.mxu0 0
        %767 = vmatprep.subr.bf16.mxu0 0
        %768 = vmatpush1.bf16.msra.mxu0 0
        %769 = vmatprep.subr.bf16.mxu0 0
        %770 = vmatpush1.bf16.msra.mxu0 0
        %771 = vmatprep.subr.bf16.mxu0 0
        %772 = vmatpush1.bf16.msra.mxu0 0
        %773 = vmatprep.subr.bf16.mxu0 0
        %774 = vmatpush1.bf16.msra.mxu0 0
        %775 = vmatprep.subr.bf16.mxu0 0
        %776 = vmatpush1.bf16.msra.mxu0 0
        %777 = vmatprep.subr.bf16.mxu0 0
        %778 = vmatpush1.bf16.msra.mxu0 0
        %779 = vmatprep.subr.bf16.mxu0 0
        %780 = vmatpush1.bf16.msra.mxu0 0
        %781 = vmatprep.subr.bf16.mxu0 0
        %782 = vmatpush1.bf16.msra.mxu0 0
        %783 = vmatprep.subr.bf16.mxu0 0
        %784 = vmatpush1.bf16.msra.mxu0 0
        %785 = vmatprep.subr.bf16.mxu0 0
        %786 = vmatpush1.bf16.msra.mxu0 0
        %787 = vmatprep.subr.bf16.mxu0 0
        %788 = vmatpush1.bf16.msra.mxu0 0
        %789 = vmatprep.subr.bf16.mxu0 0
        %790 = vmatpush1.bf16.msra.mxu0 0
        %791 = vmatprep.subr.bf16.mxu0 0
        %792 = vmatpush1.bf16.msra.mxu0 0
        %793 = vmatprep.subr.bf16.mxu0 0
        %794 = vmatpush1.bf16.msra.mxu0 0
        %795 = vmatprep.mubr.bf16.mxu0 0
        %796 = vmatmul.mubr.bf16.gmra.mrb[0].mxu0 %v758
        %v797 = vpop.f32.mrb[0].mxu0
        %v798 = vadd.f32 0.0, %v797
        %v799 = vpop.f32.mrb[0].mxu0
        %v800 = vpop.f32.mrb[0].mxu0
        %v801 = vadd.f32 0.0, %v800
        %v802 = vpop.f32.mrb[0].mxu0
        %803 = vdwg.mxu0
        %v804 = vadd.f32 %v751, %v798
        %v805 = vadd.f32 %v752, %v801
        %vm806 = vsmask.f32 5376
        %v807 = vrot.slane %v530, 2
        %v808 = vrot.slane %v532, 3
        %v809 = vor.u32 %v807, %v808
        %v810 = vrot.slane %v698, 2
        %v811 = vrot.slane %v537, 3
        %v812 = vor.u32 %v810, %v811
        %v813 = vsel %vm806, %v809, %v812
        %v815 = vsel %vm541, %v813, 0
        %v818 = vand.u32 %v458, %v548
        %820 = vmatprep.subr.bf16.mxu0 0
        %821 = vmatpush1.bf16.msra.mxu0 %v818
        %822 = vmatprep.subr.bf16.mxu0 0
        %823 = vmatpush1.bf16.msra.mxu0 0
        %824 = vmatprep.subr.bf16.mxu0 0
        %825 = vmatpush1.bf16.msra.mxu0 0
        %826 = vmatprep.subr.bf16.mxu0 0
        %827 = vmatpush1.bf16.msra.mxu0 0
        %828 = vmatprep.subr.bf16.mxu0 0
        %829 = vmatpush1.bf16.msra.mxu0 0
        %830 = vmatprep.subr.bf16.mxu0 0
        %831 = vmatpush1.bf16.msra.mxu0 0
        %832 = vmatprep.subr.bf16.mxu0 0
        %833 = vmatpush1.bf16.msra.mxu0 0
        %834 = vmatprep.subr.bf16.mxu0 0
        %835 = vmatpush1.bf16.msra.mxu0 0
        %836 = vmatprep.subr.bf16.mxu0 0
        %837 = vmatpush1.bf16.msra.mxu0 0
        %838 = vmatprep.subr.bf16.mxu0 0
        %839 = vmatpush1.bf16.msra.mxu0 0
        %840 = vmatprep.subr.bf16.mxu0 0
        %841 = vmatpush1.bf16.msra.mxu0 0
        %842 = vmatprep.subr.bf16.mxu0 0
        %843 = vmatpush1.bf16.msra.mxu0 0
        %844 = vmatprep.subr.bf16.mxu0 0
        %845 = vmatpush1.bf16.msra.mxu0 0
        %846 = vmatprep.subr.bf16.mxu0 0
        %847 = vmatpush1.bf16.msra.mxu0 0
        %848 = vmatprep.subr.bf16.mxu0 0
        %849 = vmatpush1.bf16.msra.mxu0 0
        %850 = vmatprep.subr.bf16.mxu0 0
        %851 = vmatpush1.bf16.msra.mxu0 0
        %852 = vmatprep.mubr.bf16.mxu0 0
        %853 = vmatmul.mubr.bf16.gmra.mrb[0].mxu0 %v815
        %v854 = vpop.f32.mrb[0].mxu0
        %v855 = vadd.f32 0.0, %v854
        %v856 = vpop.f32.mrb[0].mxu0
        %v857 = vpop.f32.mrb[0].mxu0
        %v858 = vadd.f32 0.0, %v857
        %v859 = vpop.f32.mrb[0].mxu0
        %860 = vdwg.mxu0
        %v861 = vadd.f32 %v804, %v855
        %v862 = vadd.f32 %v805, %v858
        %vm863 = vcmask 1044480
        %v864 = vrot.slane %v526, 3
        %v865 = vrot.slane %v527, 3
        %v866 = vsel %vm863, %v864, %v865
        %v868 = vsel %vm541, %v866, 0
        %v871 = vand.u32 %v459, %v548
        %873 = vmatprep.subr.bf16.mxu0 0
        %874 = vmatpush1.bf16.msra.mxu0 %v871
        %875 = vmatprep.subr.bf16.mxu0 0
        %876 = vmatpush1.bf16.msra.mxu0 0
        %877 = vmatprep.subr.bf16.mxu0 0
        %878 = vmatpush1.bf16.msra.mxu0 0
        %879 = vmatprep.subr.bf16.mxu0 0
        %880 = vmatpush1.bf16.msra.mxu0 0
        %881 = vmatprep.subr.bf16.mxu0 0
        %882 = vmatpush1.bf16.msra.mxu0 0
        %883 = vmatprep.subr.bf16.mxu0 0
        %884 = vmatpush1.bf16.msra.mxu0 0
        %885 = vmatprep.subr.bf16.mxu0 0
        %886 = vmatpush1.bf16.msra.mxu0 0
        %887 = vmatprep.subr.bf16.mxu0 0
        %888 = vmatpush1.bf16.msra.mxu0 0
        %889 = vmatprep.subr.bf16.mxu0 0
        %890 = vmatpush1.bf16.msra.mxu0 0
        %891 = vmatprep.subr.bf16.mxu0 0
        %892 = vmatpush1.bf16.msra.mxu0 0
        %893 = vmatprep.subr.bf16.mxu0 0
        %894 = vmatpush1.bf16.msra.mxu0 0
        %895 = vmatprep.subr.bf16.mxu0 0
        %896 = vmatpush1.bf16.msra.mxu0 0
        %897 = vmatprep.subr.bf16.mxu0 0
        %898 = vmatpush1.bf16.msra.mxu0 0
        %899 = vmatprep.subr.bf16.mxu0 0
        %900 = vmatpush1.bf16.msra.mxu0 0
        %901 = vmatprep.subr.bf16.mxu0 0
        %902 = vmatpush1.bf16.msra.mxu0 0
        %903 = vmatprep.subr.bf16.mxu0 0
        %904 = vmatpush1.bf16.msra.mxu0 0
        %905 = vmatprep.mubr.bf16.mxu0 0
        %906 = vmatmul.mubr.bf16.gmra.mrb[0].mxu0 %v868
        %v907 = vpop.f32.mrb[0].mxu0
        %v908 = vadd.f32 0.0, %v907
        %v909 = vpop.f32.mrb[0].mxu0
        %v910 = vpop.f32.mrb[0].mxu0
        %v911 = vadd.f32 0.0, %v910
        %v912 = vpop.f32.mrb[0].mxu0
        %913 = vdwg.mxu0
        %v914 = vadd.f32 %v861, %v908
        %v915 = vadd.f32 %v862, %v911
        %vm916 = vsmask.f32 4352
        %v917 = vrot.slane %v530, 3
        %v918 = vrot.slane %v532, 4
        %v919 = vor.u32 %v917, %v918
        %v920 = vrot.slane %v698, 3
        %v921 = vrot.slane %v537, 4
        %v922 = vor.u32 %v920, %v921
        %v923 = vsel %vm916, %v919, %v922
        %v925 = vsel %vm541, %v923, 0
        %v928 = vand.u32 %v460, %v548
        %930 = vmatprep.subr.bf16.mxu0 0
        %931 = vmatpush1.bf16.msra.mxu0 %v928
        %932 = vmatprep.subr.bf16.mxu0 0
        %933 = vmatpush1.bf16.msra.mxu0 0
        %934 = vmatprep.subr.bf16.mxu0 0
        %935 = vmatpush1.bf16.msra.mxu0 0
        %936 = vmatprep.subr.bf16.mxu0 0
        %937 = vmatpush1.bf16.msra.mxu0 0
        %938 = vmatprep.subr.bf16.mxu0 0
        %939 = vmatpush1.bf16.msra.mxu0 0
        %940 = vmatprep.subr.bf16.mxu0 0
        %941 = vmatpush1.bf16.msra.mxu0 0
        %942 = vmatprep.subr.bf16.mxu0 0
        %943 = vmatpush1.bf16.msra.mxu0 0
        %944 = vmatprep.subr.bf16.mxu0 0
        %945 = vmatpush1.bf16.msra.mxu0 0
        %946 = vmatprep.subr.bf16.mxu0 0
        %947 = vmatpush1.bf16.msra.mxu0 0
        %948 = vmatprep.subr.bf16.mxu0 0
        %949 = vmatpush1.bf16.msra.mxu0 0
        %950 = vmatprep.subr.bf16.mxu0 0
        %951 = vmatpush1.bf16.msra.mxu0 0
        %952 = vmatprep.subr.bf16.mxu0 0
        %953 = vmatpush1.bf16.msra.mxu0 0
        %954 = vmatprep.subr.bf16.mxu0 0
        %955 = vmatpush1.bf16.msra.mxu0 0
        %956 = vmatprep.subr.bf16.mxu0 0
        %957 = vmatpush1.bf16.msra.mxu0 0
        %958 = vmatprep.subr.bf16.mxu0 0
        %959 = vmatpush1.bf16.msra.mxu0 0
        %960 = vmatprep.subr.bf16.mxu0 0
        %961 = vmatpush1.bf16.msra.mxu0 0
        %962 = vmatprep.mubr.bf16.mxu0 0
        %963 = vmatmul.mubr.bf16.gmra.mrb[0].mxu0 %v925
        %v964 = vpop.f32.mrb[0].mxu0
        %v965 = vadd.f32 0.0, %v964
        %v966 = vpop.f32.mrb[0].mxu0
        %v967 = vpop.f32.mrb[0].mxu0
        %v968 = vadd.f32 0.0, %v967
        %v969 = vpop.f32.mrb[0].mxu0
        %970 = vdwg.mxu0
        %v971 = vadd.f32 %v914, %v965
        %v972 = vadd.f32 %v915, %v968
        %v974 = vlaneseq
        %v975 = vshrl.u32 %v974, 7
        %v976 = vsub.s32 0, %v975
        %v977 = vrot.slane %v461, %v976
        %v979 = vadd.f32 %v971, %v977
        %v980 = vadd.f32 %v972, %v977
        %v981 = vmax.f32 %v979, 0.0
        %v982 = vmax.f32 %v980, 0.0
        %v985 = vrot.slane %v981, 5
        %v986 = vrot.slane %v982, 5
        %v987 = vsel %vm517, %v985, %v986
        %v991 = vsel %vm517, 0.0, %v985
        %v992 = vsel %vm517, %v986, 0.0
        %v993 = vpack.c.bf16 %v987, %v991
        %v994 = vpack.c.bf16 %v992, %v992
        %v996 = vshrl.u32 %v993, 16
        %v998 = vshll.u32 %v993, 16
        %v1000 = vrot.slane %v998, 1
        %v1001 = vor.u32 %v996, %v1000
        %v1003 = vshll.u32 %v994, 16
        %v1005 = vrot.slane %v1003, 1
        %v1006 = vsel %vm528, %v1001, %v1005
        %v1010 = vunpack.c.l.b16 %v465
        %v1011 = vunpack.c.l.b16 %v466
        %v1012 = vunpack.c.l.b16 %v467
        %v1013 = vpack.c.b16 %v1011, %v1010
        %v1014 = vpack.c.b16 %v1012, %v1012
        %vm1016 = vcmask 162816
        %v1018 = vsel %vm1016, %v1006, 0
        %v1021 = vsel %vm546, %v1014, 0
        %1023 = vmatprep.subr.bf16.mxu0 0
        %1024 = vmatpush1.bf16.msra.mxu0 %v1013
        %1025 = vmatprep.subr.bf16.mxu0 0
        %1026 = vmatpush1.bf16.msra.mxu0 %v1021
        %1027 = vmatprep.subr.bf16.mxu0 0
        %1028 = vmatpush1.bf16.msra.mxu0 0
        %1029 = vmatprep.subr.bf16.mxu0 0
        %1030 = vmatpush1.bf16.msra.mxu0 0
        %1031 = vmatprep.subr.bf16.mxu0 0
        %1032 = vmatpush1.bf16.msra.mxu0 0
        %1033 = vmatprep.subr.bf16.mxu0 0
        %1034 = vmatpush1.bf16.msra.mxu0 0
        %1035 = vmatprep.subr.bf16.mxu0 0
        %1036 = vmatpush1.bf16.msra.mxu0 0
        %1037 = vmatprep.subr.bf16.mxu0 0
        %1038 = vmatpush1.bf16.msra.mxu0 0
        %1039 = vmatprep.subr.bf16.mxu0 0
        %1040 = vmatpush1.bf16.msra.mxu0 0
        %1041 = vmatprep.subr.bf16.mxu0 0
        %1042 = vmatpush1.bf16.msra.mxu0 0
        %1043 = vmatprep.subr.bf16.mxu0 0
        %1044 = vmatpush1.bf16.msra.mxu0 0
        %1045 = vmatprep.subr.bf16.mxu0 0
        %1046 = vmatpush1.bf16.msra.mxu0 0
        %1047 = vmatprep.subr.bf16.mxu0 0
        %1048 = vmatpush1.bf16.msra.mxu0 0
        %1049 = vmatprep.subr.bf16.mxu0 0
        %1050 = vmatpush1.bf16.msra.mxu0 0
        %1051 = vmatprep.subr.bf16.mxu0 0
        %1052 = vmatpush1.bf16.msra.mxu0 0
        %1053 = vmatprep.subr.bf16.mxu0 0
        %1054 = vmatpush1.bf16.msra.mxu0 0
        %1055 = vmatprep.mubr.bf16.mxu0 0
        %1056 = vmatmul.mubr.bf16.gmra.mrb[0].mxu0 %v1018
        %v1057 = vpop.f32.mrb[0].mxu0
        %v1058 = vadd.f32 0.0, %v1057
        %v1059 = vpop.f32.mrb[0].mxu0
        %v1060 = vpop.f32.mrb[0].mxu0
        %v1061 = vadd.f32 0.0, %v1060
        %v1062 = vpop.f32.mrb[0].mxu0
        %1063 = vdwg.mxu0
        %v1067 = vunpack.c.l.b16 %v462
        %v1068 = vunpack.c.l.b16 %v463
        %v1069 = vunpack.c.l.b16 %v464
        %v1070 = vpack.c.b16 %v1068, %v1067
        %v1071 = vpack.c.b16 %v1069, %v1069
        %v1073 = vsel %vm1016, %v993, 0
        %v1076 = vsel %vm546, %v1071, 0
        %1078 = vmatprep.subr.bf16.mxu0 0
        %1079 = vmatpush1.bf16.msra.mxu0 %v1070
        %1080 = vmatprep.subr.bf16.mxu0 0
        %1081 = vmatpush1.bf16.msra.mxu0 %v1076
        %1082 = vmatprep.subr.bf16.mxu0 0
        %1083 = vmatpush1.bf16.msra.mxu0 0
        %1084 = vmatprep.subr.bf16.mxu0 0
        %1085 = vmatpush1.bf16.msra.mxu0 0
        %1086 = vmatprep.subr.bf16.mxu0 0
        %1087 = vmatpush1.bf16.msra.mxu0 0
        %1088 = vmatprep.subr.bf16.mxu0 0
        %1089 = vmatpush1.bf16.msra.mxu0 0
        %1090 = vmatprep.subr.bf16.mxu0 0
        %1091 = vmatpush1.bf16.msra.mxu0 0
        %1092 = vmatprep.subr.bf16.mxu0 0
        %1093 = vmatpush1.bf16.msra.mxu0 0
        %1094 = vmatprep.subr.bf16.mxu0 0
        %1095 = vmatpush1.bf16.msra.mxu0 0
        %1096 = vmatprep.subr.bf16.mxu0 0
        %1097 = vmatpush1.bf16.msra.mxu0 0
        %1098 = vmatprep.subr.bf16.mxu0 0
        %1099 = vmatpush1.bf16.msra.mxu0 0
        %1100 = vmatprep.subr.bf16.mxu0 0
        %1101 = vmatpush1.bf16.msra.mxu0 0
        %1102 = vmatprep.subr.bf16.mxu0 0
        %1103 = vmatpush1.bf16.msra.mxu0 0
        %1104 = vmatprep.subr.bf16.mxu0 0
        %1105 = vmatpush1.bf16.msra.mxu0 0
        %1106 = vmatprep.subr.bf16.mxu0 0
        %1107 = vmatpush1.bf16.msra.mxu0 0
        %1108 = vmatprep.subr.bf16.mxu0 0
        %1109 = vmatpush1.bf16.msra.mxu0 0
        %1110 = vmatprep.mubr.bf16.mxu0 0
        %1111 = vmatmul.mubr.bf16.gmra.mrb[0].mxu0 %v1073
        %v1112 = vpop.f32.mrb[0].mxu0
        %v1113 = vadd.f32 %v1058, %v1112
        %v1114 = vpop.f32.mrb[0].mxu0
        %v1115 = vpop.f32.mrb[0].mxu0
        %v1116 = vadd.f32 %v1061, %v1115
        %v1117 = vpop.f32.mrb[0].mxu0
        %1118 = vdwg.mxu0
        %v1121 = vrot.slane %v993, 1
        %v1122 = vrot.slane %v994, 1
        %v1123 = vsel %vm641, %v1121, %v1122
        %v1127 = vunpack.c.l.b16 %v468
        %v1128 = vunpack.c.l.b16 %v469
        %v1129 = vunpack.c.l.b16 %v470
        %v1130 = vpack.c.b16 %v1128, %v1127
        %v1131 = vpack.c.b16 %v1129, %v1129
        %v1134 = vsel %vm1016, %v1123, 0
        %v1137 = vsel %vm546, %v1131, 0
        %1139 = vmatprep.subr.bf16.mxu0 0
        %1140 = vmatpush1.bf16.msra.mxu0 %v1130
        %1141 = vmatprep.subr.bf16.mxu0 0
        %1142 = vmatpush1.bf16.msra.mxu0 %v1137
        %1143 = vmatprep.subr.bf16.mxu0 0
        %1144 = vmatpush1.bf16.msra.mxu0 0
        %1145 = vmatprep.subr.bf16.mxu0 0
        %1146 = vmatpush1.bf16.msra.mxu0 0
        %1147 = vmatprep.subr.bf16.mxu0 0
        %1148 = vmatpush1.bf16.msra.mxu0 0
        %1149 = vmatprep.subr.bf16.mxu0 0
        %1150 = vmatpush1.bf16.msra.mxu0 0
        %1151 = vmatprep.subr.bf16.mxu0 0
        %1152 = vmatpush1.bf16.msra.mxu0 0
        %1153 = vmatprep.subr.bf16.mxu0 0
        %1154 = vmatpush1.bf16.msra.mxu0 0
        %1155 = vmatprep.subr.bf16.mxu0 0
        %1156 = vmatpush1.bf16.msra.mxu0 0
        %1157 = vmatprep.subr.bf16.mxu0 0
        %1158 = vmatpush1.bf16.msra.mxu0 0
        %1159 = vmatprep.subr.bf16.mxu0 0
        %1160 = vmatpush1.bf16.msra.mxu0 0
        %1161 = vmatprep.subr.bf16.mxu0 0
        %1162 = vmatpush1.bf16.msra.mxu0 0
        %1163 = vmatprep.subr.bf16.mxu0 0
        %1164 = vmatpush1.bf16.msra.mxu0 0
        %1165 = vmatprep.subr.bf16.mxu0 0
        %1166 = vmatpush1.bf16.msra.mxu0 0
        %1167 = vmatprep.subr.bf16.mxu0 0
        %1168 = vmatpush1.bf16.msra.mxu0 0
        %1169 = vmatprep.subr.bf16.mxu0 0
        %1170 = vmatpush1.bf16.msra.mxu0 0
        %1171 = vmatprep.mubr.bf16.mxu0 0
        %1172 = vmatmul.mubr.bf16.gmra.mrb[0].mxu0 %v1134
        %v1173 = vpop.f32.mrb[0].mxu0
        %v1174 = vadd.f32 0.0, %v1173
        %v1175 = vpop.f32.mrb[0].mxu0
        %v1176 = vpop.f32.mrb[0].mxu0
        %v1177 = vadd.f32 0.0, %v1176
        %v1178 = vpop.f32.mrb[0].mxu0
        %1179 = vdwg.mxu0
        %v1180 = vadd.f32 %v1113, %v1174
        %v1181 = vadd.f32 %v1116, %v1177
        %v1182 = vrot.slane %v996, 1
        %v1183 = vrot.slane %v998, 2
        %v1184 = vor.u32 %v1182, %v1183
        %v1185 = vshrl.u32 %v994, 16
        %v1187 = vrot.slane %v1185, 1
        %v1188 = vrot.slane %v1003, 2
        %v1189 = vor.u32 %v1187, %v1188
        %v1190 = vsel %vm694, %v1184, %v1189
        %v1194 = vunpack.c.l.b16 %v471
        %v1195 = vunpack.c.l.b16 %v472
        %v1196 = vunpack.c.l.b16 %v473
        %v1197 = vpack.c.b16 %v1195, %v1194
        %v1198 = vpack.c.b16 %v1196, %v1196
        %v1201 = vsel %vm1016, %v1190, 0
        %v1204 = vsel %vm546, %v1198, 0
        %1206 = vmatprep.subr.bf16.mxu0 0
        %1207 = vmatpush1.bf16.msra.mxu0 %v1197
        %1208 = vmatprep.subr.bf16.mxu0 0
        %1209 = vmatpush1.bf16.msra.mxu0 %v1204
        %1210 = vmatprep.subr.bf16.mxu0 0
        %1211 = vmatpush1.bf16.msra.mxu0 0
        %1212 = vmatprep.subr.bf16.mxu0 0
        %1213 = vmatpush1.bf16.msra.mxu0 0
        %1214 = vmatprep.subr.bf16.mxu0 0
        %1215 = vmatpush1.bf16.msra.mxu0 0
        %1216 = vmatprep.subr.bf16.mxu0 0
        %1217 = vmatpush1.bf16.msra.mxu0 0
        %1218 = vmatprep.subr.bf16.mxu0 0
        %1219 = vmatpush1.bf16.msra.mxu0 0
        %1220 = vmatprep.subr.bf16.mxu0 0
        %1221 = vmatpush1.bf16.msra.mxu0 0
        %1222 = vmatprep.subr.bf16.mxu0 0
        %1223 = vmatpush1.bf16.msra.mxu0 0
        %1224 = vmatprep.subr.bf16.mxu0 0
        %1225 = vmatpush1.bf16.msra.mxu0 0
        %1226 = vmatprep.subr.bf16.mxu0 0
        %1227 = vmatpush1.bf16.msra.mxu0 0
        %1228 = vmatprep.subr.bf16.mxu0 0
        %1229 = vmatpush1.bf16.msra.mxu0 0
        %1230 = vmatprep.subr.bf16.mxu0 0
        %1231 = vmatpush1.bf16.msra.mxu0 0
        %1232 = vmatprep.subr.bf16.mxu0 0
        %1233 = vmatpush1.bf16.msra.mxu0 0
        %1234 = vmatprep.subr.bf16.mxu0 0
        %1235 = vmatpush1.bf16.msra.mxu0 0
        %1236 = vmatprep.subr.bf16.mxu0 0
        %1237 = vmatpush1.bf16.msra.mxu0 0
        %1238 = vmatprep.mubr.bf16.mxu0 0
        %1239 = vmatmul.mubr.bf16.gmra.mrb[0].mxu0 %v1201
        %v1240 = vpop.f32.mrb[0].mxu0
        %v1241 = vadd.f32 0.0, %v1240
        %v1242 = vpop.f32.mrb[0].mxu0
        %v1243 = vpop.f32.mrb[0].mxu0
        %v1244 = vadd.f32 0.0, %v1243
        %v1245 = vpop.f32.mrb[0].mxu0
        %1246 = vdwg.mxu0
        %v1247 = vadd.f32 %v1180, %v1241
        %v1248 = vadd.f32 %v1181, %v1244
        %v1249 = vrot.slane %v993, 2
        %v1250 = vrot.slane %v994, 2
        %v1251 = vsel %vm753, %v1249, %v1250
        %v1255 = vunpack.c.l.b16 %v474
        %v1256 = vunpack.c.l.b16 %v475
        %v1257 = vunpack.c.l.b16 %v476
        %v1258 = vpack.c.b16 %v1256, %v1255
        %v1259 = vpack.c.b16 %v1257, %v1257
        %v1262 = vsel %vm1016, %v1251, 0
        %v1265 = vsel %vm546, %v1259, 0
        %1267 = vmatprep.subr.bf16.mxu0 0
        %1268 = vmatpush1.bf16.msra.mxu0 %v1258
        %1269 = vmatprep.subr.bf16.mxu0 0
        %1270 = vmatpush1.bf16.msra.mxu0 %v1265
        %1271 = vmatprep.subr.bf16.mxu0 0
        %1272 = vmatpush1.bf16.msra.mxu0 0
        %1273 = vmatprep.subr.bf16.mxu0 0
        %1274 = vmatpush1.bf16.msra.mxu0 0
        %1275 = vmatprep.subr.bf16.mxu0 0
        %1276 = vmatpush1.bf16.msra.mxu0 0
        %1277 = vmatprep.subr.bf16.mxu0 0
        %1278 = vmatpush1.bf16.msra.mxu0 0
        %1279 = vmatprep.subr.bf16.mxu0 0
        %1280 = vmatpush1.bf16.msra.mxu0 0
        %1281 = vmatprep.subr.bf16.mxu0 0
        %1282 = vmatpush1.bf16.msra.mxu0 0
        %1283 = vmatprep.subr.bf16.mxu0 0
        %1284 = vmatpush1.bf16.msra.mxu0 0
        %1285 = vmatprep.subr.bf16.mxu0 0
        %1286 = vmatpush1.bf16.msra.mxu0 0
        %1287 = vmatprep.subr.bf16.mxu0 0
        %1288 = vmatpush1.bf16.msra.mxu0 0
        %1289 = vmatprep.subr.bf16.mxu0 0
        %1290 = vmatpush1.bf16.msra.mxu0 0
        %1291 = vmatprep.subr.bf16.mxu0 0
        %1292 = vmatpush1.bf16.msra.mxu0 0
        %1293 = vmatprep.subr.bf16.mxu0 0
        %1294 = vmatpush1.bf16.msra.mxu0 0
        %1295 = vmatprep.subr.bf16.mxu0 0
        %1296 = vmatpush1.bf16.msra.mxu0 0
        %1297 = vmatprep.subr.bf16.mxu0 0
        %1298 = vmatpush1.bf16.msra.mxu0 0
        %1299 = vmatprep.mubr.bf16.mxu0 0
        %1300 = vmatmul.mubr.bf16.gmra.mrb[0].mxu0 %v1262
        %v1301 = vpop.f32.mrb[0].mxu0
        %v1302 = vadd.f32 0.0, %v1301
        %v1303 = vpop.f32.mrb[0].mxu0
        %v1304 = vpop.f32.mrb[0].mxu0
        %v1305 = vadd.f32 0.0, %v1304
        %v1306 = vpop.f32.mrb[0].mxu0
        %1307 = vdwg.mxu0
        %v1308 = vadd.f32 %v1247, %v1302
        %v1309 = vadd.f32 %v1248, %v1305
        %v1310 = vrot.slane %v996, 2
        %v1311 = vrot.slane %v998, 3
        %v1312 = vor.u32 %v1310, %v1311
        %v1313 = vrot.slane %v1185, 2
        %v1314 = vrot.slane %v1003, 3
        %v1315 = vor.u32 %v1313, %v1314
        %v1316 = vsel %vm806, %v1312, %v1315
        %v1320 = vunpack.c.l.b16 %v477
        %v1321 = vunpack.c.l.b16 %v478
        %v1322 = vunpack.c.l.b16 %v479
        %v1323 = vpack.c.b16 %v1321, %v1320
        %v1324 = vpack.c.b16 %v1322, %v1322
        %v1327 = vsel %vm1016, %v1316, 0
        %v1330 = vsel %vm546, %v1324, 0
        %1332 = vmatprep.subr.bf16.mxu0 0
        %1333 = vmatpush1.bf16.msra.mxu0 %v1323
        %1334 = vmatprep.subr.bf16.mxu0 0
        %1335 = vmatpush1.bf16.msra.mxu0 %v1330
        %1336 = vmatprep.subr.bf16.mxu0 0
        %1337 = vmatpush1.bf16.msra.mxu0 0
        %1338 = vmatprep.subr.bf16.mxu0 0
        %1339 = vmatpush1.bf16.msra.mxu0 0
        %1340 = vmatprep.subr.bf16.mxu0 0
        %1341 = vmatpush1.bf16.msra.mxu0 0
        %1342 = vmatprep.subr.bf16.mxu0 0
        %1343 = vmatpush1.bf16.msra.mxu0 0
        %1344 = vmatprep.subr.bf16.mxu0 0
        %1345 = vmatpush1.bf16.msra.mxu0 0
        %1346 = vmatprep.subr.bf16.mxu0 0
        %1347 = vmatpush1.bf16.msra.mxu0 0
        %1348 = vmatprep.subr.bf16.mxu0 0
        %1349 = vmatpush1.bf16.msra.mxu0 0
        %1350 = vmatprep.subr.bf16.mxu0 0
        %1351 = vmatpush1.bf16.msra.mxu0 0
        %1352 = vmatprep.subr.bf16.mxu0 0
        %1353 = vmatpush1.bf16.msra.mxu0 0
        %1354 = vmatprep.subr.bf16.mxu0 0
        %1355 = vmatpush1.bf16.msra.mxu0 0
        %1356 = vmatprep.subr.bf16.mxu0 0
        %1357 = vmatpush1.bf16.msra.mxu0 0
        %1358 = vmatprep.subr.bf16.mxu0 0
        %1359 = vmatpush1.bf16.msra.mxu0 0
        %1360 = vmatprep.subr.bf16.mxu0 0
        %1361 = vmatpush1.bf16.msra.mxu0 0
        %1362 = vmatprep.subr.bf16.mxu0 0
        %1363 = vmatpush1.bf16.msra.mxu0 0
        %1364 = vmatprep.mubr.bf16.mxu0 0
        %1365 = vmatmul.mubr.bf16.gmra.mrb[0].mxu0 %v1327
        %v1366 = vpop.f32.mrb[0].mxu0
        %v1367 = vadd.f32 0.0, %v1366
        %v1368 = vpop.f32.mrb[0].mxu0
        %v1369 = vpop.f32.mrb[0].mxu0
        %v1370 = vadd.f32 0.0, %v1369
        %v1371 = vpop.f32.mrb[0].mxu0
        %1372 = vdwg.mxu0
        %v1373 = vadd.f32 %v1308, %v1367
        %v1374 = vadd.f32 %v1309, %v1370
        %v1375 = vrot.slane %v993, 3
        %v1376 = vrot.slane %v994, 3
        %v1377 = vsel %vm863, %v1375, %v1376
        %v1381 = vunpack.c.l.b16 %v480
        %v1382 = vunpack.c.l.b16 %v481
        %v1383 = vunpack.c.l.b16 %v482
        %v1384 = vpack.c.b16 %v1382, %v1381
        %v1385 = vpack.c.b16 %v1383, %v1383
        %v1388 = vsel %vm1016, %v1377, 0
        %v1391 = vsel %vm546, %v1385, 0
        %1393 = vmatprep.subr.bf16.mxu0 0
        %1394 = vmatpush1.bf16.msra.mxu0 %v1384
        %1395 = vmatprep.subr.bf16.mxu0 0
        %1396 = vmatpush1.bf16.msra.mxu0 %v1391
        %1397 = vmatprep.subr.bf16.mxu0 0
        %1398 = vmatpush1.bf16.msra.mxu0 0
        %1399 = vmatprep.subr.bf16.mxu0 0
        %1400 = vmatpush1.bf16.msra.mxu0 0
        %1401 = vmatprep.subr.bf16.mxu0 0
        %1402 = vmatpush1.bf16.msra.mxu0 0
        %1403 = vmatprep.subr.bf16.mxu0 0
        %1404 = vmatpush1.bf16.msra.mxu0 0
        %1405 = vmatprep.subr.bf16.mxu0 0
        %1406 = vmatpush1.bf16.msra.mxu0 0
        %1407 = vmatprep.subr.bf16.mxu0 0
        %1408 = vmatpush1.bf16.msra.mxu0 0
        %1409 = vmatprep.subr.bf16.mxu0 0
        %1410 = vmatpush1.bf16.msra.mxu0 0
        %1411 = vmatprep.subr.bf16.mxu0 0
        %1412 = vmatpush1.bf16.msra.mxu0 0
        %1413 = vmatprep.subr.bf16.mxu0 0
        %1414 = vmatpush1.bf16.msra.mxu0 0
        %1415 = vmatprep.subr.bf16.mxu0 0
        %1416 = vmatpush1.bf16.msra.mxu0 0
        %1417 = vmatprep.subr.bf16.mxu0 0
        %1418 = vmatpush1.bf16.msra.mxu0 0
        %1419 = vmatprep.subr.bf16.mxu0 0
        %1420 = vmatpush1.bf16.msra.mxu0 0
        %1421 = vmatprep.subr.bf16.mxu0 0
        %1422 = vmatpush1.bf16.msra.mxu0 0
        %1423 = vmatprep.subr.bf16.mxu0 0
        %1424 = vmatpush1.bf16.msra.mxu0 0
        %1425 = vmatprep.mubr.bf16.mxu0 0
        %1426 = vmatmul.mubr.bf16.gmra.mrb[0].mxu0 %v1388
        %v1427 = vpop.f32.mrb[0].mxu0
        %v1428 = vadd.f32 0.0, %v1427
        %v1429 = vpop.f32.mrb[0].mxu0
        %v1430 = vpop.f32.mrb[0].mxu0
        %v1431 = vadd.f32 0.0, %v1430
        %v1432 = vpop.f32.mrb[0].mxu0
        %1433 = vdwg.mxu0
        %v1434 = vadd.f32 %v1373, %v1428
        %v1435 = vadd.f32 %v1374, %v1431
        %v1436 = vrot.slane %v996, 3
        %v1437 = vrot.slane %v998, 4
        %v1438 = vor.u32 %v1436, %v1437
        %v1439 = vrot.slane %v1185, 3
        %v1440 = vrot.slane %v1003, 4
        %v1441 = vor.u32 %v1439, %v1440
        %v1442 = vsel %vm916, %v1438, %v1441
        %v1446 = vunpack.c.l.b16 %v483
        %v1447 = vunpack.c.l.b16 %v484
        %v1448 = vunpack.c.l.b16 %v485
        %v1449 = vpack.c.b16 %v1447, %v1446
        %v1450 = vpack.c.b16 %v1448, %v1448
        %v1453 = vsel %vm1016, %v1442, 0
        %v1456 = vsel %vm546, %v1450, 0
        %1458 = vmatprep.subr.bf16.mxu0 0
        %1459 = vmatpush1.bf16.msra.mxu0 %v1449
        %1460 = vmatprep.subr.bf16.mxu0 0
        %1461 = vmatpush1.bf16.msra.mxu0 %v1456
        %1462 = vmatprep.subr.bf16.mxu0 0
        %1463 = vmatpush1.bf16.msra.mxu0 0
        %1464 = vmatprep.subr.bf16.mxu0 0
        %1465 = vmatpush1.bf16.msra.mxu0 0
        %1466 = vmatprep.subr.bf16.mxu0 0
        %1467 = vmatpush1.bf16.msra.mxu0 0
        %1468 = vmatprep.subr.bf16.mxu0 0
        %1469 = vmatpush1.bf16.msra.mxu0 0
        %1470 = vmatprep.subr.bf16.mxu0 0
        %1471 = vmatpush1.bf16.msra.mxu0 0
        %1472 = vmatprep.subr.bf16.mxu0 0
        %1473 = vmatpush1.bf16.msra.mxu0 0
        %1474 = vmatprep.subr.bf16.mxu0 0
        %1475 = vmatpush1.bf16.msra.mxu0 0
        %1476 = vmatprep.subr.bf16.mxu0 0
        %1477 = vmatpush1.bf16.msra.mxu0 0
        %1478 = vmatprep.subr.bf16.mxu0 0
        %1479 = vmatpush1.bf16.msra.mxu0 0
        %1480 = vmatprep.subr.bf16.mxu0 0
        %1481 = vmatpush1.bf16.msra.mxu0 0
        %1482 = vmatprep.subr.bf16.mxu0 0
        %1483 = vmatpush1.bf16.msra.mxu0 0
        %1484 = vmatprep.subr.bf16.mxu0 0
        %1485 = vmatpush1.bf16.msra.mxu0 0
        %1486 = vmatprep.subr.bf16.mxu0 0
        %1487 = vmatpush1.bf16.msra.mxu0 0
        %1488 = vmatprep.subr.bf16.mxu0 0
        %1489 = vmatpush1.bf16.msra.mxu0 0
        %1490 = vmatprep.mubr.bf16.mxu0 0
        %1491 = vmatmul.mubr.bf16.gmra.mrb[0].mxu0 %v1453
        %v1492 = vpop.f32.mrb[0].mxu0
        %v1493 = vadd.f32 0.0, %v1492
        %v1494 = vpop.f32.mrb[0].mxu0
        %v1495 = vpop.f32.mrb[0].mxu0
        %v1496 = vadd.f32 0.0, %v1495
        %v1497 = vpop.f32.mrb[0].mxu0
        %1498 = vdwg.mxu0
        %v1499 = vadd.f32 %v1434, %v1493
        %v1500 = vadd.f32 %v1435, %v1496
        %v1502 = vlaneseq
        %v1503 = vshrl.u32 %v1502, 7
        %v1504 = vsub.s32 0, %v1503
        %v1505 = vrot.slane %v486, %v1504
        %v1507 = vadd.f32 %v1499, %v1505
        %v1508 = vadd.f32 %v1500, %v1505
        %v1509 = vmax.f32 %v1507, 0.0
        %v1510 = vmax.f32 %v1508, 0.0
        %v1512 = vsel %vm1016, %v1509, 0
        %v1515 = vsel %vm1016, %v1510, 0
        %vm1517 = vcmask 1043456
        %v1519 = vsel %vm1517, %v489, 0
        %1521 = vmatprep.subr.mxu0 0.0
        %1522 = vmatpush1.msra.mxu0 %v487
        %1523 = vmatprep.subr.mxu0 0.0
        %1524 = vmatpush1.msra.mxu0 %v488
        %1525 = vmatprep.subr.mxu0 0.0
        %1526 = vmatpush1.msra.mxu0 %v1519
        %1527 = vmatprep.subr.mxu0 0.0
        %1528 = vmatpush1.msra.mxu0 0.0
        %1529 = vmatprep.subr.mxu0 0.0
        %1530 = vmatpush1.msra.mxu0 0.0
        %1531 = vmatprep.subr.mxu0 0.0
        %1532 = vmatpush1.msra.mxu0 0.0
        %1533 = vmatprep.subr.mxu0 0.0
        %1534 = vmatpush1.msra.mxu0 0.0
        %1535 = vmatprep.subr.mxu0 0.0
        %1536 = vmatpush1.msra.mxu0 0.0
        %1537 = vmatprep.subr.mxu0 0.0
        %1538 = vmatpush1.msra.mxu0 0.0
        %1539 = vmatprep.subr.mxu0 0.0
        %1540 = vmatpush1.msra.mxu0 0.0
        %1541 = vmatprep.subr.mxu0 0.0
        %1542 = vmatpush1.msra.mxu0 0.0
        %1543 = vmatprep.subr.mxu0 0.0
        %1544 = vmatpush1.msra.mxu0 0.0
        %1545 = vmatprep.subr.mxu0 0.0
        %1546 = vmatpush1.msra.mxu0 0.0
        %1547 = vmatprep.subr.mxu0 0.0
        %1548 = vmatpush1.msra.mxu0 0.0
        %1549 = vmatprep.subr.mxu0 0.0
        %1550 = vmatpush1.msra.mxu0 0.0
        %1551 = vmatprep.subr.mxu0 0.0
        %1552 = vmatpush1.msra.mxu0 0.0
        %1553 = vmatprep.subr.mxu0 0.0
        %1554 = vmatpush1.msra.mxu0 0.0
        %1555 = vmatprep.subr.mxu0 0.0
        %1556 = vmatpush1.msra.mxu0 0.0
        %1557 = vmatprep.subr.mxu0 0.0
        %1558 = vmatpush1.msra.mxu0 0.0
        %1559 = vmatprep.subr.mxu0 0.0
        %1560 = vmatpush1.msra.mxu0 0.0
        %1561 = vmatprep.subr.mxu0 0.0
        %1562 = vmatpush1.msra.mxu0 0.0
        %1563 = vmatprep.subr.mxu0 0.0
        %1564 = vmatpush1.msra.mxu0 0.0
        %1565 = vmatprep.subr.mxu0 0.0
        %1566 = vmatpush1.msra.mxu0 0.0
        %1567 = vmatprep.subr.mxu0 0.0
        %1568 = vmatpush1.msra.mxu0 0.0
        %1569 = vmatprep.subr.mxu0 0.0
        %1570 = vmatpush1.msra.mxu0 0.0
        %1571 = vmatprep.subr.mxu0 0.0
        %1572 = vmatpush1.msra.mxu0 0.0
        %1573 = vmatprep.subr.mxu0 0.0
        %1574 = vmatpush1.msra.mxu0 0.0
        %1575 = vmatprep.subr.mxu0 0.0
        %1576 = vmatpush1.msra.mxu0 0.0
        %1577 = vmatprep.subr.mxu0 0.0
        %1578 = vmatpush1.msra.mxu0 0.0
        %1579 = vmatprep.subr.mxu0 0.0
        %1580 = vmatpush1.msra.mxu0 0.0
        %1581 = vmatprep.subr.mxu0 0.0
        %1582 = vmatpush1.msra.mxu0 0.0
        %1583 = vmatprep.subr.mxu0 0.0
        %1584 = vmatpush1.msra.mxu0 0.0
        %1585 = vmatprep.mubr.f32.mxu0 0.0
        %1586 = vmatmul.mubr.f32.gmra.mrb[0].mxu0 %v1512
        %v1587 = vpop.f32.mrb[0].mxu0
        %v1588 = vadd.f32 0.0, %v1587
        %v1589 = vpop.f32.mrb[0].mxu0
        %1590 = vmatprep.mubr.f32.mxu0 0.0
        %1591 = vmatmul.mubr.f32.gmra.mrb[0].mxu0 %v1515
        %v1592 = vpop.f32.mrb[0].mxu0
        %v1593 = vadd.f32 0.0, %v1592
        %v1594 = vpop.f32.mrb[0].mxu0
        %1595 = vdwg.mxu0
        %vm1596 = vcmask 89088
        %v1597 = vsel %vm1596, %v1588, 0.0
        %v1598 = vsel %vm1596, %v1593, 0.0
        %v1599 = vadd.f32 %v1597, %v1598
        %v1600 = vrot.slane %v1599, 4
        %v1601 = vadd.f32 %v1599, %v1600
        %v1602 = vrot.slane %v1601, 2
        %v1603 = vadd.f32 %v1601, %v1602
        %v1604 = vrot.slane %v1603, 1
        %v1605 = vadd.f32 %v1603, %v1604
        %v1606 = vrcp.pop 16.0
        %v1607 = vmul.f32 %v1605, %v1606
        %v1608 = vadd.f32 %v1607, %v490
        %v1610 = vsel %vm1596, %v1608, 0
        %v1613 = vsel %vm517, %v492, 0
        %1615 = vmatprep.subr.mxu0 0.0
        %1616 = vmatpush1.msra.mxu0 %v491
        %1617 = vmatprep.subr.mxu0 0.0
        %1618 = vmatpush1.msra.mxu0 %v1613
        %1619 = vmatprep.subr.mxu0 0.0
        %1620 = vmatpush1.msra.mxu0 0.0
        %1621 = vmatprep.subr.mxu0 0.0
        %1622 = vmatpush1.msra.mxu0 0.0
        %1623 = vmatprep.subr.mxu0 0.0
        %1624 = vmatpush1.msra.mxu0 0.0
        %1625 = vmatprep.subr.mxu0 0.0
        %1626 = vmatpush1.msra.mxu0 0.0
        %1627 = vmatprep.subr.mxu0 0.0
        %1628 = vmatpush1.msra.mxu0 0.0
        %1629 = vmatprep.subr.mxu0 0.0
        %1630 = vmatpush1.msra.mxu0 0.0
        %1631 = vmatprep.subr.mxu0 0.0
        %1632 = vmatpush1.msra.mxu0 0.0
        %1633 = vmatprep.subr.mxu0 0.0
        %1634 = vmatpush1.msra.mxu0 0.0
        %1635 = vmatprep.subr.mxu0 0.0
        %1636 = vmatpush1.msra.mxu0 0.0
        %1637 = vmatprep.subr.mxu0 0.0
        %1638 = vmatpush1.msra.mxu0 0.0
        %1639 = vmatprep.subr.mxu0 0.0
        %1640 = vmatpush1.msra.mxu0 0.0
        %1641 = vmatprep.subr.mxu0 0.0
        %1642 = vmatpush1.msra.mxu0 0.0
        %1643 = vmatprep.subr.mxu0 0.0
        %1644 = vmatpush1.msra.mxu0 0.0
        %1645 = vmatprep.subr.mxu0 0.0
        %1646 = vmatpush1.msra.mxu0 0.0
        %1647 = vmatprep.subr.mxu0 0.0
        %1648 = vmatpush1.msra.mxu0 0.0
        %1649 = vmatprep.subr.mxu0 0.0
        %1650 = vmatpush1.msra.mxu0 0.0
        %1651 = vmatprep.subr.mxu0 0.0
        %1652 = vmatpush1.msra.mxu0 0.0
        %1653 = vmatprep.subr.mxu0 0.0
        %1654 = vmatpush1.msra.mxu0 0.0
        %1655 = vmatprep.subr.mxu0 0.0
        %1656 = vmatpush1.msra.mxu0 0.0
        %1657 = vmatprep.subr.mxu0 0.0
        %1658 = vmatpush1.msra.mxu0 0.0
        %1659 = vmatprep.subr.mxu0 0.0
        %1660 = vmatpush1.msra.mxu0 0.0
        %1661 = vmatprep.subr.mxu0 0.0
        %1662 = vmatpush1.msra.mxu0 0.0
        %1663 = vmatprep.subr.mxu0 0.0
        %1664 = vmatpush1.msra.mxu0 0.0
        %1665 = vmatprep.subr.mxu0 0.0
        %1666 = vmatpush1.msra.mxu0 0.0
        %1667 = vmatprep.subr.mxu0 0.0
        %1668 = vmatpush1.msra.mxu0 0.0
        %1669 = vmatprep.subr.mxu0 0.0
        %1670 = vmatpush1.msra.mxu0 0.0
        %1671 = vmatprep.subr.mxu0 0.0
        %1672 = vmatpush1.msra.mxu0 0.0
        %1673 = vmatprep.subr.mxu0 0.0
        %1674 = vmatpush1.msra.mxu0 0.0
        %1675 = vmatprep.subr.mxu0 0.0
        %1676 = vmatpush1.msra.mxu0 0.0
        %1677 = vmatprep.subr.mxu0 0.0
        %1678 = vmatpush1.msra.mxu0 0.0
        %1679 = vmatprep.mubr.f32.mxu0 0.0
        %1680 = vmatmul.mubr.f32.gmra.mrb[0].mxu0 %v1610
        %v1681 = vpop.f32.mrb[0].mxu0
        %v1682 = vadd.f32 %v493, %v1681
        %v1683 = vpop.f32.mrb[0].mxu0
        %1684 = vdwg.mxu0
        %v1685 = vmax.f32 %v1682, 0.0
        %vm1686 = vcmask 130048
        %v1688 = vsel %vm1686, %v1685, 0
        %1690 = vmatprep.subr.mxu0 0.0
        %1691 = vmatpush1.msra.mxu0 %v494
        %1692 = vmatprep.subr.mxu0 0.0
        %1693 = vmatpush1.msra.mxu0 %v495
        %1694 = vmatprep.subr.mxu0 0.0
        %1695 = vmatpush1.msra.mxu0 0.0
        %1696 = vmatprep.subr.mxu0 0.0
        %1697 = vmatpush1.msra.mxu0 0.0
        %1698 = vmatprep.subr.mxu0 0.0
        %1699 = vmatpush1.msra.mxu0 0.0
        %1700 = vmatprep.subr.mxu0 0.0
        %1701 = vmatpush1.msra.mxu0 0.0
        %1702 = vmatprep.subr.mxu0 0.0
        %1703 = vmatpush1.msra.mxu0 0.0
        %1704 = vmatprep.subr.mxu0 0.0
        %1705 = vmatpush1.msra.mxu0 0.0
        %1706 = vmatprep.subr.mxu0 0.0
        %1707 = vmatpush1.msra.mxu0 0.0
        %1708 = vmatprep.subr.mxu0 0.0
        %1709 = vmatpush1.msra.mxu0 0.0
        %1710 = vmatprep.subr.mxu0 0.0
        %1711 = vmatpush1.msra.mxu0 0.0
        %1712 = vmatprep.subr.mxu0 0.0
        %1713 = vmatpush1.msra.mxu0 0.0
        %1714 = vmatprep.subr.mxu0 0.0
        %1715 = vmatpush1.msra.mxu0 0.0
        %1716 = vmatprep.subr.mxu0 0.0
        %1717 = vmatpush1.msra.mxu0 0.0
        %1718 = vmatprep.subr.mxu0 0.0
        %1719 = vmatpush1.msra.mxu0 0.0
        %1720 = vmatprep.subr.mxu0 0.0
        %1721 = vmatpush1.msra.mxu0 0.0
        %1722 = vmatprep.subr.mxu0 0.0
        %1723 = vmatpush1.msra.mxu0 0.0
        %1724 = vmatprep.subr.mxu0 0.0
        %1725 = vmatpush1.msra.mxu0 0.0
        %1726 = vmatprep.subr.mxu0 0.0
        %1727 = vmatpush1.msra.mxu0 0.0
        %1728 = vmatprep.subr.mxu0 0.0
        %1729 = vmatpush1.msra.mxu0 0.0
        %1730 = vmatprep.subr.mxu0 0.0
        %1731 = vmatpush1.msra.mxu0 0.0
        %1732 = vmatprep.subr.mxu0 0.0
        %1733 = vmatpush1.msra.mxu0 0.0
        %1734 = vmatprep.subr.mxu0 0.0
        %1735 = vmatpush1.msra.mxu0 0.0
        %1736 = vmatprep.subr.mxu0 0.0
        %1737 = vmatpush1.msra.mxu0 0.0
        %1738 = vmatprep.subr.mxu0 0.0
        %1739 = vmatpush1.msra.mxu0 0.0
        %1740 = vmatprep.subr.mxu0 0.0
        %1741 = vmatpush1.msra.mxu0 0.0
        %1742 = vmatprep.subr.mxu0 0.0
        %1743 = vmatpush1.msra.mxu0 0.0
        %1744 = vmatprep.subr.mxu0 0.0
        %1745 = vmatpush1.msra.mxu0 0.0
        %1746 = vmatprep.subr.mxu0 0.0
        %1747 = vmatpush1.msra.mxu0 0.0
        %1748 = vmatprep.subr.mxu0 0.0
        %1749 = vmatpush1.msra.mxu0 0.0
        %1750 = vmatprep.subr.mxu0 0.0
        %1751 = vmatpush1.msra.mxu0 0.0
        %1752 = vmatprep.subr.mxu0 0.0
        %1753 = vmatpush1.msra.mxu0 0.0
        %1754 = vmatprep.mubr.f32.mxu0 0.0
        %1755 = vmatmul.mubr.f32.gmra.mrb[0].mxu0 %v1688
        %v1756 = vpop.f32.mrb[0].mxu0
        %v1757 = vadd.f32 %v496, %v1756
        %v1758 = vpop.f32.mrb[0].mxu0
        %1759 = vdwg.mxu0
        %vm1760 = vcmask 56320
        %v1762 = vsel %vm1760, %v1757, 0
        %vm1764 = vcmask 1046528
        %v1766 = vsel %vm1764, %v497, 0
        %1768 = vmatprep.subr.mxu0 0.0
        %1769 = vmatpush1.msra.mxu0 %v1766
        %1770 = vmatprep.subr.mxu0 0.0
        %1771 = vmatpush1.msra.mxu0 0.0
        %1772 = vmatprep.subr.mxu0 0.0
        %1773 = vmatpush1.msra.mxu0 0.0
        %1774 = vmatprep.subr.mxu0 0.0
        %1775 = vmatpush1.msra.mxu0 0.0
        %1776 = vmatprep.subr.mxu0 0.0
        %1777 = vmatpush1.msra.mxu0 0.0
        %1778 = vmatprep.subr.mxu0 0.0
        %1779 = vmatpush1.msra.mxu0 0.0
        %1780 = vmatprep.subr.mxu0 0.0
        %1781 = vmatpush1.msra.mxu0 0.0
        %1782 = vmatprep.subr.mxu0 0.0
        %1783 = vmatpush1.msra.mxu0 0.0
        %1784 = vmatprep.subr.mxu0 0.0
        %1785 = vmatpush1.msra.mxu0 0.0
        %1786 = vmatprep.subr.mxu0 0.0
        %1787 = vmatpush1.msra.mxu0 0.0
        %1788 = vmatprep.subr.mxu0 0.0
        %1789 = vmatpush1.msra.mxu0 0.0
        %1790 = vmatprep.subr.mxu0 0.0
        %1791 = vmatpush1.msra.mxu0 0.0
        %1792 = vmatprep.subr.mxu0 0.0
        %1793 = vmatpush1.msra.mxu0 0.0
        %1794 = vmatprep.subr.mxu0 0.0
        %1795 = vmatpush1.msra.mxu0 0.0
        %1796 = vmatprep.subr.mxu0 0.0
        %1797 = vmatpush1.msra.mxu0 0.0
        %1798 = vmatprep.subr.mxu0 0.0
        %1799 = vmatpush1.msra.mxu0 0.0
        %1800 = vmatprep.subr.mxu0 0.0
        %1801 = vmatpush1.msra.mxu0 0.0
        %1802 = vmatprep.subr.mxu0 0.0
        %1803 = vmatpush1.msra.mxu0 0.0
        %1804 = vmatprep.subr.mxu0 0.0
        %1805 = vmatpush1.msra.mxu0 0.0
        %1806 = vmatprep.subr.mxu0 0.0
        %1807 = vmatpush1.msra.mxu0 0.0
        %1808 = vmatprep.subr.mxu0 0.0
        %1809 = vmatpush1.msra.mxu0 0.0
        %1810 = vmatprep.subr.mxu0 0.0
        %1811 = vmatpush1.msra.mxu0 0.0
        %1812 = vmatprep.subr.mxu0 0.0
        %1813 = vmatpush1.msra.mxu0 0.0
        %1814 = vmatprep.subr.mxu0 0.0
        %1815 = vmatpush1.msra.mxu0 0.0
        %1816 = vmatprep.subr.mxu0 0.0
        %1817 = vmatpush1.msra.mxu0 0.0
        %1818 = vmatprep.subr.mxu0 0.0
        %1819 = vmatpush1.msra.mxu0 0.0
        %1820 = vmatprep.subr.mxu0 0.0
        %1821 = vmatpush1.msra.mxu0 0.0
        %1822 = vmatprep.subr.mxu0 0.0
        %1823 = vmatpush1.msra.mxu0 0.0
        %1824 = vmatprep.subr.mxu0 0.0
        %1825 = vmatpush1.msra.mxu0 0.0
        %1826 = vmatprep.subr.mxu0 0.0
        %1827 = vmatpush1.msra.mxu0 0.0
        %1828 = vmatprep.subr.mxu0 0.0
        %1829 = vmatpush1.msra.mxu0 0.0
        %1830 = vmatprep.subr.mxu0 0.0
        %1831 = vmatpush1.msra.mxu0 0.0
        %1832 = vmatprep.mubr.f32.mxu0 0.0
        %1833 = vmatmul.mubr.f32.gmra.mrb[0].mxu0 %v1762
        %v1834 = vpop.f32.mrb[0].mxu0
        %v1835 = vadd.f32 0.0, %v1834
        %v1836 = vpop.f32.mrb[0].mxu0
        %1837 = vdwg.mxu0
        %vm1838 = vcmask 64512
        %v1840 = vsel %vm1838, %v1835, 0
        %1842 = vmatprep.subr.mxu0 0.0
        %1843 = vmatpush1.msra.mxu0 %v512
        %1844 = vmatprep.subr.mxu0 0.0
        %1845 = vmatpush1.msra.mxu0 0.0
        %1846 = vmatprep.subr.mxu0 0.0
        %1847 = vmatpush1.msra.mxu0 0.0
        %1848 = vmatprep.subr.mxu0 0.0
        %1849 = vmatpush1.msra.mxu0 0.0
        %1850 = vmatprep.subr.mxu0 0.0
        %1851 = vmatpush1.msra.mxu0 0.0
        %1852 = vmatprep.subr.mxu0 0.0
        %1853 = vmatpush1.msra.mxu0 0.0
        %1854 = vmatprep.subr.mxu0 0.0
        %1855 = vmatpush1.msra.mxu0 0.0
        %1856 = vmatprep.subr.mxu0 0.0
        %1857 = vmatpush1.msra.mxu0 0.0
        %1858 = vmatprep.subr.mxu0 0.0
        %1859 = vmatpush1.msra.mxu0 0.0
        %1860 = vmatprep.subr.mxu0 0.0
        %1861 = vmatpush1.msra.mxu0 0.0
        %1862 = vmatprep.subr.mxu0 0.0
        %1863 = vmatpush1.msra.mxu0 0.0
        %1864 = vmatprep.subr.mxu0 0.0
        %1865 = vmatpush1.msra.mxu0 0.0
        %1866 = vmatprep.subr.mxu0 0.0
        %1867 = vmatpush1.msra.mxu0 0.0
        %1868 = vmatprep.subr.mxu0 0.0
        %1869 = vmatpush1.msra.mxu0 0.0
        %1870 = vmatprep.subr.mxu0 0.0
        %1871 = vmatpush1.msra.mxu0 0.0
        %1872 = vmatprep.subr.mxu0 0.0
        %1873 = vmatpush1.msra.mxu0 0.0
        %1874 = vmatprep.subr.mxu0 0.0
        %1875 = vmatpush1.msra.mxu0 0.0
        %1876 = vmatprep.subr.mxu0 0.0
        %1877 = vmatpush1.msra.mxu0 0.0
        %1878 = vmatprep.subr.mxu0 0.0
        %1879 = vmatpush1.msra.mxu0 0.0
        %1880 = vmatprep.subr.mxu0 0.0
        %1881 = vmatpush1.msra.mxu0 0.0
        %1882 = vmatprep.subr.mxu0 0.0
        %1883 = vmatpush1.msra.mxu0 0.0
        %1884 = vmatprep.subr.mxu0 0.0
        %1885 = vmatpush1.msra.mxu0 0.0
        %1886 = vmatprep.subr.mxu0 0.0
        %1887 = vmatpush1.msra.mxu0 0.0
        %1888 = vmatprep.subr.mxu0 0.0
        %1889 = vmatpush1.msra.mxu0 0.0
        %1890 = vmatprep.subr.mxu0 0.0
        %1891 = vmatpush1.msra.mxu0 0.0
        %1892 = vmatprep.subr.mxu0 0.0
        %1893 = vmatpush1.msra.mxu0 0.0
        %1894 = vmatprep.subr.mxu0 0.0
        %1895 = vmatpush1.msra.mxu0 0.0
        %1896 = vmatprep.subr.mxu0 0.0
        %1897 = vmatpush1.msra.mxu0 0.0
        %1898 = vmatprep.subr.mxu0 0.0
        %1899 = vmatpush1.msra.mxu0 0.0
        %1900 = vmatprep.subr.mxu0 0.0
        %1901 = vmatpush1.msra.mxu0 0.0
        %1902 = vmatprep.subr.mxu0 0.0
        %1903 = vmatpush1.msra.mxu0 0.0
        %1904 = vmatprep.subr.mxu0 0.0
        %1905 = vmatpush1.msra.mxu0 0.0
        %1906 = vmatprep.mubr.f32.mxu0 0.0
        %1907 = vmatmul.mubr.f32.gmra.mrb[0].mxu0 %v1840
        %v1908 = vpop.f32.mrb[0].mxu0
        %v1909 = vadd.f32 0.0, %v1908
        %v1910 = vpop.f32.mrb[0].mxu0
        %1911 = vdwg.mxu0
        %1912 = vrot.lane.b32.xlu0 %v1835, 120
        %v1913 = vpop.permute.xlu0 %1912
        %v1914 = vsel %vm1838, %v1913, 0
        %1916 = vmatprep.subr.mxu0 0.0
        %1917 = vmatpush1.msra.mxu0 %v512
        %1918 = vmatprep.subr.mxu0 0.0
        %1919 = vmatpush1.msra.mxu0 0.0
        %1920 = vmatprep.subr.mxu0 0.0
        %1921 = vmatpush1.msra.mxu0 0.0
        %1922 = vmatprep.subr.mxu0 0.0
        %1923 = vmatpush1.msra.mxu0 0.0
        %1924 = vmatprep.subr.mxu0 0.0
        %1925 = vmatpush1.msra.mxu0 0.0
        %1926 = vmatprep.subr.mxu0 0.0
        %1927 = vmatpush1.msra.mxu0 0.0
        %1928 = vmatprep.subr.mxu0 0.0
        %1929 = vmatpush1.msra.mxu0 0.0
        %1930 = vmatprep.subr.mxu0 0.0
        %1931 = vmatpush1.msra.mxu0 0.0
        %1932 = vmatprep.subr.mxu0 0.0
        %1933 = vmatpush1.msra.mxu0 0.0
        %1934 = vmatprep.subr.mxu0 0.0
        %1935 = vmatpush1.msra.mxu0 0.0
        %1936 = vmatprep.subr.mxu0 0.0
        %1937 = vmatpush1.msra.mxu0 0.0
        %1938 = vmatprep.subr.mxu0 0.0
        %1939 = vmatpush1.msra.mxu0 0.0
        %1940 = vmatprep.subr.mxu0 0.0
        %1941 = vmatpush1.msra.mxu0 0.0
        %1942 = vmatprep.subr.mxu0 0.0
        %1943 = vmatpush1.msra.mxu0 0.0
        %1944 = vmatprep.subr.mxu0 0.0
        %1945 = vmatpush1.msra.mxu0 0.0
        %1946 = vmatprep.subr.mxu0 0.0
        %1947 = vmatpush1.msra.mxu0 0.0
        %1948 = vmatprep.subr.mxu0 0.0
        %1949 = vmatpush1.msra.mxu0 0.0
        %1950 = vmatprep.subr.mxu0 0.0
        %1951 = vmatpush1.msra.mxu0 0.0
        %1952 = vmatprep.subr.mxu0 0.0
        %1953 = vmatpush1.msra.mxu0 0.0
        %1954 = vmatprep.subr.mxu0 0.0
        %1955 = vmatpush1.msra.mxu0 0.0
        %1956 = vmatprep.subr.mxu0 0.0
        %1957 = vmatpush1.msra.mxu0 0.0
        %1958 = vmatprep.subr.mxu0 0.0
        %1959 = vmatpush1.msra.mxu0 0.0
        %1960 = vmatprep.subr.mxu0 0.0
        %1961 = vmatpush1.msra.mxu0 0.0
        %1962 = vmatprep.subr.mxu0 0.0
        %1963 = vmatpush1.msra.mxu0 0.0
        %1964 = vmatprep.subr.mxu0 0.0
        %1965 = vmatpush1.msra.mxu0 0.0
        %1966 = vmatprep.subr.mxu0 0.0
        %1967 = vmatpush1.msra.mxu0 0.0
        %1968 = vmatprep.subr.mxu0 0.0
        %1969 = vmatpush1.msra.mxu0 0.0
        %1970 = vmatprep.subr.mxu0 0.0
        %1971 = vmatpush1.msra.mxu0 0.0
        %1972 = vmatprep.subr.mxu0 0.0
        %1973 = vmatpush1.msra.mxu0 0.0
        %1974 = vmatprep.subr.mxu0 0.0
        %1975 = vmatpush1.msra.mxu0 0.0
        %1976 = vmatprep.subr.mxu0 0.0
        %1977 = vmatpush1.msra.mxu0 0.0
        %1978 = vmatprep.subr.mxu0 0.0
        %1979 = vmatpush1.msra.mxu0 0.0
        %1980 = vmatprep.mubr.f32.mxu0 0.0
        %1981 = vmatmul.mubr.f32.gmra.mrb[0].mxu0 %v1914
        %v1982 = vpop.f32.mrb[0].mxu0
        %v1983 = vadd.f32 0.0, %v1982
        %v1984 = vpop.f32.mrb[0].mxu0
        %1985 = vdwg.mxu0
        %v1986 = vand.u32 2147483647, %v1909
        %vm1987 = vcmp.lt.f32.partialorder %v1986, 1e-07
        %v1988 = vmul.f32 %v1909, 0.0625
        %v1989 = vmul.f32 %v1988, 1.442695
        %v1990 = vpow.pop %v1989
        %v1991 = vmul.f32 %v1909, 0.5
        %v1992 = vmul.f32 %v1991, 0.0625
        %v1993 = vadd.f32 %v1992, 1.0
        %v1994 = vmul.f32 %v1993, 0.0625
        %v1995 = vsub.f32 %v1990, 1.0
        %v1996 = vsel %vm1987, 1.0, %v1909
        %v1997 = vrcp.pop %v1996
        %v1998 = vmul.f32 %v1995, %v1997
        %v1999 = vsel %vm1987, %v1994, %v1998
        %v2000 = vmul.f32 %v502, %v1990
        %v2001 = vmul.f32 %v1983, %v1999
        %v2002 = vadd.f32 %v2000, %v2001
        %v2003 = vmax.f32 %v2002, 0.0
        %v2004 = vmin.f32 %v2003, 1.0
        %v2005 = vmul.f32 %v2004, 15.0
        %v2006 = vfloor.f32 %v2005
        %v2007 = vmax.f32 %v2006, 0.0
        %v2008 = vmin.f32 %v2007, 14.0
        %v2009 = vcvt.f32.s32.to.zero.pseudo %v2008
        %v2010 = vcvt.s32.f32 %v2009
        %v2011 = vsub.f32 %v2005, %v2010
        %vm2012 = vcmp.eq.s32.totalorder %v2009, 0
        %2014 = vset.pattern.permute.xlu0 0
        %2015 = vperm.xlu0 %2014, %v2002
        %v2016 = vpop.permute.xlu0 %2015
        %v2018 = vsel %vm2012, %v2016, 0.0
        %2019 = vset.pattern.permute.xlu0 1
        %2020 = vperm.xlu0 %2019, %v2002
        %v2021 = vpop.permute.xlu0 %2020
        %v2023 = vsel %vm2012, %v2021, 0.0
        %vm2024 = vcmp.eq.s32.totalorder %v2009, 1
        %v2025 = vsel %vm2024, %v2021, %v2018
        %2026 = vset.pattern.permute.xlu0 2
        %2027 = vperm.xlu0 %2026, %v2002
        %v2028 = vpop.permute.xlu0 %2027
        %v2030 = vsel %vm2024, %v2028, %v2023
        %vm2031 = vcmp.eq.s32.totalorder %v2009, 2
        %v2032 = vsel %vm2031, %v2028, %v2025
        %2033 = vset.pattern.permute.xlu0 3
        %2034 = vperm.xlu0 %2033, %v2002
        %v2035 = vpop.permute.xlu0 %2034
        %v2037 = vsel %vm2031, %v2035, %v2030
        %vm2038 = vcmp.eq.s32.totalorder %v2009, 3
        %v2039 = vsel %vm2038, %v2035, %v2032
        %2040 = vset.pattern.permute.xlu0 4
        %2041 = vperm.xlu0 %2040, %v2002
        %v2042 = vpop.permute.xlu0 %2041
        %v2044 = vsel %vm2038, %v2042, %v2037
        %vm2045 = vcmp.eq.s32.totalorder %v2009, 4
        %v2046 = vsel %vm2045, %v2042, %v2039
        %2047 = vset.pattern.permute.xlu0 5
        %2048 = vperm.xlu0 %2047, %v2002
        %v2049 = vpop.permute.xlu0 %2048
        %v2051 = vsel %vm2045, %v2049, %v2044
        %vm2052 = vcmp.eq.s32.totalorder %v2009, 5
        %v2053 = vsel %vm2052, %v2049, %v2046
        %2054 = vset.pattern.permute.xlu0 6
        %2055 = vperm.xlu0 %2054, %v2002
        %v2056 = vpop.permute.xlu0 %2055
        %v2058 = vsel %vm2052, %v2056, %v2051
        %vm2059 = vcmp.eq.s32.totalorder %v2009, 6
        %v2060 = vsel %vm2059, %v2056, %v2053
        %2061 = vset.pattern.permute.xlu0 7
        %2062 = vperm.xlu0 %2061, %v2002
        %v2063 = vpop.permute.xlu0 %2062
        %v2065 = vsel %vm2059, %v2063, %v2058
        %vm2066 = vcmp.eq.s32.totalorder %v2009, 7
        %v2067 = vsel %vm2066, %v2063, %v2060
        %2068 = vset.pattern.permute.xlu0 8
        %2069 = vperm.xlu0 %2068, %v2002
        %v2070 = vpop.permute.xlu0 %2069
        %v2072 = vsel %vm2066, %v2070, %v2065
        %vm2073 = vcmp.eq.s32.totalorder %v2009, 8
        %v2074 = vsel %vm2073, %v2070, %v2067
        %2075 = vset.pattern.permute.xlu0 9
        %2076 = vperm.xlu0 %2075, %v2002
        %v2077 = vpop.permute.xlu0 %2076
        %v2079 = vsel %vm2073, %v2077, %v2072
        %vm2080 = vcmp.eq.s32.totalorder %v2009, 9
        %v2081 = vsel %vm2080, %v2077, %v2074
        %2082 = vset.pattern.permute.xlu0 10
        %2083 = vperm.xlu0 %2082, %v2002
        %v2084 = vpop.permute.xlu0 %2083
        %v2086 = vsel %vm2080, %v2084, %v2079
        %vm2087 = vcmp.eq.s32.totalorder %v2009, 10
        %v2088 = vsel %vm2087, %v2084, %v2081
        %2089 = vset.pattern.permute.xlu0 11
        %2090 = vperm.xlu0 %2089, %v2002
        %v2091 = vpop.permute.xlu0 %2090
        %v2093 = vsel %vm2087, %v2091, %v2086
        %vm2094 = vcmp.eq.s32.totalorder %v2009, 11
        %v2095 = vsel %vm2094, %v2091, %v2088
        %2096 = vset.pattern.permute.xlu0 12
        %2097 = vperm.xlu0 %2096, %v2002
        %v2098 = vpop.permute.xlu0 %2097
        %v2100 = vsel %vm2094, %v2098, %v2093
        %vm2101 = vcmp.eq.s32.totalorder %v2009, 12
        %v2102 = vsel %vm2101, %v2098, %v2095
        %2103 = vset.pattern.permute.xlu0 13
        %2104 = vperm.xlu0 %2103, %v2002
        %v2105 = vpop.permute.xlu0 %2104
        %v2107 = vsel %vm2101, %v2105, %v2100
        %vm2108 = vcmp.eq.s32.totalorder %v2009, 13
        %v2109 = vsel %vm2108, %v2105, %v2102
        %2110 = vset.pattern.permute.xlu0 14
        %2111 = vperm.xlu0 %2110, %v2002
        %v2112 = vpop.permute.xlu0 %2111
        %v2114 = vsel %vm2108, %v2112, %v2107
        %vm2115 = vcmp.eq.s32.totalorder %v2009, 14
        %v2116 = vsel %vm2115, %v2112, %v2109
        %2117 = vset.pattern.permute.xlu0 15
        %2118 = vperm.xlu0 %2117, %v2002
        %v2119 = vpop.permute.xlu0 %2118
        %v2121 = vsel %vm2115, %v2119, %v2114
        %v2122 = vsub.f32 1.0, %v2011
        %v2123 = vmul.f32 %v2116, %v2122
        %v2124 = vmul.f32 %v2121, %v2011
        %v2125 = vadd.f32 %v2123, %v2124
        %v2126 = vmax.f32 %v2125, 0.0
        %v2127 = vmin.f32 %v2126, 1.0
        %v2128 = vmul.f32 %v2127, 15.0
        %v2129 = vfloor.f32 %v2128
        %v2130 = vmax.f32 %v2129, 0.0
        %v2131 = vmin.f32 %v2130, 14.0
        %v2132 = vcvt.f32.s32.to.zero.pseudo %v2131
        %v2133 = vcvt.s32.f32 %v2132
        %v2134 = vsub.f32 %v2128, %v2133
        %vm2135 = vcmp.eq.s32.totalorder %v2132, 0
        %2137 = vset.pattern.permute.xlu0 0
        %2138 = vperm.xlu0 %2137, %v2125
        %v2139 = vpop.permute.xlu0 %2138
        %v2141 = vsel %vm2135, %v2139, 0.0
        %2142 = vset.pattern.permute.xlu0 1
        %2143 = vperm.xlu0 %2142, %v2125
        %v2144 = vpop.permute.xlu0 %2143
        %v2146 = vsel %vm2135, %v2144, 0.0
        %vm2147 = vcmp.eq.s32.totalorder %v2132, 1
        %v2148 = vsel %vm2147, %v2144, %v2141
        %2149 = vset.pattern.permute.xlu0 2
        %2150 = vperm.xlu0 %2149, %v2125
        %v2151 = vpop.permute.xlu0 %2150
        %v2153 = vsel %vm2147, %v2151, %v2146
        %vm2154 = vcmp.eq.s32.totalorder %v2132, 2
        %v2155 = vsel %vm2154, %v2151, %v2148
        %2156 = vset.pattern.permute.xlu0 3
        %2157 = vperm.xlu0 %2156, %v2125
        %v2158 = vpop.permute.xlu0 %2157
        %v2160 = vsel %vm2154, %v2158, %v2153
        %vm2161 = vcmp.eq.s32.totalorder %v2132, 3
        %v2162 = vsel %vm2161, %v2158, %v2155
        %2163 = vset.pattern.permute.xlu0 4
        %2164 = vperm.xlu0 %2163, %v2125
        %v2165 = vpop.permute.xlu0 %2164
        %v2167 = vsel %vm2161, %v2165, %v2160
        %vm2168 = vcmp.eq.s32.totalorder %v2132, 4
        %v2169 = vsel %vm2168, %v2165, %v2162
        %2170 = vset.pattern.permute.xlu0 5
        %2171 = vperm.xlu0 %2170, %v2125
        %v2172 = vpop.permute.xlu0 %2171
        %v2174 = vsel %vm2168, %v2172, %v2167
        %vm2175 = vcmp.eq.s32.totalorder %v2132, 5
        %v2176 = vsel %vm2175, %v2172, %v2169
        %2177 = vset.pattern.permute.xlu0 6
        %2178 = vperm.xlu0 %2177, %v2125
        %v2179 = vpop.permute.xlu0 %2178
        %v2181 = vsel %vm2175, %v2179, %v2174
        %vm2182 = vcmp.eq.s32.totalorder %v2132, 6
        %v2183 = vsel %vm2182, %v2179, %v2176
        %2184 = vset.pattern.permute.xlu0 7
        %2185 = vperm.xlu0 %2184, %v2125
        %v2186 = vpop.permute.xlu0 %2185
        %v2188 = vsel %vm2182, %v2186, %v2181
        %vm2189 = vcmp.eq.s32.totalorder %v2132, 7
        %v2190 = vsel %vm2189, %v2186, %v2183
        %2191 = vset.pattern.permute.xlu0 8
        %2192 = vperm.xlu0 %2191, %v2125
        %v2193 = vpop.permute.xlu0 %2192
        %v2195 = vsel %vm2189, %v2193, %v2188
        %vm2196 = vcmp.eq.s32.totalorder %v2132, 8
        %v2197 = vsel %vm2196, %v2193, %v2190
        %2198 = vset.pattern.permute.xlu0 9
        %2199 = vperm.xlu0 %2198, %v2125
        %v2200 = vpop.permute.xlu0 %2199
        %v2202 = vsel %vm2196, %v2200, %v2195
        %vm2203 = vcmp.eq.s32.totalorder %v2132, 9
        %v2204 = vsel %vm2203, %v2200, %v2197
        %2205 = vset.pattern.permute.xlu0 10
        %2206 = vperm.xlu0 %2205, %v2125
        %v2207 = vpop.permute.xlu0 %2206
        %v2209 = vsel %vm2203, %v2207, %v2202
        %vm2210 = vcmp.eq.s32.totalorder %v2132, 10
        %v2211 = vsel %vm2210, %v2207, %v2204
        %2212 = vset.pattern.permute.xlu0 11
        %2213 = vperm.xlu0 %2212, %v2125
        %v2214 = vpop.permute.xlu0 %2213
        %v2216 = vsel %vm2210, %v2214, %v2209
        %vm2217 = vcmp.eq.s32.totalorder %v2132, 11
        %v2218 = vsel %vm2217, %v2214, %v2211
        %2219 = vset.pattern.permute.xlu0 12
        %2220 = vperm.xlu0 %2219, %v2125
        %v2221 = vpop.permute.xlu0 %2220
        %v2223 = vsel %vm2217, %v2221, %v2216
        %vm2224 = vcmp.eq.s32.totalorder %v2132, 12
        %v2225 = vsel %vm2224, %v2221, %v2218
        %2226 = vset.pattern.permute.xlu0 13
        %2227 = vperm.xlu0 %2226, %v2125
        %v2228 = vpop.permute.xlu0 %2227
        %v2230 = vsel %vm2224, %v2228, %v2223
        %vm2231 = vcmp.eq.s32.totalorder %v2132, 13
        %v2232 = vsel %vm2231, %v2228, %v2225
        %2233 = vset.pattern.permute.xlu0 14
        %2234 = vperm.xlu0 %2233, %v2125
        %v2235 = vpop.permute.xlu0 %2234
        %v2237 = vsel %vm2231, %v2235, %v2230
        %vm2238 = vcmp.eq.s32.totalorder %v2132, 14
        %v2239 = vsel %vm2238, %v2235, %v2232
        %2240 = vset.pattern.permute.xlu0 15
        %2241 = vperm.xlu0 %2240, %v2125
        %v2242 = vpop.permute.xlu0 %2241
        %v2244 = vsel %vm2238, %v2242, %v2237
        %v2245 = vsub.f32 1.0, %v2134
        %v2246 = vmul.f32 %v2239, %v2245
        %v2247 = vmul.f32 %v2244, %v2134
        %v2248 = vadd.f32 %v2246, %v2247
        %v2249 = vmax.f32 %v2248, 0.0
        %v2250 = vmin.f32 %v2249, 1.0
        %v2251 = vmul.f32 %v2250, 15.0
        %v2252 = vfloor.f32 %v2251
        %v2253 = vmax.f32 %v2252, 0.0
        %v2254 = vmin.f32 %v2253, 14.0
        %v2255 = vcvt.f32.s32.to.zero.pseudo %v2254
        %v2256 = vcvt.s32.f32 %v2255
        %v2257 = vsub.f32 %v2251, %v2256
        %vm2258 = vcmp.eq.s32.totalorder %v2255, 0
        %2260 = vset.pattern.permute.xlu0 0
        %2261 = vperm.xlu0 %2260, %v2248
        %v2262 = vpop.permute.xlu0 %2261
        %v2264 = vsel %vm2258, %v2262, 0.0
        %2265 = vset.pattern.permute.xlu0 1
        %2266 = vperm.xlu0 %2265, %v2248
        %v2267 = vpop.permute.xlu0 %2266
        %v2269 = vsel %vm2258, %v2267, 0.0
        %vm2270 = vcmp.eq.s32.totalorder %v2255, 1
        %v2271 = vsel %vm2270, %v2267, %v2264
        %2272 = vset.pattern.permute.xlu0 2
        %2273 = vperm.xlu0 %2272, %v2248
        %v2274 = vpop.permute.xlu0 %2273
        %v2276 = vsel %vm2270, %v2274, %v2269
        %vm2277 = vcmp.eq.s32.totalorder %v2255, 2
        %v2278 = vsel %vm2277, %v2274, %v2271
        %2279 = vset.pattern.permute.xlu0 3
        %2280 = vperm.xlu0 %2279, %v2248
        %v2281 = vpop.permute.xlu0 %2280
        %v2283 = vsel %vm2277, %v2281, %v2276
        %vm2284 = vcmp.eq.s32.totalorder %v2255, 3
        %v2285 = vsel %vm2284, %v2281, %v2278
        %2286 = vset.pattern.permute.xlu0 4
        %2287 = vperm.xlu0 %2286, %v2248
        %v2288 = vpop.permute.xlu0 %2287
        %v2290 = vsel %vm2284, %v2288, %v2283
        %vm2291 = vcmp.eq.s32.totalorder %v2255, 4
        %v2292 = vsel %vm2291, %v2288, %v2285
        %2293 = vset.pattern.permute.xlu0 5
        %2294 = vperm.xlu0 %2293, %v2248
        %v2295 = vpop.permute.xlu0 %2294
        %v2297 = vsel %vm2291, %v2295, %v2290
        %vm2298 = vcmp.eq.s32.totalorder %v2255, 5
        %v2299 = vsel %vm2298, %v2295, %v2292
        %2300 = vset.pattern.permute.xlu0 6
        %2301 = vperm.xlu0 %2300, %v2248
        %v2302 = vpop.permute.xlu0 %2301
        %v2304 = vsel %vm2298, %v2302, %v2297
        %vm2305 = vcmp.eq.s32.totalorder %v2255, 6
        %v2306 = vsel %vm2305, %v2302, %v2299
        %2307 = vset.pattern.permute.xlu0 7
        %2308 = vperm.xlu0 %2307, %v2248
        %v2309 = vpop.permute.xlu0 %2308
        %v2311 = vsel %vm2305, %v2309, %v2304
        %vm2312 = vcmp.eq.s32.totalorder %v2255, 7
        %v2313 = vsel %vm2312, %v2309, %v2306
        %2314 = vset.pattern.permute.xlu0 8
        %2315 = vperm.xlu0 %2314, %v2248
        %v2316 = vpop.permute.xlu0 %2315
        %v2318 = vsel %vm2312, %v2316, %v2311
        %vm2319 = vcmp.eq.s32.totalorder %v2255, 8
        %v2320 = vsel %vm2319, %v2316, %v2313
        %2321 = vset.pattern.permute.xlu0 9
        %2322 = vperm.xlu0 %2321, %v2248
        %v2323 = vpop.permute.xlu0 %2322
        %v2325 = vsel %vm2319, %v2323, %v2318
        %vm2326 = vcmp.eq.s32.totalorder %v2255, 9
        %v2327 = vsel %vm2326, %v2323, %v2320
        %2328 = vset.pattern.permute.xlu0 10
        %2329 = vperm.xlu0 %2328, %v2248
        %v2330 = vpop.permute.xlu0 %2329
        %v2332 = vsel %vm2326, %v2330, %v2325
        %vm2333 = vcmp.eq.s32.totalorder %v2255, 10
        %v2334 = vsel %vm2333, %v2330, %v2327
        %2335 = vset.pattern.permute.xlu0 11
        %2336 = vperm.xlu0 %2335, %v2248
        %v2337 = vpop.permute.xlu0 %2336
        %v2339 = vsel %vm2333, %v2337, %v2332
        %vm2340 = vcmp.eq.s32.totalorder %v2255, 11
        %v2341 = vsel %vm2340, %v2337, %v2334
        %2342 = vset.pattern.permute.xlu0 12
        %2343 = vperm.xlu0 %2342, %v2248
        %v2344 = vpop.permute.xlu0 %2343
        %v2346 = vsel %vm2340, %v2344, %v2339
        %vm2347 = vcmp.eq.s32.totalorder %v2255, 12
        %v2348 = vsel %vm2347, %v2344, %v2341
        %2349 = vset.pattern.permute.xlu0 13
        %2350 = vperm.xlu0 %2349, %v2248
        %v2351 = vpop.permute.xlu0 %2350
        %v2353 = vsel %vm2347, %v2351, %v2346
        %vm2354 = vcmp.eq.s32.totalorder %v2255, 13
        %v2355 = vsel %vm2354, %v2351, %v2348
        %2356 = vset.pattern.permute.xlu0 14
        %2357 = vperm.xlu0 %2356, %v2248
        %v2358 = vpop.permute.xlu0 %2357
        %v2360 = vsel %vm2354, %v2358, %v2353
        %vm2361 = vcmp.eq.s32.totalorder %v2255, 14
        %v2362 = vsel %vm2361, %v2358, %v2355
        %2363 = vset.pattern.permute.xlu0 15
        %2364 = vperm.xlu0 %2363, %v2248
        %v2365 = vpop.permute.xlu0 %2364
        %v2367 = vsel %vm2361, %v2365, %v2360
        %v2368 = vsub.f32 1.0, %v2257
        %v2369 = vmul.f32 %v2362, %v2368
        %v2370 = vmul.f32 %v2367, %v2257
        %v2371 = vadd.f32 %v2369, %v2370
        %v2372 = vmax.f32 %v2371, 0.0
        %v2373 = vmin.f32 %v2372, 1.0
        %v2374 = vmul.f32 %v2373, 15.0
        %v2375 = vfloor.f32 %v2374
        %v2376 = vmax.f32 %v2375, 0.0
        %v2377 = vmin.f32 %v2376, 14.0
        %v2378 = vcvt.f32.s32.to.zero.pseudo %v2377
        %v2379 = vcvt.s32.f32 %v2378
        %v2380 = vsub.f32 %v2374, %v2379
        %vm2381 = vcmp.eq.s32.totalorder %v2378, 0
        %2383 = vset.pattern.permute.xlu0 0
        %2384 = vperm.xlu0 %2383, %v2371
        %v2385 = vpop.permute.xlu0 %2384
        %v2387 = vsel %vm2381, %v2385, 0.0
        %2388 = vset.pattern.permute.xlu0 1
        %2389 = vperm.xlu0 %2388, %v2371
        %v2390 = vpop.permute.xlu0 %2389
        %v2392 = vsel %vm2381, %v2390, 0.0
        %vm2393 = vcmp.eq.s32.totalorder %v2378, 1
        %v2394 = vsel %vm2393, %v2390, %v2387
        %2395 = vset.pattern.permute.xlu0 2
        %2396 = vperm.xlu0 %2395, %v2371
        %v2397 = vpop.permute.xlu0 %2396
        %v2399 = vsel %vm2393, %v2397, %v2392
        %vm2400 = vcmp.eq.s32.totalorder %v2378, 2
        %v2401 = vsel %vm2400, %v2397, %v2394
        %2402 = vset.pattern.permute.xlu0 3
        %2403 = vperm.xlu0 %2402, %v2371
        %v2404 = vpop.permute.xlu0 %2403
        %v2406 = vsel %vm2400, %v2404, %v2399
        %vm2407 = vcmp.eq.s32.totalorder %v2378, 3
        %v2408 = vsel %vm2407, %v2404, %v2401
        %2409 = vset.pattern.permute.xlu0 4
        %2410 = vperm.xlu0 %2409, %v2371
        %v2411 = vpop.permute.xlu0 %2410
        %v2413 = vsel %vm2407, %v2411, %v2406
        %vm2414 = vcmp.eq.s32.totalorder %v2378, 4
        %v2415 = vsel %vm2414, %v2411, %v2408
        %2416 = vset.pattern.permute.xlu0 5
        %2417 = vperm.xlu0 %2416, %v2371
        %v2418 = vpop.permute.xlu0 %2417
        %v2420 = vsel %vm2414, %v2418, %v2413
        %vm2421 = vcmp.eq.s32.totalorder %v2378, 5
        %v2422 = vsel %vm2421, %v2418, %v2415
        %2423 = vset.pattern.permute.xlu0 6
        %2424 = vperm.xlu0 %2423, %v2371
        %v2425 = vpop.permute.xlu0 %2424
        %v2427 = vsel %vm2421, %v2425, %v2420
        %vm2428 = vcmp.eq.s32.totalorder %v2378, 6
        %v2429 = vsel %vm2428, %v2425, %v2422
        %2430 = vset.pattern.permute.xlu0 7
        %2431 = vperm.xlu0 %2430, %v2371
        %v2432 = vpop.permute.xlu0 %2431
        %v2434 = vsel %vm2428, %v2432, %v2427
        %vm2435 = vcmp.eq.s32.totalorder %v2378, 7
        %v2436 = vsel %vm2435, %v2432, %v2429
        %2437 = vset.pattern.permute.xlu0 8
        %2438 = vperm.xlu0 %2437, %v2371
        %v2439 = vpop.permute.xlu0 %2438
        %v2441 = vsel %vm2435, %v2439, %v2434
        %vm2442 = vcmp.eq.s32.totalorder %v2378, 8
        %v2443 = vsel %vm2442, %v2439, %v2436
        %2444 = vset.pattern.permute.xlu0 9
        %2445 = vperm.xlu0 %2444, %v2371
        %v2446 = vpop.permute.xlu0 %2445
        %v2448 = vsel %vm2442, %v2446, %v2441
        %vm2449 = vcmp.eq.s32.totalorder %v2378, 9
        %v2450 = vsel %vm2449, %v2446, %v2443
        %2451 = vset.pattern.permute.xlu0 10
        %2452 = vperm.xlu0 %2451, %v2371
        %v2453 = vpop.permute.xlu0 %2452
        %v2455 = vsel %vm2449, %v2453, %v2448
        %vm2456 = vcmp.eq.s32.totalorder %v2378, 10
        %v2457 = vsel %vm2456, %v2453, %v2450
        %2458 = vset.pattern.permute.xlu0 11
        %2459 = vperm.xlu0 %2458, %v2371
        %v2460 = vpop.permute.xlu0 %2459
        %v2462 = vsel %vm2456, %v2460, %v2455
        %vm2463 = vcmp.eq.s32.totalorder %v2378, 11
        %v2464 = vsel %vm2463, %v2460, %v2457
        %2465 = vset.pattern.permute.xlu0 12
        %2466 = vperm.xlu0 %2465, %v2371
        %v2467 = vpop.permute.xlu0 %2466
        %v2469 = vsel %vm2463, %v2467, %v2462
        %vm2470 = vcmp.eq.s32.totalorder %v2378, 12
        %v2471 = vsel %vm2470, %v2467, %v2464
        %2472 = vset.pattern.permute.xlu0 13
        %2473 = vperm.xlu0 %2472, %v2371
        %v2474 = vpop.permute.xlu0 %2473
        %v2476 = vsel %vm2470, %v2474, %v2469
        %vm2477 = vcmp.eq.s32.totalorder %v2378, 13
        %v2478 = vsel %vm2477, %v2474, %v2471
        %2479 = vset.pattern.permute.xlu0 14
        %2480 = vperm.xlu0 %2479, %v2371
        %v2481 = vpop.permute.xlu0 %2480
        %v2483 = vsel %vm2477, %v2481, %v2476
        %vm2484 = vcmp.eq.s32.totalorder %v2378, 14
        %v2485 = vsel %vm2484, %v2481, %v2478
        %2486 = vset.pattern.permute.xlu0 15
        %2487 = vperm.xlu0 %2486, %v2371
        %v2488 = vpop.permute.xlu0 %2487
        %v2490 = vsel %vm2484, %v2488, %v2483
        %v2491 = vsub.f32 1.0, %v2380
        %v2492 = vmul.f32 %v2485, %v2491
        %v2493 = vmul.f32 %v2490, %v2380
        %v2494 = vadd.f32 %v2492, %v2493
        %v2495 = vmax.f32 %v2494, 0.0
        %v2496 = vmin.f32 %v2495, 1.0
        %v2497 = vmul.f32 %v2496, 15.0
        %v2498 = vlaneseq
        %v2499 = vshrl.u32 %v2498, 7
        %v2500 = vsub.s32 0, %v2499
        %v2501 = vrot.slane %v2497, %v2500
        %2503 = vbcast.lane.b32.xlu0 %v2501, 256
        %v2504 = vpop.permute.xlu0 %2503
        %s2506 = sor.u32 256, 8
        %2507 = vbcast.lane.b32.xlu0 %v2501, %s2506
        %v2508 = vpop.permute.xlu0 %2507
        %v2509 = vsub.f32 %v2504, %v500
        %v2510 = vsub.f32 %v2508, %v500
        %v2511 = vand.u32 2147483647, %v2509
        %v2512 = vand.u32 2147483647, %v2510
        %v2513 = vsub.f32 1.0, %v2511
        %v2514 = vsub.f32 1.0, %v2512
        %v2515 = vmax.f32 %v2513, 0.0
        %v2516 = vmax.f32 %v2514, 0.0
        %v2518 = vsel %vm1686, %v2515, 0
        %v2521 = vsel %vm1686, %v2516, 0
        %2523 = vmatprep.subr.mxu0 0.0
        %2524 = vmatpush1.msra.mxu0 %v513
        %2525 = vmatprep.subr.mxu0 0.0
        %2526 = vmatpush1.msra.mxu0 %v514
        %2527 = vmatprep.subr.mxu0 0.0
        %2528 = vmatpush1.msra.mxu0 0.0
        %2529 = vmatprep.subr.mxu0 0.0
        %2530 = vmatpush1.msra.mxu0 0.0
        %2531 = vmatprep.subr.mxu0 0.0
        %2532 = vmatpush1.msra.mxu0 0.0
        %2533 = vmatprep.subr.mxu0 0.0
        %2534 = vmatpush1.msra.mxu0 0.0
        %2535 = vmatprep.subr.mxu0 0.0
        %2536 = vmatpush1.msra.mxu0 0.0
        %2537 = vmatprep.subr.mxu0 0.0
        %2538 = vmatpush1.msra.mxu0 0.0
        %2539 = vmatprep.subr.mxu0 0.0
        %2540 = vmatpush1.msra.mxu0 0.0
        %2541 = vmatprep.subr.mxu0 0.0
        %2542 = vmatpush1.msra.mxu0 0.0
        %2543 = vmatprep.subr.mxu0 0.0
        %2544 = vmatpush1.msra.mxu0 0.0
        %2545 = vmatprep.subr.mxu0 0.0
        %2546 = vmatpush1.msra.mxu0 0.0
        %2547 = vmatprep.subr.mxu0 0.0
        %2548 = vmatpush1.msra.mxu0 0.0
        %2549 = vmatprep.subr.mxu0 0.0
        %2550 = vmatpush1.msra.mxu0 0.0
        %2551 = vmatprep.subr.mxu0 0.0
        %2552 = vmatpush1.msra.mxu0 0.0
        %2553 = vmatprep.subr.mxu0 0.0
        %2554 = vmatpush1.msra.mxu0 0.0
        %2555 = vmatprep.subr.mxu0 0.0
        %2556 = vmatpush1.msra.mxu0 0.0
        %2557 = vmatprep.subr.mxu0 0.0
        %2558 = vmatpush1.msra.mxu0 0.0
        %2559 = vmatprep.subr.mxu0 0.0
        %2560 = vmatpush1.msra.mxu0 0.0
        %2561 = vmatprep.subr.mxu0 0.0
        %2562 = vmatpush1.msra.mxu0 0.0
        %2563 = vmatprep.subr.mxu0 0.0
        %2564 = vmatpush1.msra.mxu0 0.0
        %2565 = vmatprep.subr.mxu0 0.0
        %2566 = vmatpush1.msra.mxu0 0.0
        %2567 = vmatprep.subr.mxu0 0.0
        %2568 = vmatpush1.msra.mxu0 0.0
        %2569 = vmatprep.subr.mxu0 0.0
        %2570 = vmatpush1.msra.mxu0 0.0
        %2571 = vmatprep.subr.mxu0 0.0
        %2572 = vmatpush1.msra.mxu0 0.0
        %2573 = vmatprep.subr.mxu0 0.0
        %2574 = vmatpush1.msra.mxu0 0.0
        %2575 = vmatprep.subr.mxu0 0.0
        %2576 = vmatpush1.msra.mxu0 0.0
        %2577 = vmatprep.subr.mxu0 0.0
        %2578 = vmatpush1.msra.mxu0 0.0
        %2579 = vmatprep.subr.mxu0 0.0
        %2580 = vmatpush1.msra.mxu0 0.0
        %2581 = vmatprep.subr.mxu0 0.0
        %2582 = vmatpush1.msra.mxu0 0.0
        %2583 = vmatprep.subr.mxu0 0.0
        %2584 = vmatpush1.msra.mxu0 0.0
        %2585 = vmatprep.subr.mxu0 0.0
        %2586 = vmatpush1.msra.mxu0 0.0
        %2587 = vmatprep.mubr.f32.mxu0 0.0
        %2588 = vmatmul.mubr.f32.gmra.mrb[0].mxu0 %v2518
        %v2589 = vpop.f32.mrb[0].mxu0
        %v2590 = vadd.f32 0.0, %v2589
        %v2591 = vpop.f32.mrb[0].mxu0
        %2592 = vmatprep.mubr.f32.mxu0 0.0
        %2593 = vmatmul.mubr.f32.gmra.mrb[0].mxu0 %v2521
        %v2594 = vpop.f32.mrb[0].mxu0
        %v2595 = vadd.f32 0.0, %v2594
        %v2596 = vpop.f32.mrb[0].mxu0
        %2597 = vdwg.mxu0
        %v2600 = vrot.slane %v2590, 5
        %v2601 = vrot.slane %v2595, 5
        %v2602 = vsel %vm517, %v2600, %v2601
        %v2606 = vsel %vm517, 0.0, %v2600
        %v2607 = vsel %vm517, %v2601, 0.0
        %v2608 = vpack.c.bf16 %v2602, %v2606
        %v2609 = vpack.c.bf16 %v2607, %v2607
        %v2611 = vshrl.u32 %v2608, 16
        %v2613 = vshll.u32 %v2608, 16
        %v2615 = vrot.slane %v2613, 1
        %v2616 = vor.u32 %v2611, %v2615
        %v2618 = vshll.u32 %v2609, 16
        %v2620 = vrot.slane %v2618, 1
        %v2621 = vsel %vm528, %v2616, %v2620
        %v2623 = vsel %vm541, %v2621, 0
        %2625 = vmatprep.subr.bf16.mxu0 0
        %2626 = vmatpush1.bf16.msra.mxu0 %v550
        %2627 = vmatprep.subr.bf16.mxu0 0
        %2628 = vmatpush1.bf16.msra.mxu0 0
        %2629 = vmatprep.subr.bf16.mxu0 0
        %2630 = vmatpush1.bf16.msra.mxu0 0
        %2631 = vmatprep.subr.bf16.mxu0 0
        %2632 = vmatpush1.bf16.msra.mxu0 0
        %2633 = vmatprep.subr.bf16.mxu0 0
        %2634 = vmatpush1.bf16.msra.mxu0 0
        %2635 = vmatprep.subr.bf16.mxu0 0
        %2636 = vmatpush1.bf16.msra.mxu0 0
        %2637 = vmatprep.subr.bf16.mxu0 0
        %2638 = vmatpush1.bf16.msra.mxu0 0
        %2639 = vmatprep.subr.bf16.mxu0 0
        %2640 = vmatpush1.bf16.msra.mxu0 0
        %2641 = vmatprep.subr.bf16.mxu0 0
        %2642 = vmatpush1.bf16.msra.mxu0 0
        %2643 = vmatprep.subr.bf16.mxu0 0
        %2644 = vmatpush1.bf16.msra.mxu0 0
        %2645 = vmatprep.subr.bf16.mxu0 0
        %2646 = vmatpush1.bf16.msra.mxu0 0
        %2647 = vmatprep.subr.bf16.mxu0 0
        %2648 = vmatpush1.bf16.msra.mxu0 0
        %2649 = vmatprep.subr.bf16.mxu0 0
        %2650 = vmatpush1.bf16.msra.mxu0 0
        %2651 = vmatprep.subr.bf16.mxu0 0
        %2652 = vmatpush1.bf16.msra.mxu0 0
        %2653 = vmatprep.subr.bf16.mxu0 0
        %2654 = vmatpush1.bf16.msra.mxu0 0
        %2655 = vmatprep.subr.bf16.mxu0 0
        %2656 = vmatpush1.bf16.msra.mxu0 0
        %2657 = vmatprep.mubr.bf16.mxu0 0
        %2658 = vmatmul.mubr.bf16.gmra.mrb[0].mxu0 %v2623
        %v2659 = vpop.f32.mrb[0].mxu0
        %v2660 = vadd.f32 0.0, %v2659
        %v2661 = vpop.f32.mrb[0].mxu0
        %v2662 = vpop.f32.mrb[0].mxu0
        %v2663 = vadd.f32 0.0, %v2662
        %v2664 = vpop.f32.mrb[0].mxu0
        %2665 = vdwg.mxu0
        %v2666 = vsel %vm541, %v2608, 0
        %2668 = vmatprep.subr.bf16.mxu0 0
        %2669 = vmatpush1.bf16.msra.mxu0 %v596
        %2670 = vmatprep.subr.bf16.mxu0 0
        %2671 = vmatpush1.bf16.msra.mxu0 0
        %2672 = vmatprep.subr.bf16.mxu0 0
        %2673 = vmatpush1.bf16.msra.mxu0 0
        %2674 = vmatprep.subr.bf16.mxu0 0
        %2675 = vmatpush1.bf16.msra.mxu0 0
        %2676 = vmatprep.subr.bf16.mxu0 0
        %2677 = vmatpush1.bf16.msra.mxu0 0
        %2678 = vmatprep.subr.bf16.mxu0 0
        %2679 = vmatpush1.bf16.msra.mxu0 0
        %2680 = vmatprep.subr.bf16.mxu0 0
        %2681 = vmatpush1.bf16.msra.mxu0 0
        %2682 = vmatprep.subr.bf16.mxu0 0
        %2683 = vmatpush1.bf16.msra.mxu0 0
        %2684 = vmatprep.subr.bf16.mxu0 0
        %2685 = vmatpush1.bf16.msra.mxu0 0
        %2686 = vmatprep.subr.bf16.mxu0 0
        %2687 = vmatpush1.bf16.msra.mxu0 0
        %2688 = vmatprep.subr.bf16.mxu0 0
        %2689 = vmatpush1.bf16.msra.mxu0 0
        %2690 = vmatprep.subr.bf16.mxu0 0
        %2691 = vmatpush1.bf16.msra.mxu0 0
        %2692 = vmatprep.subr.bf16.mxu0 0
        %2693 = vmatpush1.bf16.msra.mxu0 0
        %2694 = vmatprep.subr.bf16.mxu0 0
        %2695 = vmatpush1.bf16.msra.mxu0 0
        %2696 = vmatprep.subr.bf16.mxu0 0
        %2697 = vmatpush1.bf16.msra.mxu0 0
        %2698 = vmatprep.subr.bf16.mxu0 0
        %2699 = vmatpush1.bf16.msra.mxu0 0
        %2700 = vmatprep.mubr.bf16.mxu0 0
        %2701 = vmatmul.mubr.bf16.gmra.mrb[0].mxu0 %v2666
        %v2702 = vpop.f32.mrb[0].mxu0
        %v2703 = vadd.f32 %v2660, %v2702
        %v2704 = vpop.f32.mrb[0].mxu0
        %v2705 = vpop.f32.mrb[0].mxu0
        %v2706 = vadd.f32 %v2663, %v2705
        %v2707 = vpop.f32.mrb[0].mxu0
        %2708 = vdwg.mxu0
        %v2711 = vrot.slane %v2608, 1
        %v2712 = vrot.slane %v2609, 1
        %v2713 = vsel %vm641, %v2711, %v2712
        %v2715 = vsel %vm541, %v2713, 0
        %2717 = vmatprep.subr.bf16.mxu0 0
        %2718 = vmatpush1.bf16.msra.mxu0 %v649
        %2719 = vmatprep.subr.bf16.mxu0 0
        %2720 = vmatpush1.bf16.msra.mxu0 0
        %2721 = vmatprep.subr.bf16.mxu0 0
        %2722 = vmatpush1.bf16.msra.mxu0 0
        %2723 = vmatprep.subr.bf16.mxu0 0
        %2724 = vmatpush1.bf16.msra.mxu0 0
        %2725 = vmatprep.subr.bf16.mxu0 0
        %2726 = vmatpush1.bf16.msra.mxu0 0
        %2727 = vmatprep.subr.bf16.mxu0 0
        %2728 = vmatpush1.bf16.msra.mxu0 0
        %2729 = vmatprep.subr.bf16.mxu0 0
        %2730 = vmatpush1.bf16.msra.mxu0 0
        %2731 = vmatprep.subr.bf16.mxu0 0
        %2732 = vmatpush1.bf16.msra.mxu0 0
        %2733 = vmatprep.subr.bf16.mxu0 0
        %2734 = vmatpush1.bf16.msra.mxu0 0
        %2735 = vmatprep.subr.bf16.mxu0 0
        %2736 = vmatpush1.bf16.msra.mxu0 0
        %2737 = vmatprep.subr.bf16.mxu0 0
        %2738 = vmatpush1.bf16.msra.mxu0 0
        %2739 = vmatprep.subr.bf16.mxu0 0
        %2740 = vmatpush1.bf16.msra.mxu0 0
        %2741 = vmatprep.subr.bf16.mxu0 0
        %2742 = vmatpush1.bf16.msra.mxu0 0
        %2743 = vmatprep.subr.bf16.mxu0 0
        %2744 = vmatpush1.bf16.msra.mxu0 0
        %2745 = vmatprep.subr.bf16.mxu0 0
        %2746 = vmatpush1.bf16.msra.mxu0 0
        %2747 = vmatprep.subr.bf16.mxu0 0
        %2748 = vmatpush1.bf16.msra.mxu0 0
        %2749 = vmatprep.mubr.bf16.mxu0 0
        %2750 = vmatmul.mubr.bf16.gmra.mrb[0].mxu0 %v2715
        %v2751 = vpop.f32.mrb[0].mxu0
        %v2752 = vadd.f32 0.0, %v2751
        %v2753 = vpop.f32.mrb[0].mxu0
        %v2754 = vpop.f32.mrb[0].mxu0
        %v2755 = vadd.f32 0.0, %v2754
        %v2756 = vpop.f32.mrb[0].mxu0
        %2757 = vdwg.mxu0
        %v2758 = vadd.f32 %v2703, %v2752
        %v2759 = vadd.f32 %v2706, %v2755
        %v2760 = vrot.slane %v2611, 1
        %v2761 = vrot.slane %v2613, 2
        %v2762 = vor.u32 %v2760, %v2761
        %v2763 = vshrl.u32 %v2609, 16
        %v2765 = vrot.slane %v2763, 1
        %v2766 = vrot.slane %v2618, 2
        %v2767 = vor.u32 %v2765, %v2766
        %v2768 = vsel %vm694, %v2762, %v2767
        %v2770 = vsel %vm541, %v2768, 0
        %2772 = vmatprep.subr.bf16.mxu0 0
        %2773 = vmatpush1.bf16.msra.mxu0 %v708
        %2774 = vmatprep.subr.bf16.mxu0 0
        %2775 = vmatpush1.bf16.msra.mxu0 0
        %2776 = vmatprep.subr.bf16.mxu0 0
        %2777 = vmatpush1.bf16.msra.mxu0 0
        %2778 = vmatprep.subr.bf16.mxu0 0
        %2779 = vmatpush1.bf16.msra.mxu0 0
        %2780 = vmatprep.subr.bf16.mxu0 0
        %2781 = vmatpush1.bf16.msra.mxu0 0
        %2782 = vmatprep.subr.bf16.mxu0 0
        %2783 = vmatpush1.bf16.msra.mxu0 0
        %2784 = vmatprep.subr.bf16.mxu0 0
        %2785 = vmatpush1.bf16.msra.mxu0 0
        %2786 = vmatprep.subr.bf16.mxu0 0
        %2787 = vmatpush1.bf16.msra.mxu0 0
        %2788 = vmatprep.subr.bf16.mxu0 0
        %2789 = vmatpush1.bf16.msra.mxu0 0
        %2790 = vmatprep.subr.bf16.mxu0 0
        %2791 = vmatpush1.bf16.msra.mxu0 0
        %2792 = vmatprep.subr.bf16.mxu0 0
        %2793 = vmatpush1.bf16.msra.mxu0 0
        %2794 = vmatprep.subr.bf16.mxu0 0
        %2795 = vmatpush1.bf16.msra.mxu0 0
        %2796 = vmatprep.subr.bf16.mxu0 0
        %2797 = vmatpush1.bf16.msra.mxu0 0
        %2798 = vmatprep.subr.bf16.mxu0 0
        %2799 = vmatpush1.bf16.msra.mxu0 0
        %2800 = vmatprep.subr.bf16.mxu0 0
        %2801 = vmatpush1.bf16.msra.mxu0 0
        %2802 = vmatprep.subr.bf16.mxu0 0
        %2803 = vmatpush1.bf16.msra.mxu0 0
        %2804 = vmatprep.mubr.bf16.mxu0 0
        %2805 = vmatmul.mubr.bf16.gmra.mrb[0].mxu0 %v2770
        %v2806 = vpop.f32.mrb[0].mxu0
        %v2807 = vadd.f32 0.0, %v2806
        %v2808 = vpop.f32.mrb[0].mxu0
        %v2809 = vpop.f32.mrb[0].mxu0
        %v2810 = vadd.f32 0.0, %v2809
        %v2811 = vpop.f32.mrb[0].mxu0
        %2812 = vdwg.mxu0
        %v2813 = vadd.f32 %v2758, %v2807
        %v2814 = vadd.f32 %v2759, %v2810
        %v2815 = vrot.slane %v2608, 2
        %v2816 = vrot.slane %v2609, 2
        %v2817 = vsel %vm753, %v2815, %v2816
        %v2819 = vsel %vm541, %v2817, 0
        %2821 = vmatprep.subr.bf16.mxu0 0
        %2822 = vmatpush1.bf16.msra.mxu0 %v761
        %2823 = vmatprep.subr.bf16.mxu0 0
        %2824 = vmatpush1.bf16.msra.mxu0 0
        %2825 = vmatprep.subr.bf16.mxu0 0
        %2826 = vmatpush1.bf16.msra.mxu0 0
        %2827 = vmatprep.subr.bf16.mxu0 0
        %2828 = vmatpush1.bf16.msra.mxu0 0
        %2829 = vmatprep.subr.bf16.mxu0 0
        %2830 = vmatpush1.bf16.msra.mxu0 0
        %2831 = vmatprep.subr.bf16.mxu0 0
        %2832 = vmatpush1.bf16.msra.mxu0 0
        %2833 = vmatprep.subr.bf16.mxu0 0
        %2834 = vmatpush1.bf16.msra.mxu0 0
        %2835 = vmatprep.subr.bf16.mxu0 0
        %2836 = vmatpush1.bf16.msra.mxu0 0
        %2837 = vmatprep.subr.bf16.mxu0 0
        %2838 = vmatpush1.bf16.msra.mxu0 0
        %2839 = vmatprep.subr.bf16.mxu0 0
        %2840 = vmatpush1.bf16.msra.mxu0 0
        %2841 = vmatprep.subr.bf16.mxu0 0
        %2842 = vmatpush1.bf16.msra.mxu0 0
        %2843 = vmatprep.subr.bf16.mxu0 0
        %2844 = vmatpush1.bf16.msra.mxu0 0
        %2845 = vmatprep.subr.bf16.mxu0 0
        %2846 = vmatpush1.bf16.msra.mxu0 0
        %2847 = vmatprep.subr.bf16.mxu0 0
        %2848 = vmatpush1.bf16.msra.mxu0 0
        %2849 = vmatprep.subr.bf16.mxu0 0
        %2850 = vmatpush1.bf16.msra.mxu0 0
        %2851 = vmatprep.subr.bf16.mxu0 0
        %2852 = vmatpush1.bf16.msra.mxu0 0
        %2853 = vmatprep.mubr.bf16.mxu0 0
        %2854 = vmatmul.mubr.bf16.gmra.mrb[0].mxu0 %v2819
        %v2855 = vpop.f32.mrb[0].mxu0
        %v2856 = vadd.f32 0.0, %v2855
        %v2857 = vpop.f32.mrb[0].mxu0
        %v2858 = vpop.f32.mrb[0].mxu0
        %v2859 = vadd.f32 0.0, %v2858
        %v2860 = vpop.f32.mrb[0].mxu0
        %2861 = vdwg.mxu0
        %v2862 = vadd.f32 %v2813, %v2856
        %v2863 = vadd.f32 %v2814, %v2859
        %v2864 = vrot.slane %v2611, 2
        %v2865 = vrot.slane %v2613, 3
        %v2866 = vor.u32 %v2864, %v2865
        %v2867 = vrot.slane %v2763, 2
        %v2868 = vrot.slane %v2618, 3
        %v2869 = vor.u32 %v2867, %v2868
        %v2870 = vsel %vm806, %v2866, %v2869
        %v2872 = vsel %vm541, %v2870, 0
        %2874 = vmatprep.subr.bf16.mxu0 0
        %2875 = vmatpush1.bf16.msra.mxu0 %v818
        %2876 = vmatprep.subr.bf16.mxu0 0
        %2877 = vmatpush1.bf16.msra.mxu0 0
        %2878 = vmatprep.subr.bf16.mxu0 0
        %2879 = vmatpush1.bf16.msra.mxu0 0
        %2880 = vmatprep.subr.bf16.mxu0 0
        %2881 = vmatpush1.bf16.msra.mxu0 0
        %2882 = vmatprep.subr.bf16.mxu0 0
        %2883 = vmatpush1.bf16.msra.mxu0 0
        %2884 = vmatprep.subr.bf16.mxu0 0
        %2885 = vmatpush1.bf16.msra.mxu0 0
        %2886 = vmatprep.subr.bf16.mxu0 0
        %2887 = vmatpush1.bf16.msra.mxu0 0
        %2888 = vmatprep.subr.bf16.mxu0 0
        %2889 = vmatpush1.bf16.msra.mxu0 0
        %2890 = vmatprep.subr.bf16.mxu0 0
        %2891 = vmatpush1.bf16.msra.mxu0 0
        %2892 = vmatprep.subr.bf16.mxu0 0
        %2893 = vmatpush1.bf16.msra.mxu0 0
        %2894 = vmatprep.subr.bf16.mxu0 0
        %2895 = vmatpush1.bf16.msra.mxu0 0
        %2896 = vmatprep.subr.bf16.mxu0 0
        %2897 = vmatpush1.bf16.msra.mxu0 0
        %2898 = vmatprep.subr.bf16.mxu0 0
        %2899 = vmatpush1.bf16.msra.mxu0 0
        %2900 = vmatprep.subr.bf16.mxu0 0
        %2901 = vmatpush1.bf16.msra.mxu0 0
        %2902 = vmatprep.subr.bf16.mxu0 0
        %2903 = vmatpush1.bf16.msra.mxu0 0
        %2904 = vmatprep.subr.bf16.mxu0 0
        %2905 = vmatpush1.bf16.msra.mxu0 0
        %2906 = vmatprep.mubr.bf16.mxu0 0
        %2907 = vmatmul.mubr.bf16.gmra.mrb[0].mxu0 %v2872
        %v2908 = vpop.f32.mrb[0].mxu0
        %v2909 = vadd.f32 0.0, %v2908
        %v2910 = vpop.f32.mrb[0].mxu0
        %v2911 = vpop.f32.mrb[0].mxu0
        %v2912 = vadd.f32 0.0, %v2911
        %v2913 = vpop.f32.mrb[0].mxu0
        %2914 = vdwg.mxu0
        %v2915 = vadd.f32 %v2862, %v2909
        %v2916 = vadd.f32 %v2863, %v2912
        %v2917 = vrot.slane %v2608, 3
        %v2918 = vrot.slane %v2609, 3
        %v2919 = vsel %vm863, %v2917, %v2918
        %v2921 = vsel %vm541, %v2919, 0
        %2923 = vmatprep.subr.bf16.mxu0 0
        %2924 = vmatpush1.bf16.msra.mxu0 %v871
        %2925 = vmatprep.subr.bf16.mxu0 0
        %2926 = vmatpush1.bf16.msra.mxu0 0
        %2927 = vmatprep.subr.bf16.mxu0 0
        %2928 = vmatpush1.bf16.msra.mxu0 0
        %2929 = vmatprep.subr.bf16.mxu0 0
        %2930 = vmatpush1.bf16.msra.mxu0 0
        %2931 = vmatprep.subr.bf16.mxu0 0
        %2932 = vmatpush1.bf16.msra.mxu0 0
        %2933 = vmatprep.subr.bf16.mxu0 0
        %2934 = vmatpush1.bf16.msra.mxu0 0
        %2935 = vmatprep.subr.bf16.mxu0 0
        %2936 = vmatpush1.bf16.msra.mxu0 0
        %2937 = vmatprep.subr.bf16.mxu0 0
        %2938 = vmatpush1.bf16.msra.mxu0 0
        %2939 = vmatprep.subr.bf16.mxu0 0
        %2940 = vmatpush1.bf16.msra.mxu0 0
        %2941 = vmatprep.subr.bf16.mxu0 0
        %2942 = vmatpush1.bf16.msra.mxu0 0
        %2943 = vmatprep.subr.bf16.mxu0 0
        %2944 = vmatpush1.bf16.msra.mxu0 0
        %2945 = vmatprep.subr.bf16.mxu0 0
        %2946 = vmatpush1.bf16.msra.mxu0 0
        %2947 = vmatprep.subr.bf16.mxu0 0
        %2948 = vmatpush1.bf16.msra.mxu0 0
        %2949 = vmatprep.subr.bf16.mxu0 0
        %2950 = vmatpush1.bf16.msra.mxu0 0
        %2951 = vmatprep.subr.bf16.mxu0 0
        %2952 = vmatpush1.bf16.msra.mxu0 0
        %2953 = vmatprep.subr.bf16.mxu0 0
        %2954 = vmatpush1.bf16.msra.mxu0 0
        %2955 = vmatprep.mubr.bf16.mxu0 0
        %2956 = vmatmul.mubr.bf16.gmra.mrb[0].mxu0 %v2921
        %v2957 = vpop.f32.mrb[0].mxu0
        %v2958 = vadd.f32 0.0, %v2957
        %v2959 = vpop.f32.mrb[0].mxu0
        %v2960 = vpop.f32.mrb[0].mxu0
        %v2961 = vadd.f32 0.0, %v2960
        %v2962 = vpop.f32.mrb[0].mxu0
        %2963 = vdwg.mxu0
        %v2964 = vadd.f32 %v2915, %v2958
        %v2965 = vadd.f32 %v2916, %v2961
        %v2966 = vrot.slane %v2611, 3
        %v2967 = vrot.slane %v2613, 4
        %v2968 = vor.u32 %v2966, %v2967
        %v2969 = vrot.slane %v2763, 3
        %v2970 = vrot.slane %v2618, 4
        %v2971 = vor.u32 %v2969, %v2970
        %v2972 = vsel %vm916, %v2968, %v2971
        %v2974 = vsel %vm541, %v2972, 0
        %2976 = vmatprep.subr.bf16.mxu0 0
        %2977 = vmatpush1.bf16.msra.mxu0 %v928
        %2978 = vmatprep.subr.bf16.mxu0 0
        %2979 = vmatpush1.bf16.msra.mxu0 0
        %2980 = vmatprep.subr.bf16.mxu0 0
        %2981 = vmatpush1.bf16.msra.mxu0 0
        %2982 = vmatprep.subr.bf16.mxu0 0
        %2983 = vmatpush1.bf16.msra.mxu0 0
        %2984 = vmatprep.subr.bf16.mxu0 0
        %2985 = vmatpush1.bf16.msra.mxu0 0
        %2986 = vmatprep.subr.bf16.mxu0 0
        %2987 = vmatpush1.bf16.msra.mxu0 0
        %2988 = vmatprep.subr.bf16.mxu0 0
        %2989 = vmatpush1.bf16.msra.mxu0 0
        %2990 = vmatprep.subr.bf16.mxu0 0
        %2991 = vmatpush1.bf16.msra.mxu0 0
        %2992 = vmatprep.subr.bf16.mxu0 0
        %2993 = vmatpush1.bf16.msra.mxu0 0
        %2994 = vmatprep.subr.bf16.mxu0 0
        %2995 = vmatpush1.bf16.msra.mxu0 0
        %2996 = vmatprep.subr.bf16.mxu0 0
        %2997 = vmatpush1.bf16.msra.mxu0 0
        %2998 = vmatprep.subr.bf16.mxu0 0
        %2999 = vmatpush1.bf16.msra.mxu0 0
        %3000 = vmatprep.subr.bf16.mxu0 0
        %3001 = vmatpush1.bf16.msra.mxu0 0
        %3002 = vmatprep.subr.bf16.mxu0 0
        %3003 = vmatpush1.bf16.msra.mxu0 0
        %3004 = vmatprep.subr.bf16.mxu0 0
        %3005 = vmatpush1.bf16.msra.mxu0 0
        %3006 = vmatprep.subr.bf16.mxu0 0
        %3007 = vmatpush1.bf16.msra.mxu0 0
        %3008 = vmatprep.mubr.bf16.mxu0 0
        %3009 = vmatmul.mubr.bf16.gmra.mrb[0].mxu0 %v2974
        %v3010 = vpop.f32.mrb[0].mxu0
        %v3011 = vadd.f32 0.0, %v3010
        %v3012 = vpop.f32.mrb[0].mxu0
        %v3013 = vpop.f32.mrb[0].mxu0
        %v3014 = vadd.f32 0.0, %v3013
        %v3015 = vpop.f32.mrb[0].mxu0
        %3016 = vdwg.mxu0
        %v3017 = vadd.f32 %v2964, %v3011
        %v3018 = vadd.f32 %v2965, %v3014
        %v3019 = vadd.f32 %v3017, %v977
        %v3020 = vadd.f32 %v3018, %v977
        %v3021 = vmax.f32 %v3019, 0.0
        %v3022 = vmax.f32 %v3020, 0.0
        %v3025 = vrot.slane %v3021, 5
        %v3026 = vrot.slane %v3022, 5
        %v3027 = vsel %vm517, %v3025, %v3026
        %v3031 = vsel %vm517, 0.0, %v3025
        %v3032 = vsel %vm517, %v3026, 0.0
        %v3033 = vpack.c.bf16 %v3027, %v3031
        %v3034 = vpack.c.bf16 %v3032, %v3032
        %v3036 = vshrl.u32 %v3033, 16
        %v3038 = vshll.u32 %v3033, 16
        %v3040 = vrot.slane %v3038, 1
        %v3041 = vor.u32 %v3036, %v3040
        %v3043 = vshll.u32 %v3034, 16
        %v3045 = vrot.slane %v3043, 1
        %v3046 = vsel %vm528, %v3041, %v3045
        %v3048 = vsel %vm1016, %v3046, 0
        %3050 = vmatprep.subr.bf16.mxu0 0
        %3051 = vmatpush1.bf16.msra.mxu0 %v1013
        %3052 = vmatprep.subr.bf16.mxu0 0
        %3053 = vmatpush1.bf16.msra.mxu0 %v1021
        %3054 = vmatprep.subr.bf16.mxu0 0
        %3055 = vmatpush1.bf16.msra.mxu0 0
        %3056 = vmatprep.subr.bf16.mxu0 0
        %3057 = vmatpush1.bf16.msra.mxu0 0
        %3058 = vmatprep.subr.bf16.mxu0 0
        %3059 = vmatpush1.bf16.msra.mxu0 0
        %3060 = vmatprep.subr.bf16.mxu0 0
        %3061 = vmatpush1.bf16.msra.mxu0 0
        %3062 = vmatprep.subr.bf16.mxu0 0
        %3063 = vmatpush1.bf16.msra.mxu0 0
        %3064 = vmatprep.subr.bf16.mxu0 0
        %3065 = vmatpush1.bf16.msra.mxu0 0
        %3066 = vmatprep.subr.bf16.mxu0 0
        %3067 = vmatpush1.bf16.msra.mxu0 0
        %3068 = vmatprep.subr.bf16.mxu0 0
        %3069 = vmatpush1.bf16.msra.mxu0 0
        %3070 = vmatprep.subr.bf16.mxu0 0
        %3071 = vmatpush1.bf16.msra.mxu0 0
        %3072 = vmatprep.subr.bf16.mxu0 0
        %3073 = vmatpush1.bf16.msra.mxu0 0
        %3074 = vmatprep.subr.bf16.mxu0 0
        %3075 = vmatpush1.bf16.msra.mxu0 0
        %3076 = vmatprep.subr.bf16.mxu0 0
        %3077 = vmatpush1.bf16.msra.mxu0 0
        %3078 = vmatprep.subr.bf16.mxu0 0
        %3079 = vmatpush1.bf16.msra.mxu0 0
        %3080 = vmatprep.subr.bf16.mxu0 0
        %3081 = vmatpush1.bf16.msra.mxu0 0
        %3082 = vmatprep.mubr.bf16.mxu0 0
        %3083 = vmatmul.mubr.bf16.gmra.mrb[0].mxu0 %v3048
        %v3084 = vpop.f32.mrb[0].mxu0
        %v3085 = vadd.f32 0.0, %v3084
        %v3086 = vpop.f32.mrb[0].mxu0
        %v3087 = vpop.f32.mrb[0].mxu0
        %v3088 = vadd.f32 0.0, %v3087
        %v3089 = vpop.f32.mrb[0].mxu0
        %3090 = vdwg.mxu0
        %v3091 = vsel %vm1016, %v3033, 0
        %3093 = vmatprep.subr.bf16.mxu0 0
        %3094 = vmatpush1.bf16.msra.mxu0 %v1070
        %3095 = vmatprep.subr.bf16.mxu0 0
        %3096 = vmatpush1.bf16.msra.mxu0 %v1076
        %3097 = vmatprep.subr.bf16.mxu0 0
        %3098 = vmatpush1.bf16.msra.mxu0 0
        %3099 = vmatprep.subr.bf16.mxu0 0
        %3100 = vmatpush1.bf16.msra.mxu0 0
        %3101 = vmatprep.subr.bf16.mxu0 0
        %3102 = vmatpush1.bf16.msra.mxu0 0
        %3103 = vmatprep.subr.bf16.mxu0 0
        %3104 = vmatpush1.bf16.msra.mxu0 0
        %3105 = vmatprep.subr.bf16.mxu0 0
        %3106 = vmatpush1.bf16.msra.mxu0 0
        %3107 = vmatprep.subr.bf16.mxu0 0
        %3108 = vmatpush1.bf16.msra.mxu0 0
        %3109 = vmatprep.subr.bf16.mxu0 0
        %3110 = vmatpush1.bf16.msra.mxu0 0
        %3111 = vmatprep.subr.bf16.mxu0 0
        %3112 = vmatpush1.bf16.msra.mxu0 0
        %3113 = vmatprep.subr.bf16.mxu0 0
        %3114 = vmatpush1.bf16.msra.mxu0 0
        %3115 = vmatprep.subr.bf16.mxu0 0
        %3116 = vmatpush1.bf16.msra.mxu0 0
        %3117 = vmatprep.subr.bf16.mxu0 0
        %3118 = vmatpush1.bf16.msra.mxu0 0
        %3119 = vmatprep.subr.bf16.mxu0 0
        %3120 = vmatpush1.bf16.msra.mxu0 0
        %3121 = vmatprep.subr.bf16.mxu0 0
        %3122 = vmatpush1.bf16.msra.mxu0 0
        %3123 = vmatprep.subr.bf16.mxu0 0
        %3124 = vmatpush1.bf16.msra.mxu0 0
        %3125 = vmatprep.mubr.bf16.mxu0 0
        %3126 = vmatmul.mubr.bf16.gmra.mrb[0].mxu0 %v3091
        %v3127 = vpop.f32.mrb[0].mxu0
        %v3128 = vadd.f32 %v3085, %v3127
        %v3129 = vpop.f32.mrb[0].mxu0
        %v3130 = vpop.f32.mrb[0].mxu0
        %v3131 = vadd.f32 %v3088, %v3130
        %v3132 = vpop.f32.mrb[0].mxu0
        %3133 = vdwg.mxu0
        %v3136 = vrot.slane %v3033, 1
        %v3137 = vrot.slane %v3034, 1
        %v3138 = vsel %vm641, %v3136, %v3137
        %v3140 = vsel %vm1016, %v3138, 0
        %3142 = vmatprep.subr.bf16.mxu0 0
        %3143 = vmatpush1.bf16.msra.mxu0 %v1130
        %3144 = vmatprep.subr.bf16.mxu0 0
        %3145 = vmatpush1.bf16.msra.mxu0 %v1137
        %3146 = vmatprep.subr.bf16.mxu0 0
        %3147 = vmatpush1.bf16.msra.mxu0 0
        %3148 = vmatprep.subr.bf16.mxu0 0
        %3149 = vmatpush1.bf16.msra.mxu0 0
        %3150 = vmatprep.subr.bf16.mxu0 0
        %3151 = vmatpush1.bf16.msra.mxu0 0
        %3152 = vmatprep.subr.bf16.mxu0 0
        %3153 = vmatpush1.bf16.msra.mxu0 0
        %3154 = vmatprep.subr.bf16.mxu0 0
        %3155 = vmatpush1.bf16.msra.mxu0 0
        %3156 = vmatprep.subr.bf16.mxu0 0
        %3157 = vmatpush1.bf16.msra.mxu0 0
        %3158 = vmatprep.subr.bf16.mxu0 0
        %3159 = vmatpush1.bf16.msra.mxu0 0
        %3160 = vmatprep.subr.bf16.mxu0 0
        %3161 = vmatpush1.bf16.msra.mxu0 0
        %3162 = vmatprep.subr.bf16.mxu0 0
        %3163 = vmatpush1.bf16.msra.mxu0 0
        %3164 = vmatprep.subr.bf16.mxu0 0
        %3165 = vmatpush1.bf16.msra.mxu0 0
        %3166 = vmatprep.subr.bf16.mxu0 0
        %3167 = vmatpush1.bf16.msra.mxu0 0
        %3168 = vmatprep.subr.bf16.mxu0 0
        %3169 = vmatpush1.bf16.msra.mxu0 0
        %3170 = vmatprep.subr.bf16.mxu0 0
        %3171 = vmatpush1.bf16.msra.mxu0 0
        %3172 = vmatprep.subr.bf16.mxu0 0
        %3173 = vmatpush1.bf16.msra.mxu0 0
        %3174 = vmatprep.mubr.bf16.mxu0 0
        %3175 = vmatmul.mubr.bf16.gmra.mrb[0].mxu0 %v3140
        %v3176 = vpop.f32.mrb[0].mxu0
        %v3177 = vadd.f32 0.0, %v3176
        %v3178 = vpop.f32.mrb[0].mxu0
        %v3179 = vpop.f32.mrb[0].mxu0
        %v3180 = vadd.f32 0.0, %v3179
        %v3181 = vpop.f32.mrb[0].mxu0
        %3182 = vdwg.mxu0
        %v3183 = vadd.f32 %v3128, %v3177
        %v3184 = vadd.f32 %v3131, %v3180
        %v3185 = vrot.slane %v3036, 1
        %v3186 = vrot.slane %v3038, 2
        %v3187 = vor.u32 %v3185, %v3186
        %v3188 = vshrl.u32 %v3034, 16
        %v3190 = vrot.slane %v3188, 1
        %v3191 = vrot.slane %v3043, 2
        %v3192 = vor.u32 %v3190, %v3191
        %v3193 = vsel %vm694, %v3187, %v3192
        %v3195 = vsel %vm1016, %v3193, 0
        %3197 = vmatprep.subr.bf16.mxu0 0
        %3198 = vmatpush1.bf16.msra.mxu0 %v1197
        %3199 = vmatprep.subr.bf16.mxu0 0
        %3200 = vmatpush1.bf16.msra.mxu0 %v1204
        %3201 = vmatprep.subr.bf16.mxu0 0
        %3202 = vmatpush1.bf16.msra.mxu0 0
        %3203 = vmatprep.subr.bf16.mxu0 0
        %3204 = vmatpush1.bf16.msra.mxu0 0
        %3205 = vmatprep.subr.bf16.mxu0 0
        %3206 = vmatpush1.bf16.msra.mxu0 0
        %3207 = vmatprep.subr.bf16.mxu0 0
        %3208 = vmatpush1.bf16.msra.mxu0 0
        %3209 = vmatprep.subr.bf16.mxu0 0
        %3210 = vmatpush1.bf16.msra.mxu0 0
        %3211 = vmatprep.subr.bf16.mxu0 0
        %3212 = vmatpush1.bf16.msra.mxu0 0
        %3213 = vmatprep.subr.bf16.mxu0 0
        %3214 = vmatpush1.bf16.msra.mxu0 0
        %3215 = vmatprep.subr.bf16.mxu0 0
        %3216 = vmatpush1.bf16.msra.mxu0 0
        %3217 = vmatprep.subr.bf16.mxu0 0
        %3218 = vmatpush1.bf16.msra.mxu0 0
        %3219 = vmatprep.subr.bf16.mxu0 0
        %3220 = vmatpush1.bf16.msra.mxu0 0
        %3221 = vmatprep.subr.bf16.mxu0 0
        %3222 = vmatpush1.bf16.msra.mxu0 0
        %3223 = vmatprep.subr.bf16.mxu0 0
        %3224 = vmatpush1.bf16.msra.mxu0 0
        %3225 = vmatprep.subr.bf16.mxu0 0
        %3226 = vmatpush1.bf16.msra.mxu0 0
        %3227 = vmatprep.subr.bf16.mxu0 0
        %3228 = vmatpush1.bf16.msra.mxu0 0
        %3229 = vmatprep.mubr.bf16.mxu0 0
        %3230 = vmatmul.mubr.bf16.gmra.mrb[0].mxu0 %v3195
        %v3231 = vpop.f32.mrb[0].mxu0
        %v3232 = vadd.f32 0.0, %v3231
        %v3233 = vpop.f32.mrb[0].mxu0
        %v3234 = vpop.f32.mrb[0].mxu0
        %v3235 = vadd.f32 0.0, %v3234
        %v3236 = vpop.f32.mrb[0].mxu0
        %3237 = vdwg.mxu0
        %v3238 = vadd.f32 %v3183, %v3232
        %v3239 = vadd.f32 %v3184, %v3235
        %v3240 = vrot.slane %v3033, 2
        %v3241 = vrot.slane %v3034, 2
        %v3242 = vsel %vm753, %v3240, %v3241
        %v3244 = vsel %vm1016, %v3242, 0
        %3246 = vmatprep.subr.bf16.mxu0 0
        %3247 = vmatpush1.bf16.msra.mxu0 %v1258
        %3248 = vmatprep.subr.bf16.mxu0 0
        %3249 = vmatpush1.bf16.msra.mxu0 %v1265
        %3250 = vmatprep.subr.bf16.mxu0 0
        %3251 = vmatpush1.bf16.msra.mxu0 0
        %3252 = vmatprep.subr.bf16.mxu0 0
        %3253 = vmatpush1.bf16.msra.mxu0 0
        %3254 = vmatprep.subr.bf16.mxu0 0
        %3255 = vmatpush1.bf16.msra.mxu0 0
        %3256 = vmatprep.subr.bf16.mxu0 0
        %3257 = vmatpush1.bf16.msra.mxu0 0
        %3258 = vmatprep.subr.bf16.mxu0 0
        %3259 = vmatpush1.bf16.msra.mxu0 0
        %3260 = vmatprep.subr.bf16.mxu0 0
        %3261 = vmatpush1.bf16.msra.mxu0 0
        %3262 = vmatprep.subr.bf16.mxu0 0
        %3263 = vmatpush1.bf16.msra.mxu0 0
        %3264 = vmatprep.subr.bf16.mxu0 0
        %3265 = vmatpush1.bf16.msra.mxu0 0
        %3266 = vmatprep.subr.bf16.mxu0 0
        %3267 = vmatpush1.bf16.msra.mxu0 0
        %3268 = vmatprep.subr.bf16.mxu0 0
        %3269 = vmatpush1.bf16.msra.mxu0 0
        %3270 = vmatprep.subr.bf16.mxu0 0
        %3271 = vmatpush1.bf16.msra.mxu0 0
        %3272 = vmatprep.subr.bf16.mxu0 0
        %3273 = vmatpush1.bf16.msra.mxu0 0
        %3274 = vmatprep.subr.bf16.mxu0 0
        %3275 = vmatpush1.bf16.msra.mxu0 0
        %3276 = vmatprep.subr.bf16.mxu0 0
        %3277 = vmatpush1.bf16.msra.mxu0 0
        %3278 = vmatprep.mubr.bf16.mxu0 0
        %3279 = vmatmul.mubr.bf16.gmra.mrb[0].mxu0 %v3244
        %v3280 = vpop.f32.mrb[0].mxu0
        %v3281 = vadd.f32 0.0, %v3280
        %v3282 = vpop.f32.mrb[0].mxu0
        %v3283 = vpop.f32.mrb[0].mxu0
        %v3284 = vadd.f32 0.0, %v3283
        %v3285 = vpop.f32.mrb[0].mxu0
        %3286 = vdwg.mxu0
        %v3287 = vadd.f32 %v3238, %v3281
        %v3288 = vadd.f32 %v3239, %v3284
        %v3289 = vrot.slane %v3036, 2
        %v3290 = vrot.slane %v3038, 3
        %v3291 = vor.u32 %v3289, %v3290
        %v3292 = vrot.slane %v3188, 2
        %v3293 = vrot.slane %v3043, 3
        %v3294 = vor.u32 %v3292, %v3293
        %v3295 = vsel %vm806, %v3291, %v3294
        %v3297 = vsel %vm1016, %v3295, 0
        %3299 = vmatprep.subr.bf16.mxu0 0
        %3300 = vmatpush1.bf16.msra.mxu0 %v1323
        %3301 = vmatprep.subr.bf16.mxu0 0
        %3302 = vmatpush1.bf16.msra.mxu0 %v1330
        %3303 = vmatprep.subr.bf16.mxu0 0
        %3304 = vmatpush1.bf16.msra.mxu0 0
        %3305 = vmatprep.subr.bf16.mxu0 0
        %3306 = vmatpush1.bf16.msra.mxu0 0
        %3307 = vmatprep.subr.bf16.mxu0 0
        %3308 = vmatpush1.bf16.msra.mxu0 0
        %3309 = vmatprep.subr.bf16.mxu0 0
        %3310 = vmatpush1.bf16.msra.mxu0 0
        %3311 = vmatprep.subr.bf16.mxu0 0
        %3312 = vmatpush1.bf16.msra.mxu0 0
        %3313 = vmatprep.subr.bf16.mxu0 0
        %3314 = vmatpush1.bf16.msra.mxu0 0
        %3315 = vmatprep.subr.bf16.mxu0 0
        %3316 = vmatpush1.bf16.msra.mxu0 0
        %3317 = vmatprep.subr.bf16.mxu0 0
        %3318 = vmatpush1.bf16.msra.mxu0 0
        %3319 = vmatprep.subr.bf16.mxu0 0
        %3320 = vmatpush1.bf16.msra.mxu0 0
        %3321 = vmatprep.subr.bf16.mxu0 0
        %3322 = vmatpush1.bf16.msra.mxu0 0
        %3323 = vmatprep.subr.bf16.mxu0 0
        %3324 = vmatpush1.bf16.msra.mxu0 0
        %3325 = vmatprep.subr.bf16.mxu0 0
        %3326 = vmatpush1.bf16.msra.mxu0 0
        %3327 = vmatprep.subr.bf16.mxu0 0
        %3328 = vmatpush1.bf16.msra.mxu0 0
        %3329 = vmatprep.subr.bf16.mxu0 0
        %3330 = vmatpush1.bf16.msra.mxu0 0
        %3331 = vmatprep.mubr.bf16.mxu0 0
        %3332 = vmatmul.mubr.bf16.gmra.mrb[0].mxu0 %v3297
        %v3333 = vpop.f32.mrb[0].mxu0
        %v3334 = vadd.f32 0.0, %v3333
        %v3335 = vpop.f32.mrb[0].mxu0
        %v3336 = vpop.f32.mrb[0].mxu0
        %v3337 = vadd.f32 0.0, %v3336
        %v3338 = vpop.f32.mrb[0].mxu0
        %3339 = vdwg.mxu0
        %v3340 = vadd.f32 %v3287, %v3334
        %v3341 = vadd.f32 %v3288, %v3337
        %v3342 = vrot.slane %v3033, 3
        %v3343 = vrot.slane %v3034, 3
        %v3344 = vsel %vm863, %v3342, %v3343
        %v3346 = vsel %vm1016, %v3344, 0
        %3348 = vmatprep.subr.bf16.mxu0 0
        %3349 = vmatpush1.bf16.msra.mxu0 %v1384
        %3350 = vmatprep.subr.bf16.mxu0 0
        %3351 = vmatpush1.bf16.msra.mxu0 %v1391
        %3352 = vmatprep.subr.bf16.mxu0 0
        %3353 = vmatpush1.bf16.msra.mxu0 0
        %3354 = vmatprep.subr.bf16.mxu0 0
        %3355 = vmatpush1.bf16.msra.mxu0 0
        %3356 = vmatprep.subr.bf16.mxu0 0
        %3357 = vmatpush1.bf16.msra.mxu0 0
        %3358 = vmatprep.subr.bf16.mxu0 0
        %3359 = vmatpush1.bf16.msra.mxu0 0
        %3360 = vmatprep.subr.bf16.mxu0 0
        %3361 = vmatpush1.bf16.msra.mxu0 0
        %3362 = vmatprep.subr.bf16.mxu0 0
        %3363 = vmatpush1.bf16.msra.mxu0 0
        %3364 = vmatprep.subr.bf16.mxu0 0
        %3365 = vmatpush1.bf16.msra.mxu0 0
        %3366 = vmatprep.subr.bf16.mxu0 0
        %3367 = vmatpush1.bf16.msra.mxu0 0
        %3368 = vmatprep.subr.bf16.mxu0 0
        %3369 = vmatpush1.bf16.msra.mxu0 0
        %3370 = vmatprep.subr.bf16.mxu0 0
        %3371 = vmatpush1.bf16.msra.mxu0 0
        %3372 = vmatprep.subr.bf16.mxu0 0
        %3373 = vmatpush1.bf16.msra.mxu0 0
        %3374 = vmatprep.subr.bf16.mxu0 0
        %3375 = vmatpush1.bf16.msra.mxu0 0
        %3376 = vmatprep.subr.bf16.mxu0 0
        %3377 = vmatpush1.bf16.msra.mxu0 0
        %3378 = vmatprep.subr.bf16.mxu0 0
        %3379 = vmatpush1.bf16.msra.mxu0 0
        %3380 = vmatprep.mubr.bf16.mxu0 0
        %3381 = vmatmul.mubr.bf16.gmra.mrb[0].mxu0 %v3346
        %v3382 = vpop.f32.mrb[0].mxu0
        %v3383 = vadd.f32 0.0, %v3382
        %v3384 = vpop.f32.mrb[0].mxu0
        %v3385 = vpop.f32.mrb[0].mxu0
        %v3386 = vadd.f32 0.0, %v3385
        %v3387 = vpop.f32.mrb[0].mxu0
        %3388 = vdwg.mxu0
        %v3389 = vadd.f32 %v3340, %v3383
        %v3390 = vadd.f32 %v3341, %v3386
        %v3391 = vrot.slane %v3036, 3
        %v3392 = vrot.slane %v3038, 4
        %v3393 = vor.u32 %v3391, %v3392
        %v3394 = vrot.slane %v3188, 3
        %v3395 = vrot.slane %v3043, 4
        %v3396 = vor.u32 %v3394, %v3395
        %v3397 = vsel %vm916, %v3393, %v3396
        %v3399 = vsel %vm1016, %v3397, 0
        %3401 = vmatprep.subr.bf16.mxu0 0
        %3402 = vmatpush1.bf16.msra.mxu0 %v1449
        %3403 = vmatprep.subr.bf16.mxu0 0
        %3404 = vmatpush1.bf16.msra.mxu0 %v1456
        %3405 = vmatprep.subr.bf16.mxu0 0
        %3406 = vmatpush1.bf16.msra.mxu0 0
        %3407 = vmatprep.subr.bf16.mxu0 0
        %3408 = vmatpush1.bf16.msra.mxu0 0
        %3409 = vmatprep.subr.bf16.mxu0 0
        %3410 = vmatpush1.bf16.msra.mxu0 0
        %3411 = vmatprep.subr.bf16.mxu0 0
        %3412 = vmatpush1.bf16.msra.mxu0 0
        %3413 = vmatprep.subr.bf16.mxu0 0
        %3414 = vmatpush1.bf16.msra.mxu0 0
        %3415 = vmatprep.subr.bf16.mxu0 0
        %3416 = vmatpush1.bf16.msra.mxu0 0
        %3417 = vmatprep.subr.bf16.mxu0 0
        %3418 = vmatpush1.bf16.msra.mxu0 0
        %3419 = vmatprep.subr.bf16.mxu0 0
        %3420 = vmatpush1.bf16.msra.mxu0 0
        %3421 = vmatprep.subr.bf16.mxu0 0
        %3422 = vmatpush1.bf16.msra.mxu0 0
        %3423 = vmatprep.subr.bf16.mxu0 0
        %3424 = vmatpush1.bf16.msra.mxu0 0
        %3425 = vmatprep.subr.bf16.mxu0 0
        %3426 = vmatpush1.bf16.msra.mxu0 0
        %3427 = vmatprep.subr.bf16.mxu0 0
        %3428 = vmatpush1.bf16.msra.mxu0 0
        %3429 = vmatprep.subr.bf16.mxu0 0
        %3430 = vmatpush1.bf16.msra.mxu0 0
        %3431 = vmatprep.subr.bf16.mxu0 0
        %3432 = vmatpush1.bf16.msra.mxu0 0
        %3433 = vmatprep.mubr.bf16.mxu0 0
        %3434 = vmatmul.mubr.bf16.gmra.mrb[0].mxu0 %v3399
        %v3435 = vpop.f32.mrb[0].mxu0
        %v3436 = vadd.f32 0.0, %v3435
        %v3437 = vpop.f32.mrb[0].mxu0
        %v3438 = vpop.f32.mrb[0].mxu0
        %v3439 = vadd.f32 0.0, %v3438
        %v3440 = vpop.f32.mrb[0].mxu0
        %3441 = vdwg.mxu0
        %v3442 = vadd.f32 %v3389, %v3436
        %v3443 = vadd.f32 %v3390, %v3439
        %v3444 = vadd.f32 %v3442, %v1505
        %v3445 = vadd.f32 %v3443, %v1505
        %v3446 = vmax.f32 %v3444, 0.0
        %v3447 = vmax.f32 %v3445, 0.0
        %v3449 = vsel %vm1016, %v3446, 0
        %v3452 = vsel %vm1016, %v3447, 0
        %3454 = vmatprep.subr.mxu0 0.0
        %3455 = vmatpush1.msra.mxu0 %v487
        %3456 = vmatprep.subr.mxu0 0.0
        %3457 = vmatpush1.msra.mxu0 %v488
        %3458 = vmatprep.subr.mxu0 0.0
        %3459 = vmatpush1.msra.mxu0 %v1519
        %3460 = vmatprep.subr.mxu0 0.0
        %3461 = vmatpush1.msra.mxu0 0.0
        %3462 = vmatprep.subr.mxu0 0.0
        %3463 = vmatpush1.msra.mxu0 0.0
        %3464 = vmatprep.subr.mxu0 0.0
        %3465 = vmatpush1.msra.mxu0 0.0
        %3466 = vmatprep.subr.mxu0 0.0
        %3467 = vmatpush1.msra.mxu0 0.0
        %3468 = vmatprep.subr.mxu0 0.0
        %3469 = vmatpush1.msra.mxu0 0.0
        %3470 = vmatprep.subr.mxu0 0.0
        %3471 = vmatpush1.msra.mxu0 0.0
        %3472 = vmatprep.subr.mxu0 0.0
        %3473 = vmatpush1.msra.mxu0 0.0
        %3474 = vmatprep.subr.mxu0 0.0
        %3475 = vmatpush1.msra.mxu0 0.0
        %3476 = vmatprep.subr.mxu0 0.0
        %3477 = vmatpush1.msra.mxu0 0.0
        %3478 = vmatprep.subr.mxu0 0.0
        %3479 = vmatpush1.msra.mxu0 0.0
        %3480 = vmatprep.subr.mxu0 0.0
        %3481 = vmatpush1.msra.mxu0 0.0
        %3482 = vmatprep.subr.mxu0 0.0
        %3483 = vmatpush1.msra.mxu0 0.0
        %3484 = vmatprep.subr.mxu0 0.0
        %3485 = vmatpush1.msra.mxu0 0.0
        %3486 = vmatprep.subr.mxu0 0.0
        %3487 = vmatpush1.msra.mxu0 0.0
        %3488 = vmatprep.subr.mxu0 0.0
        %3489 = vmatpush1.msra.mxu0 0.0
        %3490 = vmatprep.subr.mxu0 0.0
        %3491 = vmatpush1.msra.mxu0 0.0
        %3492 = vmatprep.subr.mxu0 0.0
        %3493 = vmatpush1.msra.mxu0 0.0
        %3494 = vmatprep.subr.mxu0 0.0
        %3495 = vmatpush1.msra.mxu0 0.0
        %3496 = vmatprep.subr.mxu0 0.0
        %3497 = vmatpush1.msra.mxu0 0.0
        %3498 = vmatprep.subr.mxu0 0.0
        %3499 = vmatpush1.msra.mxu0 0.0
        %3500 = vmatprep.subr.mxu0 0.0
        %3501 = vmatpush1.msra.mxu0 0.0
        %3502 = vmatprep.subr.mxu0 0.0
        %3503 = vmatpush1.msra.mxu0 0.0
        %3504 = vmatprep.subr.mxu0 0.0
        %3505 = vmatpush1.msra.mxu0 0.0
        %3506 = vmatprep.subr.mxu0 0.0
        %3507 = vmatpush1.msra.mxu0 0.0
        %3508 = vmatprep.subr.mxu0 0.0
        %3509 = vmatpush1.msra.mxu0 0.0
        %3510 = vmatprep.subr.mxu0 0.0
        %3511 = vmatpush1.msra.mxu0 0.0
        %3512 = vmatprep.subr.mxu0 0.0
        %3513 = vmatpush1.msra.mxu0 0.0
        %3514 = vmatprep.subr.mxu0 0.0
        %3515 = vmatpush1.msra.mxu0 0.0
        %3516 = vmatprep.subr.mxu0 0.0
        %3517 = vmatpush1.msra.mxu0 0.0
        %3518 = vmatprep.mubr.f32.mxu0 0.0
        %3519 = vmatmul.mubr.f32.gmra.mrb[0].mxu0 %v3449
        %v3520 = vpop.f32.mrb[0].mxu0
        %v3521 = vadd.f32 0.0, %v3520
        %v3522 = vpop.f32.mrb[0].mxu0
        %3523 = vmatprep.mubr.f32.mxu0 0.0
        %3524 = vmatmul.mubr.f32.gmra.mrb[0].mxu0 %v3452
        %v3525 = vpop.f32.mrb[0].mxu0
        %v3526 = vadd.f32 0.0, %v3525
        %v3527 = vpop.f32.mrb[0].mxu0
        %3528 = vdwg.mxu0
        %v3529 = vsel %vm1596, %v3521, 0.0
        %v3530 = vsel %vm1596, %v3526, 0.0
        %v3531 = vadd.f32 %v3529, %v3530
        %v3532 = vrot.slane %v3531, 4
        %v3533 = vadd.f32 %v3531, %v3532
        %v3534 = vrot.slane %v3533, 2
        %v3535 = vadd.f32 %v3533, %v3534
        %v3536 = vrot.slane %v3535, 1
        %v3537 = vadd.f32 %v3535, %v3536
        %v3538 = vmul.f32 %v3537, %v1606
        %v3539 = vadd.f32 %v3538, %v490
        %v3541 = vsel %vm1596, %v3539, 0
        %3543 = vmatprep.subr.mxu0 0.0
        %3544 = vmatpush1.msra.mxu0 %v491
        %3545 = vmatprep.subr.mxu0 0.0
        %3546 = vmatpush1.msra.mxu0 %v1613
        %3547 = vmatprep.subr.mxu0 0.0
        %3548 = vmatpush1.msra.mxu0 0.0
        %3549 = vmatprep.subr.mxu0 0.0
        %3550 = vmatpush1.msra.mxu0 0.0
        %3551 = vmatprep.subr.mxu0 0.0
        %3552 = vmatpush1.msra.mxu0 0.0
        %3553 = vmatprep.subr.mxu0 0.0
        %3554 = vmatpush1.msra.mxu0 0.0
        %3555 = vmatprep.subr.mxu0 0.0
        %3556 = vmatpush1.msra.mxu0 0.0
        %3557 = vmatprep.subr.mxu0 0.0
        %3558 = vmatpush1.msra.mxu0 0.0
        %3559 = vmatprep.subr.mxu0 0.0
        %3560 = vmatpush1.msra.mxu0 0.0
        %3561 = vmatprep.subr.mxu0 0.0
        %3562 = vmatpush1.msra.mxu0 0.0
        %3563 = vmatprep.subr.mxu0 0.0
        %3564 = vmatpush1.msra.mxu0 0.0
        %3565 = vmatprep.subr.mxu0 0.0
        %3566 = vmatpush1.msra.mxu0 0.0
        %3567 = vmatprep.subr.mxu0 0.0
        %3568 = vmatpush1.msra.mxu0 0.0
        %3569 = vmatprep.subr.mxu0 0.0
        %3570 = vmatpush1.msra.mxu0 0.0
        %3571 = vmatprep.subr.mxu0 0.0
        %3572 = vmatpush1.msra.mxu0 0.0
        %3573 = vmatprep.subr.mxu0 0.0
        %3574 = vmatpush1.msra.mxu0 0.0
        %3575 = vmatprep.subr.mxu0 0.0
        %3576 = vmatpush1.msra.mxu0 0.0
        %3577 = vmatprep.subr.mxu0 0.0
        %3578 = vmatpush1.msra.mxu0 0.0
        %3579 = vmatprep.subr.mxu0 0.0
        %3580 = vmatpush1.msra.mxu0 0.0
        %3581 = vmatprep.subr.mxu0 0.0
        %3582 = vmatpush1.msra.mxu0 0.0
        %3583 = vmatprep.subr.mxu0 0.0
        %3584 = vmatpush1.msra.mxu0 0.0
        %3585 = vmatprep.subr.mxu0 0.0
        %3586 = vmatpush1.msra.mxu0 0.0
        %3587 = vmatprep.subr.mxu0 0.0
        %3588 = vmatpush1.msra.mxu0 0.0
        %3589 = vmatprep.subr.mxu0 0.0
        %3590 = vmatpush1.msra.mxu0 0.0
        %3591 = vmatprep.subr.mxu0 0.0
        %3592 = vmatpush1.msra.mxu0 0.0
        %3593 = vmatprep.subr.mxu0 0.0
        %3594 = vmatpush1.msra.mxu0 0.0
        %3595 = vmatprep.subr.mxu0 0.0
        %3596 = vmatpush1.msra.mxu0 0.0
        %3597 = vmatprep.subr.mxu0 0.0
        %3598 = vmatpush1.msra.mxu0 0.0
        %3599 = vmatprep.subr.mxu0 0.0
        %3600 = vmatpush1.msra.mxu0 0.0
        %3601 = vmatprep.subr.mxu0 0.0
        %3602 = vmatpush1.msra.mxu0 0.0
        %3603 = vmatprep.subr.mxu0 0.0
        %3604 = vmatpush1.msra.mxu0 0.0
        %3605 = vmatprep.subr.mxu0 0.0
        %3606 = vmatpush1.msra.mxu0 0.0
        %3607 = vmatprep.mubr.f32.mxu0 0.0
        %3608 = vmatmul.mubr.f32.gmra.mrb[0].mxu0 %v3541
        %v3609 = vpop.f32.mrb[0].mxu0
        %v3610 = vadd.f32 %v493, %v3609
        %v3611 = vpop.f32.mrb[0].mxu0
        %3612 = vdwg.mxu0
        %v3613 = vmax.f32 %v3610, 0.0
        %v3615 = vsel %vm1686, %v3613, 0
        %3617 = vmatprep.subr.mxu0 0.0
        %3618 = vmatpush1.msra.mxu0 %v494
        %3619 = vmatprep.subr.mxu0 0.0
        %3620 = vmatpush1.msra.mxu0 %v495
        %3621 = vmatprep.subr.mxu0 0.0
        %3622 = vmatpush1.msra.mxu0 0.0
        %3623 = vmatprep.subr.mxu0 0.0
        %3624 = vmatpush1.msra.mxu0 0.0
        %3625 = vmatprep.subr.mxu0 0.0
        %3626 = vmatpush1.msra.mxu0 0.0
        %3627 = vmatprep.subr.mxu0 0.0
        %3628 = vmatpush1.msra.mxu0 0.0
        %3629 = vmatprep.subr.mxu0 0.0
        %3630 = vmatpush1.msra.mxu0 0.0
        %3631 = vmatprep.subr.mxu0 0.0
        %3632 = vmatpush1.msra.mxu0 0.0
        %3633 = vmatprep.subr.mxu0 0.0
        %3634 = vmatpush1.msra.mxu0 0.0
        %3635 = vmatprep.subr.mxu0 0.0
        %3636 = vmatpush1.msra.mxu0 0.0
        %3637 = vmatprep.subr.mxu0 0.0
        %3638 = vmatpush1.msra.mxu0 0.0
        %3639 = vmatprep.subr.mxu0 0.0
        %3640 = vmatpush1.msra.mxu0 0.0
        %3641 = vmatprep.subr.mxu0 0.0
        %3642 = vmatpush1.msra.mxu0 0.0
        %3643 = vmatprep.subr.mxu0 0.0
        %3644 = vmatpush1.msra.mxu0 0.0
        %3645 = vmatprep.subr.mxu0 0.0
        %3646 = vmatpush1.msra.mxu0 0.0
        %3647 = vmatprep.subr.mxu0 0.0
        %3648 = vmatpush1.msra.mxu0 0.0
        %3649 = vmatprep.subr.mxu0 0.0
        %3650 = vmatpush1.msra.mxu0 0.0
        %3651 = vmatprep.subr.mxu0 0.0
        %3652 = vmatpush1.msra.mxu0 0.0
        %3653 = vmatprep.subr.mxu0 0.0
        %3654 = vmatpush1.msra.mxu0 0.0
        %3655 = vmatprep.subr.mxu0 0.0
        %3656 = vmatpush1.msra.mxu0 0.0
        %3657 = vmatprep.subr.mxu0 0.0
        %3658 = vmatpush1.msra.mxu0 0.0
        %3659 = vmatprep.subr.mxu0 0.0
        %3660 = vmatpush1.msra.mxu0 0.0
        %3661 = vmatprep.subr.mxu0 0.0
        %3662 = vmatpush1.msra.mxu0 0.0
        %3663 = vmatprep.subr.mxu0 0.0
        %3664 = vmatpush1.msra.mxu0 0.0
        %3665 = vmatprep.subr.mxu0 0.0
        %3666 = vmatpush1.msra.mxu0 0.0
        %3667 = vmatprep.subr.mxu0 0.0
        %3668 = vmatpush1.msra.mxu0 0.0
        %3669 = vmatprep.subr.mxu0 0.0
        %3670 = vmatpush1.msra.mxu0 0.0
        %3671 = vmatprep.subr.mxu0 0.0
        %3672 = vmatpush1.msra.mxu0 0.0
        %3673 = vmatprep.subr.mxu0 0.0
        %3674 = vmatpush1.msra.mxu0 0.0
        %3675 = vmatprep.subr.mxu0 0.0
        %3676 = vmatpush1.msra.mxu0 0.0
        %3677 = vmatprep.subr.mxu0 0.0
        %3678 = vmatpush1.msra.mxu0 0.0
        %3679 = vmatprep.subr.mxu0 0.0
        %3680 = vmatpush1.msra.mxu0 0.0
        %3681 = vmatprep.mubr.f32.mxu0 0.0
        %3682 = vmatmul.mubr.f32.gmra.mrb[0].mxu0 %v3615
        %v3683 = vpop.f32.mrb[0].mxu0
        %v3684 = vadd.f32 %v496, %v3683
        %v3685 = vpop.f32.mrb[0].mxu0
        %3686 = vdwg.mxu0
        %v3688 = vsel %vm1760, %v3684, 0
        %3690 = vmatprep.subr.mxu0 0.0
        %3691 = vmatpush1.msra.mxu0 %v1766
        %3692 = vmatprep.subr.mxu0 0.0
        %3693 = vmatpush1.msra.mxu0 0.0
        %3694 = vmatprep.subr.mxu0 0.0
        %3695 = vmatpush1.msra.mxu0 0.0
        %3696 = vmatprep.subr.mxu0 0.0
        %3697 = vmatpush1.msra.mxu0 0.0
        %3698 = vmatprep.subr.mxu0 0.0
        %3699 = vmatpush1.msra.mxu0 0.0
        %3700 = vmatprep.subr.mxu0 0.0
        %3701 = vmatpush1.msra.mxu0 0.0
        %3702 = vmatprep.subr.mxu0 0.0
        %3703 = vmatpush1.msra.mxu0 0.0
        %3704 = vmatprep.subr.mxu0 0.0
        %3705 = vmatpush1.msra.mxu0 0.0
        %3706 = vmatprep.subr.mxu0 0.0
        %3707 = vmatpush1.msra.mxu0 0.0
        %3708 = vmatprep.subr.mxu0 0.0
        %3709 = vmatpush1.msra.mxu0 0.0
        %3710 = vmatprep.subr.mxu0 0.0
        %3711 = vmatpush1.msra.mxu0 0.0
        %3712 = vmatprep.subr.mxu0 0.0
        %3713 = vmatpush1.msra.mxu0 0.0
        %3714 = vmatprep.subr.mxu0 0.0
        %3715 = vmatpush1.msra.mxu0 0.0
        %3716 = vmatprep.subr.mxu0 0.0
        %3717 = vmatpush1.msra.mxu0 0.0
        %3718 = vmatprep.subr.mxu0 0.0
        %3719 = vmatpush1.msra.mxu0 0.0
        %3720 = vmatprep.subr.mxu0 0.0
        %3721 = vmatpush1.msra.mxu0 0.0
        %3722 = vmatprep.subr.mxu0 0.0
        %3723 = vmatpush1.msra.mxu0 0.0
        %3724 = vmatprep.subr.mxu0 0.0
        %3725 = vmatpush1.msra.mxu0 0.0
        %3726 = vmatprep.subr.mxu0 0.0
        %3727 = vmatpush1.msra.mxu0 0.0
        %3728 = vmatprep.subr.mxu0 0.0
        %3729 = vmatpush1.msra.mxu0 0.0
        %3730 = vmatprep.subr.mxu0 0.0
        %3731 = vmatpush1.msra.mxu0 0.0
        %3732 = vmatprep.subr.mxu0 0.0
        %3733 = vmatpush1.msra.mxu0 0.0
        %3734 = vmatprep.subr.mxu0 0.0
        %3735 = vmatpush1.msra.mxu0 0.0
        %3736 = vmatprep.subr.mxu0 0.0
        %3737 = vmatpush1.msra.mxu0 0.0
        %3738 = vmatprep.subr.mxu0 0.0
        %3739 = vmatpush1.msra.mxu0 0.0
        %3740 = vmatprep.subr.mxu0 0.0
        %3741 = vmatpush1.msra.mxu0 0.0
        %3742 = vmatprep.subr.mxu0 0.0
        %3743 = vmatpush1.msra.mxu0 0.0
        %3744 = vmatprep.subr.mxu0 0.0
        %3745 = vmatpush1.msra.mxu0 0.0
        %3746 = vmatprep.subr.mxu0 0.0
        %3747 = vmatpush1.msra.mxu0 0.0
        %3748 = vmatprep.subr.mxu0 0.0
        %3749 = vmatpush1.msra.mxu0 0.0
        %3750 = vmatprep.subr.mxu0 0.0
        %3751 = vmatpush1.msra.mxu0 0.0
        %3752 = vmatprep.subr.mxu0 0.0
        %3753 = vmatpush1.msra.mxu0 0.0
        %3754 = vmatprep.mubr.f32.mxu0 0.0
        %3755 = vmatmul.mubr.f32.gmra.mrb[0].mxu0 %v3688
        %v3756 = vpop.f32.mrb[0].mxu0
        %v3757 = vadd.f32 0.0, %v3756
        %v3758 = vpop.f32.mrb[0].mxu0
        %3759 = vdwg.mxu0
        %v3761 = vsel %vm1838, %v3757, 0
        %3763 = vmatprep.subr.mxu0 0.0
        %3764 = vmatpush1.msra.mxu0 %v512
        %3765 = vmatprep.subr.mxu0 0.0
        %3766 = vmatpush1.msra.mxu0 0.0
        %3767 = vmatprep.subr.mxu0 0.0
        %3768 = vmatpush1.msra.mxu0 0.0
        %3769 = vmatprep.subr.mxu0 0.0
        %3770 = vmatpush1.msra.mxu0 0.0
        %3771 = vmatprep.subr.mxu0 0.0
        %3772 = vmatpush1.msra.mxu0 0.0
        %3773 = vmatprep.subr.mxu0 0.0
        %3774 = vmatpush1.msra.mxu0 0.0
        %3775 = vmatprep.subr.mxu0 0.0
        %3776 = vmatpush1.msra.mxu0 0.0
        %3777 = vmatprep.subr.mxu0 0.0
        %3778 = vmatpush1.msra.mxu0 0.0
        %3779 = vmatprep.subr.mxu0 0.0
        %3780 = vmatpush1.msra.mxu0 0.0
        %3781 = vmatprep.subr.mxu0 0.0
        %3782 = vmatpush1.msra.mxu0 0.0
        %3783 = vmatprep.subr.mxu0 0.0
        %3784 = vmatpush1.msra.mxu0 0.0
        %3785 = vmatprep.subr.mxu0 0.0
        %3786 = vmatpush1.msra.mxu0 0.0
        %3787 = vmatprep.subr.mxu0 0.0
        %3788 = vmatpush1.msra.mxu0 0.0
        %3789 = vmatprep.subr.mxu0 0.0
        %3790 = vmatpush1.msra.mxu0 0.0
        %3791 = vmatprep.subr.mxu0 0.0
        %3792 = vmatpush1.msra.mxu0 0.0
        %3793 = vmatprep.subr.mxu0 0.0
        %3794 = vmatpush1.msra.mxu0 0.0
        %3795 = vmatprep.subr.mxu0 0.0
        %3796 = vmatpush1.msra.mxu0 0.0
        %3797 = vmatprep.subr.mxu0 0.0
        %3798 = vmatpush1.msra.mxu0 0.0
        %3799 = vmatprep.subr.mxu0 0.0
        %3800 = vmatpush1.msra.mxu0 0.0
        %3801 = vmatprep.subr.mxu0 0.0
        %3802 = vmatpush1.msra.mxu0 0.0
        %3803 = vmatprep.subr.mxu0 0.0
        %3804 = vmatpush1.msra.mxu0 0.0
        %3805 = vmatprep.subr.mxu0 0.0
        %3806 = vmatpush1.msra.mxu0 0.0
        %3807 = vmatprep.subr.mxu0 0.0
        %3808 = vmatpush1.msra.mxu0 0.0
        %3809 = vmatprep.subr.mxu0 0.0
        %3810 = vmatpush1.msra.mxu0 0.0
        %3811 = vmatprep.subr.mxu0 0.0
        %3812 = vmatpush1.msra.mxu0 0.0
        %3813 = vmatprep.subr.mxu0 0.0
        %3814 = vmatpush1.msra.mxu0 0.0
        %3815 = vmatprep.subr.mxu0 0.0
        %3816 = vmatpush1.msra.mxu0 0.0
        %3817 = vmatprep.subr.mxu0 0.0
        %3818 = vmatpush1.msra.mxu0 0.0
        %3819 = vmatprep.subr.mxu0 0.0
        %3820 = vmatpush1.msra.mxu0 0.0
        %3821 = vmatprep.subr.mxu0 0.0
        %3822 = vmatpush1.msra.mxu0 0.0
        %3823 = vmatprep.subr.mxu0 0.0
        %3824 = vmatpush1.msra.mxu0 0.0
        %3825 = vmatprep.subr.mxu0 0.0
        %3826 = vmatpush1.msra.mxu0 0.0
        %3827 = vmatprep.mubr.f32.mxu0 0.0
        %3828 = vmatmul.mubr.f32.gmra.mrb[0].mxu0 %v3761
        %v3829 = vpop.f32.mrb[0].mxu0
        %v3830 = vadd.f32 0.0, %v3829
        %v3831 = vpop.f32.mrb[0].mxu0
        %3832 = vdwg.mxu0
        %3833 = vrot.lane.b32.xlu0 %v3757, 120
        %v3834 = vpop.permute.xlu0 %3833
        %v3835 = vsel %vm1838, %v3834, 0
        %3837 = vmatprep.subr.mxu0 0.0
        %3838 = vmatpush1.msra.mxu0 %v512
        %3839 = vmatprep.subr.mxu0 0.0
        %3840 = vmatpush1.msra.mxu0 0.0
        %3841 = vmatprep.subr.mxu0 0.0
        %3842 = vmatpush1.msra.mxu0 0.0
        %3843 = vmatprep.subr.mxu0 0.0
        %3844 = vmatpush1.msra.mxu0 0.0
        %3845 = vmatprep.subr.mxu0 0.0
        %3846 = vmatpush1.msra.mxu0 0.0
        %3847 = vmatprep.subr.mxu0 0.0
        %3848 = vmatpush1.msra.mxu0 0.0
        %3849 = vmatprep.subr.mxu0 0.0
        %3850 = vmatpush1.msra.mxu0 0.0
        %3851 = vmatprep.subr.mxu0 0.0
        %3852 = vmatpush1.msra.mxu0 0.0
        %3853 = vmatprep.subr.mxu0 0.0
        %3854 = vmatpush1.msra.mxu0 0.0
        %3855 = vmatprep.subr.mxu0 0.0
        %3856 = vmatpush1.msra.mxu0 0.0
        %3857 = vmatprep.subr.mxu0 0.0
        %3858 = vmatpush1.msra.mxu0 0.0
        %3859 = vmatprep.subr.mxu0 0.0
        %3860 = vmatpush1.msra.mxu0 0.0
        %3861 = vmatprep.subr.mxu0 0.0
        %3862 = vmatpush1.msra.mxu0 0.0
        %3863 = vmatprep.subr.mxu0 0.0
        %3864 = vmatpush1.msra.mxu0 0.0
        %3865 = vmatprep.subr.mxu0 0.0
        %3866 = vmatpush1.msra.mxu0 0.0
        %3867 = vmatprep.subr.mxu0 0.0
        %3868 = vmatpush1.msra.mxu0 0.0
        %3869 = vmatprep.subr.mxu0 0.0
        %3870 = vmatpush1.msra.mxu0 0.0
        %3871 = vmatprep.subr.mxu0 0.0
        %3872 = vmatpush1.msra.mxu0 0.0
        %3873 = vmatprep.subr.mxu0 0.0
        %3874 = vmatpush1.msra.mxu0 0.0
        %3875 = vmatprep.subr.mxu0 0.0
        %3876 = vmatpush1.msra.mxu0 0.0
        %3877 = vmatprep.subr.mxu0 0.0
        %3878 = vmatpush1.msra.mxu0 0.0
        %3879 = vmatprep.subr.mxu0 0.0
        %3880 = vmatpush1.msra.mxu0 0.0
        %3881 = vmatprep.subr.mxu0 0.0
        %3882 = vmatpush1.msra.mxu0 0.0
        %3883 = vmatprep.subr.mxu0 0.0
        %3884 = vmatpush1.msra.mxu0 0.0
        %3885 = vmatprep.subr.mxu0 0.0
        %3886 = vmatpush1.msra.mxu0 0.0
        %3887 = vmatprep.subr.mxu0 0.0
        %3888 = vmatpush1.msra.mxu0 0.0
        %3889 = vmatprep.subr.mxu0 0.0
        %3890 = vmatpush1.msra.mxu0 0.0
        %3891 = vmatprep.subr.mxu0 0.0
        %3892 = vmatpush1.msra.mxu0 0.0
        %3893 = vmatprep.subr.mxu0 0.0
        %3894 = vmatpush1.msra.mxu0 0.0
        %3895 = vmatprep.subr.mxu0 0.0
        %3896 = vmatpush1.msra.mxu0 0.0
        %3897 = vmatprep.subr.mxu0 0.0
        %3898 = vmatpush1.msra.mxu0 0.0
        %3899 = vmatprep.subr.mxu0 0.0
        %3900 = vmatpush1.msra.mxu0 0.0
        %3901 = vmatprep.mubr.f32.mxu0 0.0
        %3902 = vmatmul.mubr.f32.gmra.mrb[0].mxu0 %v3835
        %v3903 = vpop.f32.mrb[0].mxu0
        %v3904 = vadd.f32 0.0, %v3903
        %v3905 = vpop.f32.mrb[0].mxu0
        %3906 = vdwg.mxu0
        %v3907 = vand.u32 2147483647, %v3830
        %vm3908 = vcmp.lt.f32.partialorder %v3907, 1e-07
        %v3909 = vmul.f32 %v3830, 0.0625
        %v3910 = vmul.f32 %v3909, 1.442695
        %v3911 = vpow.pop %v3910
        %v3912 = vmul.f32 %v3830, 0.5
        %v3913 = vmul.f32 %v3912, 0.0625
        %v3914 = vadd.f32 %v3913, 1.0
        %v3915 = vmul.f32 %v3914, 0.0625
        %v3916 = vsub.f32 %v3911, 1.0
        %v3917 = vsel %vm3908, 1.0, %v3830
        %v3918 = vrcp.pop %v3917
        %v3919 = vmul.f32 %v3916, %v3918
        %v3920 = vsel %vm3908, %v3915, %v3919
        %v3921 = vmul.f32 %v502, %v3911
        %v3922 = vmul.f32 %v3904, %v3920
        %v3923 = vadd.f32 %v3921, %v3922
        %v3924 = vmax.f32 %v3923, 0.0
        %v3925 = vmin.f32 %v3924, 1.0
        %v3926 = vmul.f32 %v3925, 15.0
        %v3927 = vfloor.f32 %v3926
        %v3928 = vmax.f32 %v3927, 0.0
        %v3929 = vmin.f32 %v3928, 14.0
        %v3930 = vcvt.f32.s32.to.zero.pseudo %v3929
        %v3931 = vcvt.s32.f32 %v3930
        %v3932 = vsub.f32 %v3926, %v3931
        %vm3933 = vcmp.eq.s32.totalorder %v3930, 0
        %3935 = vset.pattern.permute.xlu0 0
        %3936 = vperm.xlu0 %3935, %v3923
        %v3937 = vpop.permute.xlu0 %3936
        %v3939 = vsel %vm3933, %v3937, 0.0
        %3940 = vset.pattern.permute.xlu0 1
        %3941 = vperm.xlu0 %3940, %v3923
        %v3942 = vpop.permute.xlu0 %3941
        %v3944 = vsel %vm3933, %v3942, 0.0
        %vm3945 = vcmp.eq.s32.totalorder %v3930, 1
        %v3946 = vsel %vm3945, %v3942, %v3939
        %3947 = vset.pattern.permute.xlu0 2
        %3948 = vperm.xlu0 %3947, %v3923
        %v3949 = vpop.permute.xlu0 %3948
        %v3951 = vsel %vm3945, %v3949, %v3944
        %vm3952 = vcmp.eq.s32.totalorder %v3930, 2
        %v3953 = vsel %vm3952, %v3949, %v3946
        %3954 = vset.pattern.permute.xlu0 3
        %3955 = vperm.xlu0 %3954, %v3923
        %v3956 = vpop.permute.xlu0 %3955
        %v3958 = vsel %vm3952, %v3956, %v3951
        %vm3959 = vcmp.eq.s32.totalorder %v3930, 3
        %v3960 = vsel %vm3959, %v3956, %v3953
        %3961 = vset.pattern.permute.xlu0 4
        %3962 = vperm.xlu0 %3961, %v3923
        %v3963 = vpop.permute.xlu0 %3962
        %v3965 = vsel %vm3959, %v3963, %v3958
        %vm3966 = vcmp.eq.s32.totalorder %v3930, 4
        %v3967 = vsel %vm3966, %v3963, %v3960
        %3968 = vset.pattern.permute.xlu0 5
        %3969 = vperm.xlu0 %3968, %v3923
        %v3970 = vpop.permute.xlu0 %3969
        %v3972 = vsel %vm3966, %v3970, %v3965
        %vm3973 = vcmp.eq.s32.totalorder %v3930, 5
        %v3974 = vsel %vm3973, %v3970, %v3967
        %3975 = vset.pattern.permute.xlu0 6
        %3976 = vperm.xlu0 %3975, %v3923
        %v3977 = vpop.permute.xlu0 %3976
        %v3979 = vsel %vm3973, %v3977, %v3972
        %vm3980 = vcmp.eq.s32.totalorder %v3930, 6
        %v3981 = vsel %vm3980, %v3977, %v3974
        %3982 = vset.pattern.permute.xlu0 7
        %3983 = vperm.xlu0 %3982, %v3923
        %v3984 = vpop.permute.xlu0 %3983
        %v3986 = vsel %vm3980, %v3984, %v3979
        %vm3987 = vcmp.eq.s32.totalorder %v3930, 7
        %v3988 = vsel %vm3987, %v3984, %v3981
        %3989 = vset.pattern.permute.xlu0 8
        %3990 = vperm.xlu0 %3989, %v3923
        %v3991 = vpop.permute.xlu0 %3990
        %v3993 = vsel %vm3987, %v3991, %v3986
        %vm3994 = vcmp.eq.s32.totalorder %v3930, 8
        %v3995 = vsel %vm3994, %v3991, %v3988
        %3996 = vset.pattern.permute.xlu0 9
        %3997 = vperm.xlu0 %3996, %v3923
        %v3998 = vpop.permute.xlu0 %3997
        %v4000 = vsel %vm3994, %v3998, %v3993
        %vm4001 = vcmp.eq.s32.totalorder %v3930, 9
        %v4002 = vsel %vm4001, %v3998, %v3995
        %4003 = vset.pattern.permute.xlu0 10
        %4004 = vperm.xlu0 %4003, %v3923
        %v4005 = vpop.permute.xlu0 %4004
        %v4007 = vsel %vm4001, %v4005, %v4000
        %vm4008 = vcmp.eq.s32.totalorder %v3930, 10
        %v4009 = vsel %vm4008, %v4005, %v4002
        %4010 = vset.pattern.permute.xlu0 11
        %4011 = vperm.xlu0 %4010, %v3923
        %v4012 = vpop.permute.xlu0 %4011
        %v4014 = vsel %vm4008, %v4012, %v4007
        %vm4015 = vcmp.eq.s32.totalorder %v3930, 11
        %v4016 = vsel %vm4015, %v4012, %v4009
        %4017 = vset.pattern.permute.xlu0 12
        %4018 = vperm.xlu0 %4017, %v3923
        %v4019 = vpop.permute.xlu0 %4018
        %v4021 = vsel %vm4015, %v4019, %v4014
        %vm4022 = vcmp.eq.s32.totalorder %v3930, 12
        %v4023 = vsel %vm4022, %v4019, %v4016
        %4024 = vset.pattern.permute.xlu0 13
        %4025 = vperm.xlu0 %4024, %v3923
        %v4026 = vpop.permute.xlu0 %4025
        %v4028 = vsel %vm4022, %v4026, %v4021
        %vm4029 = vcmp.eq.s32.totalorder %v3930, 13
        %v4030 = vsel %vm4029, %v4026, %v4023
        %4031 = vset.pattern.permute.xlu0 14
        %4032 = vperm.xlu0 %4031, %v3923
        %v4033 = vpop.permute.xlu0 %4032
        %v4035 = vsel %vm4029, %v4033, %v4028
        %vm4036 = vcmp.eq.s32.totalorder %v3930, 14
        %v4037 = vsel %vm4036, %v4033, %v4030
        %4038 = vset.pattern.permute.xlu0 15
        %4039 = vperm.xlu0 %4038, %v3923
        %v4040 = vpop.permute.xlu0 %4039
        %v4042 = vsel %vm4036, %v4040, %v4035
        %v4043 = vsub.f32 1.0, %v3932
        %v4044 = vmul.f32 %v4037, %v4043
        %v4045 = vmul.f32 %v4042, %v3932
        %v4046 = vadd.f32 %v4044, %v4045
        %v4047 = vmax.f32 %v4046, 0.0
        %v4048 = vmin.f32 %v4047, 1.0
        %v4049 = vmul.f32 %v4048, 15.0
        %v4050 = vfloor.f32 %v4049
        %v4051 = vmax.f32 %v4050, 0.0
        %v4052 = vmin.f32 %v4051, 14.0
        %v4053 = vcvt.f32.s32.to.zero.pseudo %v4052
        %v4054 = vcvt.s32.f32 %v4053
        %v4055 = vsub.f32 %v4049, %v4054
        %vm4056 = vcmp.eq.s32.totalorder %v4053, 0
        %4058 = vset.pattern.permute.xlu0 0
        %4059 = vperm.xlu0 %4058, %v4046
        %v4060 = vpop.permute.xlu0 %4059
        %v4062 = vsel %vm4056, %v4060, 0.0
        %4063 = vset.pattern.permute.xlu0 1
        %4064 = vperm.xlu0 %4063, %v4046
        %v4065 = vpop.permute.xlu0 %4064
        %v4067 = vsel %vm4056, %v4065, 0.0
        %vm4068 = vcmp.eq.s32.totalorder %v4053, 1
        %v4069 = vsel %vm4068, %v4065, %v4062
        %4070 = vset.pattern.permute.xlu0 2
        %4071 = vperm.xlu0 %4070, %v4046
        %v4072 = vpop.permute.xlu0 %4071
        %v4074 = vsel %vm4068, %v4072, %v4067
        %vm4075 = vcmp.eq.s32.totalorder %v4053, 2
        %v4076 = vsel %vm4075, %v4072, %v4069
        %4077 = vset.pattern.permute.xlu0 3
        %4078 = vperm.xlu0 %4077, %v4046
        %v4079 = vpop.permute.xlu0 %4078
        %v4081 = vsel %vm4075, %v4079, %v4074
        %vm4082 = vcmp.eq.s32.totalorder %v4053, 3
        %v4083 = vsel %vm4082, %v4079, %v4076
        %4084 = vset.pattern.permute.xlu0 4
        %4085 = vperm.xlu0 %4084, %v4046
        %v4086 = vpop.permute.xlu0 %4085
        %v4088 = vsel %vm4082, %v4086, %v4081
        %vm4089 = vcmp.eq.s32.totalorder %v4053, 4
        %v4090 = vsel %vm4089, %v4086, %v4083
        %4091 = vset.pattern.permute.xlu0 5
        %4092 = vperm.xlu0 %4091, %v4046
        %v4093 = vpop.permute.xlu0 %4092
        %v4095 = vsel %vm4089, %v4093, %v4088
        %vm4096 = vcmp.eq.s32.totalorder %v4053, 5
        %v4097 = vsel %vm4096, %v4093, %v4090
        %4098 = vset.pattern.permute.xlu0 6
        %4099 = vperm.xlu0 %4098, %v4046
        %v4100 = vpop.permute.xlu0 %4099
        %v4102 = vsel %vm4096, %v4100, %v4095
        %vm4103 = vcmp.eq.s32.totalorder %v4053, 6
        %v4104 = vsel %vm4103, %v4100, %v4097
        %4105 = vset.pattern.permute.xlu0 7
        %4106 = vperm.xlu0 %4105, %v4046
        %v4107 = vpop.permute.xlu0 %4106
        %v4109 = vsel %vm4103, %v4107, %v4102
        %vm4110 = vcmp.eq.s32.totalorder %v4053, 7
        %v4111 = vsel %vm4110, %v4107, %v4104
        %4112 = vset.pattern.permute.xlu0 8
        %4113 = vperm.xlu0 %4112, %v4046
        %v4114 = vpop.permute.xlu0 %4113
        %v4116 = vsel %vm4110, %v4114, %v4109
        %vm4117 = vcmp.eq.s32.totalorder %v4053, 8
        %v4118 = vsel %vm4117, %v4114, %v4111
        %4119 = vset.pattern.permute.xlu0 9
        %4120 = vperm.xlu0 %4119, %v4046
        %v4121 = vpop.permute.xlu0 %4120
        %v4123 = vsel %vm4117, %v4121, %v4116
        %vm4124 = vcmp.eq.s32.totalorder %v4053, 9
        %v4125 = vsel %vm4124, %v4121, %v4118
        %4126 = vset.pattern.permute.xlu0 10
        %4127 = vperm.xlu0 %4126, %v4046
        %v4128 = vpop.permute.xlu0 %4127
        %v4130 = vsel %vm4124, %v4128, %v4123
        %vm4131 = vcmp.eq.s32.totalorder %v4053, 10
        %v4132 = vsel %vm4131, %v4128, %v4125
        %4133 = vset.pattern.permute.xlu0 11
        %4134 = vperm.xlu0 %4133, %v4046
        %v4135 = vpop.permute.xlu0 %4134
        %v4137 = vsel %vm4131, %v4135, %v4130
        %vm4138 = vcmp.eq.s32.totalorder %v4053, 11
        %v4139 = vsel %vm4138, %v4135, %v4132
        %4140 = vset.pattern.permute.xlu0 12
        %4141 = vperm.xlu0 %4140, %v4046
        %v4142 = vpop.permute.xlu0 %4141
        %v4144 = vsel %vm4138, %v4142, %v4137
        %vm4145 = vcmp.eq.s32.totalorder %v4053, 12
        %v4146 = vsel %vm4145, %v4142, %v4139
        %4147 = vset.pattern.permute.xlu0 13
        %4148 = vperm.xlu0 %4147, %v4046
        %v4149 = vpop.permute.xlu0 %4148
        %v4151 = vsel %vm4145, %v4149, %v4144
        %vm4152 = vcmp.eq.s32.totalorder %v4053, 13
        %v4153 = vsel %vm4152, %v4149, %v4146
        %4154 = vset.pattern.permute.xlu0 14
        %4155 = vperm.xlu0 %4154, %v4046
        %v4156 = vpop.permute.xlu0 %4155
        %v4158 = vsel %vm4152, %v4156, %v4151
        %vm4159 = vcmp.eq.s32.totalorder %v4053, 14
        %v4160 = vsel %vm4159, %v4156, %v4153
        %4161 = vset.pattern.permute.xlu0 15
        %4162 = vperm.xlu0 %4161, %v4046
        %v4163 = vpop.permute.xlu0 %4162
        %v4165 = vsel %vm4159, %v4163, %v4158
        %v4166 = vsub.f32 1.0, %v4055
        %v4167 = vmul.f32 %v4160, %v4166
        %v4168 = vmul.f32 %v4165, %v4055
        %v4169 = vadd.f32 %v4167, %v4168
        %v4170 = vmax.f32 %v4169, 0.0
        %v4171 = vmin.f32 %v4170, 1.0
        %v4172 = vmul.f32 %v4171, 15.0
        %v4173 = vfloor.f32 %v4172
        %v4174 = vmax.f32 %v4173, 0.0
        %v4175 = vmin.f32 %v4174, 14.0
        %v4176 = vcvt.f32.s32.to.zero.pseudo %v4175
        %v4177 = vcvt.s32.f32 %v4176
        %v4178 = vsub.f32 %v4172, %v4177
        %vm4179 = vcmp.eq.s32.totalorder %v4176, 0
        %4181 = vset.pattern.permute.xlu0 0
        %4182 = vperm.xlu0 %4181, %v4169
        %v4183 = vpop.permute.xlu0 %4182
        %v4185 = vsel %vm4179, %v4183, 0.0
        %4186 = vset.pattern.permute.xlu0 1
        %4187 = vperm.xlu0 %4186, %v4169
        %v4188 = vpop.permute.xlu0 %4187
        %v4190 = vsel %vm4179, %v4188, 0.0
        %vm4191 = vcmp.eq.s32.totalorder %v4176, 1
        %v4192 = vsel %vm4191, %v4188, %v4185
        %4193 = vset.pattern.permute.xlu0 2
        %4194 = vperm.xlu0 %4193, %v4169
        %v4195 = vpop.permute.xlu0 %4194
        %v4197 = vsel %vm4191, %v4195, %v4190
        %vm4198 = vcmp.eq.s32.totalorder %v4176, 2
        %v4199 = vsel %vm4198, %v4195, %v4192
        %4200 = vset.pattern.permute.xlu0 3
        %4201 = vperm.xlu0 %4200, %v4169
        %v4202 = vpop.permute.xlu0 %4201
        %v4204 = vsel %vm4198, %v4202, %v4197
        %vm4205 = vcmp.eq.s32.totalorder %v4176, 3
        %v4206 = vsel %vm4205, %v4202, %v4199
        %4207 = vset.pattern.permute.xlu0 4
        %4208 = vperm.xlu0 %4207, %v4169
        %v4209 = vpop.permute.xlu0 %4208
        %v4211 = vsel %vm4205, %v4209, %v4204
        %vm4212 = vcmp.eq.s32.totalorder %v4176, 4
        %v4213 = vsel %vm4212, %v4209, %v4206
        %4214 = vset.pattern.permute.xlu0 5
        %4215 = vperm.xlu0 %4214, %v4169
        %v4216 = vpop.permute.xlu0 %4215
        %v4218 = vsel %vm4212, %v4216, %v4211
        %vm4219 = vcmp.eq.s32.totalorder %v4176, 5
        %v4220 = vsel %vm4219, %v4216, %v4213
        %4221 = vset.pattern.permute.xlu0 6
        %4222 = vperm.xlu0 %4221, %v4169
        %v4223 = vpop.permute.xlu0 %4222
        %v4225 = vsel %vm4219, %v4223, %v4218
        %vm4226 = vcmp.eq.s32.totalorder %v4176, 6
        %v4227 = vsel %vm4226, %v4223, %v4220
        %4228 = vset.pattern.permute.xlu0 7
        %4229 = vperm.xlu0 %4228, %v4169
        %v4230 = vpop.permute.xlu0 %4229
        %v4232 = vsel %vm4226, %v4230, %v4225
        %vm4233 = vcmp.eq.s32.totalorder %v4176, 7
        %v4234 = vsel %vm4233, %v4230, %v4227
        %4235 = vset.pattern.permute.xlu0 8
        %4236 = vperm.xlu0 %4235, %v4169
        %v4237 = vpop.permute.xlu0 %4236
        %v4239 = vsel %vm4233, %v4237, %v4232
        %vm4240 = vcmp.eq.s32.totalorder %v4176, 8
        %v4241 = vsel %vm4240, %v4237, %v4234
        %4242 = vset.pattern.permute.xlu0 9
        %4243 = vperm.xlu0 %4242, %v4169
        %v4244 = vpop.permute.xlu0 %4243
        %v4246 = vsel %vm4240, %v4244, %v4239
        %vm4247 = vcmp.eq.s32.totalorder %v4176, 9
        %v4248 = vsel %vm4247, %v4244, %v4241
        %4249 = vset.pattern.permute.xlu0 10
        %4250 = vperm.xlu0 %4249, %v4169
        %v4251 = vpop.permute.xlu0 %4250
        %v4253 = vsel %vm4247, %v4251, %v4246
        %vm4254 = vcmp.eq.s32.totalorder %v4176, 10
        %v4255 = vsel %vm4254, %v4251, %v4248
        %4256 = vset.pattern.permute.xlu0 11
        %4257 = vperm.xlu0 %4256, %v4169
        %v4258 = vpop.permute.xlu0 %4257
        %v4260 = vsel %vm4254, %v4258, %v4253
        %vm4261 = vcmp.eq.s32.totalorder %v4176, 11
        %v4262 = vsel %vm4261, %v4258, %v4255
        %4263 = vset.pattern.permute.xlu0 12
        %4264 = vperm.xlu0 %4263, %v4169
        %v4265 = vpop.permute.xlu0 %4264
        %v4267 = vsel %vm4261, %v4265, %v4260
        %vm4268 = vcmp.eq.s32.totalorder %v4176, 12
        %v4269 = vsel %vm4268, %v4265, %v4262
        %4270 = vset.pattern.permute.xlu0 13
        %4271 = vperm.xlu0 %4270, %v4169
        %v4272 = vpop.permute.xlu0 %4271
        %v4274 = vsel %vm4268, %v4272, %v4267
        %vm4275 = vcmp.eq.s32.totalorder %v4176, 13
        %v4276 = vsel %vm4275, %v4272, %v4269
        %4277 = vset.pattern.permute.xlu0 14
        %4278 = vperm.xlu0 %4277, %v4169
        %v4279 = vpop.permute.xlu0 %4278
        %v4281 = vsel %vm4275, %v4279, %v4274
        %vm4282 = vcmp.eq.s32.totalorder %v4176, 14
        %v4283 = vsel %vm4282, %v4279, %v4276
        %4284 = vset.pattern.permute.xlu0 15
        %4285 = vperm.xlu0 %4284, %v4169
        %v4286 = vpop.permute.xlu0 %4285
        %v4288 = vsel %vm4282, %v4286, %v4281
        %v4289 = vsub.f32 1.0, %v4178
        %v4290 = vmul.f32 %v4283, %v4289
        %v4291 = vmul.f32 %v4288, %v4178
        %v4292 = vadd.f32 %v4290, %v4291
        %v4293 = vmax.f32 %v4292, 0.0
        %v4294 = vmin.f32 %v4293, 1.0
        %v4295 = vmul.f32 %v4294, 15.0
        %v4296 = vfloor.f32 %v4295
        %v4297 = vmax.f32 %v4296, 0.0
        %v4298 = vmin.f32 %v4297, 14.0
        %v4299 = vcvt.f32.s32.to.zero.pseudo %v4298
        %v4300 = vcvt.s32.f32 %v4299
        %v4301 = vsub.f32 %v4295, %v4300
        %vm4302 = vcmp.eq.s32.totalorder %v4299, 0
        %4304 = vset.pattern.permute.xlu0 0
        %4305 = vperm.xlu0 %4304, %v4292
        %v4306 = vpop.permute.xlu0 %4305
        %v4308 = vsel %vm4302, %v4306, 0.0
        %4309 = vset.pattern.permute.xlu0 1
        %4310 = vperm.xlu0 %4309, %v4292
        %v4311 = vpop.permute.xlu0 %4310
        %v4313 = vsel %vm4302, %v4311, 0.0
        %vm4314 = vcmp.eq.s32.totalorder %v4299, 1
        %v4315 = vsel %vm4314, %v4311, %v4308
        %4316 = vset.pattern.permute.xlu0 2
        %4317 = vperm.xlu0 %4316, %v4292
        %v4318 = vpop.permute.xlu0 %4317
        %v4320 = vsel %vm4314, %v4318, %v4313
        %vm4321 = vcmp.eq.s32.totalorder %v4299, 2
        %v4322 = vsel %vm4321, %v4318, %v4315
        %4323 = vset.pattern.permute.xlu0 3
        %4324 = vperm.xlu0 %4323, %v4292
        %v4325 = vpop.permute.xlu0 %4324
        %v4327 = vsel %vm4321, %v4325, %v4320
        %vm4328 = vcmp.eq.s32.totalorder %v4299, 3
        %v4329 = vsel %vm4328, %v4325, %v4322
        %4330 = vset.pattern.permute.xlu0 4
        %4331 = vperm.xlu0 %4330, %v4292
        %v4332 = vpop.permute.xlu0 %4331
        %v4334 = vsel %vm4328, %v4332, %v4327
        %vm4335 = vcmp.eq.s32.totalorder %v4299, 4
        %v4336 = vsel %vm4335, %v4332, %v4329
        %4337 = vset.pattern.permute.xlu0 5
        %4338 = vperm.xlu0 %4337, %v4292
        %v4339 = vpop.permute.xlu0 %4338
        %v4341 = vsel %vm4335, %v4339, %v4334
        %vm4342 = vcmp.eq.s32.totalorder %v4299, 5
        %v4343 = vsel %vm4342, %v4339, %v4336
        %4344 = vset.pattern.permute.xlu0 6
        %4345 = vperm.xlu0 %4344, %v4292
        %v4346 = vpop.permute.xlu0 %4345
        %v4348 = vsel %vm4342, %v4346, %v4341
        %vm4349 = vcmp.eq.s32.totalorder %v4299, 6
        %v4350 = vsel %vm4349, %v4346, %v4343
        %4351 = vset.pattern.permute.xlu0 7
        %4352 = vperm.xlu0 %4351, %v4292
        %v4353 = vpop.permute.xlu0 %4352
        %v4355 = vsel %vm4349, %v4353, %v4348
        %vm4356 = vcmp.eq.s32.totalorder %v4299, 7
        %v4357 = vsel %vm4356, %v4353, %v4350
        %4358 = vset.pattern.permute.xlu0 8
        %4359 = vperm.xlu0 %4358, %v4292
        %v4360 = vpop.permute.xlu0 %4359
        %v4362 = vsel %vm4356, %v4360, %v4355
        %vm4363 = vcmp.eq.s32.totalorder %v4299, 8
        %v4364 = vsel %vm4363, %v4360, %v4357
        %4365 = vset.pattern.permute.xlu0 9
        %4366 = vperm.xlu0 %4365, %v4292
        %v4367 = vpop.permute.xlu0 %4366
        %v4369 = vsel %vm4363, %v4367, %v4362
        %vm4370 = vcmp.eq.s32.totalorder %v4299, 9
        %v4371 = vsel %vm4370, %v4367, %v4364
        %4372 = vset.pattern.permute.xlu0 10
        %4373 = vperm.xlu0 %4372, %v4292
        %v4374 = vpop.permute.xlu0 %4373
        %v4376 = vsel %vm4370, %v4374, %v4369
        %vm4377 = vcmp.eq.s32.totalorder %v4299, 10
        %v4378 = vsel %vm4377, %v4374, %v4371
        %4379 = vset.pattern.permute.xlu0 11
        %4380 = vperm.xlu0 %4379, %v4292
        %v4381 = vpop.permute.xlu0 %4380
        %v4383 = vsel %vm4377, %v4381, %v4376
        %vm4384 = vcmp.eq.s32.totalorder %v4299, 11
        %v4385 = vsel %vm4384, %v4381, %v4378
        %4386 = vset.pattern.permute.xlu0 12
        %4387 = vperm.xlu0 %4386, %v4292
        %v4388 = vpop.permute.xlu0 %4387
        %v4390 = vsel %vm4384, %v4388, %v4383
        %vm4391 = vcmp.eq.s32.totalorder %v4299, 12
        %v4392 = vsel %vm4391, %v4388, %v4385
        %4393 = vset.pattern.permute.xlu0 13
        %4394 = vperm.xlu0 %4393, %v4292
        %v4395 = vpop.permute.xlu0 %4394
        %v4397 = vsel %vm4391, %v4395, %v4390
        %vm4398 = vcmp.eq.s32.totalorder %v4299, 13
        %v4399 = vsel %vm4398, %v4395, %v4392
        %4400 = vset.pattern.permute.xlu0 14
        %4401 = vperm.xlu0 %4400, %v4292
        %v4402 = vpop.permute.xlu0 %4401
        %v4404 = vsel %vm4398, %v4402, %v4397
        %vm4405 = vcmp.eq.s32.totalorder %v4299, 14
        %v4406 = vsel %vm4405, %v4402, %v4399
        %4407 = vset.pattern.permute.xlu0 15
        %4408 = vperm.xlu0 %4407, %v4292
        %v4409 = vpop.permute.xlu0 %4408
        %v4411 = vsel %vm4405, %v4409, %v4404
        %v4412 = vsub.f32 1.0, %v4301
        %v4413 = vmul.f32 %v4406, %v4412
        %v4414 = vmul.f32 %v4411, %v4301
        %v4415 = vadd.f32 %v4413, %v4414
        %v4416 = vmax.f32 %v4415, 0.0
        %v4417 = vmin.f32 %v4416, 1.0
        %v4418 = vmul.f32 %v4417, 15.0
        %v4419 = vlaneseq
        %v4420 = vshrl.u32 %v4419, 7
        %v4421 = vsub.s32 0, %v4420
        %v4422 = vrot.slane %v4418, %v4421
        %4424 = vbcast.lane.b32.xlu0 %v4422, 256
        %v4425 = vpop.permute.xlu0 %4424
        %s4427 = sor.u32 256, 8
        %4428 = vbcast.lane.b32.xlu0 %v4422, %s4427
        %v4429 = vpop.permute.xlu0 %4428
        %v4430 = vsub.f32 %v4425, %v500
        %v4431 = vsub.f32 %v4429, %v500
        %v4432 = vand.u32 2147483647, %v4430
        %v4433 = vand.u32 2147483647, %v4431
        %v4434 = vsub.f32 1.0, %v4432
        %v4435 = vsub.f32 1.0, %v4433
        %v4436 = vmax.f32 %v4434, 0.0
        %v4437 = vmax.f32 %v4435, 0.0
        %v4439 = vsel %vm1686, %v4436, 0
        %v4442 = vsel %vm1686, %v4437, 0
        %4444 = vmatprep.subr.mxu0 0.0
        %4445 = vmatpush1.msra.mxu0 %v2590
        %4446 = vmatprep.subr.mxu0 0.0
        %4447 = vmatpush1.msra.mxu0 %v2595
        %4448 = vmatprep.subr.mxu0 0.0
        %4449 = vmatpush1.msra.mxu0 0.0
        %4450 = vmatprep.subr.mxu0 0.0
        %4451 = vmatpush1.msra.mxu0 0.0
        %4452 = vmatprep.subr.mxu0 0.0
        %4453 = vmatpush1.msra.mxu0 0.0
        %4454 = vmatprep.subr.mxu0 0.0
        %4455 = vmatpush1.msra.mxu0 0.0
        %4456 = vmatprep.subr.mxu0 0.0
        %4457 = vmatpush1.msra.mxu0 0.0
        %4458 = vmatprep.subr.mxu0 0.0
        %4459 = vmatpush1.msra.mxu0 0.0
        %4460 = vmatprep.subr.mxu0 0.0
        %4461 = vmatpush1.msra.mxu0 0.0
        %4462 = vmatprep.subr.mxu0 0.0
        %4463 = vmatpush1.msra.mxu0 0.0
        %4464 = vmatprep.subr.mxu0 0.0
        %4465 = vmatpush1.msra.mxu0 0.0
        %4466 = vmatprep.subr.mxu0 0.0
        %4467 = vmatpush1.msra.mxu0 0.0
        %4468 = vmatprep.subr.mxu0 0.0
        %4469 = vmatpush1.msra.mxu0 0.0
        %4470 = vmatprep.subr.mxu0 0.0
        %4471 = vmatpush1.msra.mxu0 0.0
        %4472 = vmatprep.subr.mxu0 0.0
        %4473 = vmatpush1.msra.mxu0 0.0
        %4474 = vmatprep.subr.mxu0 0.0
        %4475 = vmatpush1.msra.mxu0 0.0
        %4476 = vmatprep.subr.mxu0 0.0
        %4477 = vmatpush1.msra.mxu0 0.0
        %4478 = vmatprep.subr.mxu0 0.0
        %4479 = vmatpush1.msra.mxu0 0.0
        %4480 = vmatprep.subr.mxu0 0.0
        %4481 = vmatpush1.msra.mxu0 0.0
        %4482 = vmatprep.subr.mxu0 0.0
        %4483 = vmatpush1.msra.mxu0 0.0
        %4484 = vmatprep.subr.mxu0 0.0
        %4485 = vmatpush1.msra.mxu0 0.0
        %4486 = vmatprep.subr.mxu0 0.0
        %4487 = vmatpush1.msra.mxu0 0.0
        %4488 = vmatprep.subr.mxu0 0.0
        %4489 = vmatpush1.msra.mxu0 0.0
        %4490 = vmatprep.subr.mxu0 0.0
        %4491 = vmatpush1.msra.mxu0 0.0
        %4492 = vmatprep.subr.mxu0 0.0
        %4493 = vmatpush1.msra.mxu0 0.0
        %4494 = vmatprep.subr.mxu0 0.0
        %4495 = vmatpush1.msra.mxu0 0.0
        %4496 = vmatprep.subr.mxu0 0.0
        %4497 = vmatpush1.msra.mxu0 0.0
        %4498 = vmatprep.subr.mxu0 0.0
        %4499 = vmatpush1.msra.mxu0 0.0
        %4500 = vmatprep.subr.mxu0 0.0
        %4501 = vmatpush1.msra.mxu0 0.0
        %4502 = vmatprep.subr.mxu0 0.0
        %4503 = vmatpush1.msra.mxu0 0.0
        %4504 = vmatprep.subr.mxu0 0.0
        %4505 = vmatpush1.msra.mxu0 0.0
        %4506 = vmatprep.subr.mxu0 0.0
        %4507 = vmatpush1.msra.mxu0 0.0
        %4508 = vmatprep.mubr.f32.mxu0 0.0
        %4509 = vmatmul.mubr.f32.gmra.mrb[0].mxu0 %v4439
        %v4510 = vpop.f32.mrb[0].mxu0
        %v4511 = vadd.f32 0.0, %v4510
        %v4512 = vpop.f32.mrb[0].mxu0
        %4513 = vmatprep.mubr.f32.mxu0 0.0
        %4514 = vmatmul.mubr.f32.gmra.mrb[0].mxu0 %v4442
        %v4515 = vpop.f32.mrb[0].mxu0
        %v4516 = vadd.f32 0.0, %v4515
        %v4517 = vpop.f32.mrb[0].mxu0
        %4518 = vdwg.mxu0
        %4519 = vst.msk [vmem:[%s451] sm:$0xff] %vm541, %v4511
        %4520 = vst.msk [vmem:[%s451 + $0x8] sm:$0xff] %vm541, %v4516
        %v4521 = vrot.slane %v3684, 7
        %v4523 = vsel %vm545, %v1757, %v4521
        %vm4524 = vcmask 50176
        %4525 = vst.msk [vmem:[%s441] sm:$0x3] %vm4524, %v4523
        %p4526 = scmp.lt.s32.totalorder %s28, 1
        %s4527 = scalar_select %p4526, %s28, 1
        %s4528 = smul.addr %s4527, 2
        %s4529 = smul.addr %s4528, 8
        %s4530 = scalar_lea.vmem %s12, %s4529
        %s4531 = sand.u32 %s319, 1
        %s4532 = scalar_lea.sflag [#allocation3], %s4531
        %s4533 = sand.u32 %s319, 1
        %s4534 = smul.addr %s4533, 2
        %s4535 = scalar_lea.vmem [#allocation2], %s4534
        // Predicated region
        $region69: #{tpu_custom_call.1} parent=67 // pred_check
          %p4536 = pneg %p303
        $region70: #{tpu_custom_call.1} parent=67 // pred_check_branch
          %4538 = sbr.rel (%p4536) target = $region72
        $region71: #{tpu_custom_call.1} parent=67 // pred_region
          _
        $region72: #{tpu_custom_call.1} parent=67 // pred_fallthru
          _
        // Predicated region
        $region73: #{tpu_custom_call.1} parent=67 // pred_check
          %p4539 = pneg %p329
        $region74: #{tpu_custom_call.1} parent=67 // pred_check_branch
          %4541 = sbr.rel (%p4539) target = $region76
        $region75: #{tpu_custom_call.1} parent=67 // pred_region
          %s4543 = ssub.s32 32, 32
          %4544 = vsyncadd %s4532, %s4543
          %s4545 = smul.addr %s28, 32
          %s4546 = scalar_lea.hbm %s13, %s4545
          %s4548 = sshll.u32 %s4535, 4
          %s4549 = int_to_ptr.vmem [resolvable:$true] %s4548
          %4551 = dma.vmem_to_hbm [thread:$0]  %s4549, 32, %s4546, %s4532
        $region76: #{tpu_custom_call.1} parent=67 // pred_fallthru
          _
      $region68: #{tpu_custom_call.1} parent=5 // pred_fallthru
        _
      %p4552 = scmp.le.s32.totalorder 2, %s23
      // Predicated region
      $region77: #{tpu_custom_call.1} parent=5 // pred_check
        %p4553 = pneg %p4552
      $region78: #{tpu_custom_call.1} parent=5 // pred_check_branch
        %4555 = sbr.rel (%p4553) target = $region80
      $region79: #{tpu_custom_call.1} parent=5 // pred_region
        %s4556 = ssub.s32 %s23, 2
        // Predicated region
        $region81: #{tpu_custom_call.1} parent=79 // pred_check
          %p4557 = pneg %p309
        $region82: #{tpu_custom_call.1} parent=79 // pred_check_branch
          %4559 = sbr.rel (%p4557) target = $region84
        $region83: #{tpu_custom_call.1} parent=79 // pred_region
          %p4560 = scmp.lt.s32.totalorder %s29, 1
          %s4561 = scalar_select %p4560, %s29, 1
          %s4562 = smul.addr %s4561, 2
          %s4563 = smul.addr %s4562, 8
          %s4564 = scalar_lea.vmem %s12, %s4563
        $region84: #{tpu_custom_call.1} parent=79 // pred_fallthru
          _
        // Predicated region
        $region85: #{tpu_custom_call.1} parent=79 // pred_check
          %p4565 = pneg %p335
        $region86: #{tpu_custom_call.1} parent=79 // pred_check_branch
          %4567 = sbr.rel (%p4565) target = $region88
        $region87: #{tpu_custom_call.1} parent=79 // pred_region
          %s4568 = sand.u32 %s320, 1
          %s4569 = scalar_lea.sflag [#allocation3], %s4568
          %s4570 = sand.u32 %s320, 1
          %s4571 = smul.addr %s4570, 2
          %s4572 = scalar_lea.vmem [#allocation2], %s4571
          %4573 = dma.done %s4569, 32
        $region88: #{tpu_custom_call.1} parent=79 // pred_fallthru
          _
      $region80: #{tpu_custom_call.1} parent=5 // pred_fallthru
        _
    $region6: #{tpu_custom_call.1} parent=1 // loop_footer
      %s27 = sadd.s32 1, %s23
    $region7: #{tpu_custom_call.1} parent=1 // loop_footer_branch
      %22 = sbr.rel target = $region3
    $region8: #{tpu_custom_call.1} parent=1 // loop_exit
      _
    %4574 = vsyncpa [#allocation3], 1
    %s4575 = scalar_lea.sflag [#allocation3], 1
    %4576 = vsyncpa %s4575, 1

</llo_original>
